<compile_context>
chip_gen: v6e
topology: v6e:2x2x1
jax: 0.10.0
libtpu: 0.0.40
codegen_flags: <defaults>
</compile_context>

<pallas_src>
import functools

import jax
import jax.numpy as jnp
from jax.experimental import pallas as pl
from jax.experimental.pallas import tpu as pltpu


# ----------------------------- Pallas conv kernel --------------------------------

def _make_conv_kernel(K, TH, W, Cin, relu, with_stats):
    """Kernel: build (TH*W, K*K*Cin) col tile in VMEM, one MXU matmul, fused epilogue."""
    n_in = K + 2  # body + (K-1) halo rows + weights + bias

    def kernel(*refs):
        body_ref = refs[0]                 # (1, TH,  Wp, Cin)  bf16
        halo_refs = refs[1:K]              # K-1 x (1, 1, Wp, Cin) bf16
        w_ref = refs[K]                    # (K*K*Cin, Cout)    bf16  (VMEM-resident)
        b_ref = refs[K + 1]                # (1, Cout)          f32
        o_ref = refs[n_in]                 # (1, 1, TH*W, Cout) bf16
        stats_ref = refs[n_in + 1] if with_stats else None
        col_ref = refs[-1]                 # (TH*W, K*K*Cin)    bf16 scratch

        def win_row(ri):
            # Padded-input row (h*TH + ri) of this tile's halo'd window.
            if ri < TH:
                return body_ref[0, ri]          # (Wp, Cin)
            return halo_refs[ri - TH][0, 0]     # (Wp, Cin)

        # In-VMEM im2col: static slice copies only (no reshapes, no HBM blowup).
        for r in range(TH):
            for ky in range(K):
                src = win_row(r + ky)
                for kx in range(K):
                    tap = (ky * K + kx) * Cin
                    col_ref[r * W:(r + 1) * W, tap:tap + Cin] = src[kx:kx + W, :]

        # One fat MXU matmul, f32 accumulation, bias + ReLU fused as the f32 epilogue.
        acc = jnp.dot(col_ref[...], w_ref[...], preferred_element_type=jnp.float32)
        acc = acc + b_ref[...]
        if relu:
            acc = jnp.maximum(acc, 0.0)
        yq = acc.astype(o_ref.dtype)
        o_ref[0, 0] = yq

        if with_stats:
            # Per-channel sum / sum-of-squares of the values BN will actually rescale.
            yf = yq.astype(jnp.float32)
            stats_ref[0, 0, 0:1, :] = jnp.sum(yf, axis=0, keepdims=True)
            stats_ref[0, 0, 1:2, :] = jnp.sum(yf * yf, axis=0, keepdims=True)

    return kernel


def _halo_spec(TH, Wp, Cin, j):
    # Single padded row (h+1)*TH + j of the same activation array (block size 1 along H
    # -> block index == element row, so no divisibility constraints).
    return pl.BlockSpec((1, 1, Wp, Cin), lambda n, h: (n, (h + 1) * TH + j, 0, 0))


def _pick_th(H, W, K, KKC, Cin, Cout, Wp,
             max_rows=2048, unroll_cap=256, vmem_budget=10 * 1024 * 1024):
    """Largest H-row tile that divides H, keeps the kernel unroll modest and fits VMEM."""
    def vmem_est(th):
        tm = th * W
        col = tm * KKC * 2
        inb = 2 * 2 * (th + K - 1) * Wp * Cin * 2      # double-buffered input blocks
        wgt = 2 * KKC * Cout * 2
        out = 2 * tm * Cout * 2 + tm * Cout * 4        # output blocks + f32 accumulator
        return col + inb + wgt + out

    cap = max(1, min(max(1, H // 2),
                     max(1, max_rows // max(W, 1)),
                     max(1, unroll_cap // (K * K))))
    best = 1
    for th in range(1, min(cap, H) + 1):
        if H % th == 0 and vmem_est(th) <= vmem_budget:
            best = th
    return best


def conv2d(x, w, b, pad, relu=True, with_stats=False):
    """Stride-1 conv + bias + optional ReLU as one in-kernel-im2col MXU matmul.

    Returns (y_nhwc_bf16, stats_(N,HT,2,Cout)_f32 or None, row_count).
    """
    N, H, W, Cin = x.shape
    K = w.shape[0]
    Cout = w.shape[-1]
    KKC = K * K * Cin
    Wp = W + 2 * pad
    assert K == 2 * pad + 1, "kernel assumes 'same' padding (pad = (K-1)//2)"

    TH = _pick_th(H, W, K, KKC, Cin, Cout, Wp)
    HT = H // TH
    TM = TH * W

    xp = jnp.pad(x.astype(jnp.bfloat16), ((0, 0), (pad, pad), (pad, pad), (0, 0)))
    w2 = w.reshape(KKC, Cout).astype(jnp.bfloat16)   # (ky,kx,cin) order matches col
    b2 = b.reshape(1, Cout).astype(jnp.float32)

    body_spec = pl.BlockSpec((1, TH, Wp, Cin), lambda n, h: (n, h, 0, 0))
    halo_specs = [_halo_spec(TH, Wp, Cin, j) for j in range(K - 1)]
    w_spec = pl.BlockSpec((KKC, Cout), lambda n, h: (0, 0))   # resident across the grid
    b_spec = pl.BlockSpec((1, Cout), lambda n, h: (0, 0))

    out_shapes = [jax.ShapeDtypeStruct((N, HT, TM, Cout), jnp.bfloat16)]
    out_specs = [pl.BlockSpec((1, 1, TM, Cout), lambda n, h: (n, h, 0, 0))]
    if with_stats:
        out_shapes.append(jax.ShapeDtypeStruct((N, HT, 2, Cout), jnp.float32))
        out_specs.append(pl.BlockSpec((1, 1, 2, Cout), lambda n, h: (n, h, 0, 0)))

    kernel = _make_conv_kernel(K, TH, W, Cin, relu, with_stats)
    res = pl.pallas_call(
        kernel,
        out_shape=tuple(out_shapes) if with_stats else out_shapes[0],
        grid=(N, HT),
        in_specs=[body_spec] + halo_specs + [w_spec, b_spec],
        out_specs=tuple(out_specs) if with_stats else out_specs[0],
        scratch_shapes=[pltpu.VMEM((TM, KKC), jnp.bfloat16)],
        compiler_params=pltpu.CompilerParams(
            dimension_semantics=("parallel", "parallel"),
            vmem_limit_bytes=64 * 1024 * 1024),
    )(*([xp] * K), w2, b2)

    if with_stats:
        y, stats = res
    else:
        y, stats = res, None
    y = y.reshape(N, H, W, Cout)
    return y, stats, float(N * H * W)


# ----------------------------- JAX glue ops ------------------------------------

def apply_bn(y, stats, count, gamma, beta, eps=1e-5):
    # Fresh nn.BatchNorm2d in training mode: batch statistics, biased variance.
    # Sums come from the Pallas conv kernel; this elementwise scale/shift fuses into
    # the consumer (pad / pool / upsample) under jit.
    # TODO(synk): folding scale/shift into the next conv's weights was not done; the
    # additive shift does not commute with the next conv's zero padding at borders.
    s = jnp.sum(stats[:, :, 0, :], axis=(0, 1))
    ss = jnp.sum(stats[:, :, 1, :], axis=(0, 1))
    mean = s / count
    var = jnp.maximum(ss / count - mean * mean, 0.0)
    scale = gamma * jax.lax.rsqrt(var + eps)
    shift = beta - scale * mean
    return (y.astype(jnp.float32) * scale + shift).astype(y.dtype)


def maxpool2x2(x):
    N, H, W, C = x.shape
    return x.reshape(N, H // 2, 2, W // 2, 2, C).max(axis=(2, 4))


def upsample_bilinear_x2(x):
    # nn.Upsample(scale_factor=2, mode='bilinear', align_corners=True)
    # TODO(synk): irregular gather/interp kept in plain JAX (tiny cost at these shapes).
    def interp_axis(arr, size_in, axis):
        size_out = 2 * size_in
        if size_in == 1:
            return jnp.repeat(arr, size_out, axis=axis)
        pos = jnp.arange(size_out, dtype=jnp.float32) * (size_in - 1) / (size_out - 1)
        i0 = jnp.clip(jnp.floor(pos).astype(jnp.int32), 0, size_in - 2)
        frac = pos - i0.astype(jnp.float32)
        lo = jnp.take(arr, i0, axis=axis)
        hi = jnp.take(arr, i0 + 1, axis=axis)
        shape = [1] * arr.ndim
        shape[axis] = size_out
        frac = frac.reshape(shape)
        return lo * (1.0 - frac) + hi * frac

    N, H, W, C = x.shape
    y = interp_axis(x, H, 1)
    y = interp_axis(y, W, 2)
    return y.astype(x.dtype)


# ----------------------------- model definition --------------------------------

def init_params(key, nf=32):
    specs = {
        'conv1':   (3,       nf,      5, False),
        'conv2':   (nf,      nf * 2,  3, True),
        'conv3':   (nf * 2,  nf * 2,  3, True),
        'conv4':   (nf * 2,  nf * 4,  3, True),
        'conv5':   (nf * 4,  nf * 4,  3, True),
        'conv6':   (nf * 4,  nf * 8,  3, True),
        'deconv1': (nf * 8,  nf * 8,  3, True),
        'deconv2': (nf * 12, nf * 8,  3, True),
        'deconv3': (nf * 10, nf * 4,  3, True),
        'out1':    (nf * 5,  nf * 4,  3, True),
        'out2':    (nf * 4,  nf * 8,  3, True),
        'final':   (nf * 8,  3,       3, False),
    }
    params = {}
    for name, (cin, cout, k, use_bn) in specs.items():
        key, kw, kb = jax.random.split(key, 3)
        p = {'w': jax.random.normal(kw, (k, k, cin, cout), jnp.float32) * 0.05,
             'b': jax.random.normal(kb, (cout,), jnp.float32) * 0.05}
        if use_bn:
            p['gamma'] = jnp.ones((cout,), jnp.float32)
            p['beta'] = jnp.zeros((cout,), jnp.float32)
        params[name] = p
    return params


def conv_block(x, p, pad):
    # PyTorch block order: Conv2d -> ReLU -> (optional) BatchNorm2d (training-mode stats).
    use_bn = 'gamma' in p
    y, stats, count = conv2d(x, p['w'], p['b'], pad, relu=True, with_stats=use_bn)
    if use_bn:
        y = apply_bn(y, stats, count, p['gamma'], p['beta'])
    return y


def deconv_block(x, p):
    return conv_block(upsample_bilinear_x2(x), p, 1)


def funie_forward(x_nhwc, p):
    # TODO(synk): skip-connection concats stay as jnp.concatenate (XLA fuses them with
    # the following pad); writing deconv outputs straight into a concat buffer via
    # input_output_aliases was not implemented.
    x_nhwc = x_nhwc.astype(jnp.bfloat16)
    d1 = conv_block(x_nhwc, p['conv1'], 2)
    d1a = maxpool2x2(d1)
    d2 = conv_block(d1a, p['conv2'], 1)
    d3 = conv_block(d2, p['conv3'], 1)
    d3a = maxpool2x2(d3)
    d4 = conv_block(d3a, p['conv4'], 1)
    d5 = conv_block(d4, p['conv5'], 1)
    d5a = maxpool2x2(d5)
    d6 = conv_block(d5a, p['conv6'], 1)
    u1 = jnp.concatenate([deconv_block(d6, p['deconv1']), d5], axis=-1)
    u2 = jnp.concatenate([deconv_block(u1, p['deconv2']), d3], axis=-1)
    u3 = jnp.concatenate([deconv_block(u2, p['deconv3']), d1], axis=-1)
    o = conv_block(u3, p['out1'], 1)
    o = conv_block(o, p['out2'], 1)
    o, _, _ = conv2d(o, p['final']['w'], p['final']['b'], 1, relu=False)
    return jnp.tanh(o.astype(jnp.float32))


# ----------------------------- main --------------------------------------------

if __name__ == "__main__":
    key = jax.random.PRNGKey(0)
    kx, kp = jax.random.split(key)
    # PyTorch-style NCHW input at small shapes: batch=2, channels=3, spatial=16
    x_nchw = jax.random.normal(kx, (2, 3, 16, 16), jnp.float32)
    params = init_params(kp, nf=32)

    x_nhwc = jnp.transpose(x_nchw, (0, 2, 3, 1))

    # Sanity-check the Pallas conv kernel against XLA's conv on the first layer.
    # (Kernel computes in bf16 with f32 accumulation -> loose tolerance vs f32 reference.)
    ref = jax.lax.conv_general_dilated(
        x_nhwc, params['conv1']['w'], window_strides=(1, 1),
        padding=[(2, 2), (2, 2)], dimension_numbers=('NHWC', 'HWIO', 'NHWC'))
    ref = jnp.maximum(ref + params['conv1']['b'], 0.0)
    got, _, _ = conv2d(x_nhwc, params['conv1']['w'], params['conv1']['b'], 2, relu=True)
    assert jnp.allclose(ref, got.astype(jnp.float32), atol=5e-2), "Pallas conv kernel mismatch"

    out_nhwc = jax.jit(funie_forward)(x_nhwc, params)
    out_nchw = jnp.transpose(out_nhwc, (0, 3, 1, 2))     # back to PyTorch NCHW
    jax.block_until_ready(out_nchw)
    assert out_nchw.shape == (2, 3, 16, 16)
    print("KERNEL_OK")
</pallas_src>

<mosaic_0001>
module attributes {stable_mosaic.version = 11 : i64} {
  func.func @kernel(%arg0: i32, %arg1: i32, %arg2: memref<1x8x20x3xbf16, #tpu.memory_space<vmem>>, %arg3: memref<1x1x20x3xbf16, #tpu.memory_space<vmem>>, %arg4: memref<1x1x20x3xbf16, #tpu.memory_space<vmem>>, %arg5: memref<1x1x20x3xbf16, #tpu.memory_space<vmem>>, %arg6: memref<1x1x20x3xbf16, #tpu.memory_space<vmem>>, %arg7: memref<75x32xbf16, #tpu.memory_space<vmem>>, %arg8: memref<1x32xf32, #tpu.memory_space<vmem>>, %arg9: memref<1x1x128x32xbf16, #tpu.memory_space<vmem>>, %arg10: memref<128x75xbf16, #tpu.memory_space<vmem>>) attributes {dimension_semantics = [#tpu.dimension_semantics<parallel>, #tpu.dimension_semantics<parallel>], iteration_bounds = array<i64: 2, 2>, scalar_prefetch = 0 : i64, scratch_operands = 1 : i64, tpu.core_type = #tpu.core_type<tc>, window_params = [{transform_indices = @transform_0, window_bounds = array<i64: 1, 8, 20, 3>}, {transform_indices = @transform_1, window_bounds = array<i64: 1, 1, 20, 3>}, {transform_indices = @transform_2, window_bounds = array<i64: 1, 1, 20, 3>}, {transform_indices = @transform_3, window_bounds = array<i64: 1, 1, 20, 3>}, {transform_indices = @transform_4, window_bounds = array<i64: 1, 1, 20, 3>}, {pipeline_mode = #tpu.pipeline_mode<synchronous>, transform_indices = @transform_5, window_bounds = array<i64: 75, 32>}, {pipeline_mode = #tpu.pipeline_mode<synchronous>, transform_indices = @transform_6, window_bounds = array<i64: 1, 32>}, {transform_indices = @transform_7, window_bounds = array<i64: 1, 1, 128, 32>}]} {
    %c0 = arith.constant 0 : index
    %c0_0 = arith.constant 0 : index
    %c0_1 = arith.constant 0 : index
    %c0_2 = arith.constant 0 : index
    %0 = vector.load %arg2[%c0, %c0_0, %c0_1, %c0_2] : memref<1x8x20x3xbf16, #tpu.memory_space<vmem>>, vector<1x1x20x3xbf16>
    %1 = vector.shape_cast %0 : vector<1x1x20x3xbf16> to vector<20x3xbf16>
    %2 = vector.extract_strided_slice %1 {offsets = [0, 0], sizes = [16, 3], strides = [1, 1]} : vector<20x3xbf16> to vector<16x3xbf16>
    %c0_3 = arith.constant 0 : index
    %c0_4 = arith.constant 0 : index
    %3 = vector.load %arg10[%c0_3, %c0_4] : memref<128x75xbf16, #tpu.memory_space<vmem>>, vector<16x3xbf16>
    tpu.vector_store %arg10[%c0_3, %c0_4], %2 {strides = array<i32>} : memref<128x75xbf16, #tpu.memory_space<vmem>>, vector<16x3xbf16>,
    %4 = vector.extract_strided_slice %1 {offsets = [1, 0], sizes = [16, 3], strides = [1, 1]} : vector<20x3xbf16> to vector<16x3xbf16>
    %c0_5 = arith.constant 0 : index
    %c3 = arith.constant 3 : index
    %5 = vector.load %arg10[%c0_5, %c3] : memref<128x75xbf16, #tpu.memory_space<vmem>>, vector<16x3xbf16>
    tpu.vector_store %arg10[%c0_5, %c3], %4 {strides = array<i32>} : memref<128x75xbf16, #tpu.memory_space<vmem>>, vector<16x3xbf16>,
    %6 = vector.extract_strided_slice %1 {offsets = [2, 0], sizes = [16, 3], strides = [1, 1]} : vector<20x3xbf16> to vector<16x3xbf16>
    %c0_6 = arith.constant 0 : index
    %c6 = arith.constant 6 : index
    %7 = vector.load %arg10[%c0_6, %c6] : memref<128x75xbf16, #tpu.memory_space<vmem>>, vector<16x3xbf16>
    tpu.vector_store %arg10[%c0_6, %c6], %6 {strides = array<i32>} : memref<128x75xbf16, #tpu.memory_space<vmem>>, vector<16x3xbf16>,
    %8 = vector.extract_strided_slice %1 {offsets = [3, 0], sizes = [16, 3], strides = [1, 1]} : vector<20x3xbf16> to vector<16x3xbf16>
    %c0_7 = arith.constant 0 : index
    %c9 = arith.constant 9 : index
    %9 = vector.load %arg10[%c0_7, %c9] : memref<128x75xbf16, #tpu.memory_space<vmem>>, vector<16x3xbf16>
    tpu.vector_store %arg10[%c0_7, %c9], %8 {strides = array<i32>} : memref<128x75xbf16, #tpu.memory_space<vmem>>, vector<16x3xbf16>,
    %10 = vector.extract_strided_slice %1 {offsets = [4, 0], sizes = [16, 3], strides = [1, 1]} : vector<20x3xbf16> to vector<16x3xbf16>
    %c0_8 = arith.constant 0 : index
    %c12 = arith.constant 12 : index
    %11 = vector.load %arg10[%c0_8, %c12] : memref<128x75xbf16, #tpu.memory_space<vmem>>, vector<16x3xbf16>
    tpu.vector_store %arg10[%c0_8, %c12], %10 {strides = array<i32>} : memref<128x75xbf16, #tpu.memory_space<vmem>>, vector<16x3xbf16>,
    %c0_9 = arith.constant 0 : index
    %c1 = arith.constant 1 : index
    %c0_10 = arith.constant 0 : index
    %c0_11 = arith.constant 0 : index
    %12 = vector.load %arg2[%c0_9, %c1, %c0_10, %c0_11] : memref<1x8x20x3xbf16, #tpu.memory_space<vmem>>, vector<1x1x20x3xbf16>
    %13 = vector.shape_cast %12 : vector<1x1x20x3xbf16> to vector<20x3xbf16>
    %14 = vector.extract_strided_slice %13 {offsets = [0, 0], sizes = [16, 3], strides = [1, 1]} : vector<20x3xbf16> to vector<16x3xbf16>
    %c0_12 = arith.constant 0 : index
    %c15 = arith.constant 15 : index
    %15 = vector.load %arg10[%c0_12, %c15] : memref<128x75xbf16, #tpu.memory_space<vmem>>, vector<16x3xbf16>
    tpu.vector_store %arg10[%c0_12, %c15], %14 {strides = array<i32>} : memref<128x75xbf16, #tpu.memory_space<vmem>>, vector<16x3xbf16>,
    %16 = vector.extract_strided_slice %13 {offsets = [1, 0], sizes = [16, 3], strides = [1, 1]} : vector<20x3xbf16> to vector<16x3xbf16>
    %c0_13 = arith.constant 0 : index
    %c18 = arith.constant 18 : index
    %17 = vector.load %arg10[%c0_13, %c18] : memref<128x75xbf16, #tpu.memory_space<vmem>>, vector<16x3xbf16>
    tpu.vector_store %arg10[%c0_13, %c18], %16 {strides = array<i32>} : memref<128x75xbf16, #tpu.memory_space<vmem>>, vector<16x3xbf16>,
    %18 = vector.extract_strided_slice %13 {offsets = [2, 0], sizes = [16, 3], strides = [1, 1]} : vector<20x3xbf16> to vector<16x3xbf16>
    %c0_14 = arith.constant 0 : index
    %c21 = arith.constant 21 : index
    %19 = vector.load %arg10[%c0_14, %c21] : memref<128x75xbf16, #tpu.memory_space<vmem>>, vector<16x3xbf16>
    tpu.vector_store %arg10[%c0_14, %c21], %18 {strides = array<i32>} : memref<128x75xbf16, #tpu.memory_space<vmem>>, vector<16x3xbf16>,
    %20 = vector.extract_strided_slice %13 {offsets = [3, 0], sizes = [16, 3], strides = [1, 1]} : vector<20x3xbf16> to vector<16x3xbf16>
    %c0_15 = arith.constant 0 : index
    %c24 = arith.constant 24 : index
    %21 = vector.load %arg10[%c0_15, %c24] : memref<128x75xbf16, #tpu.memory_space<vmem>>, vector<16x3xbf16>
    tpu.vector_store %arg10[%c0_15, %c24], %20 {strides = array<i32>} : memref<128x75xbf16, #tpu.memory_space<vmem>>, vector<16x3xbf16>,
    %22 = vector.extract_strided_slice %13 {offsets = [4, 0], sizes = [16, 3], strides = [1, 1]} : vector<20x3xbf16> to vector<16x3xbf16>
    %c0_16 = arith.constant 0 : index
    %c27 = arith.constant 27 : index
    %23 = vector.load %arg10[%c0_16, %c27] : memref<128x75xbf16, #tpu.memory_space<vmem>>, vector<16x3xbf16>
    tpu.vector_store %arg10[%c0_16, %c27], %22 {strides = array<i32>} : memref<128x75xbf16, #tpu.memory_space<vmem>>, vector<16x3xbf16>,
    %c0_17 = arith.constant 0 : index
    %c2 = arith.constant 2 : index
    %c0_18 = arith.constant 0 : index
    %c0_19 = arith.constant 0 : index
    %24 = vector.load %arg2[%c0_17, %c2, %c0_18, %c0_19] : memref<1x8x20x3xbf16, #tpu.memory_space<vmem>>, vector<1x1x20x3xbf16>
    %25 = vector.shape_cast %24 : vector<1x1x20x3xbf16> to vector<20x3xbf16>
    %26 = vector.extract_strided_slice %25 {offsets = [0, 0], sizes = [16, 3], strides = [1, 1]} : vector<20x3xbf16> to vector<16x3xbf16>
    %c0_20 = arith.constant 0 : index
    %c30 = arith.constant 30 : index
    %27 = vector.load %arg10[%c0_20, %c30] : memref<128x75xbf16, #tpu.memory_space<vmem>>, vector<16x3xbf16>
    tpu.vector_store %arg10[%c0_20, %c30], %26 {strides = array<i32>} : memref<128x75xbf16, #tpu.memory_space<vmem>>, vector<16x3xbf16>,
    %28 = vector.extract_strided_slice %25 {offsets = [1, 0], sizes = [16, 3], strides = [1, 1]} : vector<20x3xbf16> to vector<16x3xbf16>
    %c0_21 = arith.constant 0 : index
    %c33 = arith.constant 33 : index
    %29 = vector.load %arg10[%c0_21, %c33] : memref<128x75xbf16, #tpu.memory_space<vmem>>, vector<16x3xbf16>
    tpu.vector_store %arg10[%c0_21, %c33], %28 {strides = array<i32>} : memref<128x75xbf16, #tpu.memory_space<vmem>>, vector<16x3xbf16>,
    %30 = vector.extract_strided_slice %25 {offsets = [2, 0], sizes = [16, 3], strides = [1, 1]} : vector<20x3xbf16> to vector<16x3xbf16>
    %c0_22 = arith.constant 0 : index
    %c36 = arith.constant 36 : index
    %31 = vector.load %arg10[%c0_22, %c36] : memref<128x75xbf16, #tpu.memory_space<vmem>>, vector<16x3xbf16>
    tpu.vector_store %arg10[%c0_22, %c36], %30 {strides = array<i32>} : memref<128x75xbf16, #tpu.memory_space<vmem>>, vector<16x3xbf16>,
    %32 = vector.extract_strided_slice %25 {offsets = [3, 0], sizes = [16, 3], strides = [1, 1]} : vector<20x3xbf16> to vector<16x3xbf16>
    %c0_23 = arith.constant 0 : index
    %c39 = arith.constant 39 : index
    %33 = vector.load %arg10[%c0_23, %c39] : memref<128x75xbf16, #tpu.memory_space<vmem>>, vector<16x3xbf16>
    tpu.vector_store %arg10[%c0_23, %c39], %32 {strides = array<i32>} : memref<128x75xbf16, #tpu.memory_space<vmem>>, vector<16x3xbf16>,
    %34 = vector.extract_strided_slice %25 {offsets = [4, 0], sizes = [16, 3], strides = [1, 1]} : vector<20x3xbf16> to vector<16x3xbf16>
    %c0_24 = arith.constant 0 : index
    %c42 = arith.constant 42 : index
    %35 = vector.load %arg10[%c0_24, %c42] : memref<128x75xbf16, #tpu.memory_space<vmem>>, vector<16x3xbf16>
    tpu.vector_store %arg10[%c0_24, %c42], %34 {strides = array<i32>} : memref<128x75xbf16, #tpu.memory_space<vmem>>, vector<16x3xbf16>,
    %c0_25 = arith.constant 0 : index
    %c3_26 = arith.constant 3 : index
    %c0_27 = arith.constant 0 : index
    %c0_28 = arith.constant 0 : index
    %36 = vector.load %arg2[%c0_25, %c3_26, %c0_27, %c0_28] : memref<1x8x20x3xbf16, #tpu.memory_space<vmem>>, vector<1x1x20x3xbf16>
    %37 = vector.shape_cast %36 : vector<1x1x20x3xbf16> to vector<20x3xbf16>
    %38 = vector.extract_strided_slice %37 {offsets = [0, 0], sizes = [16, 3], strides = [1, 1]} : vector<20x3xbf16> to vector<16x3xbf16>
    %c0_29 = arith.constant 0 : index
    %c45 = arith.constant 45 : index
    %39 = vector.load %arg10[%c0_29, %c45] : memref<128x75xbf16, #tpu.memory_space<vmem>>, vector<16x3xbf16>
    tpu.vector_store %arg10[%c0_29, %c45], %38 {strides = array<i32>} : memref<128x75xbf16, #tpu.memory_space<vmem>>, vector<16x3xbf16>,
    %40 = vector.extract_strided_slice %37 {offsets = [1, 0], sizes = [16, 3], strides = [1, 1]} : vector<20x3xbf16> to vector<16x3xbf16>
    %c0_30 = arith.constant 0 : index
    %c48 = arith.constant 48 : index
    %41 = vector.load %arg10[%c0_30, %c48] : memref<128x75xbf16, #tpu.memory_space<vmem>>, vector<16x3xbf16>
    tpu.vector_store %arg10[%c0_30, %c48], %40 {strides = array<i32>} : memref<128x75xbf16, #tpu.memory_space<vmem>>, vector<16x3xbf16>,
    %42 = vector.extract_strided_slice %37 {offsets = [2, 0], sizes = [16, 3], strides = [1, 1]} : vector<20x3xbf16> to vector<16x3xbf16>
    %c0_31 = arith.constant 0 : index
    %c51 = arith.constant 51 : index
    %43 = vector.load %arg10[%c0_31, %c51] : memref<128x75xbf16, #tpu.memory_space<vmem>>, vector<16x3xbf16>
    tpu.vector_store %arg10[%c0_31, %c51], %42 {strides = array<i32>} : memref<128x75xbf16, #tpu.memory_space<vmem>>, vector<16x3xbf16>,
    %44 = vector.extract_strided_slice %37 {offsets = [3, 0], sizes = [16, 3], strides = [1, 1]} : vector<20x3xbf16> to vector<16x3xbf16>
    %c0_32 = arith.constant 0 : index
    %c54 = arith.constant 54 : index
    %45 = vector.load %arg10[%c0_32, %c54] : memref<128x75xbf16, #tpu.memory_space<vmem>>, vector<16x3xbf16>
    tpu.vector_store %arg10[%c0_32, %c54], %44 {strides = array<i32>} : memref<128x75xbf16, #tpu.memory_space<vmem>>, vector<16x3xbf16>,
    %46 = vector.extract_strided_slice %37 {offsets = [4, 0], sizes = [16, 3], strides = [1, 1]} : vector<20x3xbf16> to vector<16x3xbf16>
    %c0_33 = arith.constant 0 : index
    %c57 = arith.constant 57 : index
    %47 = vector.load %arg10[%c0_33, %c57] : memref<128x75xbf16, #tpu.memory_space<vmem>>, vector<16x3xbf16>
    tpu.vector_store %arg10[%c0_33, %c57], %46 {strides = array<i32>} : memref<128x75xbf16, #tpu.memory_space<vmem>>, vector<16x3xbf16>,
    %c0_34 = arith.constant 0 : index
    %c4 = arith.constant 4 : index
    %c0_35 = arith.constant 0 : index
    %c0_36 = arith.constant 0 : index
    %48 = vector.load %arg2[%c0_34, %c4, %c0_35, %c0_36] : memref<1x8x20x3xbf16, #tpu.memory_space<vmem>>, vector<1x1x20x3xbf16>
    %49 = vector.shape_cast %48 : vector<1x1x20x3xbf16> to vector<20x3xbf16>
    %50 = vector.extract_strided_slice %49 {offsets = [0, 0], sizes = [16, 3], strides = [1, 1]} : vector<20x3xbf16> to vector<16x3xbf16>
    %c0_37 = arith.constant 0 : index
    %c60 = arith.constant 60 : index
    %51 = vector.load %arg10[%c0_37, %c60] : memref<128x75xbf16, #tpu.memory_space<vmem>>, vector<16x3xbf16>
    tpu.vector_store %arg10[%c0_37, %c60], %50 {strides = array<i32>} : memref<128x75xbf16, #tpu.memory_space<vmem>>, vector<16x3xbf16>,
    %52 = vector.extract_strided_slice %49 {offsets = [1, 0], sizes = [16, 3], strides = [1, 1]} : vector<20x3xbf16> to vector<16x3xbf16>
    %c0_38 = arith.constant 0 : index
    %c63 = arith.constant 63 : index
    %53 = vector.load %arg10[%c0_38, %c63] : memref<128x75xbf16, #tpu.memory_space<vmem>>, vector<16x3xbf16>
    tpu.vector_store %arg10[%c0_38, %c63], %52 {strides = array<i32>} : memref<128x75xbf16, #tpu.memory_space<vmem>>, vector<16x3xbf16>,
    %54 = vector.extract_strided_slice %49 {offsets = [2, 0], sizes = [16, 3], strides = [1, 1]} : vector<20x3xbf16> to vector<16x3xbf16>
    %c0_39 = arith.constant 0 : index
    %c66 = arith.constant 66 : index
    %55 = vector.load %arg10[%c0_39, %c66] : memref<128x75xbf16, #tpu.memory_space<vmem>>, vector<16x3xbf16>
    tpu.vector_store %arg10[%c0_39, %c66], %54 {strides = array<i32>} : memref<128x75xbf16, #tpu.memory_space<vmem>>, vector<16x3xbf16>,
    %56 = vector.extract_strided_slice %49 {offsets = [3, 0], sizes = [16, 3], strides = [1, 1]} : vector<20x3xbf16> to vector<16x3xbf16>
    %c0_40 = arith.constant 0 : index
    %c69 = arith.constant 69 : index
    %57 = vector.load %arg10[%c0_40, %c69] : memref<128x75xbf16, #tpu.memory_space<vmem>>, vector<16x3xbf16>
    tpu.vector_store %arg10[%c0_40, %c69], %56 {strides = array<i32>} : memref<128x75xbf16, #tpu.memory_space<vmem>>, vector<16x3xbf16>,
    %58 = vector.extract_strided_slice %49 {offsets = [4, 0], sizes = [16, 3], strides = [1, 1]} : vector<20x3xbf16> to vector<16x3xbf16>
    %c0_41 = arith.constant 0 : index
    %c72 = arith.constant 72 : index
    %59 = vector.load %arg10[%c0_41, %c72] : memref<128x75xbf16, #tpu.memory_space<vmem>>, vector<16x3xbf16>
    tpu.vector_store %arg10[%c0_41, %c72], %58 {strides = array<i32>} : memref<128x75xbf16, #tpu.memory_space<vmem>>, vector<16x3xbf16>,
    %c0_42 = arith.constant 0 : index
    %c1_43 = arith.constant 1 : index
    %c0_44 = arith.constant 0 : index
    %c0_45 = arith.constant 0 : index
    %60 = vector.load %arg2[%c0_42, %c1_43, %c0_44, %c0_45] : memref<1x8x20x3xbf16, #tpu.memory_space<vmem>>, vector<1x1x20x3xbf16>
    %61 = vector.shape_cast %60 : vector<1x1x20x3xbf16> to vector<20x3xbf16>
    %62 = vector.extract_strided_slice %61 {offsets = [0, 0], sizes = [16, 3], strides = [1, 1]} : vector<20x3xbf16> to vector<16x3xbf16>
    %c16 = arith.constant 16 : index
    %c0_46 = arith.constant 0 : index
    %63 = vector.load %arg10[%c16, %c0_46] : memref<128x75xbf16, #tpu.memory_space<vmem>>, vector<16x3xbf16>
    tpu.vector_store %arg10[%c16, %c0_46], %62 {strides = array<i32>} : memref<128x75xbf16, #tpu.memory_space<vmem>>, vector<16x3xbf16>,
    %64 = vector.extract_strided_slice %61 {offsets = [1, 0], sizes = [16, 3], strides = [1, 1]} : vector<20x3xbf16> to vector<16x3xbf16>
    %c16_47 = arith.constant 16 : index
    %c3_48 = arith.constant 3 : index
    %65 = vector.load %arg10[%c16_47, %c3_48] : memref<128x75xbf16, #tpu.memory_space<vmem>>, vector<16x3xbf16>
    tpu.vector_store %arg10[%c16_47, %c3_48], %64 {strides = array<i32>} : memref<128x75xbf16, #tpu.memory_space<vmem>>, vector<16x3xbf16>,
    %66 = vector.extract_strided_slice %61 {offsets = [2, 0], sizes = [16, 3], strides = [1, 1]} : vector<20x3xbf16> to vector<16x3xbf16>
    %c16_49 = arith.constant 16 : index
    %c6_50 = arith.constant 6 : index
    %67 = vector.load %arg10[%c16_49, %c6_50] : memref<128x75xbf16, #tpu.memory_space<vmem>>, vector<16x3xbf16>
    tpu.vector_store %arg10[%c16_49, %c6_50], %66 {strides = array<i32>} : memref<128x75xbf16, #tpu.memory_space<vmem>>, vector<16x3xbf16>,
    %68 = vector.extract_strided_slice %61 {offsets = [3, 0], sizes = [16, 3], strides = [1, 1]} : vector<20x3xbf16> to vector<16x3xbf16>
    %c16_51 = arith.constant 16 : index
    %c9_52 = arith.constant 9 : index
    %69 = vector.load %arg10[%c16_51, %c9_52] : memref<128x75xbf16, #tpu.memory_space<vmem>>, vector<16x3xbf16>
    tpu.vector_store %arg10[%c16_51, %c9_52], %68 {strides = array<i32>} : memref<128x75xbf16, #tpu.memory_space<vmem>>, vector<16x3xbf16>,
    %70 = vector.extract_strided_slice %61 {offsets = [4, 0], sizes = [16, 3], strides = [1, 1]} : vector<20x3xbf16> to vector<16x3xbf16>
    %c16_53 = arith.constant 16 : index
    %c12_54 = arith.constant 12 : index
    %71 = vector.load %arg10[%c16_53, %c12_54] : memref<128x75xbf16, #tpu.memory_space<vmem>>, vector<16x3xbf16>
    tpu.vector_store %arg10[%c16_53, %c12_54], %70 {strides = array<i32>} : memref<128x75xbf16, #tpu.memory_space<vmem>>, vector<16x3xbf16>,
    %c0_55 = arith.constant 0 : index
    %c2_56 = arith.constant 2 : index
    %c0_57 = arith.constant 0 : index
    %c0_58 = arith.constant 0 : index
    %72 = vector.load %arg2[%c0_55, %c2_56, %c0_57, %c0_58] : memref<1x8x20x3xbf16, #tpu.memory_space<vmem>>, vector<1x1x20x3xbf16>
    %73 = vector.shape_cast %72 : vector<1x1x20x3xbf16> to vector<20x3xbf16>
    %74 = vector.extract_strided_slice %73 {offsets = [0, 0], sizes = [16, 3], strides = [1, 1]} : vector<20x3xbf16> to vector<16x3xbf16>
    %c16_59 = arith.constant 16 : index
    %c15_60 = arith.constant 15 : index
    %75 = vector.load %arg10[%c16_59, %c15_60] : memref<128x75xbf16, #tpu.memory_space<vmem>>, vector<16x3xbf16>
    tpu.vector_store %arg10[%c16_59, %c15_60], %74 {strides = array<i32>} : memref<128x75xbf16, #tpu.memory_space<vmem>>, vector<16x3xbf16>,
    %76 = vector.extract_strided_slice %73 {offsets = [1, 0], sizes = [16, 3], strides = [1, 1]} : vector<20x3xbf16> to vector<16x3xbf16>
    %c16_61 = arith.constant 16 : index
    %c18_62 = arith.constant 18 : index
    %77 = vector.load %arg10[%c16_61, %c18_62] : memref<128x75xbf16, #tpu.memory_space<vmem>>, vector<16x3xbf16>
    tpu.vector_store %arg10[%c16_61, %c18_62], %76 {strides = array<i32>} : memref<128x75xbf16, #tpu.memory_space<vmem>>, vector<16x3xbf16>,
    %78 = vector.extract_strided_slice %73 {offsets = [2, 0], sizes = [16, 3], strides = [1, 1]} : vector<20x3xbf16> to vector<16x3xbf16>
    %c16_63 = arith.constant 16 : index
    %c21_64 = arith.constant 21 : index
    %79 = vector.load %arg10[%c16_63, %c21_64] : memref<128x75xbf16, #tpu.memory_space<vmem>>, vector<16x3xbf16>
    tpu.vector_store %arg10[%c16_63, %c21_64], %78 {strides = array<i32>} : memref<128x75xbf16, #tpu.memory_space<vmem>>, vector<16x3xbf16>,
    %80 = vector.extract_strided_slice %73 {offsets = [3, 0], sizes = [16, 3], strides = [1, 1]} : vector<20x3xbf16> to vector<16x3xbf16>
    %c16_65 = arith.constant 16 : index
    %c24_66 = arith.constant 24 : index
    %81 = vector.load %arg10[%c16_65, %c24_66] : memref<128x75xbf16, #tpu.memory_space<vmem>>, vector<16x3xbf16>
    tpu.vector_store %arg10[%c16_65, %c24_66], %80 {strides = array<i32>} : memref<128x75xbf16, #tpu.memory_space<vmem>>, vector<16x3xbf16>,
    %82 = vector.extract_strided_slice %73 {offsets = [4, 0], sizes = [16, 3], strides = [1, 1]} : vector<20x3xbf16> to vector<16x3xbf16>
    %c16_67 = arith.constant 16 : index
    %c27_68 = arith.constant 27 : index
    %83 = vector.load %arg10[%c16_67, %c27_68] : memref<128x75xbf16, #tpu.memory_space<vmem>>, vector<16x3xbf16>
    tpu.vector_store %arg10[%c16_67, %c27_68], %82 {strides = array<i32>} : memref<128x75xbf16, #tpu.memory_space<vmem>>, vector<16x3xbf16>,
    %c0_69 = arith.constant 0 : index
    %c3_70 = arith.constant 3 : index
    %c0_71 = arith.constant 0 : index
    %c0_72 = arith.constant 0 : index
    %84 = vector.load %arg2[%c0_69, %c3_70, %c0_71, %c0_72] : memref<1x8x20x3xbf16, #tpu.memory_space<vmem>>, vector<1x1x20x3xbf16>
    %85 = vector.shape_cast %84 : vector<1x1x20x3xbf16> to vector<20x3xbf16>
    %86 = vector.extract_strided_slice %85 {offsets = [0, 0], sizes = [16, 3], strides = [1, 1]} : vector<20x3xbf16> to vector<16x3xbf16>
    %c16_73 = arith.constant 16 : index
    %c30_74 = arith.constant 30 : index
    %87 = vector.load %arg10[%c16_73, %c30_74] : memref<128x75xbf16, #tpu.memory_space<vmem>>, vector<16x3xbf16>
    tpu.vector_store %arg10[%c16_73, %c30_74], %86 {strides = array<i32>} : memref<128x75xbf16, #tpu.memory_space<vmem>>, vector<16x3xbf16>,
    %88 = vector.extract_strided_slice %85 {offsets = [1, 0], sizes = [16, 3], strides = [1, 1]} : vector<20x3xbf16> to vector<16x3xbf16>
    %c16_75 = arith.constant 16 : index
    %c33_76 = arith.constant 33 : index
    %89 = vector.load %arg10[%c16_75, %c33_76] : memref<128x75xbf16, #tpu.memory_space<vmem>>, vector<16x3xbf16>
    tpu.vector_store %arg10[%c16_75, %c33_76], %88 {strides = array<i32>} : memref<128x75xbf16, #tpu.memory_space<vmem>>, vector<16x3xbf16>,
    %90 = vector.extract_strided_slice %85 {offsets = [2, 0], sizes = [16, 3], strides = [1, 1]} : vector<20x3xbf16> to vector<16x3xbf16>
    %c16_77 = arith.constant 16 : index
    %c36_78 = arith.constant 36 : index
    %91 = vector.load %arg10[%c16_77, %c36_78] : memref<128x75xbf16, #tpu.memory_space<vmem>>, vector<16x3xbf16>
    tpu.vector_store %arg10[%c16_77, %c36_78], %90 {strides = array<i32>} : memref<128x75xbf16, #tpu.memory_space<vmem>>, vector<16x3xbf16>,
    %92 = vector.extract_strided_slice %85 {offsets = [3, 0], sizes = [16, 3], strides = [1, 1]} : vector<20x3xbf16> to vector<16x3xbf16>
    %c16_79 = arith.constant 16 : index
    %c39_80 = arith.constant 39 : index
    %93 = vector.load %arg10[%c16_79, %c39_80] : memref<128x75xbf16, #tpu.memory_space<vmem>>, vector<16x3xbf16>
    tpu.vector_store %arg10[%c16_79, %c39_80], %92 {strides = array<i32>} : memref<128x75xbf16, #tpu.memory_space<vmem>>, vector<16x3xbf16>,
    %94 = vector.extract_strided_slice %85 {offsets = [4, 0], sizes = [16, 3], strides = [1, 1]} : vector<20x3xbf16> to vector<16x3xbf16>
    %c16_81 = arith.constant 16 : index
    %c42_82 = arith.constant 42 : index
    %95 = vector.load %arg10[%c16_81, %c42_82] : memref<128x75xbf16, #tpu.memory_space<vmem>>, vector<16x3xbf16>
    tpu.vector_store %arg10[%c16_81, %c42_82], %94 {strides = array<i32>} : memref<128x75xbf16, #tpu.memory_space<vmem>>, vector<16x3xbf16>,
    %c0_83 = arith.constant 0 : index
    %c4_84 = arith.constant 4 : index
    %c0_85 = arith.constant 0 : index
    %c0_86 = arith.constant 0 : index
    %96 = vector.load %arg2[%c0_83, %c4_84, %c0_85, %c0_86] : memref<1x8x20x3xbf16, #tpu.memory_space<vmem>>, vector<1x1x20x3xbf16>
    %97 = vector.shape_cast %96 : vector<1x1x20x3xbf16> to vector<20x3xbf16>
    %98 = vector.extract_strided_slice %97 {offsets = [0, 0], sizes = [16, 3], strides = [1, 1]} : vector<20x3xbf16> to vector<16x3xbf16>
    %c16_87 = arith.constant 16 : index
    %c45_88 = arith.constant 45 : index
    %99 = vector.load %arg10[%c16_87, %c45_88] : memref<128x75xbf16, #tpu.memory_space<vmem>>, vector<16x3xbf16>
    tpu.vector_store %arg10[%c16_87, %c45_88], %98 {strides = array<i32>} : memref<128x75xbf16, #tpu.memory_space<vmem>>, vector<16x3xbf16>,
    %100 = vector.extract_strided_slice %97 {offsets = [1, 0], sizes = [16, 3], strides = [1, 1]} : vector<20x3xbf16> to vector<16x3xbf16>
    %c16_89 = arith.constant 16 : index
    %c48_90 = arith.constant 48 : index
    %101 = vector.load %arg10[%c16_89, %c48_90] : memref<128x75xbf16, #tpu.memory_space<vmem>>, vector<16x3xbf16>
    tpu.vector_store %arg10[%c16_89, %c48_90], %100 {strides = array<i32>} : memref<128x75xbf16, #tpu.memory_space<vmem>>, vector<16x3xbf16>,
    %102 = vector.extract_strided_slice %97 {offsets = [2, 0], sizes = [16, 3], strides = [1, 1]} : vector<20x3xbf16> to vector<16x3xbf16>
    %c16_91 = arith.constant 16 : index
    %c51_92 = arith.constant 51 : index
    %103 = vector.load %arg10[%c16_91, %c51_92] : memref<128x75xbf16, #tpu.memory_space<vmem>>, vector<16x3xbf16>
    tpu.vector_store %arg10[%c16_91, %c51_92], %102 {strides = array<i32>} : memref<128x75xbf16, #tpu.memory_space<vmem>>, vector<16x3xbf16>,
    %104 = vector.extract_strided_slice %97 {offsets = [3, 0], sizes = [16, 3], strides = [1, 1]} : vector<20x3xbf16> to vector<16x3xbf16>
    %c16_93 = arith.constant 16 : index
    %c54_94 = arith.constant 54 : index
    %105 = vector.load %arg10[%c16_93, %c54_94] : memref<128x75xbf16, #tpu.memory_space<vmem>>, vector<16x3xbf16>
    tpu.vector_store %arg10[%c16_93, %c54_94], %104 {strides = array<i32>} : memref<128x75xbf16, #tpu.memory_space<vmem>>, vector<16x3xbf16>,
    %106 = vector.extract_strided_slice %97 {offsets = [4, 0], sizes = [16, 3], strides = [1, 1]} : vector<20x3xbf16> to vector<16x3xbf16>
    %c16_95 = arith.constant 16 : index
    %c57_96 = arith.constant 57 : index
    %107 = vector.load %arg10[%c16_95, %c57_96] : memref<128x75xbf16, #tpu.memory_space<vmem>>, vector<16x3xbf16>
    tpu.vector_store %arg10[%c16_95, %c57_96], %106 {strides = array<i32>} : memref<128x75xbf16, #tpu.memory_space<vmem>>, vector<16x3xbf16>,
    %c0_97 = arith.constant 0 : index
    %c5 = arith.constant 5 : index
    %c0_98 = arith.constant 0 : index
    %c0_99 = arith.constant 0 : index
    %108 = vector.load %arg2[%c0_97, %c5, %c0_98, %c0_99] : memref<1x8x20x3xbf16, #tpu.memory_space<vmem>>, vector<1x1x20x3xbf16>
    %109 = vector.shape_cast %108 : vector<1x1x20x3xbf16> to vector<20x3xbf16>
    %110 = vector.extract_strided_slice %109 {offsets = [0, 0], sizes = [16, 3], strides = [1, 1]} : vector<20x3xbf16> to vector<16x3xbf16>
    %c16_100 = arith.constant 16 : index
    %c60_101 = arith.constant 60 : index
    %111 = vector.load %arg10[%c16_100, %c60_101] : memref<128x75xbf16, #tpu.memory_space<vmem>>, vector<16x3xbf16>
    tpu.vector_store %arg10[%c16_100, %c60_101], %110 {strides = array<i32>} : memref<128x75xbf16, #tpu.memory_space<vmem>>, vector<16x3xbf16>,
    %112 = vector.extract_strided_slice %109 {offsets = [1, 0], sizes = [16, 3], strides = [1, 1]} : vector<20x3xbf16> to vector<16x3xbf16>
    %c16_102 = arith.constant 16 : index
    %c63_103 = arith.constant 63 : index
    %113 = vector.load %arg10[%c16_102, %c63_103] : memref<128x75xbf16, #tpu.memory_space<vmem>>, vector<16x3xbf16>
    tpu.vector_store %arg10[%c16_102, %c63_103], %112 {strides = array<i32>} : memref<128x75xbf16, #tpu.memory_space<vmem>>, vector<16x3xbf16>,
    %114 = vector.extract_strided_slice %109 {offsets = [2, 0], sizes = [16, 3], strides = [1, 1]} : vector<20x3xbf16> to vector<16x3xbf16>
    %c16_104 = arith.constant 16 : index
    %c66_105 = arith.constant 66 : index
    %115 = vector.load %arg10[%c16_104, %c66_105] : memref<128x75xbf16, #tpu.memory_space<vmem>>, vector<16x3xbf16>
    tpu.vector_store %arg10[%c16_104, %c66_105], %114 {strides = array<i32>} : memref<128x75xbf16, #tpu.memory_space<vmem>>, vector<16x3xbf16>,
    %116 = vector.extract_strided_slice %109 {offsets = [3, 0], sizes = [16, 3], strides = [1, 1]} : vector<20x3xbf16> to vector<16x3xbf16>
    %c16_106 = arith.constant 16 : index
    %c69_107 = arith.constant 69 : index
    %117 = vector.load %arg10[%c16_106, %c69_107] : memref<128x75xbf16, #tpu.memory_space<vmem>>, vector<16x3xbf16>
    tpu.vector_store %arg10[%c16_106, %c69_107], %116 {strides = array<i32>} : memref<128x75xbf16, #tpu.memory_space<vmem>>, vector<16x3xbf16>,
    %118 = vector.extract_strided_slice %109 {offsets = [4, 0], sizes = [16, 3], strides = [1, 1]} : vector<20x3xbf16> to vector<16x3xbf16>
    %c16_108 = arith.constant 16 : index
    %c72_109 = arith.constant 72 : index
    %119 = vector.load %arg10[%c16_108, %c72_109] : memref<128x75xbf16, #tpu.memory_space<vmem>>, vector<16x3xbf16>
    tpu.vector_store %arg10[%c16_108, %c72_109], %118 {strides = array<i32>} : memref<128x75xbf16, #tpu.memory_space<vmem>>, vector<16x3xbf16>,
    %c0_110 = arith.constant 0 : index
    %c2_111 = arith.constant 2 : index
    %c0_112 = arith.constant 0 : index
    %c0_113 = arith.constant 0 : index
    %120 = vector.load %arg2[%c0_110, %c2_111, %c0_112, %c0_113] : memref<1x8x20x3xbf16, #tpu.memory_space<vmem>>, vector<1x1x20x3xbf16>
    %121 = vector.shape_cast %120 : vector<1x1x20x3xbf16> to vector<20x3xbf16>
    %122 = vector.extract_strided_slice %121 {offsets = [0, 0], sizes = [16, 3], strides = [1, 1]} : vector<20x3xbf16> to vector<16x3xbf16>
    %c32 = arith.constant 32 : index
    %c0_114 = arith.constant 0 : index
    %123 = vector.load %arg10[%c32, %c0_114] : memref<128x75xbf16, #tpu.memory_space<vmem>>, vector<16x3xbf16>
    tpu.vector_store %arg10[%c32, %c0_114], %122 {strides = array<i32>} : memref<128x75xbf16, #tpu.memory_space<vmem>>, vector<16x3xbf16>,
    %124 = vector.extract_strided_slice %121 {offsets = [1, 0], sizes = [16, 3], strides = [1, 1]} : vector<20x3xbf16> to vector<16x3xbf16>
    %c32_115 = arith.constant 32 : index
    %c3_116 = arith.constant 3 : index
    %125 = vector.load %arg10[%c32_115, %c3_116] : memref<128x75xbf16, #tpu.memory_space<vmem>>, vector<16x3xbf16>
    tpu.vector_store %arg10[%c32_115, %c3_116], %124 {strides = array<i32>} : memref<128x75xbf16, #tpu.memory_space<vmem>>, vector<16x3xbf16>,
    %126 = vector.extract_strided_slice %121 {offsets = [2, 0], sizes = [16, 3], strides = [1, 1]} : vector<20x3xbf16> to vector<16x3xbf16>
    %c32_117 = arith.constant 32 : index
    %c6_118 = arith.constant 6 : index
    %127 = vector.load %arg10[%c32_117, %c6_118] : memref<128x75xbf16, #tpu.memory_space<vmem>>, vector<16x3xbf16>
    tpu.vector_store %arg10[%c32_117, %c6_118], %126 {strides = array<i32>} : memref<128x75xbf16, #tpu.memory_space<vmem>>, vector<16x3xbf16>,
    %128 = vector.extract_strided_slice %121 {offsets = [3, 0], sizes = [16, 3], strides = [1, 1]} : vector<20x3xbf16> to vector<16x3xbf16>
    %c32_119 = arith.constant 32 : index
    %c9_120 = arith.constant 9 : index
    %129 = vector.load %arg10[%c32_119, %c9_120] : memref<128x75xbf16, #tpu.memory_space<vmem>>, vector<16x3xbf16>
    tpu.vector_store %arg10[%c32_119, %c9_120], %128 {strides = array<i32>} : memref<128x75xbf16, #tpu.memory_space<vmem>>, vector<16x3xbf16>,
    %130 = vector.extract_strided_slice %121 {offsets = [4, 0], sizes = [16, 3], strides = [1, 1]} : vector<20x3xbf16> to vector<16x3xbf16>
    %c32_121 = arith.constant 32 : index
    %c12_122 = arith.constant 12 : index
    %131 = vector.load %arg10[%c32_121, %c12_122] : memref<128x75xbf16, #tpu.memory_space<vmem>>, vector<16x3xbf16>
    tpu.vector_store %arg10[%c32_121, %c12_122], %130 {strides = array<i32>} : memref<128x75xbf16, #tpu.memory_space<vmem>>, vector<16x3xbf16>,
    %c0_123 = arith.constant 0 : index
    %c3_124 = arith.constant 3 : index
    %c0_125 = arith.constant 0 : index
    %c0_126 = arith.constant 0 : index
    %132 = vector.load %arg2[%c0_123, %c3_124, %c0_125, %c0_126] : memref<1x8x20x3xbf16, #tpu.memory_space<vmem>>, vector<1x1x20x3xbf16>
    %133 = vector.shape_cast %132 : vector<1x1x20x3xbf16> to vector<20x3xbf16>
    %134 = vector.extract_strided_slice %133 {offsets = [0, 0], sizes = [16, 3], strides = [1, 1]} : vector<20x3xbf16> to vector<16x3xbf16>
    %c32_127 = arith.constant 32 : index
    %c15_128 = arith.constant 15 : index
    %135 = vector.load %arg10[%c32_127, %c15_128] : memref<128x75xbf16, #tpu.memory_space<vmem>>, vector<16x3xbf16>
    tpu.vector_store %arg10[%c32_127, %c15_128], %134 {strides = array<i32>} : memref<128x75xbf16, #tpu.memory_space<vmem>>, vector<16x3xbf16>,
    %136 = vector.extract_strided_slice %133 {offsets = [1, 0], sizes = [16, 3], strides = [1, 1]} : vector<20x3xbf16> to vector<16x3xbf16>
    %c32_129 = arith.constant 32 : index
    %c18_130 = arith.constant 18 : index
    %137 = vector.load %arg10[%c32_129, %c18_130] : memref<128x75xbf16, #tpu.memory_space<vmem>>, vector<16x3xbf16>
    tpu.vector_store %arg10[%c32_129, %c18_130], %136 {strides = array<i32>} : memref<128x75xbf16, #tpu.memory_space<vmem>>, vector<16x3xbf16>,
    %138 = vector.extract_strided_slice %133 {offsets = [2, 0], sizes = [16, 3], strides = [1, 1]} : vector<20x3xbf16> to vector<16x3xbf16>
    %c32_131 = arith.constant 32 : index
    %c21_132 = arith.constant 21 : index
    %139 = vector.load %arg10[%c32_131, %c21_132] : memref<128x75xbf16, #tpu.memory_space<vmem>>, vector<16x3xbf16>
    tpu.vector_store %arg10[%c32_131, %c21_132], %138 {strides = array<i32>} : memref<128x75xbf16, #tpu.memory_space<vmem>>, vector<16x3xbf16>,
    %140 = vector.extract_strided_slice %133 {offsets = [3, 0], sizes = [16, 3], strides = [1, 1]} : vector<20x3xbf16> to vector<16x3xbf16>
    %c32_133 = arith.constant 32 : index
    %c24_134 = arith.constant 24 : index
    %141 = vector.load %arg10[%c32_133, %c24_134] : memref<128x75xbf16, #tpu.memory_space<vmem>>, vector<16x3xbf16>
    tpu.vector_store %arg10[%c32_133, %c24_134], %140 {strides = array<i32>} : memref<128x75xbf16, #tpu.memory_space<vmem>>, vector<16x3xbf16>,
    %142 = vector.extract_strided_slice %133 {offsets = [4, 0], sizes = [16, 3], strides = [1, 1]} : vector<20x3xbf16> to vector<16x3xbf16>
    %c32_135 = arith.constant 32 : index
    %c27_136 = arith.constant 27 : index
    %143 = vector.load %arg10[%c32_135, %c27_136] : memref<128x75xbf16, #tpu.memory_space<vmem>>, vector<16x3xbf16>
    tpu.vector_store %arg10[%c32_135, %c27_136], %142 {strides = array<i32>} : memref<128x75xbf16, #tpu.memory_space<vmem>>, vector<16x3xbf16>,
    %c0_137 = arith.constant 0 : index
    %c4_138 = arith.constant 4 : index
    %c0_139 = arith.constant 0 : index
    %c0_140 = arith.constant 0 : index
    %144 = vector.load %arg2[%c0_137, %c4_138, %c0_139, %c0_140] : memref<1x8x20x3xbf16, #tpu.memory_space<vmem>>, vector<1x1x20x3xbf16>
    %145 = vector.shape_cast %144 : vector<1x1x20x3xbf16> to vector<20x3xbf16>
    %146 = vector.extract_strided_slice %145 {offsets = [0, 0], sizes = [16, 3], strides = [1, 1]} : vector<20x3xbf16> to vector<16x3xbf16>
    %c32_141 = arith.constant 32 : index
    %c30_142 = arith.constant 30 : index
    %147 = vector.load %arg10[%c32_141, %c30_142] : memref<128x75xbf16, #tpu.memory_space<vmem>>, vector<16x3xbf16>
    tpu.vector_store %arg10[%c32_141, %c30_142], %146 {strides = array<i32>} : memref<128x75xbf16, #tpu.memory_space<vmem>>, vector<16x3xbf16>,
    %148 = vector.extract_strided_slice %145 {offsets = [1, 0], sizes = [16, 3], strides = [1, 1]} : vector<20x3xbf16> to vector<16x3xbf16>
    %c32_143 = arith.constant 32 : index
    %c33_144 = arith.constant 33 : index
    %149 = vector.load %arg10[%c32_143, %c33_144] : memref<128x75xbf16, #tpu.memory_space<vmem>>, vector<16x3xbf16>
    tpu.vector_store %arg10[%c32_143, %c33_144], %148 {strides = array<i32>} : memref<128x75xbf16, #tpu.memory_space<vmem>>, vector<16x3xbf16>,
    %150 = vector.extract_strided_slice %145 {offsets = [2, 0], sizes = [16, 3], strides = [1, 1]} : vector<20x3xbf16> to vector<16x3xbf16>
    %c32_145 = arith.constant 32 : index
    %c36_146 = arith.constant 36 : index
    %151 = vector.load %arg10[%c32_145, %c36_146] : memref<128x75xbf16, #tpu.memory_space<vmem>>, vector<16x3xbf16>
    tpu.vector_store %arg10[%c32_145, %c36_146], %150 {strides = array<i32>} : memref<128x75xbf16, #tpu.memory_space<vmem>>, vector<16x3xbf16>,
    %152 = vector.extract_strided_slice %145 {offsets = [3, 0], sizes = [16, 3], strides = [1, 1]} : vector<20x3xbf16> to vector<16x3xbf16>
    %c32_147 = arith.constant 32 : index
    %c39_148 = arith.constant 39 : index
    %153 = vector.load %arg10[%c32_147, %c39_148] : memref<128x75xbf16, #tpu.memory_space<vmem>>, vector<16x3xbf16>
    tpu.vector_store %arg10[%c32_147, %c39_148], %152 {strides = array<i32>} : memref<128x75xbf16, #tpu.memory_space<vmem>>, vector<16x3xbf16>,
    %154 = vector.extract_strided_slice %145 {offsets = [4, 0], sizes = [16, 3], strides = [1, 1]} : vector<20x3xbf16> to vector<16x3xbf16>
    %c32_149 = arith.constant 32 : index
    %c42_150 = arith.constant 42 : index
    %155 = vector.load %arg10[%c32_149, %c42_150] : memref<128x75xbf16, #tpu.memory_space<vmem>>, vector<16x3xbf16>
    tpu.vector_store %arg10[%c32_149, %c42_150], %154 {strides = array<i32>} : memref<128x75xbf16, #tpu.memory_space<vmem>>, vector<16x3xbf16>,
    %c0_151 = arith.constant 0 : index
    %c5_152 = arith.constant 5 : index
    %c0_153 = arith.constant 0 : index
    %c0_154 = arith.constant 0 : index
    %156 = vector.load %arg2[%c0_151, %c5_152, %c0_153, %c0_154] : memref<1x8x20x3xbf16, #tpu.memory_space<vmem>>, vector<1x1x20x3xbf16>
    %157 = vector.shape_cast %156 : vector<1x1x20x3xbf16> to vector<20x3xbf16>
    %158 = vector.extract_strided_slice %157 {offsets = [0, 0], sizes = [16, 3], strides = [1, 1]} : vector<20x3xbf16> to vector<16x3xbf16>
    %c32_155 = arith.constant 32 : index
    %c45_156 = arith.constant 45 : index
    %159 = vector.load %arg10[%c32_155, %c45_156] : memref<128x75xbf16, #tpu.memory_space<vmem>>, vector<16x3xbf16>
    tpu.vector_store %arg10[%c32_155, %c45_156], %158 {strides = array<i32>} : memref<128x75xbf16, #tpu.memory_space<vmem>>, vector<16x3xbf16>,
    %160 = vector.extract_strided_slice %157 {offsets = [1, 0], sizes = [16, 3], strides = [1, 1]} : vector<20x3xbf16> to vector<16x3xbf16>
    %c32_157 = arith.constant 32 : index
    %c48_158 = arith.constant 48 : index
    %161 = vector.load %arg10[%c32_157, %c48_158] : memref<128x75xbf16, #tpu.memory_space<vmem>>, vector<16x3xbf16>
    tpu.vector_store %arg10[%c32_157, %c48_158], %160 {strides = array<i32>} : memref<128x75xbf16, #tpu.memory_space<vmem>>, vector<16x3xbf16>,
    %162 = vector.extract_strided_slice %157 {offsets = [2, 0], sizes = [16, 3], strides = [1, 1]} : vector<20x3xbf16> to vector<16x3xbf16>
    %c32_159 = arith.constant 32 : index
    %c51_160 = arith.constant 51 : index
    %163 = vector.load %arg10[%c32_159, %c51_160] : memref<128x75xbf16, #tpu.memory_space<vmem>>, vector<16x3xbf16>
    tpu.vector_store %arg10[%c32_159, %c51_160], %162 {strides = array<i32>} : memref<128x75xbf16, #tpu.memory_space<vmem>>, vector<16x3xbf16>,
    %164 = vector.extract_strided_slice %157 {offsets = [3, 0], sizes = [16, 3], strides = [1, 1]} : vector<20x3xbf16> to vector<16x3xbf16>
    %c32_161 = arith.constant 32 : index
    %c54_162 = arith.constant 54 : index
    %165 = vector.load %arg10[%c32_161, %c54_162] : memref<128x75xbf16, #tpu.memory_space<vmem>>, vector<16x3xbf16>
    tpu.vector_store %arg10[%c32_161, %c54_162], %164 {strides = array<i32>} : memref<128x75xbf16, #tpu.memory_space<vmem>>, vector<16x3xbf16>,
    %166 = vector.extract_strided_slice %157 {offsets = [4, 0], sizes = [16, 3], strides = [1, 1]} : vector<20x3xbf16> to vector<16x3xbf16>
    %c32_163 = arith.constant 32 : index
    %c57_164 = arith.constant 57 : index
    %167 = vector.load %arg10[%c32_163, %c57_164] : memref<128x75xbf16, #tpu.memory_space<vmem>>, vector<16x3xbf16>
    tpu.vector_store %arg10[%c32_163, %c57_164], %166 {strides = array<i32>} : memref<128x75xbf16, #tpu.memory_space<vmem>>, vector<16x3xbf16>,
    %c0_165 = arith.constant 0 : index
    %c6_166 = arith.constant 6 : index
    %c0_167 = arith.constant 0 : index
    %c0_168 = arith.constant 0 : index
    %168 = vector.load %arg2[%c0_165, %c6_166, %c0_167, %c0_168] : memref<1x8x20x3xbf16, #tpu.memory_space<vmem>>, vector<1x1x20x3xbf16>
    %169 = vector.shape_cast %168 : vector<1x1x20x3xbf16> to vector<20x3xbf16>
    %170 = vector.extract_strided_slice %169 {offsets = [0, 0], sizes = [16, 3], strides = [1, 1]} : vector<20x3xbf16> to vector<16x3xbf16>
    %c32_169 = arith.constant 32 : index
    %c60_170 = arith.constant 60 : index
    %171 = vector.load %arg10[%c32_169, %c60_170] : memref<128x75xbf16, #tpu.memory_space<vmem>>, vector<16x3xbf16>
    tpu.vector_store %arg10[%c32_169, %c60_170], %170 {strides = array<i32>} : memref<128x75xbf16, #tpu.memory_space<vmem>>, vector<16x3xbf16>,
    %172 = vector.extract_strided_slice %169 {offsets = [1, 0], sizes = [16, 3], strides = [1, 1]} : vector<20x3xbf16> to vector<16x3xbf16>
    %c32_171 = arith.constant 32 : index
    %c63_172 = arith.constant 63 : index
    %173 = vector.load %arg10[%c32_171, %c63_172] : memref<128x75xbf16, #tpu.memory_space<vmem>>, vector<16x3xbf16>
    tpu.vector_store %arg10[%c32_171, %c63_172], %172 {strides = array<i32>} : memref<128x75xbf16, #tpu.memory_space<vmem>>, vector<16x3xbf16>,
    %174 = vector.extract_strided_slice %169 {offsets = [2, 0], sizes = [16, 3], strides = [1, 1]} : vector<20x3xbf16> to vector<16x3xbf16>
    %c32_173 = arith.constant 32 : index
    %c66_174 = arith.constant 66 : index
    %175 = vector.load %arg10[%c32_173, %c66_174] : memref<128x75xbf16, #tpu.memory_space<vmem>>, vector<16x3xbf16>
    tpu.vector_store %arg10[%c32_173, %c66_174], %174 {strides = array<i32>} : memref<128x75xbf16, #tpu.memory_space<vmem>>, vector<16x3xbf16>,
    %176 = vector.extract_strided_slice %169 {offsets = [3, 0], sizes = [16, 3], strides = [1, 1]} : vector<20x3xbf16> to vector<16x3xbf16>
    %c32_175 = arith.constant 32 : index
    %c69_176 = arith.constant 69 : index
    %177 = vector.load %arg10[%c32_175, %c69_176] : memref<128x75xbf16, #tpu.memory_space<vmem>>, vector<16x3xbf16>
    tpu.vector_store %arg10[%c32_175, %c69_176], %176 {strides = array<i32>} : memref<128x75xbf16, #tpu.memory_space<vmem>>, vector<16x3xbf16>,
    %178 = vector.extract_strided_slice %169 {offsets = [4, 0], sizes = [16, 3], strides = [1, 1]} : vector<20x3xbf16> to vector<16x3xbf16>
    %c32_177 = arith.constant 32 : index
    %c72_178 = arith.constant 72 : index
    %179 = vector.load %arg10[%c32_177, %c72_178] : memref<128x75xbf16, #tpu.memory_space<vmem>>, vector<16x3xbf16>
    tpu.vector_store %arg10[%c32_177, %c72_178], %178 {strides = array<i32>} : memref<128x75xbf16, #tpu.memory_space<vmem>>, vector<16x3xbf16>,
    %c0_179 = arith.constant 0 : index
    %c3_180 = arith.constant 3 : index
    %c0_181 = arith.constant 0 : index
    %c0_182 = arith.constant 0 : index
    %180 = vector.load %arg2[%c0_179, %c3_180, %c0_181, %c0_182] : memref<1x8x20x3xbf16, #tpu.memory_space<vmem>>, vector<1x1x20x3xbf16>
    %181 = vector.shape_cast %180 : vector<1x1x20x3xbf16> to vector<20x3xbf16>
    %182 = vector.extract_strided_slice %181 {offsets = [0, 0], sizes = [16, 3], strides = [1, 1]} : vector<20x3xbf16> to vector<16x3xbf16>
    %c48_183 = arith.constant 48 : index
    %c0_184 = arith.constant 0 : index
    %183 = vector.load %arg10[%c48_183, %c0_184] : memref<128x75xbf16, #tpu.memory_space<vmem>>, vector<16x3xbf16>
    tpu.vector_store %arg10[%c48_183, %c0_184], %182 {strides = array<i32>} : memref<128x75xbf16, #tpu.memory_space<vmem>>, vector<16x3xbf16>,
    %184 = vector.extract_strided_slice %181 {offsets = [1, 0], sizes = [16, 3], strides = [1, 1]} : vector<20x3xbf16> to vector<16x3xbf16>
    %c48_185 = arith.constant 48 : index
    %c3_186 = arith.constant 3 : index
    %185 = vector.load %arg10[%c48_185, %c3_186] : memref<128x75xbf16, #tpu.memory_space<vmem>>, vector<16x3xbf16>
    tpu.vector_store %arg10[%c48_185, %c3_186], %184 {strides = array<i32>} : memref<128x75xbf16, #tpu.memory_space<vmem>>, vector<16x3xbf16>,
    %186 = vector.extract_strided_slice %181 {offsets = [2, 0], sizes = [16, 3], strides = [1, 1]} : vector<20x3xbf16> to vector<16x3xbf16>
    %c48_187 = arith.constant 48 : index
    %c6_188 = arith.constant 6 : index
    %187 = vector.load %arg10[%c48_187, %c6_188] : memref<128x75xbf16, #tpu.memory_space<vmem>>, vector<16x3xbf16>
    tpu.vector_store %arg10[%c48_187, %c6_188], %186 {strides = array<i32>} : memref<128x75xbf16, #tpu.memory_space<vmem>>, vector<16x3xbf16>,
    %188 = vector.extract_strided_slice %181 {offsets = [3, 0], sizes = [16, 3], strides = [1, 1]} : vector<20x3xbf16> to vector<16x3xbf16>
    %c48_189 = arith.constant 48 : index
    %c9_190 = arith.constant 9 : index
    %189 = vector.load %arg10[%c48_189, %c9_190] : memref<128x75xbf16, #tpu.memory_space<vmem>>, vector<16x3xbf16>
    tpu.vector_store %arg10[%c48_189, %c9_190], %188 {strides = array<i32>} : memref<128x75xbf16, #tpu.memory_space<vmem>>, vector<16x3xbf16>,
    %190 = vector.extract_strided_slice %181 {offsets = [4, 0], sizes = [16, 3], strides = [1, 1]} : vector<20x3xbf16> to vector<16x3xbf16>
    %c48_191 = arith.constant 48 : index
    %c12_192 = arith.constant 12 : index
    %191 = vector.load %arg10[%c48_191, %c12_192] : memref<128x75xbf16, #tpu.memory_space<vmem>>, vector<16x3xbf16>
    tpu.vector_store %arg10[%c48_191, %c12_192], %190 {strides = array<i32>} : memref<128x75xbf16, #tpu.memory_space<vmem>>, vector<16x3xbf16>,
    %c0_193 = arith.constant 0 : index
    %c4_194 = arith.constant 4 : index
    %c0_195 = arith.constant 0 : index
    %c0_196 = arith.constant 0 : index
    %192 = vector.load %arg2[%c0_193, %c4_194, %c0_195, %c0_196] : memref<1x8x20x3xbf16, #tpu.memory_space<vmem>>, vector<1x1x20x3xbf16>
    %193 = vector.shape_cast %192 : vector<1x1x20x3xbf16> to vector<20x3xbf16>
    %194 = vector.extract_strided_slice %193 {offsets = [0, 0], sizes = [16, 3], strides = [1, 1]} : vector<20x3xbf16> to vector<16x3xbf16>
    %c48_197 = arith.constant 48 : index
    %c15_198 = arith.constant 15 : index
    %195 = vector.load %arg10[%c48_197, %c15_198] : memref<128x75xbf16, #tpu.memory_space<vmem>>, vector<16x3xbf16>
    tpu.vector_store %arg10[%c48_197, %c15_198], %194 {strides = array<i32>} : memref<128x75xbf16, #tpu.memory_space<vmem>>, vector<16x3xbf16>,
    %196 = vector.extract_strided_slice %193 {offsets = [1, 0], sizes = [16, 3], strides = [1, 1]} : vector<20x3xbf16> to vector<16x3xbf16>
    %c48_199 = arith.constant 48 : index
    %c18_200 = arith.constant 18 : index
    %197 = vector.load %arg10[%c48_199, %c18_200] : memref<128x75xbf16, #tpu.memory_space<vmem>>, vector<16x3xbf16>
    tpu.vector_store %arg10[%c48_199, %c18_200], %196 {strides = array<i32>} : memref<128x75xbf16, #tpu.memory_space<vmem>>, vector<16x3xbf16>,
    %198 = vector.extract_strided_slice %193 {offsets = [2, 0], sizes = [16, 3], strides = [1, 1]} : vector<20x3xbf16> to vector<16x3xbf16>
    %c48_201 = arith.constant 48 : index
    %c21_202 = arith.constant 21 : index
    %199 = vector.load %arg10[%c48_201, %c21_202] : memref<128x75xbf16, #tpu.memory_space<vmem>>, vector<16x3xbf16>
    tpu.vector_store %arg10[%c48_201, %c21_202], %198 {strides = array<i32>} : memref<128x75xbf16, #tpu.memory_space<vmem>>, vector<16x3xbf16>,
    %200 = vector.extract_strided_slice %193 {offsets = [3, 0], sizes = [16, 3], strides = [1, 1]} : vector<20x3xbf16> to vector<16x3xbf16>
    %c48_203 = arith.constant 48 : index
    %c24_204 = arith.constant 24 : index
    %201 = vector.load %arg10[%c48_203, %c24_204] : memref<128x75xbf16, #tpu.memory_space<vmem>>, vector<16x3xbf16>
    tpu.vector_store %arg10[%c48_203, %c24_204], %200 {strides = array<i32>} : memref<128x75xbf16, #tpu.memory_space<vmem>>, vector<16x3xbf16>,
    %202 = vector.extract_strided_slice %193 {offsets = [4, 0], sizes = [16, 3], strides = [1, 1]} : vector<20x3xbf16> to vector<16x3xbf16>
    %c48_205 = arith.constant 48 : index
    %c27_206 = arith.constant 27 : index
    %203 = vector.load %arg10[%c48_205, %c27_206] : memref<128x75xbf16, #tpu.memory_space<vmem>>, vector<16x3xbf16>
    tpu.vector_store %arg10[%c48_205, %c27_206], %202 {strides = array<i32>} : memref<128x75xbf16, #tpu.memory_space<vmem>>, vector<16x3xbf16>,
    %c0_207 = arith.constant 0 : index
    %c5_208 = arith.constant 5 : index
    %c0_209 = arith.constant 0 : index
    %c0_210 = arith.constant 0 : index
    %204 = vector.load %arg2[%c0_207, %c5_208, %c0_209, %c0_210] : memref<1x8x20x3xbf16, #tpu.memory_space<vmem>>, vector<1x1x20x3xbf16>
    %205 = vector.shape_cast %204 : vector<1x1x20x3xbf16> to vector<20x3xbf16>
    %206 = vector.extract_strided_slice %205 {offsets = [0, 0], sizes = [16, 3], strides = [1, 1]} : vector<20x3xbf16> to vector<16x3xbf16>
    %c48_211 = arith.constant 48 : index
    %c30_212 = arith.constant 30 : index
    %207 = vector.load %arg10[%c48_211, %c30_212] : memref<128x75xbf16, #tpu.memory_space<vmem>>, vector<16x3xbf16>
    tpu.vector_store %arg10[%c48_211, %c30_212], %206 {strides = array<i32>} : memref<128x75xbf16, #tpu.memory_space<vmem>>, vector<16x3xbf16>,
    %208 = vector.extract_strided_slice %205 {offsets = [1, 0], sizes = [16, 3], strides = [1, 1]} : vector<20x3xbf16> to vector<16x3xbf16>
    %c48_213 = arith.constant 48 : index
    %c33_214 = arith.constant 33 : index
    %209 = vector.load %arg10[%c48_213, %c33_214] : memref<128x75xbf16, #tpu.memory_space<vmem>>, vector<16x3xbf16>
    tpu.vector_store %arg10[%c48_213, %c33_214], %208 {strides = array<i32>} : memref<128x75xbf16, #tpu.memory_space<vmem>>, vector<16x3xbf16>,
    %210 = vector.extract_strided_slice %205 {offsets = [2, 0], sizes = [16, 3], strides = [1, 1]} : vector<20x3xbf16> to vector<16x3xbf16>
    %c48_215 = arith.constant 48 : index
    %c36_216 = arith.constant 36 : index
    %211 = vector.load %arg10[%c48_215, %c36_216] : memref<128x75xbf16, #tpu.memory_space<vmem>>, vector<16x3xbf16>
    tpu.vector_store %arg10[%c48_215, %c36_216], %210 {strides = array<i32>} : memref<128x75xbf16, #tpu.memory_space<vmem>>, vector<16x3xbf16>,
    %212 = vector.extract_strided_slice %205 {offsets = [3, 0], sizes = [16, 3], strides = [1, 1]} : vector<20x3xbf16> to vector<16x3xbf16>
    %c48_217 = arith.constant 48 : index
    %c39_218 = arith.constant 39 : index
    %213 = vector.load %arg10[%c48_217, %c39_218] : memref<128x75xbf16, #tpu.memory_space<vmem>>, vector<16x3xbf16>
    tpu.vector_store %arg10[%c48_217, %c39_218], %212 {strides = array<i32>} : memref<128x75xbf16, #tpu.memory_space<vmem>>, vector<16x3xbf16>,
    %214 = vector.extract_strided_slice %205 {offsets = [4, 0], sizes = [16, 3], strides = [1, 1]} : vector<20x3xbf16> to vector<16x3xbf16>
    %c48_219 = arith.constant 48 : index
    %c42_220 = arith.constant 42 : index
    %215 = vector.load %arg10[%c48_219, %c42_220] : memref<128x75xbf16, #tpu.memory_space<vmem>>, vector<16x3xbf16>
    tpu.vector_store %arg10[%c48_219, %c42_220], %214 {strides = array<i32>} : memref<128x75xbf16, #tpu.memory_space<vmem>>, vector<16x3xbf16>,
    %c0_221 = arith.constant 0 : index
    %c6_222 = arith.constant 6 : index
    %c0_223 = arith.constant 0 : index
    %c0_224 = arith.constant 0 : index
    %216 = vector.load %arg2[%c0_221, %c6_222, %c0_223, %c0_224] : memref<1x8x20x3xbf16, #tpu.memory_space<vmem>>, vector<1x1x20x3xbf16>
    %217 = vector.shape_cast %216 : vector<1x1x20x3xbf16> to vector<20x3xbf16>
    %218 = vector.extract_strided_slice %217 {offsets = [0, 0], sizes = [16, 3], strides = [1, 1]} : vector<20x3xbf16> to vector<16x3xbf16>
    %c48_225 = arith.constant 48 : index
    %c45_226 = arith.constant 45 : index
    %219 = vector.load %arg10[%c48_225, %c45_226] : memref<128x75xbf16, #tpu.memory_space<vmem>>, vector<16x3xbf16>
    tpu.vector_store %arg10[%c48_225, %c45_226], %218 {strides = array<i32>} : memref<128x75xbf16, #tpu.memory_space<vmem>>, vector<16x3xbf16>,
    %220 = vector.extract_strided_slice %217 {offsets = [1, 0], sizes = [16, 3], strides = [1, 1]} : vector<20x3xbf16> to vector<16x3xbf16>
    %c48_227 = arith.constant 48 : index
    %c48_228 = arith.constant 48 : index
    %221 = vector.load %arg10[%c48_227, %c48_228] : memref<128x75xbf16, #tpu.memory_space<vmem>>, vector<16x3xbf16>
    tpu.vector_store %arg10[%c48_227, %c48_228], %220 {strides = array<i32>} : memref<128x75xbf16, #tpu.memory_space<vmem>>, vector<16x3xbf16>,
    %222 = vector.extract_strided_slice %217 {offsets = [2, 0], sizes = [16, 3], strides = [1, 1]} : vector<20x3xbf16> to vector<16x3xbf16>
    %c48_229 = arith.constant 48 : index
    %c51_230 = arith.constant 51 : index
    %223 = vector.load %arg10[%c48_229, %c51_230] : memref<128x75xbf16, #tpu.memory_space<vmem>>, vector<16x3xbf16>
    tpu.vector_store %arg10[%c48_229, %c51_230], %222 {strides = array<i32>} : memref<128x75xbf16, #tpu.memory_space<vmem>>, vector<16x3xbf16>,
    %224 = vector.extract_strided_slice %217 {offsets = [3, 0], sizes = [16, 3], strides = [1, 1]} : vector<20x3xbf16> to vector<16x3xbf16>
    %c48_231 = arith.constant 48 : index
    %c54_232 = arith.constant 54 : index
    %225 = vector.load %arg10[%c48_231, %c54_232] : memref<128x75xbf16, #tpu.memory_space<vmem>>, vector<16x3xbf16>
    tpu.vector_store %arg10[%c48_231, %c54_232], %224 {strides = array<i32>} : memref<128x75xbf16, #tpu.memory_space<vmem>>, vector<16x3xbf16>,
    %226 = vector.extract_strided_slice %217 {offsets = [4, 0], sizes = [16, 3], strides = [1, 1]} : vector<20x3xbf16> to vector<16x3xbf16>
    %c48_233 = arith.constant 48 : index
    %c57_234 = arith.constant 57 : index
    %227 = vector.load %arg10[%c48_233, %c57_234] : memref<128x75xbf16, #tpu.memory_space<vmem>>, vector<16x3xbf16>
    tpu.vector_store %arg10[%c48_233, %c57_234], %226 {strides = array<i32>} : memref<128x75xbf16, #tpu.memory_space<vmem>>, vector<16x3xbf16>,
    %c0_235 = arith.constant 0 : index
    %c7 = arith.constant 7 : index
    %c0_236 = arith.constant 0 : index
    %c0_237 = arith.constant 0 : index
    %228 = vector.load %arg2[%c0_235, %c7, %c0_236, %c0_237] : memref<1x8x20x3xbf16, #tpu.memory_space<vmem>>, vector<1x1x20x3xbf16>
    %229 = vector.shape_cast %228 : vector<1x1x20x3xbf16> to vector<20x3xbf16>
    %230 = vector.extract_strided_slice %229 {offsets = [0, 0], sizes = [16, 3], strides = [1, 1]} : vector<20x3xbf16> to vector<16x3xbf16>
    %c48_238 = arith.constant 48 : index
    %c60_239 = arith.constant 60 : index
    %231 = vector.load %arg10[%c48_238, %c60_239] : memref<128x75xbf16, #tpu.memory_space<vmem>>, vector<16x3xbf16>
    tpu.vector_store %arg10[%c48_238, %c60_239], %230 {strides = array<i32>} : memref<128x75xbf16, #tpu.memory_space<vmem>>, vector<16x3xbf16>,
    %232 = vector.extract_strided_slice %229 {offsets = [1, 0], sizes = [16, 3], strides = [1, 1]} : vector<20x3xbf16> to vector<16x3xbf16>
    %c48_240 = arith.constant 48 : index
    %c63_241 = arith.constant 63 : index
    %233 = vector.load %arg10[%c48_240, %c63_241] : memref<128x75xbf16, #tpu.memory_space<vmem>>, vector<16x3xbf16>
    tpu.vector_store %arg10[%c48_240, %c63_241], %232 {strides = array<i32>} : memref<128x75xbf16, #tpu.memory_space<vmem>>, vector<16x3xbf16>,
    %234 = vector.extract_strided_slice %229 {offsets = [2, 0], sizes = [16, 3], strides = [1, 1]} : vector<20x3xbf16> to vector<16x3xbf16>
    %c48_242 = arith.constant 48 : index
    %c66_243 = arith.constant 66 : index
    %235 = vector.load %arg10[%c48_242, %c66_243] : memref<128x75xbf16, #tpu.memory_space<vmem>>, vector<16x3xbf16>
    tpu.vector_store %arg10[%c48_242, %c66_243], %234 {strides = array<i32>} : memref<128x75xbf16, #tpu.memory_space<vmem>>, vector<16x3xbf16>,
    %236 = vector.extract_strided_slice %229 {offsets = [3, 0], sizes = [16, 3], strides = [1, 1]} : vector<20x3xbf16> to vector<16x3xbf16>
    %c48_244 = arith.constant 48 : index
    %c69_245 = arith.constant 69 : index
    %237 = vector.load %arg10[%c48_244, %c69_245] : memref<128x75xbf16, #tpu.memory_space<vmem>>, vector<16x3xbf16>
    tpu.vector_store %arg10[%c48_244, %c69_245], %236 {strides = array<i32>} : memref<128x75xbf16, #tpu.memory_space<vmem>>, vector<16x3xbf16>,
    %238 = vector.extract_strided_slice %229 {offsets = [4, 0], sizes = [16, 3], strides = [1, 1]} : vector<20x3xbf16> to vector<16x3xbf16>
    %c48_246 = arith.constant 48 : index
    %c72_247 = arith.constant 72 : index
    %239 = vector.load %arg10[%c48_246, %c72_247] : memref<128x75xbf16, #tpu.memory_space<vmem>>, vector<16x3xbf16>
    tpu.vector_store %arg10[%c48_246, %c72_247], %238 {strides = array<i32>} : memref<128x75xbf16, #tpu.memory_space<vmem>>, vector<16x3xbf16>,
    %c0_248 = arith.constant 0 : index
    %c4_249 = arith.constant 4 : index
    %c0_250 = arith.constant 0 : index
    %c0_251 = arith.constant 0 : index
    %240 = vector.load %arg2[%c0_248, %c4_249, %c0_250, %c0_251] : memref<1x8x20x3xbf16, #tpu.memory_space<vmem>>, vector<1x1x20x3xbf16>
    %241 = vector.shape_cast %240 : vector<1x1x20x3xbf16> to vector<20x3xbf16>
    %242 = vector.extract_strided_slice %241 {offsets = [0, 0], sizes = [16, 3], strides = [1, 1]} : vector<20x3xbf16> to vector<16x3xbf16>
    %c64 = arith.constant 64 : index
    %c0_252 = arith.constant 0 : index
    %243 = vector.load %arg10[%c64, %c0_252] : memref<128x75xbf16, #tpu.memory_space<vmem>>, vector<16x3xbf16>
    tpu.vector_store %arg10[%c64, %c0_252], %242 {strides = array<i32>} : memref<128x75xbf16, #tpu.memory_space<vmem>>, vector<16x3xbf16>,
    %244 = vector.extract_strided_slice %241 {offsets = [1, 0], sizes = [16, 3], strides = [1, 1]} : vector<20x3xbf16> to vector<16x3xbf16>
    %c64_253 = arith.constant 64 : index
    %c3_254 = arith.constant 3 : index
    %245 = vector.load %arg10[%c64_253, %c3_254] : memref<128x75xbf16, #tpu.memory_space<vmem>>, vector<16x3xbf16>
    tpu.vector_store %arg10[%c64_253, %c3_254], %244 {strides = array<i32>} : memref<128x75xbf16, #tpu.memory_space<vmem>>, vector<16x3xbf16>,
    %246 = vector.extract_strided_slice %241 {offsets = [2, 0], sizes = [16, 3], strides = [1, 1]} : vector<20x3xbf16> to vector<16x3xbf16>
    %c64_255 = arith.constant 64 : index
    %c6_256 = arith.constant 6 : index
    %247 = vector.load %arg10[%c64_255, %c6_256] : memref<128x75xbf16, #tpu.memory_space<vmem>>, vector<16x3xbf16>
    tpu.vector_store %arg10[%c64_255, %c6_256], %246 {strides = array<i32>} : memref<128x75xbf16, #tpu.memory_space<vmem>>, vector<16x3xbf16>,
    %248 = vector.extract_strided_slice %241 {offsets = [3, 0], sizes = [16, 3], strides = [1, 1]} : vector<20x3xbf16> to vector<16x3xbf16>
    %c64_257 = arith.constant 64 : index
    %c9_258 = arith.constant 9 : index
    %249 = vector.load %arg10[%c64_257, %c9_258] : memref<128x75xbf16, #tpu.memory_space<vmem>>, vector<16x3xbf16>
    tpu.vector_store %arg10[%c64_257, %c9_258], %248 {strides = array<i32>} : memref<128x75xbf16, #tpu.memory_space<vmem>>, vector<16x3xbf16>,
    %250 = vector.extract_strided_slice %241 {offsets = [4, 0], sizes = [16, 3], strides = [1, 1]} : vector<20x3xbf16> to vector<16x3xbf16>
    %c64_259 = arith.constant 64 : index
    %c12_260 = arith.constant 12 : index
    %251 = vector.load %arg10[%c64_259, %c12_260] : memref<128x75xbf16, #tpu.memory_space<vmem>>, vector<16x3xbf16>
    tpu.vector_store %arg10[%c64_259, %c12_260], %250 {strides = array<i32>} : memref<128x75xbf16, #tpu.memory_space<vmem>>, vector<16x3xbf16>,
    %c0_261 = arith.constant 0 : index
    %c5_262 = arith.constant 5 : index
    %c0_263 = arith.constant 0 : index
    %c0_264 = arith.constant 0 : index
    %252 = vector.load %arg2[%c0_261, %c5_262, %c0_263, %c0_264] : memref<1x8x20x3xbf16, #tpu.memory_space<vmem>>, vector<1x1x20x3xbf16>
    %253 = vector.shape_cast %252 : vector<1x1x20x3xbf16> to vector<20x3xbf16>
    %254 = vector.extract_strided_slice %253 {offsets = [0, 0], sizes = [16, 3], strides = [1, 1]} : vector<20x3xbf16> to vector<16x3xbf16>
    %c64_265 = arith.constant 64 : index
    %c15_266 = arith.constant 15 : index
    %255 = vector.load %arg10[%c64_265, %c15_266] : memref<128x75xbf16, #tpu.memory_space<vmem>>, vector<16x3xbf16>
    tpu.vector_store %arg10[%c64_265, %c15_266], %254 {strides = array<i32>} : memref<128x75xbf16, #tpu.memory_space<vmem>>, vector<16x3xbf16>,
    %256 = vector.extract_strided_slice %253 {offsets = [1, 0], sizes = [16, 3], strides = [1, 1]} : vector<20x3xbf16> to vector<16x3xbf16>
    %c64_267 = arith.constant 64 : index
    %c18_268 = arith.constant 18 : index
    %257 = vector.load %arg10[%c64_267, %c18_268] : memref<128x75xbf16, #tpu.memory_space<vmem>>, vector<16x3xbf16>
    tpu.vector_store %arg10[%c64_267, %c18_268], %256 {strides = array<i32>} : memref<128x75xbf16, #tpu.memory_space<vmem>>, vector<16x3xbf16>,
    %258 = vector.extract_strided_slice %253 {offsets = [2, 0], sizes = [16, 3], strides = [1, 1]} : vector<20x3xbf16> to vector<16x3xbf16>
    %c64_269 = arith.constant 64 : index
    %c21_270 = arith.constant 21 : index
    %259 = vector.load %arg10[%c64_269, %c21_270] : memref<128x75xbf16, #tpu.memory_space<vmem>>, vector<16x3xbf16>
    tpu.vector_store %arg10[%c64_269, %c21_270], %258 {strides = array<i32>} : memref<128x75xbf16, #tpu.memory_space<vmem>>, vector<16x3xbf16>,
    %260 = vector.extract_strided_slice %253 {offsets = [3, 0], sizes = [16, 3], strides = [1, 1]} : vector<20x3xbf16> to vector<16x3xbf16>
    %c64_271 = arith.constant 64 : index
    %c24_272 = arith.constant 24 : index
    %261 = vector.load %arg10[%c64_271, %c24_272] : memref<128x75xbf16, #tpu.memory_space<vmem>>, vector<16x3xbf16>
    tpu.vector_store %arg10[%c64_271, %c24_272], %260 {strides = array<i32>} : memref<128x75xbf16, #tpu.memory_space<vmem>>, vector<16x3xbf16>,
    %262 = vector.extract_strided_slice %253 {offsets = [4, 0], sizes = [16, 3], strides = [1, 1]} : vector<20x3xbf16> to vector<16x3xbf16>
    %c64_273 = arith.constant 64 : index
    %c27_274 = arith.constant 27 : index
    %263 = vector.load %arg10[%c64_273, %c27_274] : memref<128x75xbf16, #tpu.memory_space<vmem>>, vector<16x3xbf16>
    tpu.vector_store %arg10[%c64_273, %c27_274], %262 {strides = array<i32>} : memref<128x75xbf16, #tpu.memory_space<vmem>>, vector<16x3xbf16>,
    %c0_275 = arith.constant 0 : index
    %c6_276 = arith.constant 6 : index
    %c0_277 = arith.constant 0 : index
    %c0_278 = arith.constant 0 : index
    %264 = vector.load %arg2[%c0_275, %c6_276, %c0_277, %c0_278] : memref<1x8x20x3xbf16, #tpu.memory_space<vmem>>, vector<1x1x20x3xbf16>
    %265 = vector.shape_cast %264 : vector<1x1x20x3xbf16> to vector<20x3xbf16>
    %266 = vector.extract_strided_slice %265 {offsets = [0, 0], sizes = [16, 3], strides = [1, 1]} : vector<20x3xbf16> to vector<16x3xbf16>
    %c64_279 = arith.constant 64 : index
    %c30_280 = arith.constant 30 : index
    %267 = vector.load %arg10[%c64_279, %c30_280] : memref<128x75xbf16, #tpu.memory_space<vmem>>, vector<16x3xbf16>
    tpu.vector_store %arg10[%c64_279, %c30_280], %266 {strides = array<i32>} : memref<128x75xbf16, #tpu.memory_space<vmem>>, vector<16x3xbf16>,
    %268 = vector.extract_strided_slice %265 {offsets = [1, 0], sizes = [16, 3], strides = [1, 1]} : vector<20x3xbf16> to vector<16x3xbf16>
    %c64_281 = arith.constant 64 : index
    %c33_282 = arith.constant 33 : index
    %269 = vector.load %arg10[%c64_281, %c33_282] : memref<128x75xbf16, #tpu.memory_space<vmem>>, vector<16x3xbf16>
    tpu.vector_store %arg10[%c64_281, %c33_282], %268 {strides = array<i32>} : memref<128x75xbf16, #tpu.memory_space<vmem>>, vector<16x3xbf16>,
    %270 = vector.extract_strided_slice %265 {offsets = [2, 0], sizes = [16, 3], strides = [1, 1]} : vector<20x3xbf16> to vector<16x3xbf16>
    %c64_283 = arith.constant 64 : index
    %c36_284 = arith.constant 36 : index
    %271 = vector.load %arg10[%c64_283, %c36_284] : memref<128x75xbf16, #tpu.memory_space<vmem>>, vector<16x3xbf16>
    tpu.vector_store %arg10[%c64_283, %c36_284], %270 {strides = array<i32>} : memref<128x75xbf16, #tpu.memory_space<vmem>>, vector<16x3xbf16>,
    %272 = vector.extract_strided_slice %265 {offsets = [3, 0], sizes = [16, 3], strides = [1, 1]} : vector<20x3xbf16> to vector<16x3xbf16>
    %c64_285 = arith.constant 64 : index
    %c39_286 = arith.constant 39 : index
    %273 = vector.load %arg10[%c64_285, %c39_286] : memref<128x75xbf16, #tpu.memory_space<vmem>>, vector<16x3xbf16>
    tpu.vector_store %arg10[%c64_285, %c39_286], %272 {strides = array<i32>} : memref<128x75xbf16, #tpu.memory_space<vmem>>, vector<16x3xbf16>,
    %274 = vector.extract_strided_slice %265 {offsets = [4, 0], sizes = [16, 3], strides = [1, 1]} : vector<20x3xbf16> to vector<16x3xbf16>
    %c64_287 = arith.constant 64 : index
    %c42_288 = arith.constant 42 : index
    %275 = vector.load %arg10[%c64_287, %c42_288] : memref<128x75xbf16, #tpu.memory_space<vmem>>, vector<16x3xbf16>
    tpu.vector_store %arg10[%c64_287, %c42_288], %274 {strides = array<i32>} : memref<128x75xbf16, #tpu.memory_space<vmem>>, vector<16x3xbf16>,
    %c0_289 = arith.constant 0 : index
    %c7_290 = arith.constant 7 : index
    %c0_291 = arith.constant 0 : index
    %c0_292 = arith.constant 0 : index
    %276 = vector.load %arg2[%c0_289, %c7_290, %c0_291, %c0_292] : memref<1x8x20x3xbf16, #tpu.memory_space<vmem>>, vector<1x1x20x3xbf16>
    %277 = vector.shape_cast %276 : vector<1x1x20x3xbf16> to vector<20x3xbf16>
    %278 = vector.extract_strided_slice %277 {offsets = [0, 0], sizes = [16, 3], strides = [1, 1]} : vector<20x3xbf16> to vector<16x3xbf16>
    %c64_293 = arith.constant 64 : index
    %c45_294 = arith.constant 45 : index
    %279 = vector.load %arg10[%c64_293, %c45_294] : memref<128x75xbf16, #tpu.memory_space<vmem>>, vector<16x3xbf16>
    tpu.vector_store %arg10[%c64_293, %c45_294], %278 {strides = array<i32>} : memref<128x75xbf16, #tpu.memory_space<vmem>>, vector<16x3xbf16>,
    %280 = vector.extract_strided_slice %277 {offsets = [1, 0], sizes = [16, 3], strides = [1, 1]} : vector<20x3xbf16> to vector<16x3xbf16>
    %c64_295 = arith.constant 64 : index
    %c48_296 = arith.constant 48 : index
    %281 = vector.load %arg10[%c64_295, %c48_296] : memref<128x75xbf16, #tpu.memory_space<vmem>>, vector<16x3xbf16>
    tpu.vector_store %arg10[%c64_295, %c48_296], %280 {strides = array<i32>} : memref<128x75xbf16, #tpu.memory_space<vmem>>, vector<16x3xbf16>,
    %282 = vector.extract_strided_slice %277 {offsets = [2, 0], sizes = [16, 3], strides = [1, 1]} : vector<20x3xbf16> to vector<16x3xbf16>
    %c64_297 = arith.constant 64 : index
    %c51_298 = arith.constant 51 : index
    %283 = vector.load %arg10[%c64_297, %c51_298] : memref<128x75xbf16, #tpu.memory_space<vmem>>, vector<16x3xbf16>
    tpu.vector_store %arg10[%c64_297, %c51_298], %282 {strides = array<i32>} : memref<128x75xbf16, #tpu.memory_space<vmem>>, vector<16x3xbf16>,
    %284 = vector.extract_strided_slice %277 {offsets = [3, 0], sizes = [16, 3], strides = [1, 1]} : vector<20x3xbf16> to vector<16x3xbf16>
    %c64_299 = arith.constant 64 : index
    %c54_300 = arith.constant 54 : index
    %285 = vector.load %arg10[%c64_299, %c54_300] : memref<128x75xbf16, #tpu.memory_space<vmem>>, vector<16x3xbf16>
    tpu.vector_store %arg10[%c64_299, %c54_300], %284 {strides = array<i32>} : memref<128x75xbf16, #tpu.memory_space<vmem>>, vector<16x3xbf16>,
    %286 = vector.extract_strided_slice %277 {offsets = [4, 0], sizes = [16, 3], strides = [1, 1]} : vector<20x3xbf16> to vector<16x3xbf16>
    %c64_301 = arith.constant 64 : index
    %c57_302 = arith.constant 57 : index
    %287 = vector.load %arg10[%c64_301, %c57_302] : memref<128x75xbf16, #tpu.memory_space<vmem>>, vector<16x3xbf16>
    tpu.vector_store %arg10[%c64_301, %c57_302], %286 {strides = array<i32>} : memref<128x75xbf16, #tpu.memory_space<vmem>>, vector<16x3xbf16>,
    %c0_303 = arith.constant 0 : index
    %c0_304 = arith.constant 0 : index
    %c0_305 = arith.constant 0 : index
    %c0_306 = arith.constant 0 : index
    %288 = vector.load %arg3[%c0_303, %c0_304, %c0_305, %c0_306] : memref<1x1x20x3xbf16, #tpu.memory_space<vmem>>, vector<1x1x20x3xbf16>
    %289 = vector.shape_cast %288 : vector<1x1x20x3xbf16> to vector<20x3xbf16>
    %290 = vector.extract_strided_slice %289 {offsets = [0, 0], sizes = [16, 3], strides = [1, 1]} : vector<20x3xbf16> to vector<16x3xbf16>
    %c64_307 = arith.constant 64 : index
    %c60_308 = arith.constant 60 : index
    %291 = vector.load %arg10[%c64_307, %c60_308] : memref<128x75xbf16, #tpu.memory_space<vmem>>, vector<16x3xbf16>
    tpu.vector_store %arg10[%c64_307, %c60_308], %290 {strides = array<i32>} : memref<128x75xbf16, #tpu.memory_space<vmem>>, vector<16x3xbf16>,
    %292 = vector.extract_strided_slice %289 {offsets = [1, 0], sizes = [16, 3], strides = [1, 1]} : vector<20x3xbf16> to vector<16x3xbf16>
    %c64_309 = arith.constant 64 : index
    %c63_310 = arith.constant 63 : index
    %293 = vector.load %arg10[%c64_309, %c63_310] : memref<128x75xbf16, #tpu.memory_space<vmem>>, vector<16x3xbf16>
    tpu.vector_store %arg10[%c64_309, %c63_310], %292 {strides = array<i32>} : memref<128x75xbf16, #tpu.memory_space<vmem>>, vector<16x3xbf16>,
    %294 = vector.extract_strided_slice %289 {offsets = [2, 0], sizes = [16, 3], strides = [1, 1]} : vector<20x3xbf16> to vector<16x3xbf16>
    %c64_311 = arith.constant 64 : index
    %c66_312 = arith.constant 66 : index
    %295 = vector.load %arg10[%c64_311, %c66_312] : memref<128x75xbf16, #tpu.memory_space<vmem>>, vector<16x3xbf16>
    tpu.vector_store %arg10[%c64_311, %c66_312], %294 {strides = array<i32>} : memref<128x75xbf16, #tpu.memory_space<vmem>>, vector<16x3xbf16>,
    %296 = vector.extract_strided_slice %289 {offsets = [3, 0], sizes = [16, 3], strides = [1, 1]} : vector<20x3xbf16> to vector<16x3xbf16>
    %c64_313 = arith.constant 64 : index
    %c69_314 = arith.constant 69 : index
    %297 = vector.load %arg10[%c64_313, %c69_314] : memref<128x75xbf16, #tpu.memory_space<vmem>>, vector<16x3xbf16>
    tpu.vector_store %arg10[%c64_313, %c69_314], %296 {strides = array<i32>} : memref<128x75xbf16, #tpu.memory_space<vmem>>, vector<16x3xbf16>,
    %298 = vector.extract_strided_slice %289 {offsets = [4, 0], sizes = [16, 3], strides = [1, 1]} : vector<20x3xbf16> to vector<16x3xbf16>
    %c64_315 = arith.constant 64 : index
    %c72_316 = arith.constant 72 : index
    %299 = vector.load %arg10[%c64_315, %c72_316] : memref<128x75xbf16, #tpu.memory_space<vmem>>, vector<16x3xbf16>
    tpu.vector_store %arg10[%c64_315, %c72_316], %298 {strides = array<i32>} : memref<128x75xbf16, #tpu.memory_space<vmem>>, vector<16x3xbf16>,
    %c0_317 = arith.constant 0 : index
    %c5_318 = arith.constant 5 : index
    %c0_319 = arith.constant 0 : index
    %c0_320 = arith.constant 0 : index
    %300 = vector.load %arg2[%c0_317, %c5_318, %c0_319, %c0_320] : memref<1x8x20x3xbf16, #tpu.memory_space<vmem>>, vector<1x1x20x3xbf16>
    %301 = vector.shape_cast %300 : vector<1x1x20x3xbf16> to vector<20x3xbf16>
    %302 = vector.extract_strided_slice %301 {offsets = [0, 0], sizes = [16, 3], strides = [1, 1]} : vector<20x3xbf16> to vector<16x3xbf16>
    %c80 = arith.constant 80 : index
    %c0_321 = arith.constant 0 : index
    %303 = vector.load %arg10[%c80, %c0_321] : memref<128x75xbf16, #tpu.memory_space<vmem>>, vector<16x3xbf16>
    tpu.vector_store %arg10[%c80, %c0_321], %302 {strides = array<i32>} : memref<128x75xbf16, #tpu.memory_space<vmem>>, vector<16x3xbf16>,
    %304 = vector.extract_strided_slice %301 {offsets = [1, 0], sizes = [16, 3], strides = [1, 1]} : vector<20x3xbf16> to vector<16x3xbf16>
    %c80_322 = arith.constant 80 : index
    %c3_323 = arith.constant 3 : index
    %305 = vector.load %arg10[%c80_322, %c3_323] : memref<128x75xbf16, #tpu.memory_space<vmem>>, vector<16x3xbf16>
    tpu.vector_store %arg10[%c80_322, %c3_323], %304 {strides = array<i32>} : memref<128x75xbf16, #tpu.memory_space<vmem>>, vector<16x3xbf16>,
    %306 = vector.extract_strided_slice %301 {offsets = [2, 0], sizes = [16, 3], strides = [1, 1]} : vector<20x3xbf16> to vector<16x3xbf16>
    %c80_324 = arith.constant 80 : index
    %c6_325 = arith.constant 6 : index
    %307 = vector.load %arg10[%c80_324, %c6_325] : memref<128x75xbf16, #tpu.memory_space<vmem>>, vector<16x3xbf16>
    tpu.vector_store %arg10[%c80_324, %c6_325], %306 {strides = array<i32>} : memref<128x75xbf16, #tpu.memory_space<vmem>>, vector<16x3xbf16>,
    %308 = vector.extract_strided_slice %301 {offsets = [3, 0], sizes = [16, 3], strides = [1, 1]} : vector<20x3xbf16> to vector<16x3xbf16>
    %c80_326 = arith.constant 80 : index
    %c9_327 = arith.constant 9 : index
    %309 = vector.load %arg10[%c80_326, %c9_327] : memref<128x75xbf16, #tpu.memory_space<vmem>>, vector<16x3xbf16>
    tpu.vector_store %arg10[%c80_326, %c9_327], %308 {strides = array<i32>} : memref<128x75xbf16, #tpu.memory_space<vmem>>, vector<16x3xbf16>,
    %310 = vector.extract_strided_slice %301 {offsets = [4, 0], sizes = [16, 3], strides = [1, 1]} : vector<20x3xbf16> to vector<16x3xbf16>
    %c80_328 = arith.constant 80 : index
    %c12_329 = arith.constant 12 : index
    %311 = vector.load %arg10[%c80_328, %c12_329] : memref<128x75xbf16, #tpu.memory_space<vmem>>, vector<16x3xbf16>
    tpu.vector_store %arg10[%c80_328, %c12_329], %310 {strides = array<i32>} : memref<128x75xbf16, #tpu.memory_space<vmem>>, vector<16x3xbf16>,
    %c0_330 = arith.constant 0 : index
    %c6_331 = arith.constant 6 : index
    %c0_332 = arith.constant 0 : index
    %c0_333 = arith.constant 0 : index
    %312 = vector.load %arg2[%c0_330, %c6_331, %c0_332, %c0_333] : memref<1x8x20x3xbf16, #tpu.memory_space<vmem>>, vector<1x1x20x3xbf16>
    %313 = vector.shape_cast %312 : vector<1x1x20x3xbf16> to vector<20x3xbf16>
    %314 = vector.extract_strided_slice %313 {offsets = [0, 0], sizes = [16, 3], strides = [1, 1]} : vector<20x3xbf16> to vector<16x3xbf16>
    %c80_334 = arith.constant 80 : index
    %c15_335 = arith.constant 15 : index
    %315 = vector.load %arg10[%c80_334, %c15_335] : memref<128x75xbf16, #tpu.memory_space<vmem>>, vector<16x3xbf16>
    tpu.vector_store %arg10[%c80_334, %c15_335], %314 {strides = array<i32>} : memref<128x75xbf16, #tpu.memory_space<vmem>>, vector<16x3xbf16>,
    %316 = vector.extract_strided_slice %313 {offsets = [1, 0], sizes = [16, 3], strides = [1, 1]} : vector<20x3xbf16> to vector<16x3xbf16>
    %c80_336 = arith.constant 80 : index
    %c18_337 = arith.constant 18 : index
    %317 = vector.load %arg10[%c80_336, %c18_337] : memref<128x75xbf16, #tpu.memory_space<vmem>>, vector<16x3xbf16>
    tpu.vector_store %arg10[%c80_336, %c18_337], %316 {strides = array<i32>} : memref<128x75xbf16, #tpu.memory_space<vmem>>, vector<16x3xbf16>,
    %318 = vector.extract_strided_slice %313 {offsets = [2, 0], sizes = [16, 3], strides = [1, 1]} : vector<20x3xbf16> to vector<16x3xbf16>
    %c80_338 = arith.constant 80 : index
    %c21_339 = arith.constant 21 : index
    %319 = vector.load %arg10[%c80_338, %c21_339] : memref<128x75xbf16, #tpu.memory_space<vmem>>, vector<16x3xbf16>
    tpu.vector_store %arg10[%c80_338, %c21_339], %318 {strides = array<i32>} : memref<128x75xbf16, #tpu.memory_space<vmem>>, vector<16x3xbf16>,
    %320 = vector.extract_strided_slice %313 {offsets = [3, 0], sizes = [16, 3], strides = [1, 1]} : vector<20x3xbf16> to vector<16x3xbf16>
    %c80_340 = arith.constant 80 : index
    %c24_341 = arith.constant 24 : index
    %321 = vector.load %arg10[%c80_340, %c24_341] : memref<128x75xbf16, #tpu.memory_space<vmem>>, vector<16x3xbf16>
    tpu.vector_store %arg10[%c80_340, %c24_341], %320 {strides = array<i32>} : memref<128x75xbf16, #tpu.memory_space<vmem>>, vector<16x3xbf16>,
    %322 = vector.extract_strided_slice %313 {offsets = [4, 0], sizes = [16, 3], strides = [1, 1]} : vector<20x3xbf16> to vector<16x3xbf16>
    %c80_342 = arith.constant 80 : index
    %c27_343 = arith.constant 27 : index
    %323 = vector.load %arg10[%c80_342, %c27_343] : memref<128x75xbf16, #tpu.memory_space<vmem>>, vector<16x3xbf16>
    tpu.vector_store %arg10[%c80_342, %c27_343], %322 {strides = array<i32>} : memref<128x75xbf16, #tpu.memory_space<vmem>>, vector<16x3xbf16>,
    %c0_344 = arith.constant 0 : index
    %c7_345 = arith.constant 7 : index
    %c0_346 = arith.constant 0 : index
    %c0_347 = arith.constant 0 : index
    %324 = vector.load %arg2[%c0_344, %c7_345, %c0_346, %c0_347] : memref<1x8x20x3xbf16, #tpu.memory_space<vmem>>, vector<1x1x20x3xbf16>
    %325 = vector.shape_cast %324 : vector<1x1x20x3xbf16> to vector<20x3xbf16>
    %326 = vector.extract_strided_slice %325 {offsets = [0, 0], sizes = [16, 3], strides = [1, 1]} : vector<20x3xbf16> to vector<16x3xbf16>
    %c80_348 = arith.constant 80 : index
    %c30_349 = arith.constant 30 : index
    %327 = vector.load %arg10[%c80_348, %c30_349] : memref<128x75xbf16, #tpu.memory_space<vmem>>, vector<16x3xbf16>
    tpu.vector_store %arg10[%c80_348, %c30_349], %326 {strides = array<i32>} : memref<128x75xbf16, #tpu.memory_space<vmem>>, vector<16x3xbf16>,
    %328 = vector.extract_strided_slice %325 {offsets = [1, 0], sizes = [16, 3], strides = [1, 1]} : vector<20x3xbf16> to vector<16x3xbf16>
    %c80_350 = arith.constant 80 : index
    %c33_351 = arith.constant 33 : index
    %329 = vector.load %arg10[%c80_350, %c33_351] : memref<128x75xbf16, #tpu.memory_space<vmem>>, vector<16x3xbf16>
    tpu.vector_store %arg10[%c80_350, %c33_351], %328 {strides = array<i32>} : memref<128x75xbf16, #tpu.memory_space<vmem>>, vector<16x3xbf16>,
    %330 = vector.extract_strided_slice %325 {offsets = [2, 0], sizes = [16, 3], strides = [1, 1]} : vector<20x3xbf16> to vector<16x3xbf16>
    %c80_352 = arith.constant 80 : index
    %c36_353 = arith.constant 36 : index
    %331 = vector.load %arg10[%c80_352, %c36_353] : memref<128x75xbf16, #tpu.memory_space<vmem>>, vector<16x3xbf16>
    tpu.vector_store %arg10[%c80_352, %c36_353], %330 {strides = array<i32>} : memref<128x75xbf16, #tpu.memory_space<vmem>>, vector<16x3xbf16>,
    %332 = vector.extract_strided_slice %325 {offsets = [3, 0], sizes = [16, 3], strides = [1, 1]} : vector<20x3xbf16> to vector<16x3xbf16>
    %c80_354 = arith.constant 80 : index
    %c39_355 = arith.constant 39 : index
    %333 = vector.load %arg10[%c80_354, %c39_355] : memref<128x75xbf16, #tpu.memory_space<vmem>>, vector<16x3xbf16>
    tpu.vector_store %arg10[%c80_354, %c39_355], %332 {strides = array<i32>} : memref<128x75xbf16, #tpu.memory_space<vmem>>, vector<16x3xbf16>,
    %334 = vector.extract_strided_slice %325 {offsets = [4, 0], sizes = [16, 3], strides = [1, 1]} : vector<20x3xbf16> to vector<16x3xbf16>
    %c80_356 = arith.constant 80 : index
    %c42_357 = arith.constant 42 : index
    %335 = vector.load %arg10[%c80_356, %c42_357] : memref<128x75xbf16, #tpu.memory_space<vmem>>, vector<16x3xbf16>
    tpu.vector_store %arg10[%c80_356, %c42_357], %334 {strides = array<i32>} : memref<128x75xbf16, #tpu.memory_space<vmem>>, vector<16x3xbf16>,
    %c0_358 = arith.constant 0 : index
    %c0_359 = arith.constant 0 : index
    %c0_360 = arith.constant 0 : index
    %c0_361 = arith.constant 0 : index
    %336 = vector.load %arg3[%c0_358, %c0_359, %c0_360, %c0_361] : memref<1x1x20x3xbf16, #tpu.memory_space<vmem>>, vector<1x1x20x3xbf16>
    %337 = vector.shape_cast %336 : vector<1x1x20x3xbf16> to vector<20x3xbf16>
    %338 = vector.extract_strided_slice %337 {offsets = [0, 0], sizes = [16, 3], strides = [1, 1]} : vector<20x3xbf16> to vector<16x3xbf16>
    %c80_362 = arith.constant 80 : index
    %c45_363 = arith.constant 45 : index
    %339 = vector.load %arg10[%c80_362, %c45_363] : memref<128x75xbf16, #tpu.memory_space<vmem>>, vector<16x3xbf16>
    tpu.vector_store %arg10[%c80_362, %c45_363], %338 {strides = array<i32>} : memref<128x75xbf16, #tpu.memory_space<vmem>>, vector<16x3xbf16>,
    %340 = vector.extract_strided_slice %337 {offsets = [1, 0], sizes = [16, 3], strides = [1, 1]} : vector<20x3xbf16> to vector<16x3xbf16>
    %c80_364 = arith.constant 80 : index
    %c48_365 = arith.constant 48 : index
    %341 = vector.load %arg10[%c80_364, %c48_365] : memref<128x75xbf16, #tpu.memory_space<vmem>>, vector<16x3xbf16>
    tpu.vector_store %arg10[%c80_364, %c48_365], %340 {strides = array<i32>} : memref<128x75xbf16, #tpu.memory_space<vmem>>, vector<16x3xbf16>,
    %342 = vector.extract_strided_slice %337 {offsets = [2, 0], sizes = [16, 3], strides = [1, 1]} : vector<20x3xbf16> to vector<16x3xbf16>
    %c80_366 = arith.constant 80 : index
    %c51_367 = arith.constant 51 : index
    %343 = vector.load %arg10[%c80_366, %c51_367] : memref<128x75xbf16, #tpu.memory_space<vmem>>, vector<16x3xbf16>
    tpu.vector_store %arg10[%c80_366, %c51_367], %342 {strides = array<i32>} : memref<128x75xbf16, #tpu.memory_space<vmem>>, vector<16x3xbf16>,
    %344 = vector.extract_strided_slice %337 {offsets = [3, 0], sizes = [16, 3], strides = [1, 1]} : vector<20x3xbf16> to vector<16x3xbf16>
    %c80_368 = arith.constant 80 : index
    %c54_369 = arith.constant 54 : index
    %345 = vector.load %arg10[%c80_368, %c54_369] : memref<128x75xbf16, #tpu.memory_space<vmem>>, vector<16x3xbf16>
    tpu.vector_store %arg10[%c80_368, %c54_369], %344 {strides = array<i32>} : memref<128x75xbf16, #tpu.memory_space<vmem>>, vector<16x3xbf16>,
    %346 = vector.extract_strided_slice %337 {offsets = [4, 0], sizes = [16, 3], strides = [1, 1]} : vector<20x3xbf16> to vector<16x3xbf16>
    %c80_370 = arith.constant 80 : index
    %c57_371 = arith.constant 57 : index
    %347 = vector.load %arg10[%c80_370, %c57_371] : memref<128x75xbf16, #tpu.memory_space<vmem>>, vector<16x3xbf16>
    tpu.vector_store %arg10[%c80_370, %c57_371], %346 {strides = array<i32>} : memref<128x75xbf16, #tpu.memory_space<vmem>>, vector<16x3xbf16>,
    %c0_372 = arith.constant 0 : index
    %c0_373 = arith.constant 0 : index
    %c0_374 = arith.constant 0 : index
    %c0_375 = arith.constant 0 : index
    %348 = vector.load %arg4[%c0_372, %c0_373, %c0_374, %c0_375] : memref<1x1x20x3xbf16, #tpu.memory_space<vmem>>, vector<1x1x20x3xbf16>
    %349 = vector.shape_cast %348 : vector<1x1x20x3xbf16> to vector<20x3xbf16>
    %350 = vector.extract_strided_slice %349 {offsets = [0, 0], sizes = [16, 3], strides = [1, 1]} : vector<20x3xbf16> to vector<16x3xbf16>
    %c80_376 = arith.constant 80 : index
    %c60_377 = arith.constant 60 : index
    %351 = vector.load %arg10[%c80_376, %c60_377] : memref<128x75xbf16, #tpu.memory_space<vmem>>, vector<16x3xbf16>
    tpu.vector_store %arg10[%c80_376, %c60_377], %350 {strides = array<i32>} : memref<128x75xbf16, #tpu.memory_space<vmem>>, vector<16x3xbf16>,
    %352 = vector.extract_strided_slice %349 {offsets = [1, 0], sizes = [16, 3], strides = [1, 1]} : vector<20x3xbf16> to vector<16x3xbf16>
    %c80_378 = arith.constant 80 : index
    %c63_379 = arith.constant 63 : index
    %353 = vector.load %arg10[%c80_378, %c63_379] : memref<128x75xbf16, #tpu.memory_space<vmem>>, vector<16x3xbf16>
    tpu.vector_store %arg10[%c80_378, %c63_379], %352 {strides = array<i32>} : memref<128x75xbf16, #tpu.memory_space<vmem>>, vector<16x3xbf16>,
    %354 = vector.extract_strided_slice %349 {offsets = [2, 0], sizes = [16, 3], strides = [1, 1]} : vector<20x3xbf16> to vector<16x3xbf16>
    %c80_380 = arith.constant 80 : index
    %c66_381 = arith.constant 66 : index
    %355 = vector.load %arg10[%c80_380, %c66_381] : memref<128x75xbf16, #tpu.memory_space<vmem>>, vector<16x3xbf16>
    tpu.vector_store %arg10[%c80_380, %c66_381], %354 {strides = array<i32>} : memref<128x75xbf16, #tpu.memory_space<vmem>>, vector<16x3xbf16>,
    %356 = vector.extract_strided_slice %349 {offsets = [3, 0], sizes = [16, 3], strides = [1, 1]} : vector<20x3xbf16> to vector<16x3xbf16>
    %c80_382 = arith.constant 80 : index
    %c69_383 = arith.constant 69 : index
    %357 = vector.load %arg10[%c80_382, %c69_383] : memref<128x75xbf16, #tpu.memory_space<vmem>>, vector<16x3xbf16>
    tpu.vector_store %arg10[%c80_382, %c69_383], %356 {strides = array<i32>} : memref<128x75xbf16, #tpu.memory_space<vmem>>, vector<16x3xbf16>,
    %358 = vector.extract_strided_slice %349 {offsets = [4, 0], sizes = [16, 3], strides = [1, 1]} : vector<20x3xbf16> to vector<16x3xbf16>
    %c80_384 = arith.constant 80 : index
    %c72_385 = arith.constant 72 : index
    %359 = vector.load %arg10[%c80_384, %c72_385] : memref<128x75xbf16, #tpu.memory_space<vmem>>, vector<16x3xbf16>
    tpu.vector_store %arg10[%c80_384, %c72_385], %358 {strides = array<i32>} : memref<128x75xbf16, #tpu.memory_space<vmem>>, vector<16x3xbf16>,
    %c0_386 = arith.constant 0 : index
    %c6_387 = arith.constant 6 : index
    %c0_388 = arith.constant 0 : index
    %c0_389 = arith.constant 0 : index
    %360 = vector.load %arg2[%c0_386, %c6_387, %c0_388, %c0_389] : memref<1x8x20x3xbf16, #tpu.memory_space<vmem>>, vector<1x1x20x3xbf16>
    %361 = vector.shape_cast %360 : vector<1x1x20x3xbf16> to vector<20x3xbf16>
    %362 = vector.extract_strided_slice %361 {offsets = [0, 0], sizes = [16, 3], strides = [1, 1]} : vector<20x3xbf16> to vector<16x3xbf16>
    %c96 = arith.constant 96 : index
    %c0_390 = arith.constant 0 : index
    %363 = vector.load %arg10[%c96, %c0_390] : memref<128x75xbf16, #tpu.memory_space<vmem>>, vector<16x3xbf16>
    tpu.vector_store %arg10[%c96, %c0_390], %362 {strides = array<i32>} : memref<128x75xbf16, #tpu.memory_space<vmem>>, vector<16x3xbf16>,
    %364 = vector.extract_strided_slice %361 {offsets = [1, 0], sizes = [16, 3], strides = [1, 1]} : vector<20x3xbf16> to vector<16x3xbf16>
    %c96_391 = arith.constant 96 : index
    %c3_392 = arith.constant 3 : index
    %365 = vector.load %arg10[%c96_391, %c3_392] : memref<128x75xbf16, #tpu.memory_space<vmem>>, vector<16x3xbf16>
    tpu.vector_store %arg10[%c96_391, %c3_392], %364 {strides = array<i32>} : memref<128x75xbf16, #tpu.memory_space<vmem>>, vector<16x3xbf16>,
    %366 = vector.extract_strided_slice %361 {offsets = [2, 0], sizes = [16, 3], strides = [1, 1]} : vector<20x3xbf16> to vector<16x3xbf16>
    %c96_393 = arith.constant 96 : index
    %c6_394 = arith.constant 6 : index
    %367 = vector.load %arg10[%c96_393, %c6_394] : memref<128x75xbf16, #tpu.memory_space<vmem>>, vector<16x3xbf16>
    tpu.vector_store %arg10[%c96_393, %c6_394], %366 {strides = array<i32>} : memref<128x75xbf16, #tpu.memory_space<vmem>>, vector<16x3xbf16>,
    %368 = vector.extract_strided_slice %361 {offsets = [3, 0], sizes = [16, 3], strides = [1, 1]} : vector<20x3xbf16> to vector<16x3xbf16>
    %c96_395 = arith.constant 96 : index
    %c9_396 = arith.constant 9 : index
    %369 = vector.load %arg10[%c96_395, %c9_396] : memref<128x75xbf16, #tpu.memory_space<vmem>>, vector<16x3xbf16>
    tpu.vector_store %arg10[%c96_395, %c9_396], %368 {strides = array<i32>} : memref<128x75xbf16, #tpu.memory_space<vmem>>, vector<16x3xbf16>,
    %370 = vector.extract_strided_slice %361 {offsets = [4, 0], sizes = [16, 3], strides = [1, 1]} : vector<20x3xbf16> to vector<16x3xbf16>
    %c96_397 = arith.constant 96 : index
    %c12_398 = arith.constant 12 : index
    %371 = vector.load %arg10[%c96_397, %c12_398] : memref<128x75xbf16, #tpu.memory_space<vmem>>, vector<16x3xbf16>
    tpu.vector_store %arg10[%c96_397, %c12_398], %370 {strides = array<i32>} : memref<128x75xbf16, #tpu.memory_space<vmem>>, vector<16x3xbf16>,
    %c0_399 = arith.constant 0 : index
    %c7_400 = arith.constant 7 : index
    %c0_401 = arith.constant 0 : index
    %c0_402 = arith.constant 0 : index
    %372 = vector.load %arg2[%c0_399, %c7_400, %c0_401, %c0_402] : memref<1x8x20x3xbf16, #tpu.memory_space<vmem>>, vector<1x1x20x3xbf16>
    %373 = vector.shape_cast %372 : vector<1x1x20x3xbf16> to vector<20x3xbf16>
    %374 = vector.extract_strided_slice %373 {offsets = [0, 0], sizes = [16, 3], strides = [1, 1]} : vector<20x3xbf16> to vector<16x3xbf16>
    %c96_403 = arith.constant 96 : index
    %c15_404 = arith.constant 15 : index
    %375 = vector.load %arg10[%c96_403, %c15_404] : memref<128x75xbf16, #tpu.memory_space<vmem>>, vector<16x3xbf16>
    tpu.vector_store %arg10[%c96_403, %c15_404], %374 {strides = array<i32>} : memref<128x75xbf16, #tpu.memory_space<vmem>>, vector<16x3xbf16>,
    %376 = vector.extract_strided_slice %373 {offsets = [1, 0], sizes = [16, 3], strides = [1, 1]} : vector<20x3xbf16> to vector<16x3xbf16>
    %c96_405 = arith.constant 96 : index
    %c18_406 = arith.constant 18 : index
    %377 = vector.load %arg10[%c96_405, %c18_406] : memref<128x75xbf16, #tpu.memory_space<vmem>>, vector<16x3xbf16>
    tpu.vector_store %arg10[%c96_405, %c18_406], %376 {strides = array<i32>} : memref<128x75xbf16, #tpu.memory_space<vmem>>, vector<16x3xbf16>,
    %378 = vector.extract_strided_slice %373 {offsets = [2, 0], sizes = [16, 3], strides = [1, 1]} : vector<20x3xbf16> to vector<16x3xbf16>
    %c96_407 = arith.constant 96 : index
    %c21_408 = arith.constant 21 : index
    %379 = vector.load %arg10[%c96_407, %c21_408] : memref<128x75xbf16, #tpu.memory_space<vmem>>, vector<16x3xbf16>
    tpu.vector_store %arg10[%c96_407, %c21_408], %378 {strides = array<i32>} : memref<128x75xbf16, #tpu.memory_space<vmem>>, vector<16x3xbf16>,
    %380 = vector.extract_strided_slice %373 {offsets = [3, 0], sizes = [16, 3], strides = [1, 1]} : vector<20x3xbf16> to vector<16x3xbf16>
    %c96_409 = arith.constant 96 : index
    %c24_410 = arith.constant 24 : index
    %381 = vector.load %arg10[%c96_409, %c24_410] : memref<128x75xbf16, #tpu.memory_space<vmem>>, vector<16x3xbf16>
    tpu.vector_store %arg10[%c96_409, %c24_410], %380 {strides = array<i32>} : memref<128x75xbf16, #tpu.memory_space<vmem>>, vector<16x3xbf16>,
    %382 = vector.extract_strided_slice %373 {offsets = [4, 0], sizes = [16, 3], strides = [1, 1]} : vector<20x3xbf16> to vector<16x3xbf16>
    %c96_411 = arith.constant 96 : index
    %c27_412 = arith.constant 27 : index
    %383 = vector.load %arg10[%c96_411, %c27_412] : memref<128x75xbf16, #tpu.memory_space<vmem>>, vector<16x3xbf16>
    tpu.vector_store %arg10[%c96_411, %c27_412], %382 {strides = array<i32>} : memref<128x75xbf16, #tpu.memory_space<vmem>>, vector<16x3xbf16>,
    %c0_413 = arith.constant 0 : index
    %c0_414 = arith.constant 0 : index
    %c0_415 = arith.constant 0 : index
    %c0_416 = arith.constant 0 : index
    %384 = vector.load %arg3[%c0_413, %c0_414, %c0_415, %c0_416] : memref<1x1x20x3xbf16, #tpu.memory_space<vmem>>, vector<1x1x20x3xbf16>
    %385 = vector.shape_cast %384 : vector<1x1x20x3xbf16> to vector<20x3xbf16>
    %386 = vector.extract_strided_slice %385 {offsets = [0, 0], sizes = [16, 3], strides = [1, 1]} : vector<20x3xbf16> to vector<16x3xbf16>
    %c96_417 = arith.constant 96 : index
    %c30_418 = arith.constant 30 : index
    %387 = vector.load %arg10[%c96_417, %c30_418] : memref<128x75xbf16, #tpu.memory_space<vmem>>, vector<16x3xbf16>
    tpu.vector_store %arg10[%c96_417, %c30_418], %386 {strides = array<i32>} : memref<128x75xbf16, #tpu.memory_space<vmem>>, vector<16x3xbf16>,
    %388 = vector.extract_strided_slice %385 {offsets = [1, 0], sizes = [16, 3], strides = [1, 1]} : vector<20x3xbf16> to vector<16x3xbf16>
    %c96_419 = arith.constant 96 : index
    %c33_420 = arith.constant 33 : index
    %389 = vector.load %arg10[%c96_419, %c33_420] : memref<128x75xbf16, #tpu.memory_space<vmem>>, vector<16x3xbf16>
    tpu.vector_store %arg10[%c96_419, %c33_420], %388 {strides = array<i32>} : memref<128x75xbf16, #tpu.memory_space<vmem>>, vector<16x3xbf16>,
    %390 = vector.extract_strided_slice %385 {offsets = [2, 0], sizes = [16, 3], strides = [1, 1]} : vector<20x3xbf16> to vector<16x3xbf16>
    %c96_421 = arith.constant 96 : index
    %c36_422 = arith.constant 36 : index
    %391 = vector.load %arg10[%c96_421, %c36_422] : memref<128x75xbf16, #tpu.memory_space<vmem>>, vector<16x3xbf16>
    tpu.vector_store %arg10[%c96_421, %c36_422], %390 {strides = array<i32>} : memref<128x75xbf16, #tpu.memory_space<vmem>>, vector<16x3xbf16>,
    %392 = vector.extract_strided_slice %385 {offsets = [3, 0], sizes = [16, 3], strides = [1, 1]} : vector<20x3xbf16> to vector<16x3xbf16>
    %c96_423 = arith.constant 96 : index
    %c39_424 = arith.constant 39 : index
    %393 = vector.load %arg10[%c96_423, %c39_424] : memref<128x75xbf16, #tpu.memory_space<vmem>>, vector<16x3xbf16>
    tpu.vector_store %arg10[%c96_423, %c39_424], %392 {strides = array<i32>} : memref<128x75xbf16, #tpu.memory_space<vmem>>, vector<16x3xbf16>,
    %394 = vector.extract_strided_slice %385 {offsets = [4, 0], sizes = [16, 3], strides = [1, 1]} : vector<20x3xbf16> to vector<16x3xbf16>
    %c96_425 = arith.constant 96 : index
    %c42_426 = arith.constant 42 : index
    %395 = vector.load %arg10[%c96_425, %c42_426] : memref<128x75xbf16, #tpu.memory_space<vmem>>, vector<16x3xbf16>
    tpu.vector_store %arg10[%c96_425, %c42_426], %394 {strides = array<i32>} : memref<128x75xbf16, #tpu.memory_space<vmem>>, vector<16x3xbf16>,
    %c0_427 = arith.constant 0 : index
    %c0_428 = arith.constant 0 : index
    %c0_429 = arith.constant 0 : index
    %c0_430 = arith.constant 0 : index
    %396 = vector.load %arg4[%c0_427, %c0_428, %c0_429, %c0_430] : memref<1x1x20x3xbf16, #tpu.memory_space<vmem>>, vector<1x1x20x3xbf16>
    %397 = vector.shape_cast %396 : vector<1x1x20x3xbf16> to vector<20x3xbf16>
    %398 = vector.extract_strided_slice %397 {offsets = [0, 0], sizes = [16, 3], strides = [1, 1]} : vector<20x3xbf16> to vector<16x3xbf16>
    %c96_431 = arith.constant 96 : index
    %c45_432 = arith.constant 45 : index
    %399 = vector.load %arg10[%c96_431, %c45_432] : memref<128x75xbf16, #tpu.memory_space<vmem>>, vector<16x3xbf16>
    tpu.vector_store %arg10[%c96_431, %c45_432], %398 {strides = array<i32>} : memref<128x75xbf16, #tpu.memory_space<vmem>>, vector<16x3xbf16>,
    %400 = vector.extract_strided_slice %397 {offsets = [1, 0], sizes = [16, 3], strides = [1, 1]} : vector<20x3xbf16> to vector<16x3xbf16>
    %c96_433 = arith.constant 96 : index
    %c48_434 = arith.constant 48 : index
    %401 = vector.load %arg10[%c96_433, %c48_434] : memref<128x75xbf16, #tpu.memory_space<vmem>>, vector<16x3xbf16>
    tpu.vector_store %arg10[%c96_433, %c48_434], %400 {strides = array<i32>} : memref<128x75xbf16, #tpu.memory_space<vmem>>, vector<16x3xbf16>,
    %402 = vector.extract_strided_slice %397 {offsets = [2, 0], sizes = [16, 3], strides = [1, 1]} : vector<20x3xbf16> to vector<16x3xbf16>
    %c96_435 = arith.constant 96 : index
    %c51_436 = arith.constant 51 : index
    %403 = vector.load %arg10[%c96_435, %c51_436] : memref<128x75xbf16, #tpu.memory_space<vmem>>, vector<16x3xbf16>
    tpu.vector_store %arg10[%c96_435, %c51_436], %402 {strides = array<i32>} : memref<128x75xbf16, #tpu.memory_space<vmem>>, vector<16x3xbf16>,
    %404 = vector.extract_strided_slice %397 {offsets = [3, 0], sizes = [16, 3], strides = [1, 1]} : vector<20x3xbf16> to vector<16x3xbf16>
    %c96_437 = arith.constant 96 : index
    %c54_438 = arith.constant 54 : index
    %405 = vector.load %arg10[%c96_437, %c54_438] : memref<128x75xbf16, #tpu.memory_space<vmem>>, vector<16x3xbf16>
    tpu.vector_store %arg10[%c96_437, %c54_438], %404 {strides = array<i32>} : memref<128x75xbf16, #tpu.memory_space<vmem>>, vector<16x3xbf16>,
    %406 = vector.extract_strided_slice %397 {offsets = [4, 0], sizes = [16, 3], strides = [1, 1]} : vector<20x3xbf16> to vector<16x3xbf16>
    %c96_439 = arith.constant 96 : index
    %c57_440 = arith.constant 57 : index
    %407 = vector.load %arg10[%c96_439, %c57_440] : memref<128x75xbf16, #tpu.memory_space<vmem>>, vector<16x3xbf16>
    tpu.vector_store %arg10[%c96_439, %c57_440], %406 {strides = array<i32>} : memref<128x75xbf16, #tpu.memory_space<vmem>>, vector<16x3xbf16>,
    %c0_441 = arith.constant 0 : index
    %c0_442 = arith.constant 0 : index
    %c0_443 = arith.constant 0 : index
    %c0_444 = arith.constant 0 : index
    %408 = vector.load %arg5[%c0_441, %c0_442, %c0_443, %c0_444] : memref<1x1x20x3xbf16, #tpu.memory_space<vmem>>, vector<1x1x20x3xbf16>
    %409 = vector.shape_cast %408 : vector<1x1x20x3xbf16> to vector<20x3xbf16>
    %410 = vector.extract_strided_slice %409 {offsets = [0, 0], sizes = [16, 3], strides = [1, 1]} : vector<20x3xbf16> to vector<16x3xbf16>
    %c96_445 = arith.constant 96 : index
    %c60_446 = arith.constant 60 : index
    %411 = vector.load %arg10[%c96_445, %c60_446] : memref<128x75xbf16, #tpu.memory_space<vmem>>, vector<16x3xbf16>
    tpu.vector_store %arg10[%c96_445, %c60_446], %410 {strides = array<i32>} : memref<128x75xbf16, #tpu.memory_space<vmem>>, vector<16x3xbf16>,
    %412 = vector.extract_strided_slice %409 {offsets = [1, 0], sizes = [16, 3], strides = [1, 1]} : vector<20x3xbf16> to vector<16x3xbf16>
    %c96_447 = arith.constant 96 : index
    %c63_448 = arith.constant 63 : index
    %413 = vector.load %arg10[%c96_447, %c63_448] : memref<128x75xbf16, #tpu.memory_space<vmem>>, vector<16x3xbf16>
    tpu.vector_store %arg10[%c96_447, %c63_448], %412 {strides = array<i32>} : memref<128x75xbf16, #tpu.memory_space<vmem>>, vector<16x3xbf16>,
    %414 = vector.extract_strided_slice %409 {offsets = [2, 0], sizes = [16, 3], strides = [1, 1]} : vector<20x3xbf16> to vector<16x3xbf16>
    %c96_449 = arith.constant 96 : index
    %c66_450 = arith.constant 66 : index
    %415 = vector.load %arg10[%c96_449, %c66_450] : memref<128x75xbf16, #tpu.memory_space<vmem>>, vector<16x3xbf16>
    tpu.vector_store %arg10[%c96_449, %c66_450], %414 {strides = array<i32>} : memref<128x75xbf16, #tpu.memory_space<vmem>>, vector<16x3xbf16>,
    %416 = vector.extract_strided_slice %409 {offsets = [3, 0], sizes = [16, 3], strides = [1, 1]} : vector<20x3xbf16> to vector<16x3xbf16>
    %c96_451 = arith.constant 96 : index
    %c69_452 = arith.constant 69 : index
    %417 = vector.load %arg10[%c96_451, %c69_452] : memref<128x75xbf16, #tpu.memory_space<vmem>>, vector<16x3xbf16>
    tpu.vector_store %arg10[%c96_451, %c69_452], %416 {strides = array<i32>} : memref<128x75xbf16, #tpu.memory_space<vmem>>, vector<16x3xbf16>,
    %418 = vector.extract_strided_slice %409 {offsets = [4, 0], sizes = [16, 3], strides = [1, 1]} : vector<20x3xbf16> to vector<16x3xbf16>
    %c96_453 = arith.constant 96 : index
    %c72_454 = arith.constant 72 : index
    %419 = vector.load %arg10[%c96_453, %c72_454] : memref<128x75xbf16, #tpu.memory_space<vmem>>, vector<16x3xbf16>
    tpu.vector_store %arg10[%c96_453, %c72_454], %418 {strides = array<i32>} : memref<128x75xbf16, #tpu.memory_space<vmem>>, vector<16x3xbf16>,
    %c0_455 = arith.constant 0 : index
    %c7_456 = arith.constant 7 : index
    %c0_457 = arith.constant 0 : index
    %c0_458 = arith.constant 0 : index
    %420 = vector.load %arg2[%c0_455, %c7_456, %c0_457, %c0_458] : memref<1x8x20x3xbf16, #tpu.memory_space<vmem>>, vector<1x1x20x3xbf16>
    %421 = vector.shape_cast %420 : vector<1x1x20x3xbf16> to vector<20x3xbf16>
    %422 = vector.extract_strided_slice %421 {offsets = [0, 0], sizes = [16, 3], strides = [1, 1]} : vector<20x3xbf16> to vector<16x3xbf16>
    %c112 = arith.constant 112 : index
    %c0_459 = arith.constant 0 : index
    %423 = vector.load %arg10[%c112, %c0_459] : memref<128x75xbf16, #tpu.memory_space<vmem>>, vector<16x3xbf16>
    tpu.vector_store %arg10[%c112, %c0_459], %422 {strides = array<i32>} : memref<128x75xbf16, #tpu.memory_space<vmem>>, vector<16x3xbf16>,
    %424 = vector.extract_strided_slice %421 {offsets = [1, 0], sizes = [16, 3], strides = [1, 1]} : vector<20x3xbf16> to vector<16x3xbf16>
    %c112_460 = arith.constant 112 : index
    %c3_461 = arith.constant 3 : index
    %425 = vector.load %arg10[%c112_460, %c3_461] : memref<128x75xbf16, #tpu.memory_space<vmem>>, vector<16x3xbf16>
    tpu.vector_store %arg10[%c112_460, %c3_461], %424 {strides = array<i32>} : memref<128x75xbf16, #tpu.memory_space<vmem>>, vector<16x3xbf16>,
    %426 = vector.extract_strided_slice %421 {offsets = [2, 0], sizes = [16, 3], strides = [1, 1]} : vector<20x3xbf16> to vector<16x3xbf16>
    %c112_462 = arith.constant 112 : index
    %c6_463 = arith.constant 6 : index
    %427 = vector.load %arg10[%c112_462, %c6_463] : memref<128x75xbf16, #tpu.memory_space<vmem>>, vector<16x3xbf16>
    tpu.vector_store %arg10[%c112_462, %c6_463], %426 {strides = array<i32>} : memref<128x75xbf16, #tpu.memory_space<vmem>>, vector<16x3xbf16>,
    %428 = vector.extract_strided_slice %421 {offsets = [3, 0], sizes = [16, 3], strides = [1, 1]} : vector<20x3xbf16> to vector<16x3xbf16>
    %c112_464 = arith.constant 112 : index
    %c9_465 = arith.constant 9 : index
    %429 = vector.load %arg10[%c112_464, %c9_465] : memref<128x75xbf16, #tpu.memory_space<vmem>>, vector<16x3xbf16>
    tpu.vector_store %arg10[%c112_464, %c9_465], %428 {strides = array<i32>} : memref<128x75xbf16, #tpu.memory_space<vmem>>, vector<16x3xbf16>,
    %430 = vector.extract_strided_slice %421 {offsets = [4, 0], sizes = [16, 3], strides = [1, 1]} : vector<20x3xbf16> to vector<16x3xbf16>
    %c112_466 = arith.constant 112 : index
    %c12_467 = arith.constant 12 : index
    %431 = vector.load %arg10[%c112_466, %c12_467] : memref<128x75xbf16, #tpu.memory_space<vmem>>, vector<16x3xbf16>
    tpu.vector_store %arg10[%c112_466, %c12_467], %430 {strides = array<i32>} : memref<128x75xbf16, #tpu.memory_space<vmem>>, vector<16x3xbf16>,
    %c0_468 = arith.constant 0 : index
    %c0_469 = arith.constant 0 : index
    %c0_470 = arith.constant 0 : index
    %c0_471 = arith.constant 0 : index
    %432 = vector.load %arg3[%c0_468, %c0_469, %c0_470, %c0_471] : memref<1x1x20x3xbf16, #tpu.memory_space<vmem>>, vector<1x1x20x3xbf16>
    %433 = vector.shape_cast %432 : vector<1x1x20x3xbf16> to vector<20x3xbf16>
    %434 = vector.extract_strided_slice %433 {offsets = [0, 0], sizes = [16, 3], strides = [1, 1]} : vector<20x3xbf16> to vector<16x3xbf16>
    %c112_472 = arith.constant 112 : index
    %c15_473 = arith.constant 15 : index
    %435 = vector.load %arg10[%c112_472, %c15_473] : memref<128x75xbf16, #tpu.memory_space<vmem>>, vector<16x3xbf16>
    tpu.vector_store %arg10[%c112_472, %c15_473], %434 {strides = array<i32>} : memref<128x75xbf16, #tpu.memory_space<vmem>>, vector<16x3xbf16>,
    %436 = vector.extract_strided_slice %433 {offsets = [1, 0], sizes = [16, 3], strides = [1, 1]} : vector<20x3xbf16> to vector<16x3xbf16>
    %c112_474 = arith.constant 112 : index
    %c18_475 = arith.constant 18 : index
    %437 = vector.load %arg10[%c112_474, %c18_475] : memref<128x75xbf16, #tpu.memory_space<vmem>>, vector<16x3xbf16>
    tpu.vector_store %arg10[%c112_474, %c18_475], %436 {strides = array<i32>} : memref<128x75xbf16, #tpu.memory_space<vmem>>, vector<16x3xbf16>,
    %438 = vector.extract_strided_slice %433 {offsets = [2, 0], sizes = [16, 3], strides = [1, 1]} : vector<20x3xbf16> to vector<16x3xbf16>
    %c112_476 = arith.constant 112 : index
    %c21_477 = arith.constant 21 : index
    %439 = vector.load %arg10[%c112_476, %c21_477] : memref<128x75xbf16, #tpu.memory_space<vmem>>, vector<16x3xbf16>
    tpu.vector_store %arg10[%c112_476, %c21_477], %438 {strides = array<i32>} : memref<128x75xbf16, #tpu.memory_space<vmem>>, vector<16x3xbf16>,
    %440 = vector.extract_strided_slice %433 {offsets = [3, 0], sizes = [16, 3], strides = [1, 1]} : vector<20x3xbf16> to vector<16x3xbf16>
    %c112_478 = arith.constant 112 : index
    %c24_479 = arith.constant 24 : index
    %441 = vector.load %arg10[%c112_478, %c24_479] : memref<128x75xbf16, #tpu.memory_space<vmem>>, vector<16x3xbf16>
    tpu.vector_store %arg10[%c112_478, %c24_479], %440 {strides = array<i32>} : memref<128x75xbf16, #tpu.memory_space<vmem>>, vector<16x3xbf16>,
    %442 = vector.extract_strided_slice %433 {offsets = [4, 0], sizes = [16, 3], strides = [1, 1]} : vector<20x3xbf16> to vector<16x3xbf16>
    %c112_480 = arith.constant 112 : index
    %c27_481 = arith.constant 27 : index
    %443 = vector.load %arg10[%c112_480, %c27_481] : memref<128x75xbf16, #tpu.memory_space<vmem>>, vector<16x3xbf16>
    tpu.vector_store %arg10[%c112_480, %c27_481], %442 {strides = array<i32>} : memref<128x75xbf16, #tpu.memory_space<vmem>>, vector<16x3xbf16>,
    %c0_482 = arith.constant 0 : index
    %c0_483 = arith.constant 0 : index
    %c0_484 = arith.constant 0 : index
    %c0_485 = arith.constant 0 : index
    %444 = vector.load %arg4[%c0_482, %c0_483, %c0_484, %c0_485] : memref<1x1x20x3xbf16, #tpu.memory_space<vmem>>, vector<1x1x20x3xbf16>
    %445 = vector.shape_cast %444 : vector<1x1x20x3xbf16> to vector<20x3xbf16>
    %446 = vector.extract_strided_slice %445 {offsets = [0, 0], sizes = [16, 3], strides = [1, 1]} : vector<20x3xbf16> to vector<16x3xbf16>
    %c112_486 = arith.constant 112 : index
    %c30_487 = arith.constant 30 : index
    %447 = vector.load %arg10[%c112_486, %c30_487] : memref<128x75xbf16, #tpu.memory_space<vmem>>, vector<16x3xbf16>
    tpu.vector_store %arg10[%c112_486, %c30_487], %446 {strides = array<i32>} : memref<128x75xbf16, #tpu.memory_space<vmem>>, vector<16x3xbf16>,
    %448 = vector.extract_strided_slice %445 {offsets = [1, 0], sizes = [16, 3], strides = [1, 1]} : vector<20x3xbf16> to vector<16x3xbf16>
    %c112_488 = arith.constant 112 : index
    %c33_489 = arith.constant 33 : index
    %449 = vector.load %arg10[%c112_488, %c33_489] : memref<128x75xbf16, #tpu.memory_space<vmem>>, vector<16x3xbf16>
    tpu.vector_store %arg10[%c112_488, %c33_489], %448 {strides = array<i32>} : memref<128x75xbf16, #tpu.memory_space<vmem>>, vector<16x3xbf16>,
    %450 = vector.extract_strided_slice %445 {offsets = [2, 0], sizes = [16, 3], strides = [1, 1]} : vector<20x3xbf16> to vector<16x3xbf16>
    %c112_490 = arith.constant 112 : index
    %c36_491 = arith.constant 36 : index
    %451 = vector.load %arg10[%c112_490, %c36_491] : memref<128x75xbf16, #tpu.memory_space<vmem>>, vector<16x3xbf16>
    tpu.vector_store %arg10[%c112_490, %c36_491], %450 {strides = array<i32>} : memref<128x75xbf16, #tpu.memory_space<vmem>>, vector<16x3xbf16>,
    %452 = vector.extract_strided_slice %445 {offsets = [3, 0], sizes = [16, 3], strides = [1, 1]} : vector<20x3xbf16> to vector<16x3xbf16>
    %c112_492 = arith.constant 112 : index
    %c39_493 = arith.constant 39 : index
    %453 = vector.load %arg10[%c112_492, %c39_493] : memref<128x75xbf16, #tpu.memory_space<vmem>>, vector<16x3xbf16>
    tpu.vector_store %arg10[%c112_492, %c39_493], %452 {strides = array<i32>} : memref<128x75xbf16, #tpu.memory_space<vmem>>, vector<16x3xbf16>,
    %454 = vector.extract_strided_slice %445 {offsets = [4, 0], sizes = [16, 3], strides = [1, 1]} : vector<20x3xbf16> to vector<16x3xbf16>
    %c112_494 = arith.constant 112 : index
    %c42_495 = arith.constant 42 : index
    %455 = vector.load %arg10[%c112_494, %c42_495] : memref<128x75xbf16, #tpu.memory_space<vmem>>, vector<16x3xbf16>
    tpu.vector_store %arg10[%c112_494, %c42_495], %454 {strides = array<i32>} : memref<128x75xbf16, #tpu.memory_space<vmem>>, vector<16x3xbf16>,
    %c0_496 = arith.constant 0 : index
    %c0_497 = arith.constant 0 : index
    %c0_498 = arith.constant 0 : index
    %c0_499 = arith.constant 0 : index
    %456 = vector.load %arg5[%c0_496, %c0_497, %c0_498, %c0_499] : memref<1x1x20x3xbf16, #tpu.memory_space<vmem>>, vector<1x1x20x3xbf16>
    %457 = vector.shape_cast %456 : vector<1x1x20x3xbf16> to vector<20x3xbf16>
    %458 = vector.extract_strided_slice %457 {offsets = [0, 0], sizes = [16, 3], strides = [1, 1]} : vector<20x3xbf16> to vector<16x3xbf16>
    %c112_500 = arith.constant 112 : index
    %c45_501 = arith.constant 45 : index
    %459 = vector.load %arg10[%c112_500, %c45_501] : memref<128x75xbf16, #tpu.memory_space<vmem>>, vector<16x3xbf16>
    tpu.vector_store %arg10[%c112_500, %c45_501], %458 {strides = array<i32>} : memref<128x75xbf16, #tpu.memory_space<vmem>>, vector<16x3xbf16>,
    %460 = vector.extract_strided_slice %457 {offsets = [1, 0], sizes = [16, 3], strides = [1, 1]} : vector<20x3xbf16> to vector<16x3xbf16>
    %c112_502 = arith.constant 112 : index
    %c48_503 = arith.constant 48 : index
    %461 = vector.load %arg10[%c112_502, %c48_503] : memref<128x75xbf16, #tpu.memory_space<vmem>>, vector<16x3xbf16>
    tpu.vector_store %arg10[%c112_502, %c48_503], %460 {strides = array<i32>} : memref<128x75xbf16, #tpu.memory_space<vmem>>, vector<16x3xbf16>,
    %462 = vector.extract_strided_slice %457 {offsets = [2, 0], sizes = [16, 3], strides = [1, 1]} : vector<20x3xbf16> to vector<16x3xbf16>
    %c112_504 = arith.constant 112 : index
    %c51_505 = arith.constant 51 : index
    %463 = vector.load %arg10[%c112_504, %c51_505] : memref<128x75xbf16, #tpu.memory_space<vmem>>, vector<16x3xbf16>
    tpu.vector_store %arg10[%c112_504, %c51_505], %462 {strides = array<i32>} : memref<128x75xbf16, #tpu.memory_space<vmem>>, vector<16x3xbf16>,
    %464 = vector.extract_strided_slice %457 {offsets = [3, 0], sizes = [16, 3], strides = [1, 1]} : vector<20x3xbf16> to vector<16x3xbf16>
    %c112_506 = arith.constant 112 : index
    %c54_507 = arith.constant 54 : index
    %465 = vector.load %arg10[%c112_506, %c54_507] : memref<128x75xbf16, #tpu.memory_space<vmem>>, vector<16x3xbf16>
    tpu.vector_store %arg10[%c112_506, %c54_507], %464 {strides = array<i32>} : memref<128x75xbf16, #tpu.memory_space<vmem>>, vector<16x3xbf16>,
    %466 = vector.extract_strided_slice %457 {offsets = [4, 0], sizes = [16, 3], strides = [1, 1]} : vector<20x3xbf16> to vector<16x3xbf16>
    %c112_508 = arith.constant 112 : index
    %c57_509 = arith.constant 57 : index
    %467 = vector.load %arg10[%c112_508, %c57_509] : memref<128x75xbf16, #tpu.memory_space<vmem>>, vector<16x3xbf16>
    tpu.vector_store %arg10[%c112_508, %c57_509], %466 {strides = array<i32>} : memref<128x75xbf16, #tpu.memory_space<vmem>>, vector<16x3xbf16>,
    %c0_510 = arith.constant 0 : index
    %c0_511 = arith.constant 0 : index
    %c0_512 = arith.constant 0 : index
    %c0_513 = arith.constant 0 : index
    %468 = vector.load %arg6[%c0_510, %c0_511, %c0_512, %c0_513] : memref<1x1x20x3xbf16, #tpu.memory_space<vmem>>, vector<1x1x20x3xbf16>
    %469 = vector.shape_cast %468 : vector<1x1x20x3xbf16> to vector<20x3xbf16>
    %470 = vector.extract_strided_slice %469 {offsets = [0, 0], sizes = [16, 3], strides = [1, 1]} : vector<20x3xbf16> to vector<16x3xbf16>
    %c112_514 = arith.constant 112 : index
    %c60_515 = arith.constant 60 : index
    %471 = vector.load %arg10[%c112_514, %c60_515] : memref<128x75xbf16, #tpu.memory_space<vmem>>, vector<16x3xbf16>
    tpu.vector_store %arg10[%c112_514, %c60_515], %470 {strides = array<i32>} : memref<128x75xbf16, #tpu.memory_space<vmem>>, vector<16x3xbf16>,
    %472 = vector.extract_strided_slice %469 {offsets = [1, 0], sizes = [16, 3], strides = [1, 1]} : vector<20x3xbf16> to vector<16x3xbf16>
    %c112_516 = arith.constant 112 : index
    %c63_517 = arith.constant 63 : index
    %473 = vector.load %arg10[%c112_516, %c63_517] : memref<128x75xbf16, #tpu.memory_space<vmem>>, vector<16x3xbf16>
    tpu.vector_store %arg10[%c112_516, %c63_517], %472 {strides = array<i32>} : memref<128x75xbf16, #tpu.memory_space<vmem>>, vector<16x3xbf16>,
    %474 = vector.extract_strided_slice %469 {offsets = [2, 0], sizes = [16, 3], strides = [1, 1]} : vector<20x3xbf16> to vector<16x3xbf16>
    %c112_518 = arith.constant 112 : index
    %c66_519 = arith.constant 66 : index
    %475 = vector.load %arg10[%c112_518, %c66_519] : memref<128x75xbf16, #tpu.memory_space<vmem>>, vector<16x3xbf16>
    tpu.vector_store %arg10[%c112_518, %c66_519], %474 {strides = array<i32>} : memref<128x75xbf16, #tpu.memory_space<vmem>>, vector<16x3xbf16>,
    %476 = vector.extract_strided_slice %469 {offsets = [3, 0], sizes = [16, 3], strides = [1, 1]} : vector<20x3xbf16> to vector<16x3xbf16>
    %c112_520 = arith.constant 112 : index
    %c69_521 = arith.constant 69 : index
    %477 = vector.load %arg10[%c112_520, %c69_521] : memref<128x75xbf16, #tpu.memory_space<vmem>>, vector<16x3xbf16>
    tpu.vector_store %arg10[%c112_520, %c69_521], %476 {strides = array<i32>} : memref<128x75xbf16, #tpu.memory_space<vmem>>, vector<16x3xbf16>,
    %478 = vector.extract_strided_slice %469 {offsets = [4, 0], sizes = [16, 3], strides = [1, 1]} : vector<20x3xbf16> to vector<16x3xbf16>
    %c112_522 = arith.constant 112 : index
    %c72_523 = arith.constant 72 : index
    %479 = vector.load %arg10[%c112_522, %c72_523] : memref<128x75xbf16, #tpu.memory_space<vmem>>, vector<16x3xbf16>
    tpu.vector_store %arg10[%c112_522, %c72_523], %478 {strides = array<i32>} : memref<128x75xbf16, #tpu.memory_space<vmem>>, vector<16x3xbf16>,
    %c0_524 = arith.constant 0 : index
    %c0_525 = arith.constant 0 : index
    %480 = vector.load %arg10[%c0_524, %c0_525] : memref<128x75xbf16, #tpu.memory_space<vmem>>, vector<128x75xbf16>
    %c0_526 = arith.constant 0 : index
    %c0_527 = arith.constant 0 : index
    %481 = vector.load %arg7[%c0_526, %c0_527] : memref<75x32xbf16, #tpu.memory_space<vmem>>, vector<75x32xbf16>
    %cst = arith.constant dense<0.000000e+00> : vector<128x32xf32>
    %482 = tpu.matmul %480, %481, %cst {dimension_numbers = #tpu.dot_dimension_numbers<[1], [0], [0], [1], [0, 0, 1, 1], [], []>} : vector<128x75xbf16>, vector<75x32xbf16>, vector<128x32xf32> -> vector<128x32xf32>
    %c0_528 = arith.constant 0 : index
    %c0_529 = arith.constant 0 : index
    %483 = vector.load %arg8[%c0_528, %c0_529] : memref<1x32xf32, #tpu.memory_space<vmem>>, vector<1x32xf32>
    %484 = vector.broadcast %483 : vector<1x32xf32> to vector<128x32xf32>
    %485 = arith.addf %482, %484 : vector<128x32xf32>
    %cst_530 = arith.constant 0.000000e+00 : f32
    %486 = vector.broadcast %cst_530 : f32 to vector<128x32xf32>
    %487 = arith.maximumf %485, %486 : vector<128x32xf32>
    %488 = arith.truncf %487 : vector<128x32xf32> to vector<128x32xbf16>
    %c0_531 = arith.constant 0 : index
    %c0_532 = arith.constant 0 : index
    %c0_533 = arith.constant 0 : index
    %c0_534 = arith.constant 0 : index
    %489 = vector.load %arg9[%c0_531, %c0_532, %c0_533, %c0_534] : memref<1x1x128x32xbf16, #tpu.memory_space<vmem>>, vector<1x1x128x32xbf16>
    %490 = vector.shape_cast %489 : vector<1x1x128x32xbf16> to vector<128x32xbf16>
    %491 = vector.shape_cast %488 : vector<128x32xbf16> to vector<1x1x128x32xbf16>
    tpu.vector_store %arg9[%c0_531, %c0_532, %c0_533, %c0_534], %491 {strides = array<i32>} : memref<1x1x128x32xbf16, #tpu.memory_space<vmem>>, vector<1x1x128x32xbf16>,
    return
  }
  func.func @transform_0(%arg0: i32, %arg1: i32) -> (i32, i32, i32, i32) {
    %c0_i32 = arith.constant 0 : i32
    %c0_i32_0 = arith.constant 0 : i32
    %c0_i32_1 = arith.constant 0 : i32
    return %arg0, %arg1, %c0_i32, %c0_i32_0 : i32, i32, i32, i32
  }
  func.func @transform_1(%arg0: i32, %arg1: i32) -> (i32, i32, i32, i32) {
    %c1_i32 = arith.constant 1 : i32
    %0 = arith.addi %arg1, %c1_i32 : i32
    %c8_i32 = arith.constant 8 : i32
    %1 = arith.muli %0, %c8_i32 : i32
    %c0_i32 = arith.constant 0 : i32
    %2 = arith.addi %1, %c0_i32 : i32
    %c0_i32_0 = arith.constant 0 : i32
    %c0_i32_1 = arith.constant 0 : i32
    %c0_i32_2 = arith.constant 0 : i32
    return %arg0, %2, %c0_i32_0, %c0_i32_1 : i32, i32, i32, i32
  }
  func.func @transform_2(%arg0: i32, %arg1: i32) -> (i32, i32, i32, i32) {
    %c1_i32 = arith.constant 1 : i32
    %0 = arith.addi %arg1, %c1_i32 : i32
    %c8_i32 = arith.constant 8 : i32
    %1 = arith.muli %0, %c8_i32 : i32
    %c1_i32_0 = arith.constant 1 : i32
    %2 = arith.addi %1, %c1_i32_0 : i32
    %c0_i32 = arith.constant 0 : i32
    %c0_i32_1 = arith.constant 0 : i32
    %c0_i32_2 = arith.constant 0 : i32
    return %arg0, %2, %c0_i32, %c0_i32_1 : i32, i32, i32, i32
  }
  func.func @transform_3(%arg0: i32, %arg1: i32) -> (i32, i32, i32, i32) {
    %c1_i32 = arith.constant 1 : i32
    %0 = arith.addi %arg1, %c1_i32 : i32
    %c8_i32 = arith.constant 8 : i32
    %1 = arith.muli %0, %c8_i32 : i32
    %c2_i32 = arith.constant 2 : i32
    %2 = arith.addi %1, %c2_i32 : i32
    %c0_i32 = arith.constant 0 : i32
    %c0_i32_0 = arith.constant 0 : i32
    %c0_i32_1 = arith.constant 0 : i32
    return %arg0, %2, %c0_i32, %c0_i32_0 : i32, i32, i32, i32
  }
  func.func @transform_4(%arg0: i32, %arg1: i32) -> (i32, i32, i32, i32) {
    %c1_i32 = arith.constant 1 : i32
    %0 = arith.addi %arg1, %c1_i32 : i32
    %c8_i32 = arith.constant 8 : i32
    %1 = arith.muli %0, %c8_i32 : i32
    %c3_i32 = arith.constant 3 : i32
    %2 = arith.addi %1, %c3_i32 : i32
    %c0_i32 = arith.constant 0 : i32
    %c0_i32_0 = arith.constant 0 : i32
    %c0_i32_1 = arith.constant 0 : i32
    return %arg0, %2, %c0_i32, %c0_i32_0 : i32, i32, i32, i32
  }
  func.func @transform_5(%arg0: i32, %arg1: i32) -> (i32, i32) {
    %c0_i32 = arith.constant 0 : i32
    %c0_i32_0 = arith.constant 0 : i32
    %c0_i32_1 = arith.constant 0 : i32
    return %c0_i32, %c0_i32_0 : i32, i32
  }
  func.func @transform_6(%arg0: i32, %arg1: i32) -> (i32, i32) {
    %c0_i32 = arith.constant 0 : i32
    %c0_i32_0 = arith.constant 0 : i32
    %c0_i32_1 = arith.constant 0 : i32
    return %c0_i32, %c0_i32_0 : i32, i32
  }
  func.func @transform_7(%arg0: i32, %arg1: i32) -> (i32, i32, i32, i32) {
    %c0_i32 = arith.constant 0 : i32
    %c0_i32_0 = arith.constant 0 : i32
    %c0_i32_1 = arith.constant 0 : i32
    return %arg0, %arg1, %c0_i32, %c0_i32_0 : i32, i32, i32, i32
  }
}

</mosaic_0001>

<llo_original>
// kernel: tpu_custom_call.1
$region0: #{tpu_custom_call.1}
  #allocation0 [shape = 'u32[]', space=smem, size = 0x4, offset = 0x4, fixed_abs, tag = 'smem constant byte address 0x4 - core index']
  #allocation1 [shape = 'u32[144,128]{1,0:T(1,128)}', space=vmem, size = 0x12000, scoped, tag = 'internal scratch']
  #allocation2 [shape = 'bf16[128,75]{1,0:T(8,128)(2,1)}', space=vmem, size = 0x8000, scoped, tag = 'scratch operand']
  %s0 = inlined_call_operand.vmem [shape: bf16[2,20,20,3], index: 0, kind: input, shape index: {}]
  %s1 = inlined_call_operand.vmem [shape: bf16[2,20,20,3], index: 1, kind: input, shape index: {}]
  %s2 = inlined_call_operand.vmem [shape: bf16[2,20,20,3], index: 2, kind: input, shape index: {}]
  %s3 = inlined_call_operand.vmem [shape: bf16[2,20,20,3], index: 3, kind: input, shape index: {}]
  %s4 = inlined_call_operand.vmem [shape: bf16[2,20,20,3], index: 4, kind: input, shape index: {}]
  %s5 = inlined_call_operand.vmem [shape: bf16[75,32], index: 5, kind: input, shape index: {}]
  %s6 = inlined_call_operand.vmem [shape: f32[1,32], index: 6, kind: input, shape index: {}]
  %s7 = inlined_call_operand.vmem [shape: bf16[2,2,128,32], index: 7, kind: output, shape index: {}]
  %s8 = sld [smem:[#allocation0]]
  $region61: #{tpu_custom_call.1} parent=0
    _
  %s10 = ssub.s32 1, %s8
  %s11 = scalar_select 0, %s10, %s8
  loop: start=0, step=1, limit=6
  $region2: #{tpu_custom_call.1} parent=0 // loop_pre_header
    _
  $region3: #{tpu_custom_call.1} parent=0 // loop_header
    %s13 = sphi 0, %s17
    %p14 = scmp.ge.s32.totalorder %s13, 6
    %s20 = sphi 0, %s32
    %s21 = sphi 0, %s28
    %s22 = sphi 0, %s20
    %s23 = sphi 0, %s21
    %s24 = sphi 0, %s22
    %s25 = sphi 0, %s23
    %s37 = sphi 0, %s39
    %s40 = sphi 0, %s37
    %s41 = sphi 0, %s40
    %s57 = sphi 0, %s41
    %s69 = sphi 0, %s71
    %s72 = sphi 0, %s69
    %s73 = sphi 0, %s72
    %s89 = sphi 0, %s73
    %s103 = sphi 0, %s105
    %s106 = sphi 0, %s103
    %s107 = sphi 0, %s106
    %s123 = sphi 0, %s107
    %s137 = sphi 0, %s139
    %s140 = sphi 0, %s137
    %s141 = sphi 0, %s140
    %s157 = sphi 0, %s141
    %s171 = sphi 0, %s173
    %s174 = sphi 0, %s171
    %s175 = sphi 0, %s174
    %s191 = sphi 0, %s175
    %s195 = sphi 0, %s195
    %s197 = sphi 0, %s195
    %s198 = sphi 0, %s197
    %s212 = sphi 0, %s198
    %s216 = sphi 0, %s216
    %s218 = sphi 0, %s216
    %s219 = sphi 0, %s218
    %s233 = sphi 0, %s219
    %s241 = sphi 0, %s243
    %s244 = sphi 0, %s241
    %s245 = sphi 0, %s244
    %s261 = sphi 0, %s245
  $region4: #{tpu_custom_call.1} parent=0 // loop_header_branch
    %16 = sbr.rel (%p14) target = $region8
  $region5: #{tpu_custom_call.1} parent=0 // loop_body
    %s18 = ssub.s32 %s13, 1
    %s19 = ssub.s32 %s13, 2
    %s26 = sadd.s32 1, %s21
    %p27 = scmp.ge.s32.totalorder %s26, 2
    %s28 = scalar_select %p27, 0, %s26
    %s29 = sadd.s32 1, %s20
    %s30 = scalar_select %p27, %s29, %s20
    %p31 = scmp.ge.s32.totalorder %s30, 2
    %s32 = scalar_select %p31, 0, %s30
    %s33 = ssub.s32 %s20, %s32
    %s34 = ssub.s32 %s21, %s28
    %s35 = sor.u32 %s33, %s34
    %p36 = scmp.eq.s32.totalorder %s35, 0
    %s38 = sadd.s32 %s37, 1
    %s39 = scalar_select %p36, %s37, %s38
    %p42 = pneg %p36
    %p43 = scmp.eq.s32.totalorder %s13, 3
    %p44 = por %p42, %p43
    %p45 = scmp.ne.s32.totalorder %s37, %s40
    %p46 = scmp.eq.s32.totalorder %s13, 0
    %p47 = por %p45, %p46
    %p48 = scmp.ne.s32.totalorder %s37, %s40
    %p49 = scmp.eq.s32.totalorder %s18, 3
    %p50 = por %p48, %p49
    %p51 = scmp.ne.s32.totalorder %s40, %s41
    %p52 = scmp.eq.s32.totalorder %s18, 0
    %p53 = por %p51, %p52
    %p54 = scmp.ne.s32.totalorder %s40, %s41
    %p55 = scmp.eq.s32.totalorder %s19, 3
    %p56 = por %p54, %p55
    %p58 = scmp.ne.s32.totalorder %s41, %s57
    %p59 = scmp.eq.s32.totalorder %s19, 0
    %p60 = por %p58, %p59
    %s61 = sadd.s32 %s21, 1
    %s62 = smul.u32 %s61, 8
    %s63 = sadd.s32 %s28, 1
    %s64 = smul.u32 %s63, 8
    %s65 = ssub.s32 %s20, %s32
    %s66 = ssub.s32 %s62, %s64
    %s67 = sor.u32 %s65, %s66
    %p68 = scmp.eq.s32.totalorder %s67, 0
    %s70 = sadd.s32 %s69, 1
    %s71 = scalar_select %p68, %s69, %s70
    %p74 = pneg %p68
    %p75 = scmp.eq.s32.totalorder %s13, 3
    %p76 = por %p74, %p75
    %p77 = scmp.ne.s32.totalorder %s69, %s72
    %p78 = scmp.eq.s32.totalorder %s13, 0
    %p79 = por %p77, %p78
    %p80 = scmp.ne.s32.totalorder %s69, %s72
    %p81 = scmp.eq.s32.totalorder %s18, 3
    %p82 = por %p80, %p81
    %p83 = scmp.ne.s32.totalorder %s72, %s73
    %p84 = scmp.eq.s32.totalorder %s18, 0
    %p85 = por %p83, %p84
    %p86 = scmp.ne.s32.totalorder %s72, %s73
    %p87 = scmp.eq.s32.totalorder %s19, 3
    %p88 = por %p86, %p87
    %p90 = scmp.ne.s32.totalorder %s73, %s89
    %p91 = scmp.eq.s32.totalorder %s19, 0
    %p92 = por %p90, %p91
    %s93 = sadd.s32 %s21, 1
    %s94 = smul.u32 %s93, 8
    %s95 = sadd.s32 %s94, 1
    %s96 = sadd.s32 %s28, 1
    %s97 = smul.u32 %s96, 8
    %s98 = sadd.s32 %s97, 1
    %s99 = ssub.s32 %s20, %s32
    %s100 = ssub.s32 %s95, %s98
    %s101 = sor.u32 %s99, %s100
    %p102 = scmp.eq.s32.totalorder %s101, 0
    %s104 = sadd.s32 %s103, 1
    %s105 = scalar_select %p102, %s103, %s104
    %p108 = pneg %p102
    %p109 = scmp.eq.s32.totalorder %s13, 3
    %p110 = por %p108, %p109
    %p111 = scmp.ne.s32.totalorder %s103, %s106
    %p112 = scmp.eq.s32.totalorder %s13, 0
    %p113 = por %p111, %p112
    %p114 = scmp.ne.s32.totalorder %s103, %s106
    %p115 = scmp.eq.s32.totalorder %s18, 3
    %p116 = por %p114, %p115
    %p117 = scmp.ne.s32.totalorder %s106, %s107
    %p118 = scmp.eq.s32.totalorder %s18, 0
    %p119 = por %p117, %p118
    %p120 = scmp.ne.s32.totalorder %s106, %s107
    %p121 = scmp.eq.s32.totalorder %s19, 3
    %p122 = por %p120, %p121
    %p124 = scmp.ne.s32.totalorder %s107, %s123
    %p125 = scmp.eq.s32.totalorder %s19, 0
    %p126 = por %p124, %p125
    %s127 = sadd.s32 %s21, 1
    %s128 = smul.u32 %s127, 8
    %s129 = sadd.s32 %s128, 2
    %s130 = sadd.s32 %s28, 1
    %s131 = smul.u32 %s130, 8
    %s132 = sadd.s32 %s131, 2
    %s133 = ssub.s32 %s20, %s32
    %s134 = ssub.s32 %s129, %s132
    %s135 = sor.u32 %s133, %s134
    %p136 = scmp.eq.s32.totalorder %s135, 0
    %s138 = sadd.s32 %s137, 1
    %s139 = scalar_select %p136, %s137, %s138
    %p142 = pneg %p136
    %p143 = scmp.eq.s32.totalorder %s13, 3
    %p144 = por %p142, %p143
    %p145 = scmp.ne.s32.totalorder %s137, %s140
    %p146 = scmp.eq.s32.totalorder %s13, 0
    %p147 = por %p145, %p146
    %p148 = scmp.ne.s32.totalorder %s137, %s140
    %p149 = scmp.eq.s32.totalorder %s18, 3
    %p150 = por %p148, %p149
    %p151 = scmp.ne.s32.totalorder %s140, %s141
    %p152 = scmp.eq.s32.totalorder %s18, 0
    %p153 = por %p151, %p152
    %p154 = scmp.ne.s32.totalorder %s140, %s141
    %p155 = scmp.eq.s32.totalorder %s19, 3
    %p156 = por %p154, %p155
    %p158 = scmp.ne.s32.totalorder %s141, %s157
    %p159 = scmp.eq.s32.totalorder %s19, 0
    %p160 = por %p158, %p159
    %s161 = sadd.s32 %s21, 1
    %s162 = smul.u32 %s161, 8
    %s163 = sadd.s32 %s162, 3
    %s164 = sadd.s32 %s28, 1
    %s165 = smul.u32 %s164, 8
    %s166 = sadd.s32 %s165, 3
    %s167 = ssub.s32 %s20, %s32
    %s168 = ssub.s32 %s163, %s166
    %s169 = sor.u32 %s167, %s168
    %p170 = scmp.eq.s32.totalorder %s169, 0
    %s172 = sadd.s32 %s171, 1
    %s173 = scalar_select %p170, %s171, %s172
    %p176 = pneg %p170
    %p177 = scmp.eq.s32.totalorder %s13, 3
    %p178 = por %p176, %p177
    %p179 = scmp.ne.s32.totalorder %s171, %s174
    %p180 = scmp.eq.s32.totalorder %s13, 0
    %p181 = por %p179, %p180
    %p182 = scmp.ne.s32.totalorder %s171, %s174
    %p183 = scmp.eq.s32.totalorder %s18, 3
    %p184 = por %p182, %p183
    %p185 = scmp.ne.s32.totalorder %s174, %s175
    %p186 = scmp.eq.s32.totalorder %s18, 0
    %p187 = por %p185, %p186
    %p188 = scmp.ne.s32.totalorder %s174, %s175
    %p189 = scmp.eq.s32.totalorder %s19, 3
    %p190 = por %p188, %p189
    %p192 = scmp.ne.s32.totalorder %s175, %s191
    %p193 = scmp.eq.s32.totalorder %s19, 0
    %p194 = por %p192, %p193
    %s196 = sadd.s32 %s195, 1
    %p199 = scmp.eq.s32.totalorder %s13, 3
    %p200 = scmp.ne.s32.totalorder %s195, %s197
    %p201 = scmp.eq.s32.totalorder %s13, 0
    %p202 = por %p200, %p201
    %p203 = scmp.ne.s32.totalorder %s195, %s197
    %p204 = scmp.eq.s32.totalorder %s18, 3
    %p205 = por %p203, %p204
    %p206 = scmp.ne.s32.totalorder %s197, %s198
    %p207 = scmp.eq.s32.totalorder %s18, 0
    %p208 = por %p206, %p207
    %p209 = scmp.ne.s32.totalorder %s197, %s198
    %p210 = scmp.eq.s32.totalorder %s19, 3
    %p211 = por %p209, %p210
    %p213 = scmp.ne.s32.totalorder %s198, %s212
    %p214 = scmp.eq.s32.totalorder %s19, 0
    %p215 = por %p213, %p214
    %s217 = sadd.s32 %s216, 1
    %p220 = scmp.eq.s32.totalorder %s13, 3
    %p221 = scmp.ne.s32.totalorder %s216, %s218
    %p222 = scmp.eq.s32.totalorder %s13, 0
    %p223 = por %p221, %p222
    %p224 = scmp.ne.s32.totalorder %s216, %s218
    %p225 = scmp.eq.s32.totalorder %s18, 3
    %p226 = por %p224, %p225
    %p227 = scmp.ne.s32.totalorder %s218, %s219
    %p228 = scmp.eq.s32.totalorder %s18, 0
    %p229 = por %p227, %p228
    %p230 = scmp.ne.s32.totalorder %s218, %s219
    %p231 = scmp.eq.s32.totalorder %s19, 3
    %p232 = por %p230, %p231
    %p234 = scmp.ne.s32.totalorder %s219, %s233
    %p235 = scmp.eq.s32.totalorder %s19, 0
    %p236 = por %p234, %p235
    %s237 = ssub.s32 %s20, %s32
    %s238 = ssub.s32 %s21, %s28
    %s239 = sor.u32 %s237, %s238
    %p240 = scmp.eq.s32.totalorder %s239, 0
    %s242 = sadd.s32 %s241, 1
    %s243 = scalar_select %p240, %s241, %s242
    %p246 = pneg %p240
    %p247 = scmp.eq.s32.totalorder %s13, 3
    %p248 = por %p246, %p247
    %p249 = scmp.ne.s32.totalorder %s241, %s244
    %p250 = scmp.eq.s32.totalorder %s13, 0
    %p251 = por %p249, %p250
    %p252 = scmp.ne.s32.totalorder %s241, %s244
    %p253 = scmp.eq.s32.totalorder %s18, 3
    %p254 = por %p252, %p253
    %p255 = scmp.ne.s32.totalorder %s244, %s245
    %p256 = scmp.eq.s32.totalorder %s18, 0
    %p257 = por %p255, %p256
    %p258 = scmp.ne.s32.totalorder %s244, %s245
    %p259 = scmp.eq.s32.totalorder %s19, 3
    %p260 = por %p258, %p259
    %p262 = scmp.ne.s32.totalorder %s245, %s261
    %p263 = scmp.eq.s32.totalorder %s19, 0
    %p264 = por %p262, %p263
    %p265 = scmp.le.s32.totalorder 1, %s13
    %p266 = scmp.lt.s32.totalorder %s13, 5
    %p267 = pnand %p265, %p266
    %p268 = pneg %p267
    // Predicated region
    $region9: #{tpu_custom_call.1} parent=5 // pred_check
      _
    $region10: #{tpu_custom_call.1} parent=5 // pred_check_branch
      %270 = sbr.rel (%p267) target = $region12
    $region11: #{tpu_custom_call.1} parent=5 // pred_region
      %s271 = ssub.s32 %s13, 1
      // Predicated region
      $region13: #{tpu_custom_call.1} parent=11 // pred_check
        %p272 = pneg %p208
      $region14: #{tpu_custom_call.1} parent=11 // pred_check_branch
        %274 = sbr.rel (%p272) target = $region16
      $region15: #{tpu_custom_call.1} parent=11 // pred_region
        _
      $region16: #{tpu_custom_call.1} parent=11 // pred_fallthru
        _
      // Predicated region
      $region17: #{tpu_custom_call.1} parent=11 // pred_check
        %p275 = pneg %p229
      $region18: #{tpu_custom_call.1} parent=11 // pred_check_branch
        %277 = sbr.rel (%p275) target = $region20
      $region19: #{tpu_custom_call.1} parent=11 // pred_region
        _
      $region20: #{tpu_custom_call.1} parent=11 // pred_fallthru
        _
    $region12: #{tpu_custom_call.1} parent=5 // pred_fallthru
      _
    %p278 = scmp.lt.s32.totalorder %s13, 4
    // Predicated region
    $region21: #{tpu_custom_call.1} parent=5 // pred_check
      %p279 = pneg %p278
    $region22: #{tpu_custom_call.1} parent=5 // pred_check_branch
      %281 = sbr.rel (%p279) target = $region24
    $region23: #{tpu_custom_call.1} parent=5 // pred_region
      // Predicated region
      $region25: #{tpu_custom_call.1} parent=23 // pred_check
        %p282 = pneg %p47
      $region26: #{tpu_custom_call.1} parent=23 // pred_check_branch
        %284 = sbr.rel (%p282) target = $region28
      $region27: #{tpu_custom_call.1} parent=23 // pred_region
        %s285 = smul.u32 8, %s21
        %s286 = ssub.s32 20, %s285
        %p287 = scmp.lt.s32.totalorder %s286, 8
        %s288 = scalar_select %p287, %s286, 8
        %s289 = smul.u32 64, %s288
        %s290 = smul.u32 %s289, 3
        %p291 = scmp.lt.s32.totalorder %s20, 1
        %s292 = scalar_select %p291, %s20, 1
        %p293 = scmp.lt.s32.totalorder %s285, 19
        %s294 = scalar_select %p293, %s285, 19
        %s295 = smul.addr %s294, 3
        %s296 = smul.addr %s292, 60
        %s297 = sadd.s32 %s295, %s296
        %s298 = smul.addr %s297, 4
        %s299 = scalar_lea.vmem %s0, %s298
        %s300 = smul.u32 8, %s21
        %s301 = ssub.s32 20, %s300
        %p302 = scmp.lt.s32.totalorder %s301, 8
        %s303 = scalar_select %p302, %s301, 8
        %s304 = smul.u32 64, %s303
        %s305 = smul.u32 %s304, 3
      $region28: #{tpu_custom_call.1} parent=23 // pred_fallthru
        _
      // Predicated region
      $region29: #{tpu_custom_call.1} parent=23 // pred_check
        %p306 = pneg %p79
      $region30: #{tpu_custom_call.1} parent=23 // pred_check_branch
        %308 = sbr.rel (%p306) target = $region32
      $region31: #{tpu_custom_call.1} parent=23 // pred_region
        %s309 = sadd.s32 %s21, 1
        %s310 = smul.u32 %s309, 8
        %p311 = scmp.lt.s32.totalorder %s20, 1
        %s312 = scalar_select %p311, %s20, 1
        %p313 = scmp.lt.s32.totalorder %s310, 19
        %s314 = scalar_select %p313, %s310, 19
        %s315 = smul.addr %s314, 3
        %s316 = smul.addr %s312, 60
        %s317 = sadd.s32 %s315, %s316
        %s318 = smul.addr %s317, 4
        %s319 = scalar_lea.vmem %s1, %s318
        %s320 = sadd.s32 %s21, 1
        %s321 = smul.u32 %s320, 8
      $region32: #{tpu_custom_call.1} parent=23 // pred_fallthru
        _
      // Predicated region
      $region33: #{tpu_custom_call.1} parent=23 // pred_check
        %p322 = pneg %p113
      $region34: #{tpu_custom_call.1} parent=23 // pred_check_branch
        %324 = sbr.rel (%p322) target = $region36
      $region35: #{tpu_custom_call.1} parent=23 // pred_region
        %s325 = sadd.s32 %s21, 1
        %s326 = smul.u32 %s325, 8
        %s327 = sadd.s32 %s326, 1
        %p328 = scmp.lt.s32.totalorder %s20, 1
        %s329 = scalar_select %p328, %s20, 1
        %p330 = scmp.lt.s32.totalorder %s327, 19
        %s331 = scalar_select %p330, %s327, 19
        %s332 = smul.addr %s331, 3
        %s333 = smul.addr %s329, 60
        %s334 = sadd.s32 %s332, %s333
        %s335 = smul.addr %s334, 4
        %s336 = scalar_lea.vmem %s2, %s335
        %s337 = sadd.s32 %s21, 1
        %s338 = smul.u32 %s337, 8
        %s339 = sadd.s32 %s338, 1
      $region36: #{tpu_custom_call.1} parent=23 // pred_fallthru
        _
      // Predicated region
      $region37: #{tpu_custom_call.1} parent=23 // pred_check
        %p340 = pneg %p147
      $region38: #{tpu_custom_call.1} parent=23 // pred_check_branch
        %342 = sbr.rel (%p340) target = $region40
      $region39: #{tpu_custom_call.1} parent=23 // pred_region
        %s343 = sadd.s32 %s21, 1
        %s344 = smul.u32 %s343, 8
        %s345 = sadd.s32 %s344, 2
        %p346 = scmp.lt.s32.totalorder %s20, 1
        %s347 = scalar_select %p346, %s20, 1
        %p348 = scmp.lt.s32.totalorder %s345, 19
        %s349 = scalar_select %p348, %s345, 19
        %s350 = smul.addr %s349, 3
        %s351 = smul.addr %s347, 60
        %s352 = sadd.s32 %s350, %s351
        %s353 = smul.addr %s352, 4
        %s354 = scalar_lea.vmem %s3, %s353
        %s355 = sadd.s32 %s21, 1
        %s356 = smul.u32 %s355, 8
        %s357 = sadd.s32 %s356, 2
      $region40: #{tpu_custom_call.1} parent=23 // pred_fallthru
        _
      // Predicated region
      $region41: #{tpu_custom_call.1} parent=23 // pred_check
        %p358 = pneg %p181
      $region42: #{tpu_custom_call.1} parent=23 // pred_check_branch
        %360 = sbr.rel (%p358) target = $region44
      $region43: #{tpu_custom_call.1} parent=23 // pred_region
        %s361 = sadd.s32 %s21, 1
        %s362 = smul.u32 %s361, 8
        %s363 = sadd.s32 %s362, 3
        %p364 = scmp.lt.s32.totalorder %s20, 1
        %s365 = scalar_select %p364, %s20, 1
        %p366 = scmp.lt.s32.totalorder %s363, 19
        %s367 = scalar_select %p366, %s363, 19
        %s368 = smul.addr %s367, 3
        %s369 = smul.addr %s365, 60
        %s370 = sadd.s32 %s368, %s369
        %s371 = smul.addr %s370, 4
        %s372 = scalar_lea.vmem %s4, %s371
        %s373 = sadd.s32 %s21, 1
        %s374 = smul.u32 %s373, 8
        %s375 = sadd.s32 %s374, 3
      $region44: #{tpu_custom_call.1} parent=23 // pred_fallthru
        _
    $region24: #{tpu_custom_call.1} parent=5 // pred_fallthru
      _
    %p376 = scmp.le.s32.totalorder 1, %s13
    %p377 = scmp.lt.s32.totalorder %s13, 5
    %p378 = pnand %p376, %p377
    %p379 = pneg %p378
    // Predicated region
    $region45: #{tpu_custom_call.1} parent=5 // pred_check
      _
    $region46: #{tpu_custom_call.1} parent=5 // pred_check_branch
      %381 = sbr.rel (%p378) target = $region48
    $region47: #{tpu_custom_call.1} parent=5 // pred_region
      %s382 = ssub.s32 %s13, 1
      %s383 = smul.u32 8, %s23
      %s384 = ssub.s32 20, %s383
      %p385 = scmp.lt.s32.totalorder %s384, 8
      %s386 = scalar_select %p385, %s384, 8
      %s387 = smul.u32 64, %s386
      %s388 = smul.u32 %s387, 3
      %p389 = scmp.lt.s32.totalorder %s22, 1
      %s390 = scalar_select %p389, %s22, 1
      %p391 = scmp.lt.s32.totalorder %s383, 19
      %s392 = scalar_select %p391, %s383, 19
      %s393 = smul.addr %s392, 3
      %s394 = smul.addr %s390, 60
      %s395 = sadd.s32 %s393, %s394
      %s396 = smul.addr %s395, 4
      %s397 = scalar_lea.vmem %s0, %s396
      %p398 = pneg %p53
      %p399 = pneg %p50
      %s400 = sadd.s32 %s23, 1
      %s401 = smul.u32 %s400, 8
      %p402 = scmp.lt.s32.totalorder %s22, 1
      %s403 = scalar_select %p402, %s22, 1
      %p404 = scmp.lt.s32.totalorder %s401, 19
      %s405 = scalar_select %p404, %s401, 19
      %s406 = smul.addr %s405, 3
      %s407 = smul.addr %s403, 60
      %s408 = sadd.s32 %s406, %s407
      %s409 = smul.addr %s408, 4
      %s410 = scalar_lea.vmem %s1, %s409
      %p411 = pneg %p85
      %p412 = pneg %p82
      %s413 = sadd.s32 %s23, 1
      %s414 = smul.u32 %s413, 8
      %s415 = sadd.s32 %s414, 1
      %p416 = scmp.lt.s32.totalorder %s22, 1
      %s417 = scalar_select %p416, %s22, 1
      %p418 = scmp.lt.s32.totalorder %s415, 19
      %s419 = scalar_select %p418, %s415, 19
      %s420 = smul.addr %s419, 3
      %s421 = smul.addr %s417, 60
      %s422 = sadd.s32 %s420, %s421
      %s423 = smul.addr %s422, 4
      %s424 = scalar_lea.vmem %s2, %s423
      %p425 = pneg %p119
      %p426 = pneg %p116
      %s427 = sadd.s32 %s23, 1
      %s428 = smul.u32 %s427, 8
      %s429 = sadd.s32 %s428, 2
      %p430 = scmp.lt.s32.totalorder %s22, 1
      %s431 = scalar_select %p430, %s22, 1
      %p432 = scmp.lt.s32.totalorder %s429, 19
      %s433 = scalar_select %p432, %s429, 19
      %s434 = smul.addr %s433, 3
      %s435 = smul.addr %s431, 60
      %s436 = sadd.s32 %s434, %s435
      %s437 = smul.addr %s436, 4
      %s438 = scalar_lea.vmem %s3, %s437
      %p439 = pneg %p153
      %p440 = pneg %p150
      %s441 = sadd.s32 %s23, 1
      %s442 = smul.u32 %s441, 8
      %s443 = sadd.s32 %s442, 3
      %p444 = scmp.lt.s32.totalorder %s22, 1
      %s445 = scalar_select %p444, %s22, 1
      %p446 = scmp.lt.s32.totalorder %s443, 19
      %s447 = scalar_select %p446, %s443, 19
      %s448 = smul.addr %s447, 3
      %s449 = smul.addr %s445, 60
      %s450 = sadd.s32 %s448, %s449
      %s451 = smul.addr %s450, 4
      %s452 = scalar_lea.vmem %s4, %s451
      %p453 = pneg %p187
      %p454 = pneg %p184
      %p455 = pneg %p208
      %p456 = pneg %p205
      %p457 = pneg %p229
      %p458 = pneg %p226
      %p459 = pneg %p257
      %p460 = pneg %p254
      %p461 = scmp.lt.s32.totalorder %s22, 1
      %s462 = scalar_select %p461, %s22, 1
      %p463 = scmp.lt.s32.totalorder %s23, 1
      %s464 = scalar_select %p463, %s23, 1
      %s465 = smul.addr %s464, 16
      %s466 = smul.addr %s462, 32
      %s467 = sadd.s32 %s465, %s466
      %s468 = smul.addr %s467, 4
      %s469 = scalar_lea.vmem %s7, %s468
      %s470 = smul.u32 8, %s23
      %s471 = ssub.s32 20, %s470
      %p472 = scmp.lt.s32.totalorder %s471, 8
      %s473 = scalar_select %p472, %s471, 8
      %s474 = smul.u32 64, %s473
      %s475 = smul.u32 %s474, 3
      %p476 = scmp.lt.s32.totalorder %s22, 1
      %s477 = scalar_select %p476, %s22, 1
      %p478 = scmp.lt.s32.totalorder %s470, 19
      %s479 = scalar_select %p478, %s470, 19
      %s480 = smul.addr %s479, 3
      %s481 = smul.addr %s477, 60
      %s482 = sadd.s32 %s480, %s481
      %s483 = smul.addr %s482, 4
      %s484 = scalar_lea.vmem %s0, %s483
      %s485 = smul.u32 8, %s23
      %s486 = ssub.s32 20, %s485
      %p487 = scmp.lt.s32.totalorder %s486, 8
      %s488 = scalar_select %p487, %s486, 8
      %s489 = smul.u32 64, %s488
      %s490 = smul.u32 %s489, 3
      %s491 = sadd.s32 %s23, 1
      %s492 = smul.u32 %s491, 8
      %p493 = scmp.lt.s32.totalorder %s22, 1
      %s494 = scalar_select %p493, %s22, 1
      %p495 = scmp.lt.s32.totalorder %s492, 19
      %s496 = scalar_select %p495, %s492, 19
      %s497 = smul.addr %s496, 3
      %s498 = smul.addr %s494, 60
      %s499 = sadd.s32 %s497, %s498
      %s500 = smul.addr %s499, 4
      %s501 = scalar_lea.vmem %s1, %s500
      %s502 = sadd.s32 %s23, 1
      %s503 = smul.u32 %s502, 8
      %s504 = sadd.s32 %s23, 1
      %s505 = smul.u32 %s504, 8
      %s506 = sadd.s32 %s505, 1
      %p507 = scmp.lt.s32.totalorder %s22, 1
      %s508 = scalar_select %p507, %s22, 1
      %p509 = scmp.lt.s32.totalorder %s506, 19
      %s510 = scalar_select %p509, %s506, 19
      %s511 = smul.addr %s510, 3
      %s512 = smul.addr %s508, 60
      %s513 = sadd.s32 %s511, %s512
      %s514 = smul.addr %s513, 4
      %s515 = scalar_lea.vmem %s2, %s514
      %s516 = sadd.s32 %s23, 1
      %s517 = smul.u32 %s516, 8
      %s518 = sadd.s32 %s517, 1
      %s519 = sadd.s32 %s23, 1
      %s520 = smul.u32 %s519, 8
      %s521 = sadd.s32 %s520, 2
      %p522 = scmp.lt.s32.totalorder %s22, 1
      %s523 = scalar_select %p522, %s22, 1
      %p524 = scmp.lt.s32.totalorder %s521, 19
      %s525 = scalar_select %p524, %s521, 19
      %s526 = smul.addr %s525, 3
      %s527 = smul.addr %s523, 60
      %s528 = sadd.s32 %s526, %s527
      %s529 = smul.addr %s528, 4
      %s530 = scalar_lea.vmem %s3, %s529
      %s531 = sadd.s32 %s23, 1
      %s532 = smul.u32 %s531, 8
      %s533 = sadd.s32 %s532, 2
      %s534 = sadd.s32 %s23, 1
      %s535 = smul.u32 %s534, 8
      %s536 = sadd.s32 %s535, 3
      %p537 = scmp.lt.s32.totalorder %s22, 1
      %s538 = scalar_select %p537, %s22, 1
      %p539 = scmp.lt.s32.totalorder %s536, 19
      %s540 = scalar_select %p539, %s536, 19
      %s541 = smul.addr %s540, 3
      %s542 = smul.addr %s538, 60
      %s543 = sadd.s32 %s541, %s542
      %s544 = smul.addr %s543, 4
      %s545 = scalar_lea.vmem %s4, %s544
      %s546 = sadd.s32 %s23, 1
      %s547 = smul.u32 %s546, 8
      %s548 = sadd.s32 %s547, 3
      %p549 = scmp.lt.s32.totalorder %s22, 1
      %s550 = scalar_select %p549, %s22, 1
      %p551 = scmp.lt.s32.totalorder %s23, 1
      %s552 = scalar_select %p551, %s23, 1
      %s553 = smul.addr %s552, 16
      %s554 = smul.addr %s550, 32
      %s555 = sadd.s32 %s553, %s554
      %s556 = smul.addr %s555, 4
      %s557 = scalar_lea.vmem %s7, %s556
      %v559 = vld [vmem:[%s484] sm:$0xf]
      %v560 = vld [vmem:[%s484 + $0x4] sm:$0xf]
      %v561 = vld [vmem:[%s484 + $0x8] sm:$0x3]
      %vm562 = vcmask 19456
      %563 = vst.msk [vmem:[#allocation2] sm:$0xf] %vm562, %v559
      %564 = vst.msk [vmem:[#allocation2 + $0x4] sm:$0xf] %vm562, %v560
      %vm565 = vsmask.f32 3328
      %vm566 = vsmask.f32 7440
      %vm567 = vmor %vm565, %vm566
      %v569 = vshrl.u32 %v559, 16
      %v571 = vrot.slane %v569, 4
      %v572 = vshll.u32 %v559, 16
      %v574 = vrot.slane %v572, 5
      %v575 = vor.u32 %v571, %v574
      %v576 = vrot.slane %v575, 4
      %v578 = vshll.u32 %v560, 16
      %v580 = vrot.slane %v578, 5
      %v581 = vsel %vm567, %v576, %v580
      %v582 = vshrl.u32 %v560, 16
      %v584 = vrot.slane %v582, 4
      %v585 = vor.u32 %v584, %v580
      %v586 = vrot.slane %v585, 4
      %v588 = vshll.u32 %v561, 16
      %v590 = vrot.slane %v588, 5
      %v591 = vsel %vm567, %v586, %v590
      %592 = vrot.lane.b32.xlu0 %v581, 3
      %v593 = vpop.permute.xlu0 %592
      %594 = vrot.lane.b32.xlu0 %v591, 3
      %v595 = vpop.permute.xlu0 %594
      %vm598 = vcmask 44056
      %599 = vst.msk [vmem:[#allocation2] sm:$0xf] %vm598, %v593
      %600 = vst.msk [vmem:[#allocation2 + $0x4] sm:$0xf] %vm598, %v595
      %vm604 = vcmask 1042432
      %vm605 = vcmask 1046532
      %vm606 = vmor %vm604, %vm605
      %v607 = vrot.slane %v559, 5
      %v608 = vrot.slane %v607, 4
      %v609 = vrot.slane %v560, 5
      %v610 = vsel %vm606, %v608, %v609
      %v611 = vrot.slane %v609, 4
      %v612 = vrot.slane %v561, 5
      %v613 = vsel %vm606, %v611, %v612
      %614 = vrot.lane.b32.xlu0 %v610, 6
      %v615 = vpop.permute.xlu0 %614
      %616 = vrot.lane.b32.xlu0 %v613, 6
      %v617 = vpop.permute.xlu0 %616
      %vm620 = vcmask 68656
      %621 = vst.msk [vmem:[#allocation2] sm:$0xf] %vm620, %v615
      %622 = vst.msk [vmem:[#allocation2 + $0x4] sm:$0xf] %vm620, %v617
      %vm623 = vsmask.f32 2304
      %vm624 = vsmask.f32 6416
      %vm625 = vmor %vm623, %vm624
      %v626 = vrot.slane %v569, 5
      %v627 = vrot.slane %v572, 6
      %v628 = vor.u32 %v626, %v627
      %v629 = vrot.slane %v628, 4
      %v630 = vrot.slane %v582, 5
      %v631 = vrot.slane %v578, 6
      %v632 = vor.u32 %v630, %v631
      %v633 = vsel %vm625, %v629, %v632
      %v634 = vrot.slane %v632, 4
      %v635 = vshrl.u32 %v561, 16
      %v637 = vrot.slane %v635, 5
      %v638 = vrot.slane %v588, 6
      %v639 = vor.u32 %v637, %v638
      %v640 = vsel %vm625, %v634, %v639
      %641 = vrot.lane.b32.xlu0 %v633, 9
      %v642 = vpop.permute.xlu0 %641
      %643 = vrot.lane.b32.xlu0 %v640, 9
      %v644 = vpop.permute.xlu0 %643
      %vm647 = vcmask 93256
      %648 = vst.msk [vmem:[#allocation2] sm:$0xf] %vm647, %v642
      %649 = vst.msk [vmem:[#allocation2 + $0x4] sm:$0xf] %vm647, %v644
      %vm650 = vcmask 1041408
      %vm651 = vcmask 1045508
      %vm652 = vmor %vm650, %vm651
      %v653 = vrot.slane %v559, 6
      %v654 = vrot.slane %v653, 4
      %v655 = vrot.slane %v560, 6
      %v656 = vsel %vm652, %v654, %v655
      %v657 = vrot.slane %v655, 4
      %v658 = vrot.slane %v561, 6
      %v659 = vsel %vm652, %v657, %v658
      %660 = vrot.lane.b32.xlu0 %v656, 12
      %v661 = vpop.permute.xlu0 %660
      %662 = vrot.lane.b32.xlu0 %v659, 12
      %v663 = vpop.permute.xlu0 %662
      %vm666 = vcmask 117856
      %667 = vst.msk [vmem:[#allocation2] sm:$0xf] %vm666, %v661
      %668 = vst.msk [vmem:[#allocation2 + $0x4] sm:$0xf] %vm666, %v663
      %s669 = scalar_lea.vmem %s484, 12
      %v670 = vld [vmem:[%s669] sm:$0xf]
      %v671 = vld [vmem:[%s669 + $0x4] sm:$0xf]
      %v672 = vld [vmem:[%s669 + $0x8] sm:$0x3]
      %675 = vrot.lane.b32.xlu0 %v670, 15
      %v676 = vpop.permute.xlu0 %675
      %677 = vrot.lane.b32.xlu0 %v671, 15
      %v678 = vpop.permute.xlu0 %677
      %vm681 = vcmask 142456
      %682 = vst.msk [vmem:[#allocation2] sm:$0xf] %vm681, %v676
      %683 = vst.msk [vmem:[#allocation2 + $0x4] sm:$0xf] %vm681, %v678
      %v685 = vshrl.u32 %v670, 16
      %v687 = vrot.slane %v685, 4
      %v688 = vshll.u32 %v670, 16
      %v690 = vrot.slane %v688, 5
      %v691 = vor.u32 %v687, %v690
      %v692 = vrot.slane %v691, 4
      %v694 = vshll.u32 %v671, 16
      %v696 = vrot.slane %v694, 5
      %v697 = vsel %vm567, %v692, %v696
      %v698 = vshrl.u32 %v671, 16
      %v700 = vrot.slane %v698, 4
      %v701 = vor.u32 %v700, %v696
      %v702 = vrot.slane %v701, 4
      %v704 = vshll.u32 %v672, 16
      %v706 = vrot.slane %v704, 5
      %v707 = vsel %vm567, %v702, %v706
      %708 = vrot.lane.b32.xlu0 %v697, 18
      %v709 = vpop.permute.xlu0 %708
      %710 = vrot.lane.b32.xlu0 %v707, 18
      %v711 = vpop.permute.xlu0 %710
      %vm714 = vcmask 167056
      %715 = vst.msk [vmem:[#allocation2] sm:$0xf] %vm714, %v709
      %716 = vst.msk [vmem:[#allocation2 + $0x4] sm:$0xf] %vm714, %v711
      %v718 = vrot.slane %v670, 5
      %v719 = vrot.slane %v718, 4
      %v720 = vrot.slane %v671, 5
      %v721 = vsel %vm606, %v719, %v720
      %v722 = vrot.slane %v720, 4
      %v723 = vrot.slane %v672, 5
      %v724 = vsel %vm606, %v722, %v723
      %725 = vrot.lane.b32.xlu0 %v721, 21
      %v726 = vpop.permute.xlu0 %725
      %727 = vrot.lane.b32.xlu0 %v724, 21
      %v728 = vpop.permute.xlu0 %727
      %vm731 = vcmask 191656
      %732 = vst.msk [vmem:[#allocation2] sm:$0xf] %vm731, %v726
      %733 = vst.msk [vmem:[#allocation2 + $0x4] sm:$0xf] %vm731, %v728
      %v734 = vrot.slane %v685, 5
      %v735 = vrot.slane %v688, 6
      %v736 = vor.u32 %v734, %v735
      %v737 = vrot.slane %v736, 4
      %v738 = vrot.slane %v698, 5
      %v739 = vrot.slane %v694, 6
      %v740 = vor.u32 %v738, %v739
      %v741 = vsel %vm625, %v737, %v740
      %v742 = vrot.slane %v740, 4
      %v743 = vshrl.u32 %v672, 16
      %v745 = vrot.slane %v743, 5
      %v746 = vrot.slane %v704, 6
      %v747 = vor.u32 %v745, %v746
      %v748 = vsel %vm625, %v742, %v747
      %749 = vrot.lane.b32.xlu0 %v741, 24
      %v750 = vpop.permute.xlu0 %749
      %751 = vrot.lane.b32.xlu0 %v748, 24
      %v752 = vpop.permute.xlu0 %751
      %vm755 = vcmask 216256
      %756 = vst.msk [vmem:[#allocation2] sm:$0xf] %vm755, %v750
      %757 = vst.msk [vmem:[#allocation2 + $0x4] sm:$0xf] %vm755, %v752
      %v758 = vrot.slane %v670, 6
      %v759 = vrot.slane %v758, 4
      %v760 = vrot.slane %v671, 6
      %v761 = vsel %vm652, %v759, %v760
      %v762 = vrot.slane %v760, 4
      %v763 = vrot.slane %v672, 6
      %v764 = vsel %vm652, %v762, %v763
      %765 = vrot.lane.b32.xlu0 %v761, 27
      %v766 = vpop.permute.xlu0 %765
      %767 = vrot.lane.b32.xlu0 %v764, 27
      %v768 = vpop.permute.xlu0 %767
      %vm771 = vcmask 240856
      %772 = vst.msk [vmem:[#allocation2] sm:$0xf] %vm771, %v766
      %773 = vst.msk [vmem:[#allocation2 + $0x4] sm:$0xf] %vm771, %v768
      %s774 = scalar_lea.vmem %s484, 24
      %v775 = vld [vmem:[%s774] sm:$0xf]
      %v776 = vld [vmem:[%s774 + $0x4] sm:$0xf]
      %v777 = vld [vmem:[%s774 + $0x8] sm:$0x3]
      %780 = vrot.lane.b32.xlu0 %v775, 30
      %v781 = vpop.permute.xlu0 %780
      %782 = vrot.lane.b32.xlu0 %v776, 30
      %v783 = vpop.permute.xlu0 %782
      %vm786 = vcmask 265456
      %787 = vst.msk [vmem:[#allocation2] sm:$0xf] %vm786, %v781
      %788 = vst.msk [vmem:[#allocation2 + $0x4] sm:$0xf] %vm786, %v783
      %v790 = vshrl.u32 %v775, 16
      %v792 = vrot.slane %v790, 4
      %v793 = vshll.u32 %v775, 16
      %v795 = vrot.slane %v793, 5
      %v796 = vor.u32 %v792, %v795
      %v797 = vrot.slane %v796, 4
      %v799 = vshll.u32 %v776, 16
      %v801 = vrot.slane %v799, 5
      %v802 = vsel %vm567, %v797, %v801
      %v803 = vshrl.u32 %v776, 16
      %v805 = vrot.slane %v803, 4
      %v806 = vor.u32 %v805, %v801
      %v807 = vrot.slane %v806, 4
      %v809 = vshll.u32 %v777, 16
      %v811 = vrot.slane %v809, 5
      %v812 = vsel %vm567, %v807, %v811
      %813 = vrot.lane.b32.xlu0 %v802, 33
      %v814 = vpop.permute.xlu0 %813
      %815 = vrot.lane.b32.xlu0 %v812, 33
      %v816 = vpop.permute.xlu0 %815
      %vm819 = vcmask 290056
      %820 = vst.msk [vmem:[#allocation2] sm:$0xf] %vm819, %v814
      %821 = vst.msk [vmem:[#allocation2 + $0x4] sm:$0xf] %vm819, %v816
      %v823 = vrot.slane %v775, 5
      %v824 = vrot.slane %v823, 4
      %v825 = vrot.slane %v776, 5
      %v826 = vsel %vm606, %v824, %v825
      %v827 = vrot.slane %v825, 4
      %v828 = vrot.slane %v777, 5
      %v829 = vsel %vm606, %v827, %v828
      %830 = vrot.lane.b32.xlu0 %v826, 36
      %v831 = vpop.permute.xlu0 %830
      %832 = vrot.lane.b32.xlu0 %v829, 36
      %v833 = vpop.permute.xlu0 %832
      %vm836 = vcmask 314656
      %837 = vst.msk [vmem:[#allocation2] sm:$0xf] %vm836, %v831
      %838 = vst.msk [vmem:[#allocation2 + $0x4] sm:$0xf] %vm836, %v833
      %v839 = vrot.slane %v790, 5
      %v840 = vrot.slane %v793, 6
      %v841 = vor.u32 %v839, %v840
      %v842 = vrot.slane %v841, 4
      %v843 = vrot.slane %v803, 5
      %v844 = vrot.slane %v799, 6
      %v845 = vor.u32 %v843, %v844
      %v846 = vsel %vm625, %v842, %v845
      %v847 = vrot.slane %v845, 4
      %v848 = vshrl.u32 %v777, 16
      %v850 = vrot.slane %v848, 5
      %v851 = vrot.slane %v809, 6
      %v852 = vor.u32 %v850, %v851
      %v853 = vsel %vm625, %v847, %v852
      %854 = vrot.lane.b32.xlu0 %v846, 39
      %v855 = vpop.permute.xlu0 %854
      %856 = vrot.lane.b32.xlu0 %v853, 39
      %v857 = vpop.permute.xlu0 %856
      %vm860 = vcmask 339256
      %861 = vst.msk [vmem:[#allocation2] sm:$0xf] %vm860, %v855
      %862 = vst.msk [vmem:[#allocation2 + $0x4] sm:$0xf] %vm860, %v857
      %v863 = vrot.slane %v775, 6
      %v864 = vrot.slane %v863, 4
      %v865 = vrot.slane %v776, 6
      %v866 = vsel %vm652, %v864, %v865
      %v867 = vrot.slane %v865, 4
      %v868 = vrot.slane %v777, 6
      %v869 = vsel %vm652, %v867, %v868
      %870 = vrot.lane.b32.xlu0 %v866, 42
      %v871 = vpop.permute.xlu0 %870
      %872 = vrot.lane.b32.xlu0 %v869, 42
      %v873 = vpop.permute.xlu0 %872
      %vm876 = vcmask 363856
      %877 = vst.msk [vmem:[#allocation2] sm:$0xf] %vm876, %v871
      %878 = vst.msk [vmem:[#allocation2 + $0x4] sm:$0xf] %vm876, %v873
      %s879 = scalar_lea.vmem %s484, 36
      %v880 = vld [vmem:[%s879] sm:$0xf]
      %v881 = vld [vmem:[%s879 + $0x4] sm:$0xf]
      %v882 = vld [vmem:[%s879 + $0x8] sm:$0x3]
      %885 = vrot.lane.b32.xlu0 %v880, 45
      %v886 = vpop.permute.xlu0 %885
      %887 = vrot.lane.b32.xlu0 %v881, 45
      %v888 = vpop.permute.xlu0 %887
      %vm891 = vcmask 388456
      %892 = vst.msk [vmem:[#allocation2] sm:$0xf] %vm891, %v886
      %893 = vst.msk [vmem:[#allocation2 + $0x4] sm:$0xf] %vm891, %v888
      %v895 = vshrl.u32 %v880, 16
      %v897 = vrot.slane %v895, 4
      %v898 = vshll.u32 %v880, 16
      %v900 = vrot.slane %v898, 5
      %v901 = vor.u32 %v897, %v900
      %v902 = vrot.slane %v901, 4
      %v904 = vshll.u32 %v881, 16
      %v906 = vrot.slane %v904, 5
      %v907 = vsel %vm567, %v902, %v906
      %v908 = vshrl.u32 %v881, 16
      %v910 = vrot.slane %v908, 4
      %v911 = vor.u32 %v910, %v906
      %v912 = vrot.slane %v911, 4
      %v914 = vshll.u32 %v882, 16
      %v916 = vrot.slane %v914, 5
      %v917 = vsel %vm567, %v912, %v916
      %918 = vrot.lane.b32.xlu0 %v907, 48
      %v919 = vpop.permute.xlu0 %918
      %920 = vrot.lane.b32.xlu0 %v917, 48
      %v921 = vpop.permute.xlu0 %920
      %vm924 = vcmask 413056
      %925 = vst.msk [vmem:[#allocation2] sm:$0xf] %vm924, %v919
      %926 = vst.msk [vmem:[#allocation2 + $0x4] sm:$0xf] %vm924, %v921
      %v928 = vrot.slane %v880, 5
      %v929 = vrot.slane %v928, 4
      %v930 = vrot.slane %v881, 5
      %v931 = vsel %vm606, %v929, %v930
      %v932 = vrot.slane %v930, 4
      %v933 = vrot.slane %v882, 5
      %v934 = vsel %vm606, %v932, %v933
      %935 = vrot.lane.b32.xlu0 %v931, 51
      %v936 = vpop.permute.xlu0 %935
      %937 = vrot.lane.b32.xlu0 %v934, 51
      %v938 = vpop.permute.xlu0 %937
      %vm941 = vcmask 437656
      %942 = vst.msk [vmem:[#allocation2] sm:$0xf] %vm941, %v936
      %943 = vst.msk [vmem:[#allocation2 + $0x4] sm:$0xf] %vm941, %v938
      %v944 = vrot.slane %v895, 5
      %v945 = vrot.slane %v898, 6
      %v946 = vor.u32 %v944, %v945
      %v947 = vrot.slane %v946, 4
      %v948 = vrot.slane %v908, 5
      %v949 = vrot.slane %v904, 6
      %v950 = vor.u32 %v948, %v949
      %v951 = vsel %vm625, %v947, %v950
      %v952 = vrot.slane %v950, 4
      %v953 = vshrl.u32 %v882, 16
      %v955 = vrot.slane %v953, 5
      %v956 = vrot.slane %v914, 6
      %v957 = vor.u32 %v955, %v956
      %v958 = vsel %vm625, %v952, %v957
      %959 = vrot.lane.b32.xlu0 %v951, 54
      %v960 = vpop.permute.xlu0 %959
      %961 = vrot.lane.b32.xlu0 %v958, 54
      %v962 = vpop.permute.xlu0 %961
      %vm965 = vcmask 462256
      %966 = vst.msk [vmem:[#allocation2] sm:$0xf] %vm965, %v960
      %967 = vst.msk [vmem:[#allocation2 + $0x4] sm:$0xf] %vm965, %v962
      %v968 = vrot.slane %v880, 6
      %v969 = vrot.slane %v968, 4
      %v970 = vrot.slane %v881, 6
      %v971 = vsel %vm652, %v969, %v970
      %v972 = vrot.slane %v970, 4
      %v973 = vrot.slane %v882, 6
      %v974 = vsel %vm652, %v972, %v973
      %975 = vrot.lane.b32.xlu0 %v971, 57
      %v976 = vpop.permute.xlu0 %975
      %977 = vrot.lane.b32.xlu0 %v974, 57
      %v978 = vpop.permute.xlu0 %977
      %vm981 = vcmask 486856
      %982 = vst.msk [vmem:[#allocation2] sm:$0xf] %vm981, %v976
      %983 = vst.msk [vmem:[#allocation2 + $0x4] sm:$0xf] %vm981, %v978
      %s984 = scalar_lea.vmem %s484, 48
      %v985 = vld [vmem:[%s984] sm:$0xf]
      %v986 = vld [vmem:[%s984 + $0x4] sm:$0xf]
      %v987 = vld [vmem:[%s984 + $0x8] sm:$0x3]
      %990 = vrot.lane.b32.xlu0 %v985, 60
      %v991 = vpop.permute.xlu0 %990
      %992 = vrot.lane.b32.xlu0 %v986, 60
      %v993 = vpop.permute.xlu0 %992
      %vm996 = vcmask 511456
      %997 = vst.msk [vmem:[#allocation2] sm:$0xf] %vm996, %v991
      %998 = vst.msk [vmem:[#allocation2 + $0x4] sm:$0xf] %vm996, %v993
      %v1000 = vshrl.u32 %v985, 16
      %v1002 = vrot.slane %v1000, 4
      %v1003 = vshll.u32 %v985, 16
      %v1005 = vrot.slane %v1003, 5
      %v1006 = vor.u32 %v1002, %v1005
      %v1007 = vrot.slane %v1006, 4
      %v1009 = vshll.u32 %v986, 16
      %v1011 = vrot.slane %v1009, 5
      %v1012 = vsel %vm567, %v1007, %v1011
      %v1013 = vshrl.u32 %v986, 16
      %v1015 = vrot.slane %v1013, 4
      %v1016 = vor.u32 %v1015, %v1011
      %v1017 = vrot.slane %v1016, 4
      %v1019 = vshll.u32 %v987, 16
      %v1021 = vrot.slane %v1019, 5
      %v1022 = vsel %vm567, %v1017, %v1021
      %1023 = vrot.lane.b32.xlu0 %v1012, 63
      %v1024 = vpop.permute.xlu0 %1023
      %1025 = vrot.lane.b32.xlu0 %v1022, 63
      %v1026 = vpop.permute.xlu0 %1025
      %vm1029 = vcmask 536056
      %1030 = vst.msk [vmem:[#allocation2] sm:$0xf] %vm1029, %v1024
      %1031 = vst.msk [vmem:[#allocation2 + $0x4] sm:$0xf] %vm1029, %v1026
      %v1033 = vrot.slane %v985, 5
      %v1034 = vrot.slane %v1033, 4
      %v1035 = vrot.slane %v986, 5
      %v1036 = vsel %vm606, %v1034, %v1035
      %v1037 = vrot.slane %v1035, 4
      %v1038 = vrot.slane %v987, 5
      %v1039 = vsel %vm606, %v1037, %v1038
      %1040 = vrot.lane.b32.xlu0 %v1036, 66
      %v1041 = vpop.permute.xlu0 %1040
      %1042 = vrot.lane.b32.xlu0 %v1039, 66
      %v1043 = vpop.permute.xlu0 %1042
      %vm1046 = vcmask 560656
      %1047 = vst.msk [vmem:[#allocation2] sm:$0xf] %vm1046, %v1041
      %1048 = vst.msk [vmem:[#allocation2 + $0x4] sm:$0xf] %vm1046, %v1043
      %v1049 = vrot.slane %v1000, 5
      %v1050 = vrot.slane %v1003, 6
      %v1051 = vor.u32 %v1049, %v1050
      %v1052 = vrot.slane %v1051, 4
      %v1053 = vrot.slane %v1013, 5
      %v1054 = vrot.slane %v1009, 6
      %v1055 = vor.u32 %v1053, %v1054
      %v1056 = vsel %vm625, %v1052, %v1055
      %v1057 = vrot.slane %v1055, 4
      %v1058 = vshrl.u32 %v987, 16
      %v1060 = vrot.slane %v1058, 5
      %v1061 = vrot.slane %v1019, 6
      %v1062 = vor.u32 %v1060, %v1061
      %v1063 = vsel %vm625, %v1057, %v1062
      %1064 = vrot.lane.b32.xlu0 %v1056, 69
      %v1065 = vpop.permute.xlu0 %1064
      %1066 = vrot.lane.b32.xlu0 %v1063, 69
      %v1067 = vpop.permute.xlu0 %1066
      %vm1070 = vcmask 585256
      %1071 = vst.msk [vmem:[#allocation2] sm:$0xf] %vm1070, %v1065
      %1072 = vst.msk [vmem:[#allocation2 + $0x4] sm:$0xf] %vm1070, %v1067
      %v1073 = vrot.slane %v985, 6
      %v1074 = vrot.slane %v1073, 4
      %v1075 = vrot.slane %v986, 6
      %v1076 = vsel %vm652, %v1074, %v1075
      %v1077 = vrot.slane %v1075, 4
      %v1078 = vrot.slane %v987, 6
      %v1079 = vsel %vm652, %v1077, %v1078
      %1080 = vrot.lane.b32.xlu0 %v1076, 72
      %v1081 = vpop.permute.xlu0 %1080
      %1082 = vrot.lane.b32.xlu0 %v1079, 72
      %v1083 = vpop.permute.xlu0 %1082
      %vm1086 = vcmask 609856
      %1087 = vst.msk [vmem:[#allocation2] sm:$0xf] %vm1086, %v1081
      %1088 = vst.msk [vmem:[#allocation2 + $0x4] sm:$0xf] %vm1086, %v1083
      %v1089 = vld [vmem:[%s669] sm:$0xf]
      %v1090 = vld [vmem:[%s669 + $0x4] sm:$0xf]
      %v1091 = vld [vmem:[%s669 + $0x8] sm:$0x3]
      %1092 = vst.msk [vmem:[#allocation2 + $0x8] sm:$0xf] %vm562, %v1089
      %1093 = vst.msk [vmem:[#allocation2 + $0xc] sm:$0xf] %vm562, %v1090
      %v1095 = vshrl.u32 %v1089, 16
      %v1097 = vrot.slane %v1095, 4
      %v1098 = vshll.u32 %v1089, 16
      %v1100 = vrot.slane %v1098, 5
      %v1101 = vor.u32 %v1097, %v1100
      %v1102 = vrot.slane %v1101, 4
      %v1104 = vshll.u32 %v1090, 16
      %v1106 = vrot.slane %v1104, 5
      %v1107 = vsel %vm567, %v1102, %v1106
      %v1108 = vshrl.u32 %v1090, 16
      %v1110 = vrot.slane %v1108, 4
      %v1111 = vor.u32 %v1110, %v1106
      %v1112 = vrot.slane %v1111, 4
      %v1114 = vshll.u32 %v1091, 16
      %v1116 = vrot.slane %v1114, 5
      %v1117 = vsel %vm567, %v1112, %v1116
      %1118 = vrot.lane.b32.xlu0 %v1107, 3
      %v1119 = vpop.permute.xlu0 %1118
      %1120 = vrot.lane.b32.xlu0 %v1117, 3
      %v1121 = vpop.permute.xlu0 %1120
      %1124 = vst.msk [vmem:[#allocation2 + $0x8] sm:$0xf] %vm598, %v1119
      %1125 = vst.msk [vmem:[#allocation2 + $0xc] sm:$0xf] %vm598, %v1121
      %v1129 = vrot.slane %v1089, 5
      %v1130 = vrot.slane %v1129, 4
      %v1131 = vrot.slane %v1090, 5
      %v1132 = vsel %vm606, %v1130, %v1131
      %v1133 = vrot.slane %v1131, 4
      %v1134 = vrot.slane %v1091, 5
      %v1135 = vsel %vm606, %v1133, %v1134
      %1136 = vrot.lane.b32.xlu0 %v1132, 6
      %v1137 = vpop.permute.xlu0 %1136
      %1138 = vrot.lane.b32.xlu0 %v1135, 6
      %v1139 = vpop.permute.xlu0 %1138
      %1142 = vst.msk [vmem:[#allocation2 + $0x8] sm:$0xf] %vm620, %v1137
      %1143 = vst.msk [vmem:[#allocation2 + $0xc] sm:$0xf] %vm620, %v1139
      %v1144 = vrot.slane %v1095, 5
      %v1145 = vrot.slane %v1098, 6
      %v1146 = vor.u32 %v1144, %v1145
      %v1147 = vrot.slane %v1146, 4
      %v1148 = vrot.slane %v1108, 5
      %v1149 = vrot.slane %v1104, 6
      %v1150 = vor.u32 %v1148, %v1149
      %v1151 = vsel %vm625, %v1147, %v1150
      %v1152 = vrot.slane %v1150, 4
      %v1153 = vshrl.u32 %v1091, 16
      %v1155 = vrot.slane %v1153, 5
      %v1156 = vrot.slane %v1114, 6
      %v1157 = vor.u32 %v1155, %v1156
      %v1158 = vsel %vm625, %v1152, %v1157
      %1159 = vrot.lane.b32.xlu0 %v1151, 9
      %v1160 = vpop.permute.xlu0 %1159
      %1161 = vrot.lane.b32.xlu0 %v1158, 9
      %v1162 = vpop.permute.xlu0 %1161
      %1165 = vst.msk [vmem:[#allocation2 + $0x8] sm:$0xf] %vm647, %v1160
      %1166 = vst.msk [vmem:[#allocation2 + $0xc] sm:$0xf] %vm647, %v1162
      %v1167 = vrot.slane %v1089, 6
      %v1168 = vrot.slane %v1167, 4
      %v1169 = vrot.slane %v1090, 6
      %v1170 = vsel %vm652, %v1168, %v1169
      %v1171 = vrot.slane %v1169, 4
      %v1172 = vrot.slane %v1091, 6
      %v1173 = vsel %vm652, %v1171, %v1172
      %1174 = vrot.lane.b32.xlu0 %v1170, 12
      %v1175 = vpop.permute.xlu0 %1174
      %1176 = vrot.lane.b32.xlu0 %v1173, 12
      %v1177 = vpop.permute.xlu0 %1176
      %1180 = vst.msk [vmem:[#allocation2 + $0x8] sm:$0xf] %vm666, %v1175
      %1181 = vst.msk [vmem:[#allocation2 + $0xc] sm:$0xf] %vm666, %v1177
      %v1182 = vld [vmem:[%s774] sm:$0xf]
      %v1183 = vld [vmem:[%s774 + $0x4] sm:$0xf]
      %v1184 = vld [vmem:[%s774 + $0x8] sm:$0x3]
      %1187 = vrot.lane.b32.xlu0 %v1182, 15
      %v1188 = vpop.permute.xlu0 %1187
      %1189 = vrot.lane.b32.xlu0 %v1183, 15
      %v1190 = vpop.permute.xlu0 %1189
      %1193 = vst.msk [vmem:[#allocation2 + $0x8] sm:$0xf] %vm681, %v1188
      %1194 = vst.msk [vmem:[#allocation2 + $0xc] sm:$0xf] %vm681, %v1190
      %v1196 = vshrl.u32 %v1182, 16
      %v1198 = vrot.slane %v1196, 4
      %v1199 = vshll.u32 %v1182, 16
      %v1201 = vrot.slane %v1199, 5
      %v1202 = vor.u32 %v1198, %v1201
      %v1203 = vrot.slane %v1202, 4
      %v1205 = vshll.u32 %v1183, 16
      %v1207 = vrot.slane %v1205, 5
      %v1208 = vsel %vm567, %v1203, %v1207
      %v1209 = vshrl.u32 %v1183, 16
      %v1211 = vrot.slane %v1209, 4
      %v1212 = vor.u32 %v1211, %v1207
      %v1213 = vrot.slane %v1212, 4
      %v1215 = vshll.u32 %v1184, 16
      %v1217 = vrot.slane %v1215, 5
      %v1218 = vsel %vm567, %v1213, %v1217
      %1219 = vrot.lane.b32.xlu0 %v1208, 18
      %v1220 = vpop.permute.xlu0 %1219
      %1221 = vrot.lane.b32.xlu0 %v1218, 18
      %v1222 = vpop.permute.xlu0 %1221
      %1225 = vst.msk [vmem:[#allocation2 + $0x8] sm:$0xf] %vm714, %v1220
      %1226 = vst.msk [vmem:[#allocation2 + $0xc] sm:$0xf] %vm714, %v1222
      %v1228 = vrot.slane %v1182, 5
      %v1229 = vrot.slane %v1228, 4
      %v1230 = vrot.slane %v1183, 5
      %v1231 = vsel %vm606, %v1229, %v1230
      %v1232 = vrot.slane %v1230, 4
      %v1233 = vrot.slane %v1184, 5
      %v1234 = vsel %vm606, %v1232, %v1233
      %1235 = vrot.lane.b32.xlu0 %v1231, 21
      %v1236 = vpop.permute.xlu0 %1235
      %1237 = vrot.lane.b32.xlu0 %v1234, 21
      %v1238 = vpop.permute.xlu0 %1237
      %1241 = vst.msk [vmem:[#allocation2 + $0x8] sm:$0xf] %vm731, %v1236
      %1242 = vst.msk [vmem:[#allocation2 + $0xc] sm:$0xf] %vm731, %v1238
      %v1243 = vrot.slane %v1196, 5
      %v1244 = vrot.slane %v1199, 6
      %v1245 = vor.u32 %v1243, %v1244
      %v1246 = vrot.slane %v1245, 4
      %v1247 = vrot.slane %v1209, 5
      %v1248 = vrot.slane %v1205, 6
      %v1249 = vor.u32 %v1247, %v1248
      %v1250 = vsel %vm625, %v1246, %v1249
      %v1251 = vrot.slane %v1249, 4
      %v1252 = vshrl.u32 %v1184, 16
      %v1254 = vrot.slane %v1252, 5
      %v1255 = vrot.slane %v1215, 6
      %v1256 = vor.u32 %v1254, %v1255
      %v1257 = vsel %vm625, %v1251, %v1256
      %1258 = vrot.lane.b32.xlu0 %v1250, 24
      %v1259 = vpop.permute.xlu0 %1258
      %1260 = vrot.lane.b32.xlu0 %v1257, 24
      %v1261 = vpop.permute.xlu0 %1260
      %1264 = vst.msk [vmem:[#allocation2 + $0x8] sm:$0xf] %vm755, %v1259
      %1265 = vst.msk [vmem:[#allocation2 + $0xc] sm:$0xf] %vm755, %v1261
      %v1266 = vrot.slane %v1182, 6
      %v1267 = vrot.slane %v1266, 4
      %v1268 = vrot.slane %v1183, 6
      %v1269 = vsel %vm652, %v1267, %v1268
      %v1270 = vrot.slane %v1268, 4
      %v1271 = vrot.slane %v1184, 6
      %v1272 = vsel %vm652, %v1270, %v1271
      %1273 = vrot.lane.b32.xlu0 %v1269, 27
      %v1274 = vpop.permute.xlu0 %1273
      %1275 = vrot.lane.b32.xlu0 %v1272, 27
      %v1276 = vpop.permute.xlu0 %1275
      %1279 = vst.msk [vmem:[#allocation2 + $0x8] sm:$0xf] %vm771, %v1274
      %1280 = vst.msk [vmem:[#allocation2 + $0xc] sm:$0xf] %vm771, %v1276
      %v1281 = vld [vmem:[%s879] sm:$0xf]
      %v1282 = vld [vmem:[%s879 + $0x4] sm:$0xf]
      %v1283 = vld [vmem:[%s879 + $0x8] sm:$0x3]
      %1286 = vrot.lane.b32.xlu0 %v1281, 30
      %v1287 = vpop.permute.xlu0 %1286
      %1288 = vrot.lane.b32.xlu0 %v1282, 30
      %v1289 = vpop.permute.xlu0 %1288
      %1292 = vst.msk [vmem:[#allocation2 + $0x8] sm:$0xf] %vm786, %v1287
      %1293 = vst.msk [vmem:[#allocation2 + $0xc] sm:$0xf] %vm786, %v1289
      %v1295 = vshrl.u32 %v1281, 16
      %v1297 = vrot.slane %v1295, 4
      %v1298 = vshll.u32 %v1281, 16
      %v1300 = vrot.slane %v1298, 5
      %v1301 = vor.u32 %v1297, %v1300
      %v1302 = vrot.slane %v1301, 4
      %v1304 = vshll.u32 %v1282, 16
      %v1306 = vrot.slane %v1304, 5
      %v1307 = vsel %vm567, %v1302, %v1306
      %v1308 = vshrl.u32 %v1282, 16
      %v1310 = vrot.slane %v1308, 4
      %v1311 = vor.u32 %v1310, %v1306
      %v1312 = vrot.slane %v1311, 4
      %v1314 = vshll.u32 %v1283, 16
      %v1316 = vrot.slane %v1314, 5
      %v1317 = vsel %vm567, %v1312, %v1316
      %1318 = vrot.lane.b32.xlu0 %v1307, 33
      %v1319 = vpop.permute.xlu0 %1318
      %1320 = vrot.lane.b32.xlu0 %v1317, 33
      %v1321 = vpop.permute.xlu0 %1320
      %1324 = vst.msk [vmem:[#allocation2 + $0x8] sm:$0xf] %vm819, %v1319
      %1325 = vst.msk [vmem:[#allocation2 + $0xc] sm:$0xf] %vm819, %v1321
      %v1327 = vrot.slane %v1281, 5
      %v1328 = vrot.slane %v1327, 4
      %v1329 = vrot.slane %v1282, 5
      %v1330 = vsel %vm606, %v1328, %v1329
      %v1331 = vrot.slane %v1329, 4
      %v1332 = vrot.slane %v1283, 5
      %v1333 = vsel %vm606, %v1331, %v1332
      %1334 = vrot.lane.b32.xlu0 %v1330, 36
      %v1335 = vpop.permute.xlu0 %1334
      %1336 = vrot.lane.b32.xlu0 %v1333, 36
      %v1337 = vpop.permute.xlu0 %1336
      %1340 = vst.msk [vmem:[#allocation2 + $0x8] sm:$0xf] %vm836, %v1335
      %1341 = vst.msk [vmem:[#allocation2 + $0xc] sm:$0xf] %vm836, %v1337
      %v1342 = vrot.slane %v1295, 5
      %v1343 = vrot.slane %v1298, 6
      %v1344 = vor.u32 %v1342, %v1343
      %v1345 = vrot.slane %v1344, 4
      %v1346 = vrot.slane %v1308, 5
      %v1347 = vrot.slane %v1304, 6
      %v1348 = vor.u32 %v1346, %v1347
      %v1349 = vsel %vm625, %v1345, %v1348
      %v1350 = vrot.slane %v1348, 4
      %v1351 = vshrl.u32 %v1283, 16
      %v1353 = vrot.slane %v1351, 5
      %v1354 = vrot.slane %v1314, 6
      %v1355 = vor.u32 %v1353, %v1354
      %v1356 = vsel %vm625, %v1350, %v1355
      %1357 = vrot.lane.b32.xlu0 %v1349, 39
      %v1358 = vpop.permute.xlu0 %1357
      %1359 = vrot.lane.b32.xlu0 %v1356, 39
      %v1360 = vpop.permute.xlu0 %1359
      %1363 = vst.msk [vmem:[#allocation2 + $0x8] sm:$0xf] %vm860, %v1358
      %1364 = vst.msk [vmem:[#allocation2 + $0xc] sm:$0xf] %vm860, %v1360
      %v1365 = vrot.slane %v1281, 6
      %v1366 = vrot.slane %v1365, 4
      %v1367 = vrot.slane %v1282, 6
      %v1368 = vsel %vm652, %v1366, %v1367
      %v1369 = vrot.slane %v1367, 4
      %v1370 = vrot.slane %v1283, 6
      %v1371 = vsel %vm652, %v1369, %v1370
      %1372 = vrot.lane.b32.xlu0 %v1368, 42
      %v1373 = vpop.permute.xlu0 %1372
      %1374 = vrot.lane.b32.xlu0 %v1371, 42
      %v1375 = vpop.permute.xlu0 %1374
      %1378 = vst.msk [vmem:[#allocation2 + $0x8] sm:$0xf] %vm876, %v1373
      %1379 = vst.msk [vmem:[#allocation2 + $0xc] sm:$0xf] %vm876, %v1375
      %v1380 = vld [vmem:[%s984] sm:$0xf]
      %v1381 = vld [vmem:[%s984 + $0x4] sm:$0xf]
      %v1382 = vld [vmem:[%s984 + $0x8] sm:$0x3]
      %1385 = vrot.lane.b32.xlu0 %v1380, 45
      %v1386 = vpop.permute.xlu0 %1385
      %1387 = vrot.lane.b32.xlu0 %v1381, 45
      %v1388 = vpop.permute.xlu0 %1387
      %1391 = vst.msk [vmem:[#allocation2 + $0x8] sm:$0xf] %vm891, %v1386
      %1392 = vst.msk [vmem:[#allocation2 + $0xc] sm:$0xf] %vm891, %v1388
      %v1394 = vshrl.u32 %v1380, 16
      %v1396 = vrot.slane %v1394, 4
      %v1397 = vshll.u32 %v1380, 16
      %v1399 = vrot.slane %v1397, 5
      %v1400 = vor.u32 %v1396, %v1399
      %v1401 = vrot.slane %v1400, 4
      %v1403 = vshll.u32 %v1381, 16
      %v1405 = vrot.slane %v1403, 5
      %v1406 = vsel %vm567, %v1401, %v1405
      %v1407 = vshrl.u32 %v1381, 16
      %v1409 = vrot.slane %v1407, 4
      %v1410 = vor.u32 %v1409, %v1405
      %v1411 = vrot.slane %v1410, 4
      %v1413 = vshll.u32 %v1382, 16
      %v1415 = vrot.slane %v1413, 5
      %v1416 = vsel %vm567, %v1411, %v1415
      %1417 = vrot.lane.b32.xlu0 %v1406, 48
      %v1418 = vpop.permute.xlu0 %1417
      %1419 = vrot.lane.b32.xlu0 %v1416, 48
      %v1420 = vpop.permute.xlu0 %1419
      %1423 = vst.msk [vmem:[#allocation2 + $0x8] sm:$0xf] %vm924, %v1418
      %1424 = vst.msk [vmem:[#allocation2 + $0xc] sm:$0xf] %vm924, %v1420
      %v1426 = vrot.slane %v1380, 5
      %v1427 = vrot.slane %v1426, 4
      %v1428 = vrot.slane %v1381, 5
      %v1429 = vsel %vm606, %v1427, %v1428
      %v1430 = vrot.slane %v1428, 4
      %v1431 = vrot.slane %v1382, 5
      %v1432 = vsel %vm606, %v1430, %v1431
      %1433 = vrot.lane.b32.xlu0 %v1429, 51
      %v1434 = vpop.permute.xlu0 %1433
      %1435 = vrot.lane.b32.xlu0 %v1432, 51
      %v1436 = vpop.permute.xlu0 %1435
      %1439 = vst.msk [vmem:[#allocation2 + $0x8] sm:$0xf] %vm941, %v1434
      %1440 = vst.msk [vmem:[#allocation2 + $0xc] sm:$0xf] %vm941, %v1436
      %v1441 = vrot.slane %v1394, 5
      %v1442 = vrot.slane %v1397, 6
      %v1443 = vor.u32 %v1441, %v1442
      %v1444 = vrot.slane %v1443, 4
      %v1445 = vrot.slane %v1407, 5
      %v1446 = vrot.slane %v1403, 6
      %v1447 = vor.u32 %v1445, %v1446
      %v1448 = vsel %vm625, %v1444, %v1447
      %v1449 = vrot.slane %v1447, 4
      %v1450 = vshrl.u32 %v1382, 16
      %v1452 = vrot.slane %v1450, 5
      %v1453 = vrot.slane %v1413, 6
      %v1454 = vor.u32 %v1452, %v1453
      %v1455 = vsel %vm625, %v1449, %v1454
      %1456 = vrot.lane.b32.xlu0 %v1448, 54
      %v1457 = vpop.permute.xlu0 %1456
      %1458 = vrot.lane.b32.xlu0 %v1455, 54
      %v1459 = vpop.permute.xlu0 %1458
      %1462 = vst.msk [vmem:[#allocation2 + $0x8] sm:$0xf] %vm965, %v1457
      %1463 = vst.msk [vmem:[#allocation2 + $0xc] sm:$0xf] %vm965, %v1459
      %v1464 = vrot.slane %v1380, 6
      %v1465 = vrot.slane %v1464, 4
      %v1466 = vrot.slane %v1381, 6
      %v1467 = vsel %vm652, %v1465, %v1466
      %v1468 = vrot.slane %v1466, 4
      %v1469 = vrot.slane %v1382, 6
      %v1470 = vsel %vm652, %v1468, %v1469
      %1471 = vrot.lane.b32.xlu0 %v1467, 57
      %v1472 = vpop.permute.xlu0 %1471
      %1473 = vrot.lane.b32.xlu0 %v1470, 57
      %v1474 = vpop.permute.xlu0 %1473
      %1477 = vst.msk [vmem:[#allocation2 + $0x8] sm:$0xf] %vm981, %v1472
      %1478 = vst.msk [vmem:[#allocation2 + $0xc] sm:$0xf] %vm981, %v1474
      %s1479 = scalar_lea.vmem %s484, 60
      %v1480 = vld [vmem:[%s1479] sm:$0xf]
      %v1481 = vld [vmem:[%s1479 + $0x4] sm:$0xf]
      %v1482 = vld [vmem:[%s1479 + $0x8] sm:$0x3]
      %1485 = vrot.lane.b32.xlu0 %v1480, 60
      %v1486 = vpop.permute.xlu0 %1485
      %1487 = vrot.lane.b32.xlu0 %v1481, 60
      %v1488 = vpop.permute.xlu0 %1487
      %1491 = vst.msk [vmem:[#allocation2 + $0x8] sm:$0xf] %vm996, %v1486
      %1492 = vst.msk [vmem:[#allocation2 + $0xc] sm:$0xf] %vm996, %v1488
      %v1494 = vshrl.u32 %v1480, 16
      %v1496 = vrot.slane %v1494, 4
      %v1497 = vshll.u32 %v1480, 16
      %v1499 = vrot.slane %v1497, 5
      %v1500 = vor.u32 %v1496, %v1499
      %v1501 = vrot.slane %v1500, 4
      %v1503 = vshll.u32 %v1481, 16
      %v1505 = vrot.slane %v1503, 5
      %v1506 = vsel %vm567, %v1501, %v1505
      %v1507 = vshrl.u32 %v1481, 16
      %v1509 = vrot.slane %v1507, 4
      %v1510 = vor.u32 %v1509, %v1505
      %v1511 = vrot.slane %v1510, 4
      %v1513 = vshll.u32 %v1482, 16
      %v1515 = vrot.slane %v1513, 5
      %v1516 = vsel %vm567, %v1511, %v1515
      %1517 = vrot.lane.b32.xlu0 %v1506, 63
      %v1518 = vpop.permute.xlu0 %1517
      %1519 = vrot.lane.b32.xlu0 %v1516, 63
      %v1520 = vpop.permute.xlu0 %1519
      %1523 = vst.msk [vmem:[#allocation2 + $0x8] sm:$0xf] %vm1029, %v1518
      %1524 = vst.msk [vmem:[#allocation2 + $0xc] sm:$0xf] %vm1029, %v1520
      %v1526 = vrot.slane %v1480, 5
      %v1527 = vrot.slane %v1526, 4
      %v1528 = vrot.slane %v1481, 5
      %v1529 = vsel %vm606, %v1527, %v1528
      %v1530 = vrot.slane %v1528, 4
      %v1531 = vrot.slane %v1482, 5
      %v1532 = vsel %vm606, %v1530, %v1531
      %1533 = vrot.lane.b32.xlu0 %v1529, 66
      %v1534 = vpop.permute.xlu0 %1533
      %1535 = vrot.lane.b32.xlu0 %v1532, 66
      %v1536 = vpop.permute.xlu0 %1535
      %1539 = vst.msk [vmem:[#allocation2 + $0x8] sm:$0xf] %vm1046, %v1534
      %1540 = vst.msk [vmem:[#allocation2 + $0xc] sm:$0xf] %vm1046, %v1536
      %v1541 = vrot.slane %v1494, 5
      %v1542 = vrot.slane %v1497, 6
      %v1543 = vor.u32 %v1541, %v1542
      %v1544 = vrot.slane %v1543, 4
      %v1545 = vrot.slane %v1507, 5
      %v1546 = vrot.slane %v1503, 6
      %v1547 = vor.u32 %v1545, %v1546
      %v1548 = vsel %vm625, %v1544, %v1547
      %v1549 = vrot.slane %v1547, 4
      %v1550 = vshrl.u32 %v1482, 16
      %v1552 = vrot.slane %v1550, 5
      %v1553 = vrot.slane %v1513, 6
      %v1554 = vor.u32 %v1552, %v1553
      %v1555 = vsel %vm625, %v1549, %v1554
      %1556 = vrot.lane.b32.xlu0 %v1548, 69
      %v1557 = vpop.permute.xlu0 %1556
      %1558 = vrot.lane.b32.xlu0 %v1555, 69
      %v1559 = vpop.permute.xlu0 %1558
      %1562 = vst.msk [vmem:[#allocation2 + $0x8] sm:$0xf] %vm1070, %v1557
      %1563 = vst.msk [vmem:[#allocation2 + $0xc] sm:$0xf] %vm1070, %v1559
      %v1564 = vrot.slane %v1480, 6
      %v1565 = vrot.slane %v1564, 4
      %v1566 = vrot.slane %v1481, 6
      %v1567 = vsel %vm652, %v1565, %v1566
      %v1568 = vrot.slane %v1566, 4
      %v1569 = vrot.slane %v1482, 6
      %v1570 = vsel %vm652, %v1568, %v1569
      %1571 = vrot.lane.b32.xlu0 %v1567, 72
      %v1572 = vpop.permute.xlu0 %1571
      %1573 = vrot.lane.b32.xlu0 %v1570, 72
      %v1574 = vpop.permute.xlu0 %1573
      %1577 = vst.msk [vmem:[#allocation2 + $0x8] sm:$0xf] %vm1086, %v1572
      %1578 = vst.msk [vmem:[#allocation2 + $0xc] sm:$0xf] %vm1086, %v1574
      %v1579 = vld [vmem:[%s774] sm:$0xf]
      %v1580 = vld [vmem:[%s774 + $0x4] sm:$0xf]
      %v1581 = vld [vmem:[%s774 + $0x8] sm:$0x3]
      %1582 = vst.msk [vmem:[#allocation2 + $0x10] sm:$0xf] %vm562, %v1579
      %1583 = vst.msk [vmem:[#allocation2 + $0x14] sm:$0xf] %vm562, %v1580
      %v1585 = vshrl.u32 %v1579, 16
      %v1587 = vrot.slane %v1585, 4
      %v1588 = vshll.u32 %v1579, 16
      %v1590 = vrot.slane %v1588, 5
      %v1591 = vor.u32 %v1587, %v1590
      %v1592 = vrot.slane %v1591, 4
      %v1594 = vshll.u32 %v1580, 16
      %v1596 = vrot.slane %v1594, 5
      %v1597 = vsel %vm567, %v1592, %v1596
      %v1598 = vshrl.u32 %v1580, 16
      %v1600 = vrot.slane %v1598, 4
      %v1601 = vor.u32 %v1600, %v1596
      %v1602 = vrot.slane %v1601, 4
      %v1604 = vshll.u32 %v1581, 16
      %v1606 = vrot.slane %v1604, 5
      %v1607 = vsel %vm567, %v1602, %v1606
      %1608 = vrot.lane.b32.xlu0 %v1597, 3
      %v1609 = vpop.permute.xlu0 %1608
      %1610 = vrot.lane.b32.xlu0 %v1607, 3
      %v1611 = vpop.permute.xlu0 %1610
      %1614 = vst.msk [vmem:[#allocation2 + $0x10] sm:$0xf] %vm598, %v1609
      %1615 = vst.msk [vmem:[#allocation2 + $0x14] sm:$0xf] %vm598, %v1611
      %v1619 = vrot.slane %v1579, 5
      %v1620 = vrot.slane %v1619, 4
      %v1621 = vrot.slane %v1580, 5
      %v1622 = vsel %vm606, %v1620, %v1621
      %v1623 = vrot.slane %v1621, 4
      %v1624 = vrot.slane %v1581, 5
      %v1625 = vsel %vm606, %v1623, %v1624
      %1626 = vrot.lane.b32.xlu0 %v1622, 6
      %v1627 = vpop.permute.xlu0 %1626
      %1628 = vrot.lane.b32.xlu0 %v1625, 6
      %v1629 = vpop.permute.xlu0 %1628
      %1632 = vst.msk [vmem:[#allocation2 + $0x10] sm:$0xf] %vm620, %v1627
      %1633 = vst.msk [vmem:[#allocation2 + $0x14] sm:$0xf] %vm620, %v1629
      %v1634 = vrot.slane %v1585, 5
      %v1635 = vrot.slane %v1588, 6
      %v1636 = vor.u32 %v1634, %v1635
      %v1637 = vrot.slane %v1636, 4
      %v1638 = vrot.slane %v1598, 5
      %v1639 = vrot.slane %v1594, 6
      %v1640 = vor.u32 %v1638, %v1639
      %v1641 = vsel %vm625, %v1637, %v1640
      %v1642 = vrot.slane %v1640, 4
      %v1643 = vshrl.u32 %v1581, 16
      %v1645 = vrot.slane %v1643, 5
      %v1646 = vrot.slane %v1604, 6
      %v1647 = vor.u32 %v1645, %v1646
      %v1648 = vsel %vm625, %v1642, %v1647
      %1649 = vrot.lane.b32.xlu0 %v1641, 9
      %v1650 = vpop.permute.xlu0 %1649
      %1651 = vrot.lane.b32.xlu0 %v1648, 9
      %v1652 = vpop.permute.xlu0 %1651
      %1655 = vst.msk [vmem:[#allocation2 + $0x10] sm:$0xf] %vm647, %v1650
      %1656 = vst.msk [vmem:[#allocation2 + $0x14] sm:$0xf] %vm647, %v1652
      %v1657 = vrot.slane %v1579, 6
      %v1658 = vrot.slane %v1657, 4
      %v1659 = vrot.slane %v1580, 6
      %v1660 = vsel %vm652, %v1658, %v1659
      %v1661 = vrot.slane %v1659, 4
      %v1662 = vrot.slane %v1581, 6
      %v1663 = vsel %vm652, %v1661, %v1662
      %1664 = vrot.lane.b32.xlu0 %v1660, 12
      %v1665 = vpop.permute.xlu0 %1664
      %1666 = vrot.lane.b32.xlu0 %v1663, 12
      %v1667 = vpop.permute.xlu0 %1666
      %1670 = vst.msk [vmem:[#allocation2 + $0x10] sm:$0xf] %vm666, %v1665
      %1671 = vst.msk [vmem:[#allocation2 + $0x14] sm:$0xf] %vm666, %v1667
      %v1672 = vld [vmem:[%s879] sm:$0xf]
      %v1673 = vld [vmem:[%s879 + $0x4] sm:$0xf]
      %v1674 = vld [vmem:[%s879 + $0x8] sm:$0x3]
      %1677 = vrot.lane.b32.xlu0 %v1672, 15
      %v1678 = vpop.permute.xlu0 %1677
      %1679 = vrot.lane.b32.xlu0 %v1673, 15
      %v1680 = vpop.permute.xlu0 %1679
      %1683 = vst.msk [vmem:[#allocation2 + $0x10] sm:$0xf] %vm681, %v1678
      %1684 = vst.msk [vmem:[#allocation2 + $0x14] sm:$0xf] %vm681, %v1680
      %v1686 = vshrl.u32 %v1672, 16
      %v1688 = vrot.slane %v1686, 4
      %v1689 = vshll.u32 %v1672, 16
      %v1691 = vrot.slane %v1689, 5
      %v1692 = vor.u32 %v1688, %v1691
      %v1693 = vrot.slane %v1692, 4
      %v1695 = vshll.u32 %v1673, 16
      %v1697 = vrot.slane %v1695, 5
      %v1698 = vsel %vm567, %v1693, %v1697
      %v1699 = vshrl.u32 %v1673, 16
      %v1701 = vrot.slane %v1699, 4
      %v1702 = vor.u32 %v1701, %v1697
      %v1703 = vrot.slane %v1702, 4
      %v1705 = vshll.u32 %v1674, 16
      %v1707 = vrot.slane %v1705, 5
      %v1708 = vsel %vm567, %v1703, %v1707
      %1709 = vrot.lane.b32.xlu0 %v1698, 18
      %v1710 = vpop.permute.xlu0 %1709
      %1711 = vrot.lane.b32.xlu0 %v1708, 18
      %v1712 = vpop.permute.xlu0 %1711
      %1715 = vst.msk [vmem:[#allocation2 + $0x10] sm:$0xf] %vm714, %v1710
      %1716 = vst.msk [vmem:[#allocation2 + $0x14] sm:$0xf] %vm714, %v1712
      %v1718 = vrot.slane %v1672, 5
      %v1719 = vrot.slane %v1718, 4
      %v1720 = vrot.slane %v1673, 5
      %v1721 = vsel %vm606, %v1719, %v1720
      %v1722 = vrot.slane %v1720, 4
      %v1723 = vrot.slane %v1674, 5
      %v1724 = vsel %vm606, %v1722, %v1723
      %1725 = vrot.lane.b32.xlu0 %v1721, 21
      %v1726 = vpop.permute.xlu0 %1725
      %1727 = vrot.lane.b32.xlu0 %v1724, 21
      %v1728 = vpop.permute.xlu0 %1727
      %1731 = vst.msk [vmem:[#allocation2 + $0x10] sm:$0xf] %vm731, %v1726
      %1732 = vst.msk [vmem:[#allocation2 + $0x14] sm:$0xf] %vm731, %v1728
      %v1733 = vrot.slane %v1686, 5
      %v1734 = vrot.slane %v1689, 6
      %v1735 = vor.u32 %v1733, %v1734
      %v1736 = vrot.slane %v1735, 4
      %v1737 = vrot.slane %v1699, 5
      %v1738 = vrot.slane %v1695, 6
      %v1739 = vor.u32 %v1737, %v1738
      %v1740 = vsel %vm625, %v1736, %v1739
      %v1741 = vrot.slane %v1739, 4
      %v1742 = vshrl.u32 %v1674, 16
      %v1744 = vrot.slane %v1742, 5
      %v1745 = vrot.slane %v1705, 6
      %v1746 = vor.u32 %v1744, %v1745
      %v1747 = vsel %vm625, %v1741, %v1746
      %1748 = vrot.lane.b32.xlu0 %v1740, 24
      %v1749 = vpop.permute.xlu0 %1748
      %1750 = vrot.lane.b32.xlu0 %v1747, 24
      %v1751 = vpop.permute.xlu0 %1750
      %1754 = vst.msk [vmem:[#allocation2 + $0x10] sm:$0xf] %vm755, %v1749
      %1755 = vst.msk [vmem:[#allocation2 + $0x14] sm:$0xf] %vm755, %v1751
      %v1756 = vrot.slane %v1672, 6
      %v1757 = vrot.slane %v1756, 4
      %v1758 = vrot.slane %v1673, 6
      %v1759 = vsel %vm652, %v1757, %v1758
      %v1760 = vrot.slane %v1758, 4
      %v1761 = vrot.slane %v1674, 6
      %v1762 = vsel %vm652, %v1760, %v1761
      %1763 = vrot.lane.b32.xlu0 %v1759, 27
      %v1764 = vpop.permute.xlu0 %1763
      %1765 = vrot.lane.b32.xlu0 %v1762, 27
      %v1766 = vpop.permute.xlu0 %1765
      %1769 = vst.msk [vmem:[#allocation2 + $0x10] sm:$0xf] %vm771, %v1764
      %1770 = vst.msk [vmem:[#allocation2 + $0x14] sm:$0xf] %vm771, %v1766
      %v1771 = vld [vmem:[%s984] sm:$0xf]
      %v1772 = vld [vmem:[%s984 + $0x4] sm:$0xf]
      %v1773 = vld [vmem:[%s984 + $0x8] sm:$0x3]
      %1776 = vrot.lane.b32.xlu0 %v1771, 30
      %v1777 = vpop.permute.xlu0 %1776
      %1778 = vrot.lane.b32.xlu0 %v1772, 30
      %v1779 = vpop.permute.xlu0 %1778
      %1782 = vst.msk [vmem:[#allocation2 + $0x10] sm:$0xf] %vm786, %v1777
      %1783 = vst.msk [vmem:[#allocation2 + $0x14] sm:$0xf] %vm786, %v1779
      %v1785 = vshrl.u32 %v1771, 16
      %v1787 = vrot.slane %v1785, 4
      %v1788 = vshll.u32 %v1771, 16
      %v1790 = vrot.slane %v1788, 5
      %v1791 = vor.u32 %v1787, %v1790
      %v1792 = vrot.slane %v1791, 4
      %v1794 = vshll.u32 %v1772, 16
      %v1796 = vrot.slane %v1794, 5
      %v1797 = vsel %vm567, %v1792, %v1796
      %v1798 = vshrl.u32 %v1772, 16
      %v1800 = vrot.slane %v1798, 4
      %v1801 = vor.u32 %v1800, %v1796
      %v1802 = vrot.slane %v1801, 4
      %v1804 = vshll.u32 %v1773, 16
      %v1806 = vrot.slane %v1804, 5
      %v1807 = vsel %vm567, %v1802, %v1806
      %1808 = vrot.lane.b32.xlu0 %v1797, 33
      %v1809 = vpop.permute.xlu0 %1808
      %1810 = vrot.lane.b32.xlu0 %v1807, 33
      %v1811 = vpop.permute.xlu0 %1810
      %1814 = vst.msk [vmem:[#allocation2 + $0x10] sm:$0xf] %vm819, %v1809
      %1815 = vst.msk [vmem:[#allocation2 + $0x14] sm:$0xf] %vm819, %v1811
      %v1817 = vrot.slane %v1771, 5
      %v1818 = vrot.slane %v1817, 4
      %v1819 = vrot.slane %v1772, 5
      %v1820 = vsel %vm606, %v1818, %v1819
      %v1821 = vrot.slane %v1819, 4
      %v1822 = vrot.slane %v1773, 5
      %v1823 = vsel %vm606, %v1821, %v1822
      %1824 = vrot.lane.b32.xlu0 %v1820, 36
      %v1825 = vpop.permute.xlu0 %1824
      %1826 = vrot.lane.b32.xlu0 %v1823, 36
      %v1827 = vpop.permute.xlu0 %1826
      %1830 = vst.msk [vmem:[#allocation2 + $0x10] sm:$0xf] %vm836, %v1825
      %1831 = vst.msk [vmem:[#allocation2 + $0x14] sm:$0xf] %vm836, %v1827
      %v1832 = vrot.slane %v1785, 5
      %v1833 = vrot.slane %v1788, 6
      %v1834 = vor.u32 %v1832, %v1833
      %v1835 = vrot.slane %v1834, 4
      %v1836 = vrot.slane %v1798, 5
      %v1837 = vrot.slane %v1794, 6
      %v1838 = vor.u32 %v1836, %v1837
      %v1839 = vsel %vm625, %v1835, %v1838
      %v1840 = vrot.slane %v1838, 4
      %v1841 = vshrl.u32 %v1773, 16
      %v1843 = vrot.slane %v1841, 5
      %v1844 = vrot.slane %v1804, 6
      %v1845 = vor.u32 %v1843, %v1844
      %v1846 = vsel %vm625, %v1840, %v1845
      %1847 = vrot.lane.b32.xlu0 %v1839, 39
      %v1848 = vpop.permute.xlu0 %1847
      %1849 = vrot.lane.b32.xlu0 %v1846, 39
      %v1850 = vpop.permute.xlu0 %1849
      %1853 = vst.msk [vmem:[#allocation2 + $0x10] sm:$0xf] %vm860, %v1848
      %1854 = vst.msk [vmem:[#allocation2 + $0x14] sm:$0xf] %vm860, %v1850
      %v1855 = vrot.slane %v1771, 6
      %v1856 = vrot.slane %v1855, 4
      %v1857 = vrot.slane %v1772, 6
      %v1858 = vsel %vm652, %v1856, %v1857
      %v1859 = vrot.slane %v1857, 4
      %v1860 = vrot.slane %v1773, 6
      %v1861 = vsel %vm652, %v1859, %v1860
      %1862 = vrot.lane.b32.xlu0 %v1858, 42
      %v1863 = vpop.permute.xlu0 %1862
      %1864 = vrot.lane.b32.xlu0 %v1861, 42
      %v1865 = vpop.permute.xlu0 %1864
      %1868 = vst.msk [vmem:[#allocation2 + $0x10] sm:$0xf] %vm876, %v1863
      %1869 = vst.msk [vmem:[#allocation2 + $0x14] sm:$0xf] %vm876, %v1865
      %v1870 = vld [vmem:[%s1479] sm:$0xf]
      %v1871 = vld [vmem:[%s1479 + $0x4] sm:$0xf]
      %v1872 = vld [vmem:[%s1479 + $0x8] sm:$0x3]
      %1875 = vrot.lane.b32.xlu0 %v1870, 45
      %v1876 = vpop.permute.xlu0 %1875
      %1877 = vrot.lane.b32.xlu0 %v1871, 45
      %v1878 = vpop.permute.xlu0 %1877
      %1881 = vst.msk [vmem:[#allocation2 + $0x10] sm:$0xf] %vm891, %v1876
      %1882 = vst.msk [vmem:[#allocation2 + $0x14] sm:$0xf] %vm891, %v1878
      %v1884 = vshrl.u32 %v1870, 16
      %v1886 = vrot.slane %v1884, 4
      %v1887 = vshll.u32 %v1870, 16
      %v1889 = vrot.slane %v1887, 5
      %v1890 = vor.u32 %v1886, %v1889
      %v1891 = vrot.slane %v1890, 4
      %v1893 = vshll.u32 %v1871, 16
      %v1895 = vrot.slane %v1893, 5
      %v1896 = vsel %vm567, %v1891, %v1895
      %v1897 = vshrl.u32 %v1871, 16
      %v1899 = vrot.slane %v1897, 4
      %v1900 = vor.u32 %v1899, %v1895
      %v1901 = vrot.slane %v1900, 4
      %v1903 = vshll.u32 %v1872, 16
      %v1905 = vrot.slane %v1903, 5
      %v1906 = vsel %vm567, %v1901, %v1905
      %1907 = vrot.lane.b32.xlu0 %v1896, 48
      %v1908 = vpop.permute.xlu0 %1907
      %1909 = vrot.lane.b32.xlu0 %v1906, 48
      %v1910 = vpop.permute.xlu0 %1909
      %1913 = vst.msk [vmem:[#allocation2 + $0x10] sm:$0xf] %vm924, %v1908
      %1914 = vst.msk [vmem:[#allocation2 + $0x14] sm:$0xf] %vm924, %v1910
      %v1916 = vrot.slane %v1870, 5
      %v1917 = vrot.slane %v1916, 4
      %v1918 = vrot.slane %v1871, 5
      %v1919 = vsel %vm606, %v1917, %v1918
      %v1920 = vrot.slane %v1918, 4
      %v1921 = vrot.slane %v1872, 5
      %v1922 = vsel %vm606, %v1920, %v1921
      %1923 = vrot.lane.b32.xlu0 %v1919, 51
      %v1924 = vpop.permute.xlu0 %1923
      %1925 = vrot.lane.b32.xlu0 %v1922, 51
      %v1926 = vpop.permute.xlu0 %1925
      %1929 = vst.msk [vmem:[#allocation2 + $0x10] sm:$0xf] %vm941, %v1924
      %1930 = vst.msk [vmem:[#allocation2 + $0x14] sm:$0xf] %vm941, %v1926
      %v1931 = vrot.slane %v1884, 5
      %v1932 = vrot.slane %v1887, 6
      %v1933 = vor.u32 %v1931, %v1932
      %v1934 = vrot.slane %v1933, 4
      %v1935 = vrot.slane %v1897, 5
      %v1936 = vrot.slane %v1893, 6
      %v1937 = vor.u32 %v1935, %v1936
      %v1938 = vsel %vm625, %v1934, %v1937
      %v1939 = vrot.slane %v1937, 4
      %v1940 = vshrl.u32 %v1872, 16
      %v1942 = vrot.slane %v1940, 5
      %v1943 = vrot.slane %v1903, 6
      %v1944 = vor.u32 %v1942, %v1943
      %v1945 = vsel %vm625, %v1939, %v1944
      %1946 = vrot.lane.b32.xlu0 %v1938, 54
      %v1947 = vpop.permute.xlu0 %1946
      %1948 = vrot.lane.b32.xlu0 %v1945, 54
      %v1949 = vpop.permute.xlu0 %1948
      %1952 = vst.msk [vmem:[#allocation2 + $0x10] sm:$0xf] %vm965, %v1947
      %1953 = vst.msk [vmem:[#allocation2 + $0x14] sm:$0xf] %vm965, %v1949
      %v1954 = vrot.slane %v1870, 6
      %v1955 = vrot.slane %v1954, 4
      %v1956 = vrot.slane %v1871, 6
      %v1957 = vsel %vm652, %v1955, %v1956
      %v1958 = vrot.slane %v1956, 4
      %v1959 = vrot.slane %v1872, 6
      %v1960 = vsel %vm652, %v1958, %v1959
      %1961 = vrot.lane.b32.xlu0 %v1957, 57
      %v1962 = vpop.permute.xlu0 %1961
      %1963 = vrot.lane.b32.xlu0 %v1960, 57
      %v1964 = vpop.permute.xlu0 %1963
      %1967 = vst.msk [vmem:[#allocation2 + $0x10] sm:$0xf] %vm981, %v1962
      %1968 = vst.msk [vmem:[#allocation2 + $0x14] sm:$0xf] %vm981, %v1964
      %s1969 = scalar_lea.vmem %s484, 72
      %v1970 = vld [vmem:[%s1969] sm:$0xf]
      %v1971 = vld [vmem:[%s1969 + $0x4] sm:$0xf]
      %v1972 = vld [vmem:[%s1969 + $0x8] sm:$0x3]
      %1975 = vrot.lane.b32.xlu0 %v1970, 60
      %v1976 = vpop.permute.xlu0 %1975
      %1977 = vrot.lane.b32.xlu0 %v1971, 60
      %v1978 = vpop.permute.xlu0 %1977
      %1981 = vst.msk [vmem:[#allocation2 + $0x10] sm:$0xf] %vm996, %v1976
      %1982 = vst.msk [vmem:[#allocation2 + $0x14] sm:$0xf] %vm996, %v1978
      %v1984 = vshrl.u32 %v1970, 16
      %v1986 = vrot.slane %v1984, 4
      %v1987 = vshll.u32 %v1970, 16
      %v1989 = vrot.slane %v1987, 5
      %v1990 = vor.u32 %v1986, %v1989
      %v1991 = vrot.slane %v1990, 4
      %v1993 = vshll.u32 %v1971, 16
      %v1995 = vrot.slane %v1993, 5
      %v1996 = vsel %vm567, %v1991, %v1995
      %v1997 = vshrl.u32 %v1971, 16
      %v1999 = vrot.slane %v1997, 4
      %v2000 = vor.u32 %v1999, %v1995
      %v2001 = vrot.slane %v2000, 4
      %v2003 = vshll.u32 %v1972, 16
      %v2005 = vrot.slane %v2003, 5
      %v2006 = vsel %vm567, %v2001, %v2005
      %2007 = vrot.lane.b32.xlu0 %v1996, 63
      %v2008 = vpop.permute.xlu0 %2007
      %2009 = vrot.lane.b32.xlu0 %v2006, 63
      %v2010 = vpop.permute.xlu0 %2009
      %2013 = vst.msk [vmem:[#allocation2 + $0x10] sm:$0xf] %vm1029, %v2008
      %2014 = vst.msk [vmem:[#allocation2 + $0x14] sm:$0xf] %vm1029, %v2010
      %v2016 = vrot.slane %v1970, 5
      %v2017 = vrot.slane %v2016, 4
      %v2018 = vrot.slane %v1971, 5
      %v2019 = vsel %vm606, %v2017, %v2018
      %v2020 = vrot.slane %v2018, 4
      %v2021 = vrot.slane %v1972, 5
      %v2022 = vsel %vm606, %v2020, %v2021
      %2023 = vrot.lane.b32.xlu0 %v2019, 66
      %v2024 = vpop.permute.xlu0 %2023
      %2025 = vrot.lane.b32.xlu0 %v2022, 66
      %v2026 = vpop.permute.xlu0 %2025
      %2029 = vst.msk [vmem:[#allocation2 + $0x10] sm:$0xf] %vm1046, %v2024
      %2030 = vst.msk [vmem:[#allocation2 + $0x14] sm:$0xf] %vm1046, %v2026
      %v2031 = vrot.slane %v1984, 5
      %v2032 = vrot.slane %v1987, 6
      %v2033 = vor.u32 %v2031, %v2032
      %v2034 = vrot.slane %v2033, 4
      %v2035 = vrot.slane %v1997, 5
      %v2036 = vrot.slane %v1993, 6
      %v2037 = vor.u32 %v2035, %v2036
      %v2038 = vsel %vm625, %v2034, %v2037
      %v2039 = vrot.slane %v2037, 4
      %v2040 = vshrl.u32 %v1972, 16
      %v2042 = vrot.slane %v2040, 5
      %v2043 = vrot.slane %v2003, 6
      %v2044 = vor.u32 %v2042, %v2043
      %v2045 = vsel %vm625, %v2039, %v2044
      %2046 = vrot.lane.b32.xlu0 %v2038, 69
      %v2047 = vpop.permute.xlu0 %2046
      %2048 = vrot.lane.b32.xlu0 %v2045, 69
      %v2049 = vpop.permute.xlu0 %2048
      %2052 = vst.msk [vmem:[#allocation2 + $0x10] sm:$0xf] %vm1070, %v2047
      %2053 = vst.msk [vmem:[#allocation2 + $0x14] sm:$0xf] %vm1070, %v2049
      %v2054 = vrot.slane %v1970, 6
      %v2055 = vrot.slane %v2054, 4
      %v2056 = vrot.slane %v1971, 6
      %v2057 = vsel %vm652, %v2055, %v2056
      %v2058 = vrot.slane %v2056, 4
      %v2059 = vrot.slane %v1972, 6
      %v2060 = vsel %vm652, %v2058, %v2059
      %2061 = vrot.lane.b32.xlu0 %v2057, 72
      %v2062 = vpop.permute.xlu0 %2061
      %2063 = vrot.lane.b32.xlu0 %v2060, 72
      %v2064 = vpop.permute.xlu0 %2063
      %2067 = vst.msk [vmem:[#allocation2 + $0x10] sm:$0xf] %vm1086, %v2062
      %2068 = vst.msk [vmem:[#allocation2 + $0x14] sm:$0xf] %vm1086, %v2064
      %v2069 = vld [vmem:[%s879] sm:$0xf]
      %v2070 = vld [vmem:[%s879 + $0x4] sm:$0xf]
      %v2071 = vld [vmem:[%s879 + $0x8] sm:$0x3]
      %2072 = vst.msk [vmem:[#allocation2 + $0x18] sm:$0xf] %vm562, %v2069
      %2073 = vst.msk [vmem:[#allocation2 + $0x1c] sm:$0xf] %vm562, %v2070
      %v2075 = vshrl.u32 %v2069, 16
      %v2077 = vrot.slane %v2075, 4
      %v2078 = vshll.u32 %v2069, 16
      %v2080 = vrot.slane %v2078, 5
      %v2081 = vor.u32 %v2077, %v2080
      %v2082 = vrot.slane %v2081, 4
      %v2084 = vshll.u32 %v2070, 16
      %v2086 = vrot.slane %v2084, 5
      %v2087 = vsel %vm567, %v2082, %v2086
      %v2088 = vshrl.u32 %v2070, 16
      %v2090 = vrot.slane %v2088, 4
      %v2091 = vor.u32 %v2090, %v2086
      %v2092 = vrot.slane %v2091, 4
      %v2094 = vshll.u32 %v2071, 16
      %v2096 = vrot.slane %v2094, 5
      %v2097 = vsel %vm567, %v2092, %v2096
      %2098 = vrot.lane.b32.xlu0 %v2087, 3
      %v2099 = vpop.permute.xlu0 %2098
      %2100 = vrot.lane.b32.xlu0 %v2097, 3
      %v2101 = vpop.permute.xlu0 %2100
      %2104 = vst.msk [vmem:[#allocation2 + $0x18] sm:$0xf] %vm598, %v2099
      %2105 = vst.msk [vmem:[#allocation2 + $0x1c] sm:$0xf] %vm598, %v2101
      %v2109 = vrot.slane %v2069, 5
      %v2110 = vrot.slane %v2109, 4
      %v2111 = vrot.slane %v2070, 5
      %v2112 = vsel %vm606, %v2110, %v2111
      %v2113 = vrot.slane %v2111, 4
      %v2114 = vrot.slane %v2071, 5
      %v2115 = vsel %vm606, %v2113, %v2114
      %2116 = vrot.lane.b32.xlu0 %v2112, 6
      %v2117 = vpop.permute.xlu0 %2116
      %2118 = vrot.lane.b32.xlu0 %v2115, 6
      %v2119 = vpop.permute.xlu0 %2118
      %2122 = vst.msk [vmem:[#allocation2 + $0x18] sm:$0xf] %vm620, %v2117
      %2123 = vst.msk [vmem:[#allocation2 + $0x1c] sm:$0xf] %vm620, %v2119
      %v2124 = vrot.slane %v2075, 5
      %v2125 = vrot.slane %v2078, 6
      %v2126 = vor.u32 %v2124, %v2125
      %v2127 = vrot.slane %v2126, 4
      %v2128 = vrot.slane %v2088, 5
      %v2129 = vrot.slane %v2084, 6
      %v2130 = vor.u32 %v2128, %v2129
      %v2131 = vsel %vm625, %v2127, %v2130
      %v2132 = vrot.slane %v2130, 4
      %v2133 = vshrl.u32 %v2071, 16
      %v2135 = vrot.slane %v2133, 5
      %v2136 = vrot.slane %v2094, 6
      %v2137 = vor.u32 %v2135, %v2136
      %v2138 = vsel %vm625, %v2132, %v2137
      %2139 = vrot.lane.b32.xlu0 %v2131, 9
      %v2140 = vpop.permute.xlu0 %2139
      %2141 = vrot.lane.b32.xlu0 %v2138, 9
      %v2142 = vpop.permute.xlu0 %2141
      %2145 = vst.msk [vmem:[#allocation2 + $0x18] sm:$0xf] %vm647, %v2140
      %2146 = vst.msk [vmem:[#allocation2 + $0x1c] sm:$0xf] %vm647, %v2142
      %v2147 = vrot.slane %v2069, 6
      %v2148 = vrot.slane %v2147, 4
      %v2149 = vrot.slane %v2070, 6
      %v2150 = vsel %vm652, %v2148, %v2149
      %v2151 = vrot.slane %v2149, 4
      %v2152 = vrot.slane %v2071, 6
      %v2153 = vsel %vm652, %v2151, %v2152
      %2154 = vrot.lane.b32.xlu0 %v2150, 12
      %v2155 = vpop.permute.xlu0 %2154
      %2156 = vrot.lane.b32.xlu0 %v2153, 12
      %v2157 = vpop.permute.xlu0 %2156
      %2160 = vst.msk [vmem:[#allocation2 + $0x18] sm:$0xf] %vm666, %v2155
      %2161 = vst.msk [vmem:[#allocation2 + $0x1c] sm:$0xf] %vm666, %v2157
      %v2162 = vld [vmem:[%s984] sm:$0xf]
      %v2163 = vld [vmem:[%s984 + $0x4] sm:$0xf]
      %v2164 = vld [vmem:[%s984 + $0x8] sm:$0x3]
      %2167 = vrot.lane.b32.xlu0 %v2162, 15
      %v2168 = vpop.permute.xlu0 %2167
      %2169 = vrot.lane.b32.xlu0 %v2163, 15
      %v2170 = vpop.permute.xlu0 %2169
      %2173 = vst.msk [vmem:[#allocation2 + $0x18] sm:$0xf] %vm681, %v2168
      %2174 = vst.msk [vmem:[#allocation2 + $0x1c] sm:$0xf] %vm681, %v2170
      %v2176 = vshrl.u32 %v2162, 16
      %v2178 = vrot.slane %v2176, 4
      %v2179 = vshll.u32 %v2162, 16
      %v2181 = vrot.slane %v2179, 5
      %v2182 = vor.u32 %v2178, %v2181
      %v2183 = vrot.slane %v2182, 4
      %v2185 = vshll.u32 %v2163, 16
      %v2187 = vrot.slane %v2185, 5
      %v2188 = vsel %vm567, %v2183, %v2187
      %v2189 = vshrl.u32 %v2163, 16
      %v2191 = vrot.slane %v2189, 4
      %v2192 = vor.u32 %v2191, %v2187
      %v2193 = vrot.slane %v2192, 4
      %v2195 = vshll.u32 %v2164, 16
      %v2197 = vrot.slane %v2195, 5
      %v2198 = vsel %vm567, %v2193, %v2197
      %2199 = vrot.lane.b32.xlu0 %v2188, 18
      %v2200 = vpop.permute.xlu0 %2199
      %2201 = vrot.lane.b32.xlu0 %v2198, 18
      %v2202 = vpop.permute.xlu0 %2201
      %2205 = vst.msk [vmem:[#allocation2 + $0x18] sm:$0xf] %vm714, %v2200
      %2206 = vst.msk [vmem:[#allocation2 + $0x1c] sm:$0xf] %vm714, %v2202
      %v2208 = vrot.slane %v2162, 5
      %v2209 = vrot.slane %v2208, 4
      %v2210 = vrot.slane %v2163, 5
      %v2211 = vsel %vm606, %v2209, %v2210
      %v2212 = vrot.slane %v2210, 4
      %v2213 = vrot.slane %v2164, 5
      %v2214 = vsel %vm606, %v2212, %v2213
      %2215 = vrot.lane.b32.xlu0 %v2211, 21
      %v2216 = vpop.permute.xlu0 %2215
      %2217 = vrot.lane.b32.xlu0 %v2214, 21
      %v2218 = vpop.permute.xlu0 %2217
      %2221 = vst.msk [vmem:[#allocation2 + $0x18] sm:$0xf] %vm731, %v2216
      %2222 = vst.msk [vmem:[#allocation2 + $0x1c] sm:$0xf] %vm731, %v2218
      %v2223 = vrot.slane %v2176, 5
      %v2224 = vrot.slane %v2179, 6
      %v2225 = vor.u32 %v2223, %v2224
      %v2226 = vrot.slane %v2225, 4
      %v2227 = vrot.slane %v2189, 5
      %v2228 = vrot.slane %v2185, 6
      %v2229 = vor.u32 %v2227, %v2228
      %v2230 = vsel %vm625, %v2226, %v2229
      %v2231 = vrot.slane %v2229, 4
      %v2232 = vshrl.u32 %v2164, 16
      %v2234 = vrot.slane %v2232, 5
      %v2235 = vrot.slane %v2195, 6
      %v2236 = vor.u32 %v2234, %v2235
      %v2237 = vsel %vm625, %v2231, %v2236
      %2238 = vrot.lane.b32.xlu0 %v2230, 24
      %v2239 = vpop.permute.xlu0 %2238
      %2240 = vrot.lane.b32.xlu0 %v2237, 24
      %v2241 = vpop.permute.xlu0 %2240
      %2244 = vst.msk [vmem:[#allocation2 + $0x18] sm:$0xf] %vm755, %v2239
      %2245 = vst.msk [vmem:[#allocation2 + $0x1c] sm:$0xf] %vm755, %v2241
      %v2246 = vrot.slane %v2162, 6
      %v2247 = vrot.slane %v2246, 4
      %v2248 = vrot.slane %v2163, 6
      %v2249 = vsel %vm652, %v2247, %v2248
      %v2250 = vrot.slane %v2248, 4
      %v2251 = vrot.slane %v2164, 6
      %v2252 = vsel %vm652, %v2250, %v2251
      %2253 = vrot.lane.b32.xlu0 %v2249, 27
      %v2254 = vpop.permute.xlu0 %2253
      %2255 = vrot.lane.b32.xlu0 %v2252, 27
      %v2256 = vpop.permute.xlu0 %2255
      %2259 = vst.msk [vmem:[#allocation2 + $0x18] sm:$0xf] %vm771, %v2254
      %2260 = vst.msk [vmem:[#allocation2 + $0x1c] sm:$0xf] %vm771, %v2256
      %v2261 = vld [vmem:[%s1479] sm:$0xf]
      %v2262 = vld [vmem:[%s1479 + $0x4] sm:$0xf]
      %v2263 = vld [vmem:[%s1479 + $0x8] sm:$0x3]
      %2266 = vrot.lane.b32.xlu0 %v2261, 30
      %v2267 = vpop.permute.xlu0 %2266
      %2268 = vrot.lane.b32.xlu0 %v2262, 30
      %v2269 = vpop.permute.xlu0 %2268
      %2272 = vst.msk [vmem:[#allocation2 + $0x18] sm:$0xf] %vm786, %v2267
      %2273 = vst.msk [vmem:[#allocation2 + $0x1c] sm:$0xf] %vm786, %v2269
      %v2275 = vshrl.u32 %v2261, 16
      %v2277 = vrot.slane %v2275, 4
      %v2278 = vshll.u32 %v2261, 16
      %v2280 = vrot.slane %v2278, 5
      %v2281 = vor.u32 %v2277, %v2280
      %v2282 = vrot.slane %v2281, 4
      %v2284 = vshll.u32 %v2262, 16
      %v2286 = vrot.slane %v2284, 5
      %v2287 = vsel %vm567, %v2282, %v2286
      %v2288 = vshrl.u32 %v2262, 16
      %v2290 = vrot.slane %v2288, 4
      %v2291 = vor.u32 %v2290, %v2286
      %v2292 = vrot.slane %v2291, 4
      %v2294 = vshll.u32 %v2263, 16
      %v2296 = vrot.slane %v2294, 5
      %v2297 = vsel %vm567, %v2292, %v2296
      %2298 = vrot.lane.b32.xlu0 %v2287, 33
      %v2299 = vpop.permute.xlu0 %2298
      %2300 = vrot.lane.b32.xlu0 %v2297, 33
      %v2301 = vpop.permute.xlu0 %2300
      %2304 = vst.msk [vmem:[#allocation2 + $0x18] sm:$0xf] %vm819, %v2299
      %2305 = vst.msk [vmem:[#allocation2 + $0x1c] sm:$0xf] %vm819, %v2301
      %v2307 = vrot.slane %v2261, 5
      %v2308 = vrot.slane %v2307, 4
      %v2309 = vrot.slane %v2262, 5
      %v2310 = vsel %vm606, %v2308, %v2309
      %v2311 = vrot.slane %v2309, 4
      %v2312 = vrot.slane %v2263, 5
      %v2313 = vsel %vm606, %v2311, %v2312
      %2314 = vrot.lane.b32.xlu0 %v2310, 36
      %v2315 = vpop.permute.xlu0 %2314
      %2316 = vrot.lane.b32.xlu0 %v2313, 36
      %v2317 = vpop.permute.xlu0 %2316
      %2320 = vst.msk [vmem:[#allocation2 + $0x18] sm:$0xf] %vm836, %v2315
      %2321 = vst.msk [vmem:[#allocation2 + $0x1c] sm:$0xf] %vm836, %v2317
      %v2322 = vrot.slane %v2275, 5
      %v2323 = vrot.slane %v2278, 6
      %v2324 = vor.u32 %v2322, %v2323
      %v2325 = vrot.slane %v2324, 4
      %v2326 = vrot.slane %v2288, 5
      %v2327 = vrot.slane %v2284, 6
      %v2328 = vor.u32 %v2326, %v2327
      %v2329 = vsel %vm625, %v2325, %v2328
      %v2330 = vrot.slane %v2328, 4
      %v2331 = vshrl.u32 %v2263, 16
      %v2333 = vrot.slane %v2331, 5
      %v2334 = vrot.slane %v2294, 6
      %v2335 = vor.u32 %v2333, %v2334
      %v2336 = vsel %vm625, %v2330, %v2335
      %2337 = vrot.lane.b32.xlu0 %v2329, 39
      %v2338 = vpop.permute.xlu0 %2337
      %2339 = vrot.lane.b32.xlu0 %v2336, 39
      %v2340 = vpop.permute.xlu0 %2339
      %2343 = vst.msk [vmem:[#allocation2 + $0x18] sm:$0xf] %vm860, %v2338
      %2344 = vst.msk [vmem:[#allocation2 + $0x1c] sm:$0xf] %vm860, %v2340
      %v2345 = vrot.slane %v2261, 6
      %v2346 = vrot.slane %v2345, 4
      %v2347 = vrot.slane %v2262, 6
      %v2348 = vsel %vm652, %v2346, %v2347
      %v2349 = vrot.slane %v2347, 4
      %v2350 = vrot.slane %v2263, 6
      %v2351 = vsel %vm652, %v2349, %v2350
      %2352 = vrot.lane.b32.xlu0 %v2348, 42
      %v2353 = vpop.permute.xlu0 %2352
      %2354 = vrot.lane.b32.xlu0 %v2351, 42
      %v2355 = vpop.permute.xlu0 %2354
      %2358 = vst.msk [vmem:[#allocation2 + $0x18] sm:$0xf] %vm876, %v2353
      %2359 = vst.msk [vmem:[#allocation2 + $0x1c] sm:$0xf] %vm876, %v2355
      %v2360 = vld [vmem:[%s1969] sm:$0xf]
      %v2361 = vld [vmem:[%s1969 + $0x4] sm:$0xf]
      %v2362 = vld [vmem:[%s1969 + $0x8] sm:$0x3]
      %2365 = vrot.lane.b32.xlu0 %v2360, 45
      %v2366 = vpop.permute.xlu0 %2365
      %2367 = vrot.lane.b32.xlu0 %v2361, 45
      %v2368 = vpop.permute.xlu0 %2367
      %2371 = vst.msk [vmem:[#allocation2 + $0x18] sm:$0xf] %vm891, %v2366
      %2372 = vst.msk [vmem:[#allocation2 + $0x1c] sm:$0xf] %vm891, %v2368
      %v2374 = vshrl.u32 %v2360, 16
      %v2376 = vrot.slane %v2374, 4
      %v2377 = vshll.u32 %v2360, 16
      %v2379 = vrot.slane %v2377, 5
      %v2380 = vor.u32 %v2376, %v2379
      %v2381 = vrot.slane %v2380, 4
      %v2383 = vshll.u32 %v2361, 16
      %v2385 = vrot.slane %v2383, 5
      %v2386 = vsel %vm567, %v2381, %v2385
      %v2387 = vshrl.u32 %v2361, 16
      %v2389 = vrot.slane %v2387, 4
      %v2390 = vor.u32 %v2389, %v2385
      %v2391 = vrot.slane %v2390, 4
      %v2393 = vshll.u32 %v2362, 16
      %v2395 = vrot.slane %v2393, 5
      %v2396 = vsel %vm567, %v2391, %v2395
      %2397 = vrot.lane.b32.xlu0 %v2386, 48
      %v2398 = vpop.permute.xlu0 %2397
      %2399 = vrot.lane.b32.xlu0 %v2396, 48
      %v2400 = vpop.permute.xlu0 %2399
      %2403 = vst.msk [vmem:[#allocation2 + $0x18] sm:$0xf] %vm924, %v2398
      %2404 = vst.msk [vmem:[#allocation2 + $0x1c] sm:$0xf] %vm924, %v2400
      %v2406 = vrot.slane %v2360, 5
      %v2407 = vrot.slane %v2406, 4
      %v2408 = vrot.slane %v2361, 5
      %v2409 = vsel %vm606, %v2407, %v2408
      %v2410 = vrot.slane %v2408, 4
      %v2411 = vrot.slane %v2362, 5
      %v2412 = vsel %vm606, %v2410, %v2411
      %2413 = vrot.lane.b32.xlu0 %v2409, 51
      %v2414 = vpop.permute.xlu0 %2413
      %2415 = vrot.lane.b32.xlu0 %v2412, 51
      %v2416 = vpop.permute.xlu0 %2415
      %2419 = vst.msk [vmem:[#allocation2 + $0x18] sm:$0xf] %vm941, %v2414
      %2420 = vst.msk [vmem:[#allocation2 + $0x1c] sm:$0xf] %vm941, %v2416
      %v2421 = vrot.slane %v2374, 5
      %v2422 = vrot.slane %v2377, 6
      %v2423 = vor.u32 %v2421, %v2422
      %v2424 = vrot.slane %v2423, 4
      %v2425 = vrot.slane %v2387, 5
      %v2426 = vrot.slane %v2383, 6
      %v2427 = vor.u32 %v2425, %v2426
      %v2428 = vsel %vm625, %v2424, %v2427
      %v2429 = vrot.slane %v2427, 4
      %v2430 = vshrl.u32 %v2362, 16
      %v2432 = vrot.slane %v2430, 5
      %v2433 = vrot.slane %v2393, 6
      %v2434 = vor.u32 %v2432, %v2433
      %v2435 = vsel %vm625, %v2429, %v2434
      %2436 = vrot.lane.b32.xlu0 %v2428, 54
      %v2437 = vpop.permute.xlu0 %2436
      %2438 = vrot.lane.b32.xlu0 %v2435, 54
      %v2439 = vpop.permute.xlu0 %2438
      %2442 = vst.msk [vmem:[#allocation2 + $0x18] sm:$0xf] %vm965, %v2437
      %2443 = vst.msk [vmem:[#allocation2 + $0x1c] sm:$0xf] %vm965, %v2439
      %v2444 = vrot.slane %v2360, 6
      %v2445 = vrot.slane %v2444, 4
      %v2446 = vrot.slane %v2361, 6
      %v2447 = vsel %vm652, %v2445, %v2446
      %v2448 = vrot.slane %v2446, 4
      %v2449 = vrot.slane %v2362, 6
      %v2450 = vsel %vm652, %v2448, %v2449
      %2451 = vrot.lane.b32.xlu0 %v2447, 57
      %v2452 = vpop.permute.xlu0 %2451
      %2453 = vrot.lane.b32.xlu0 %v2450, 57
      %v2454 = vpop.permute.xlu0 %2453
      %2457 = vst.msk [vmem:[#allocation2 + $0x18] sm:$0xf] %vm981, %v2452
      %2458 = vst.msk [vmem:[#allocation2 + $0x1c] sm:$0xf] %vm981, %v2454
      %s2459 = scalar_lea.vmem %s484, 84
      %v2460 = vld [vmem:[%s2459] sm:$0xf]
      %v2461 = vld [vmem:[%s2459 + $0x4] sm:$0xf]
      %v2462 = vld [vmem:[%s2459 + $0x8] sm:$0x3]
      %2465 = vrot.lane.b32.xlu0 %v2460, 60
      %v2466 = vpop.permute.xlu0 %2465
      %2467 = vrot.lane.b32.xlu0 %v2461, 60
      %v2468 = vpop.permute.xlu0 %2467
      %2471 = vst.msk [vmem:[#allocation2 + $0x18] sm:$0xf] %vm996, %v2466
      %2472 = vst.msk [vmem:[#allocation2 + $0x1c] sm:$0xf] %vm996, %v2468
      %v2474 = vshrl.u32 %v2460, 16
      %v2476 = vrot.slane %v2474, 4
      %v2477 = vshll.u32 %v2460, 16
      %v2479 = vrot.slane %v2477, 5
      %v2480 = vor.u32 %v2476, %v2479
      %v2481 = vrot.slane %v2480, 4
      %v2483 = vshll.u32 %v2461, 16
      %v2485 = vrot.slane %v2483, 5
      %v2486 = vsel %vm567, %v2481, %v2485
      %v2487 = vshrl.u32 %v2461, 16
      %v2489 = vrot.slane %v2487, 4
      %v2490 = vor.u32 %v2489, %v2485
      %v2491 = vrot.slane %v2490, 4
      %v2493 = vshll.u32 %v2462, 16
      %v2495 = vrot.slane %v2493, 5
      %v2496 = vsel %vm567, %v2491, %v2495
      %2497 = vrot.lane.b32.xlu0 %v2486, 63
      %v2498 = vpop.permute.xlu0 %2497
      %2499 = vrot.lane.b32.xlu0 %v2496, 63
      %v2500 = vpop.permute.xlu0 %2499
      %2503 = vst.msk [vmem:[#allocation2 + $0x18] sm:$0xf] %vm1029, %v2498
      %2504 = vst.msk [vmem:[#allocation2 + $0x1c] sm:$0xf] %vm1029, %v2500
      %v2506 = vrot.slane %v2460, 5
      %v2507 = vrot.slane %v2506, 4
      %v2508 = vrot.slane %v2461, 5
      %v2509 = vsel %vm606, %v2507, %v2508
      %v2510 = vrot.slane %v2508, 4
      %v2511 = vrot.slane %v2462, 5
      %v2512 = vsel %vm606, %v2510, %v2511
      %2513 = vrot.lane.b32.xlu0 %v2509, 66
      %v2514 = vpop.permute.xlu0 %2513
      %2515 = vrot.lane.b32.xlu0 %v2512, 66
      %v2516 = vpop.permute.xlu0 %2515
      %2519 = vst.msk [vmem:[#allocation2 + $0x18] sm:$0xf] %vm1046, %v2514
      %2520 = vst.msk [vmem:[#allocation2 + $0x1c] sm:$0xf] %vm1046, %v2516
      %v2521 = vrot.slane %v2474, 5
      %v2522 = vrot.slane %v2477, 6
      %v2523 = vor.u32 %v2521, %v2522
      %v2524 = vrot.slane %v2523, 4
      %v2525 = vrot.slane %v2487, 5
      %v2526 = vrot.slane %v2483, 6
      %v2527 = vor.u32 %v2525, %v2526
      %v2528 = vsel %vm625, %v2524, %v2527
      %v2529 = vrot.slane %v2527, 4
      %v2530 = vshrl.u32 %v2462, 16
      %v2532 = vrot.slane %v2530, 5
      %v2533 = vrot.slane %v2493, 6
      %v2534 = vor.u32 %v2532, %v2533
      %v2535 = vsel %vm625, %v2529, %v2534
      %2536 = vrot.lane.b32.xlu0 %v2528, 69
      %v2537 = vpop.permute.xlu0 %2536
      %2538 = vrot.lane.b32.xlu0 %v2535, 69
      %v2539 = vpop.permute.xlu0 %2538
      %2542 = vst.msk [vmem:[#allocation2 + $0x18] sm:$0xf] %vm1070, %v2537
      %2543 = vst.msk [vmem:[#allocation2 + $0x1c] sm:$0xf] %vm1070, %v2539
      %v2544 = vrot.slane %v2460, 6
      %v2545 = vrot.slane %v2544, 4
      %v2546 = vrot.slane %v2461, 6
      %v2547 = vsel %vm652, %v2545, %v2546
      %v2548 = vrot.slane %v2546, 4
      %v2549 = vrot.slane %v2462, 6
      %v2550 = vsel %vm652, %v2548, %v2549
      %2551 = vrot.lane.b32.xlu0 %v2547, 72
      %v2552 = vpop.permute.xlu0 %2551
      %2553 = vrot.lane.b32.xlu0 %v2550, 72
      %v2554 = vpop.permute.xlu0 %2553
      %2557 = vst.msk [vmem:[#allocation2 + $0x18] sm:$0xf] %vm1086, %v2552
      %2558 = vst.msk [vmem:[#allocation2 + $0x1c] sm:$0xf] %vm1086, %v2554
      %v2559 = vld [vmem:[%s984] sm:$0xf]
      %v2560 = vld [vmem:[%s984 + $0x4] sm:$0xf]
      %v2561 = vld [vmem:[%s984 + $0x8] sm:$0x3]
      %2562 = vst.msk [vmem:[#allocation2 + $0x20] sm:$0xf] %vm562, %v2559
      %2563 = vst.msk [vmem:[#allocation2 + $0x24] sm:$0xf] %vm562, %v2560
      %v2565 = vshrl.u32 %v2559, 16
      %v2567 = vrot.slane %v2565, 4
      %v2568 = vshll.u32 %v2559, 16
      %v2570 = vrot.slane %v2568, 5
      %v2571 = vor.u32 %v2567, %v2570
      %v2572 = vrot.slane %v2571, 4
      %v2574 = vshll.u32 %v2560, 16
      %v2576 = vrot.slane %v2574, 5
      %v2577 = vsel %vm567, %v2572, %v2576
      %v2578 = vshrl.u32 %v2560, 16
      %v2580 = vrot.slane %v2578, 4
      %v2581 = vor.u32 %v2580, %v2576
      %v2582 = vrot.slane %v2581, 4
      %v2584 = vshll.u32 %v2561, 16
      %v2586 = vrot.slane %v2584, 5
      %v2587 = vsel %vm567, %v2582, %v2586
      %2588 = vrot.lane.b32.xlu0 %v2577, 3
      %v2589 = vpop.permute.xlu0 %2588
      %2590 = vrot.lane.b32.xlu0 %v2587, 3
      %v2591 = vpop.permute.xlu0 %2590
      %2594 = vst.msk [vmem:[#allocation2 + $0x20] sm:$0xf] %vm598, %v2589
      %2595 = vst.msk [vmem:[#allocation2 + $0x24] sm:$0xf] %vm598, %v2591
      %v2599 = vrot.slane %v2559, 5
      %v2600 = vrot.slane %v2599, 4
      %v2601 = vrot.slane %v2560, 5
      %v2602 = vsel %vm606, %v2600, %v2601
      %v2603 = vrot.slane %v2601, 4
      %v2604 = vrot.slane %v2561, 5
      %v2605 = vsel %vm606, %v2603, %v2604
      %2606 = vrot.lane.b32.xlu0 %v2602, 6
      %v2607 = vpop.permute.xlu0 %2606
      %2608 = vrot.lane.b32.xlu0 %v2605, 6
      %v2609 = vpop.permute.xlu0 %2608
      %2612 = vst.msk [vmem:[#allocation2 + $0x20] sm:$0xf] %vm620, %v2607
      %2613 = vst.msk [vmem:[#allocation2 + $0x24] sm:$0xf] %vm620, %v2609
      %v2614 = vrot.slane %v2565, 5
      %v2615 = vrot.slane %v2568, 6
      %v2616 = vor.u32 %v2614, %v2615
      %v2617 = vrot.slane %v2616, 4
      %v2618 = vrot.slane %v2578, 5
      %v2619 = vrot.slane %v2574, 6
      %v2620 = vor.u32 %v2618, %v2619
      %v2621 = vsel %vm625, %v2617, %v2620
      %v2622 = vrot.slane %v2620, 4
      %v2623 = vshrl.u32 %v2561, 16
      %v2625 = vrot.slane %v2623, 5
      %v2626 = vrot.slane %v2584, 6
      %v2627 = vor.u32 %v2625, %v2626
      %v2628 = vsel %vm625, %v2622, %v2627
      %2629 = vrot.lane.b32.xlu0 %v2621, 9
      %v2630 = vpop.permute.xlu0 %2629
      %2631 = vrot.lane.b32.xlu0 %v2628, 9
      %v2632 = vpop.permute.xlu0 %2631
      %2635 = vst.msk [vmem:[#allocation2 + $0x20] sm:$0xf] %vm647, %v2630
      %2636 = vst.msk [vmem:[#allocation2 + $0x24] sm:$0xf] %vm647, %v2632
      %v2637 = vrot.slane %v2559, 6
      %v2638 = vrot.slane %v2637, 4
      %v2639 = vrot.slane %v2560, 6
      %v2640 = vsel %vm652, %v2638, %v2639
      %v2641 = vrot.slane %v2639, 4
      %v2642 = vrot.slane %v2561, 6
      %v2643 = vsel %vm652, %v2641, %v2642
      %2644 = vrot.lane.b32.xlu0 %v2640, 12
      %v2645 = vpop.permute.xlu0 %2644
      %2646 = vrot.lane.b32.xlu0 %v2643, 12
      %v2647 = vpop.permute.xlu0 %2646
      %2650 = vst.msk [vmem:[#allocation2 + $0x20] sm:$0xf] %vm666, %v2645
      %2651 = vst.msk [vmem:[#allocation2 + $0x24] sm:$0xf] %vm666, %v2647
      %v2652 = vld [vmem:[%s1479] sm:$0xf]
      %v2653 = vld [vmem:[%s1479 + $0x4] sm:$0xf]
      %v2654 = vld [vmem:[%s1479 + $0x8] sm:$0x3]
      %2657 = vrot.lane.b32.xlu0 %v2652, 15
      %v2658 = vpop.permute.xlu0 %2657
      %2659 = vrot.lane.b32.xlu0 %v2653, 15
      %v2660 = vpop.permute.xlu0 %2659
      %2663 = vst.msk [vmem:[#allocation2 + $0x20] sm:$0xf] %vm681, %v2658
      %2664 = vst.msk [vmem:[#allocation2 + $0x24] sm:$0xf] %vm681, %v2660
      %v2666 = vshrl.u32 %v2652, 16
      %v2668 = vrot.slane %v2666, 4
      %v2669 = vshll.u32 %v2652, 16
      %v2671 = vrot.slane %v2669, 5
      %v2672 = vor.u32 %v2668, %v2671
      %v2673 = vrot.slane %v2672, 4
      %v2675 = vshll.u32 %v2653, 16
      %v2677 = vrot.slane %v2675, 5
      %v2678 = vsel %vm567, %v2673, %v2677
      %v2679 = vshrl.u32 %v2653, 16
      %v2681 = vrot.slane %v2679, 4
      %v2682 = vor.u32 %v2681, %v2677
      %v2683 = vrot.slane %v2682, 4
      %v2685 = vshll.u32 %v2654, 16
      %v2687 = vrot.slane %v2685, 5
      %v2688 = vsel %vm567, %v2683, %v2687
      %2689 = vrot.lane.b32.xlu0 %v2678, 18
      %v2690 = vpop.permute.xlu0 %2689
      %2691 = vrot.lane.b32.xlu0 %v2688, 18
      %v2692 = vpop.permute.xlu0 %2691
      %2695 = vst.msk [vmem:[#allocation2 + $0x20] sm:$0xf] %vm714, %v2690
      %2696 = vst.msk [vmem:[#allocation2 + $0x24] sm:$0xf] %vm714, %v2692
      %v2698 = vrot.slane %v2652, 5
      %v2699 = vrot.slane %v2698, 4
      %v2700 = vrot.slane %v2653, 5
      %v2701 = vsel %vm606, %v2699, %v2700
      %v2702 = vrot.slane %v2700, 4
      %v2703 = vrot.slane %v2654, 5
      %v2704 = vsel %vm606, %v2702, %v2703
      %2705 = vrot.lane.b32.xlu0 %v2701, 21
      %v2706 = vpop.permute.xlu0 %2705
      %2707 = vrot.lane.b32.xlu0 %v2704, 21
      %v2708 = vpop.permute.xlu0 %2707
      %2711 = vst.msk [vmem:[#allocation2 + $0x20] sm:$0xf] %vm731, %v2706
      %2712 = vst.msk [vmem:[#allocation2 + $0x24] sm:$0xf] %vm731, %v2708
      %v2713 = vrot.slane %v2666, 5
      %v2714 = vrot.slane %v2669, 6
      %v2715 = vor.u32 %v2713, %v2714
      %v2716 = vrot.slane %v2715, 4
      %v2717 = vrot.slane %v2679, 5
      %v2718 = vrot.slane %v2675, 6
      %v2719 = vor.u32 %v2717, %v2718
      %v2720 = vsel %vm625, %v2716, %v2719
      %v2721 = vrot.slane %v2719, 4
      %v2722 = vshrl.u32 %v2654, 16
      %v2724 = vrot.slane %v2722, 5
      %v2725 = vrot.slane %v2685, 6
      %v2726 = vor.u32 %v2724, %v2725
      %v2727 = vsel %vm625, %v2721, %v2726
      %2728 = vrot.lane.b32.xlu0 %v2720, 24
      %v2729 = vpop.permute.xlu0 %2728
      %2730 = vrot.lane.b32.xlu0 %v2727, 24
      %v2731 = vpop.permute.xlu0 %2730
      %2734 = vst.msk [vmem:[#allocation2 + $0x20] sm:$0xf] %vm755, %v2729
      %2735 = vst.msk [vmem:[#allocation2 + $0x24] sm:$0xf] %vm755, %v2731
      %v2736 = vrot.slane %v2652, 6
      %v2737 = vrot.slane %v2736, 4
      %v2738 = vrot.slane %v2653, 6
      %v2739 = vsel %vm652, %v2737, %v2738
      %v2740 = vrot.slane %v2738, 4
      %v2741 = vrot.slane %v2654, 6
      %v2742 = vsel %vm652, %v2740, %v2741
      %2743 = vrot.lane.b32.xlu0 %v2739, 27
      %v2744 = vpop.permute.xlu0 %2743
      %2745 = vrot.lane.b32.xlu0 %v2742, 27
      %v2746 = vpop.permute.xlu0 %2745
      %2749 = vst.msk [vmem:[#allocation2 + $0x20] sm:$0xf] %vm771, %v2744
      %2750 = vst.msk [vmem:[#allocation2 + $0x24] sm:$0xf] %vm771, %v2746
      %v2751 = vld [vmem:[%s1969] sm:$0xf]
      %v2752 = vld [vmem:[%s1969 + $0x4] sm:$0xf]
      %v2753 = vld [vmem:[%s1969 + $0x8] sm:$0x3]
      %2756 = vrot.lane.b32.xlu0 %v2751, 30
      %v2757 = vpop.permute.xlu0 %2756
      %2758 = vrot.lane.b32.xlu0 %v2752, 30
      %v2759 = vpop.permute.xlu0 %2758
      %2762 = vst.msk [vmem:[#allocation2 + $0x20] sm:$0xf] %vm786, %v2757
      %2763 = vst.msk [vmem:[#allocation2 + $0x24] sm:$0xf] %vm786, %v2759
      %v2765 = vshrl.u32 %v2751, 16
      %v2767 = vrot.slane %v2765, 4
      %v2768 = vshll.u32 %v2751, 16
      %v2770 = vrot.slane %v2768, 5
      %v2771 = vor.u32 %v2767, %v2770
      %v2772 = vrot.slane %v2771, 4
      %v2774 = vshll.u32 %v2752, 16
      %v2776 = vrot.slane %v2774, 5
      %v2777 = vsel %vm567, %v2772, %v2776
      %v2778 = vshrl.u32 %v2752, 16
      %v2780 = vrot.slane %v2778, 4
      %v2781 = vor.u32 %v2780, %v2776
      %v2782 = vrot.slane %v2781, 4
      %v2784 = vshll.u32 %v2753, 16
      %v2786 = vrot.slane %v2784, 5
      %v2787 = vsel %vm567, %v2782, %v2786
      %2788 = vrot.lane.b32.xlu0 %v2777, 33
      %v2789 = vpop.permute.xlu0 %2788
      %2790 = vrot.lane.b32.xlu0 %v2787, 33
      %v2791 = vpop.permute.xlu0 %2790
      %2794 = vst.msk [vmem:[#allocation2 + $0x20] sm:$0xf] %vm819, %v2789
      %2795 = vst.msk [vmem:[#allocation2 + $0x24] sm:$0xf] %vm819, %v2791
      %v2797 = vrot.slane %v2751, 5
      %v2798 = vrot.slane %v2797, 4
      %v2799 = vrot.slane %v2752, 5
      %v2800 = vsel %vm606, %v2798, %v2799
      %v2801 = vrot.slane %v2799, 4
      %v2802 = vrot.slane %v2753, 5
      %v2803 = vsel %vm606, %v2801, %v2802
      %2804 = vrot.lane.b32.xlu0 %v2800, 36
      %v2805 = vpop.permute.xlu0 %2804
      %2806 = vrot.lane.b32.xlu0 %v2803, 36
      %v2807 = vpop.permute.xlu0 %2806
      %2810 = vst.msk [vmem:[#allocation2 + $0x20] sm:$0xf] %vm836, %v2805
      %2811 = vst.msk [vmem:[#allocation2 + $0x24] sm:$0xf] %vm836, %v2807
      %v2812 = vrot.slane %v2765, 5
      %v2813 = vrot.slane %v2768, 6
      %v2814 = vor.u32 %v2812, %v2813
      %v2815 = vrot.slane %v2814, 4
      %v2816 = vrot.slane %v2778, 5
      %v2817 = vrot.slane %v2774, 6
      %v2818 = vor.u32 %v2816, %v2817
      %v2819 = vsel %vm625, %v2815, %v2818
      %v2820 = vrot.slane %v2818, 4
      %v2821 = vshrl.u32 %v2753, 16
      %v2823 = vrot.slane %v2821, 5
      %v2824 = vrot.slane %v2784, 6
      %v2825 = vor.u32 %v2823, %v2824
      %v2826 = vsel %vm625, %v2820, %v2825
      %2827 = vrot.lane.b32.xlu0 %v2819, 39
      %v2828 = vpop.permute.xlu0 %2827
      %2829 = vrot.lane.b32.xlu0 %v2826, 39
      %v2830 = vpop.permute.xlu0 %2829
      %2833 = vst.msk [vmem:[#allocation2 + $0x20] sm:$0xf] %vm860, %v2828
      %2834 = vst.msk [vmem:[#allocation2 + $0x24] sm:$0xf] %vm860, %v2830
      %v2835 = vrot.slane %v2751, 6
      %v2836 = vrot.slane %v2835, 4
      %v2837 = vrot.slane %v2752, 6
      %v2838 = vsel %vm652, %v2836, %v2837
      %v2839 = vrot.slane %v2837, 4
      %v2840 = vrot.slane %v2753, 6
      %v2841 = vsel %vm652, %v2839, %v2840
      %2842 = vrot.lane.b32.xlu0 %v2838, 42
      %v2843 = vpop.permute.xlu0 %2842
      %2844 = vrot.lane.b32.xlu0 %v2841, 42
      %v2845 = vpop.permute.xlu0 %2844
      %2848 = vst.msk [vmem:[#allocation2 + $0x20] sm:$0xf] %vm876, %v2843
      %2849 = vst.msk [vmem:[#allocation2 + $0x24] sm:$0xf] %vm876, %v2845
      %v2850 = vld [vmem:[%s2459] sm:$0xf]
      %v2851 = vld [vmem:[%s2459 + $0x4] sm:$0xf]
      %v2852 = vld [vmem:[%s2459 + $0x8] sm:$0x3]
      %2855 = vrot.lane.b32.xlu0 %v2850, 45
      %v2856 = vpop.permute.xlu0 %2855
      %2857 = vrot.lane.b32.xlu0 %v2851, 45
      %v2858 = vpop.permute.xlu0 %2857
      %2861 = vst.msk [vmem:[#allocation2 + $0x20] sm:$0xf] %vm891, %v2856
      %2862 = vst.msk [vmem:[#allocation2 + $0x24] sm:$0xf] %vm891, %v2858
      %v2864 = vshrl.u32 %v2850, 16
      %v2866 = vrot.slane %v2864, 4
      %v2867 = vshll.u32 %v2850, 16
      %v2869 = vrot.slane %v2867, 5
      %v2870 = vor.u32 %v2866, %v2869
      %v2871 = vrot.slane %v2870, 4
      %v2873 = vshll.u32 %v2851, 16
      %v2875 = vrot.slane %v2873, 5
      %v2876 = vsel %vm567, %v2871, %v2875
      %v2877 = vshrl.u32 %v2851, 16
      %v2879 = vrot.slane %v2877, 4
      %v2880 = vor.u32 %v2879, %v2875
      %v2881 = vrot.slane %v2880, 4
      %v2883 = vshll.u32 %v2852, 16
      %v2885 = vrot.slane %v2883, 5
      %v2886 = vsel %vm567, %v2881, %v2885
      %2887 = vrot.lane.b32.xlu0 %v2876, 48
      %v2888 = vpop.permute.xlu0 %2887
      %2889 = vrot.lane.b32.xlu0 %v2886, 48
      %v2890 = vpop.permute.xlu0 %2889
      %2893 = vst.msk [vmem:[#allocation2 + $0x20] sm:$0xf] %vm924, %v2888
      %2894 = vst.msk [vmem:[#allocation2 + $0x24] sm:$0xf] %vm924, %v2890
      %v2896 = vrot.slane %v2850, 5
      %v2897 = vrot.slane %v2896, 4
      %v2898 = vrot.slane %v2851, 5
      %v2899 = vsel %vm606, %v2897, %v2898
      %v2900 = vrot.slane %v2898, 4
      %v2901 = vrot.slane %v2852, 5
      %v2902 = vsel %vm606, %v2900, %v2901
      %2903 = vrot.lane.b32.xlu0 %v2899, 51
      %v2904 = vpop.permute.xlu0 %2903
      %2905 = vrot.lane.b32.xlu0 %v2902, 51
      %v2906 = vpop.permute.xlu0 %2905
      %2909 = vst.msk [vmem:[#allocation2 + $0x20] sm:$0xf] %vm941, %v2904
      %2910 = vst.msk [vmem:[#allocation2 + $0x24] sm:$0xf] %vm941, %v2906
      %v2911 = vrot.slane %v2864, 5
      %v2912 = vrot.slane %v2867, 6
      %v2913 = vor.u32 %v2911, %v2912
      %v2914 = vrot.slane %v2913, 4
      %v2915 = vrot.slane %v2877, 5
      %v2916 = vrot.slane %v2873, 6
      %v2917 = vor.u32 %v2915, %v2916
      %v2918 = vsel %vm625, %v2914, %v2917
      %v2919 = vrot.slane %v2917, 4
      %v2920 = vshrl.u32 %v2852, 16
      %v2922 = vrot.slane %v2920, 5
      %v2923 = vrot.slane %v2883, 6
      %v2924 = vor.u32 %v2922, %v2923
      %v2925 = vsel %vm625, %v2919, %v2924
      %2926 = vrot.lane.b32.xlu0 %v2918, 54
      %v2927 = vpop.permute.xlu0 %2926
      %2928 = vrot.lane.b32.xlu0 %v2925, 54
      %v2929 = vpop.permute.xlu0 %2928
      %2932 = vst.msk [vmem:[#allocation2 + $0x20] sm:$0xf] %vm965, %v2927
      %2933 = vst.msk [vmem:[#allocation2 + $0x24] sm:$0xf] %vm965, %v2929
      %v2934 = vrot.slane %v2850, 6
      %v2935 = vrot.slane %v2934, 4
      %v2936 = vrot.slane %v2851, 6
      %v2937 = vsel %vm652, %v2935, %v2936
      %v2938 = vrot.slane %v2936, 4
      %v2939 = vrot.slane %v2852, 6
      %v2940 = vsel %vm652, %v2938, %v2939
      %2941 = vrot.lane.b32.xlu0 %v2937, 57
      %v2942 = vpop.permute.xlu0 %2941
      %2943 = vrot.lane.b32.xlu0 %v2940, 57
      %v2944 = vpop.permute.xlu0 %2943
      %2947 = vst.msk [vmem:[#allocation2 + $0x20] sm:$0xf] %vm981, %v2942
      %2948 = vst.msk [vmem:[#allocation2 + $0x24] sm:$0xf] %vm981, %v2944
      %v2949 = vld [vmem:[%s501] sm:$0xf]
      %v2950 = vld [vmem:[%s501 + $0x4] sm:$0xf]
      %v2951 = vld [vmem:[%s501 + $0x8] sm:$0x3]
      %2954 = vrot.lane.b32.xlu0 %v2949, 60
      %v2955 = vpop.permute.xlu0 %2954
      %2956 = vrot.lane.b32.xlu0 %v2950, 60
      %v2957 = vpop.permute.xlu0 %2956
      %2960 = vst.msk [vmem:[#allocation2 + $0x20] sm:$0xf] %vm996, %v2955
      %2961 = vst.msk [vmem:[#allocation2 + $0x24] sm:$0xf] %vm996, %v2957
      %v2963 = vshrl.u32 %v2949, 16
      %v2965 = vrot.slane %v2963, 4
      %v2966 = vshll.u32 %v2949, 16
      %v2968 = vrot.slane %v2966, 5
      %v2969 = vor.u32 %v2965, %v2968
      %v2970 = vrot.slane %v2969, 4
      %v2972 = vshll.u32 %v2950, 16
      %v2974 = vrot.slane %v2972, 5
      %v2975 = vsel %vm567, %v2970, %v2974
      %v2976 = vshrl.u32 %v2950, 16
      %v2978 = vrot.slane %v2976, 4
      %v2979 = vor.u32 %v2978, %v2974
      %v2980 = vrot.slane %v2979, 4
      %v2982 = vshll.u32 %v2951, 16
      %v2984 = vrot.slane %v2982, 5
      %v2985 = vsel %vm567, %v2980, %v2984
      %2986 = vrot.lane.b32.xlu0 %v2975, 63
      %v2987 = vpop.permute.xlu0 %2986
      %2988 = vrot.lane.b32.xlu0 %v2985, 63
      %v2989 = vpop.permute.xlu0 %2988
      %2992 = vst.msk [vmem:[#allocation2 + $0x20] sm:$0xf] %vm1029, %v2987
      %2993 = vst.msk [vmem:[#allocation2 + $0x24] sm:$0xf] %vm1029, %v2989
      %v2995 = vrot.slane %v2949, 5
      %v2996 = vrot.slane %v2995, 4
      %v2997 = vrot.slane %v2950, 5
      %v2998 = vsel %vm606, %v2996, %v2997
      %v2999 = vrot.slane %v2997, 4
      %v3000 = vrot.slane %v2951, 5
      %v3001 = vsel %vm606, %v2999, %v3000
      %3002 = vrot.lane.b32.xlu0 %v2998, 66
      %v3003 = vpop.permute.xlu0 %3002
      %3004 = vrot.lane.b32.xlu0 %v3001, 66
      %v3005 = vpop.permute.xlu0 %3004
      %3008 = vst.msk [vmem:[#allocation2 + $0x20] sm:$0xf] %vm1046, %v3003
      %3009 = vst.msk [vmem:[#allocation2 + $0x24] sm:$0xf] %vm1046, %v3005
      %v3010 = vrot.slane %v2963, 5
      %v3011 = vrot.slane %v2966, 6
      %v3012 = vor.u32 %v3010, %v3011
      %v3013 = vrot.slane %v3012, 4
      %v3014 = vrot.slane %v2976, 5
      %v3015 = vrot.slane %v2972, 6
      %v3016 = vor.u32 %v3014, %v3015
      %v3017 = vsel %vm625, %v3013, %v3016
      %v3018 = vrot.slane %v3016, 4
      %v3019 = vshrl.u32 %v2951, 16
      %v3021 = vrot.slane %v3019, 5
      %v3022 = vrot.slane %v2982, 6
      %v3023 = vor.u32 %v3021, %v3022
      %v3024 = vsel %vm625, %v3018, %v3023
      %3025 = vrot.lane.b32.xlu0 %v3017, 69
      %v3026 = vpop.permute.xlu0 %3025
      %3027 = vrot.lane.b32.xlu0 %v3024, 69
      %v3028 = vpop.permute.xlu0 %3027
      %3031 = vst.msk [vmem:[#allocation2 + $0x20] sm:$0xf] %vm1070, %v3026
      %3032 = vst.msk [vmem:[#allocation2 + $0x24] sm:$0xf] %vm1070, %v3028
      %v3033 = vrot.slane %v2949, 6
      %v3034 = vrot.slane %v3033, 4
      %v3035 = vrot.slane %v2950, 6
      %v3036 = vsel %vm652, %v3034, %v3035
      %v3037 = vrot.slane %v3035, 4
      %v3038 = vrot.slane %v2951, 6
      %v3039 = vsel %vm652, %v3037, %v3038
      %3040 = vrot.lane.b32.xlu0 %v3036, 72
      %v3041 = vpop.permute.xlu0 %3040
      %3042 = vrot.lane.b32.xlu0 %v3039, 72
      %v3043 = vpop.permute.xlu0 %3042
      %3046 = vst.msk [vmem:[#allocation2 + $0x20] sm:$0xf] %vm1086, %v3041
      %3047 = vst.msk [vmem:[#allocation2 + $0x24] sm:$0xf] %vm1086, %v3043
      %v3048 = vld [vmem:[%s1479] sm:$0xf]
      %v3049 = vld [vmem:[%s1479 + $0x4] sm:$0xf]
      %v3050 = vld [vmem:[%s1479 + $0x8] sm:$0x3]
      %3051 = vst.msk [vmem:[#allocation2 + $0x28] sm:$0xf] %vm562, %v3048
      %3052 = vst.msk [vmem:[#allocation2 + $0x2c] sm:$0xf] %vm562, %v3049
      %v3054 = vshrl.u32 %v3048, 16
      %v3056 = vrot.slane %v3054, 4
      %v3057 = vshll.u32 %v3048, 16
      %v3059 = vrot.slane %v3057, 5
      %v3060 = vor.u32 %v3056, %v3059
      %v3061 = vrot.slane %v3060, 4
      %v3063 = vshll.u32 %v3049, 16
      %v3065 = vrot.slane %v3063, 5
      %v3066 = vsel %vm567, %v3061, %v3065
      %v3067 = vshrl.u32 %v3049, 16
      %v3069 = vrot.slane %v3067, 4
      %v3070 = vor.u32 %v3069, %v3065
      %v3071 = vrot.slane %v3070, 4
      %v3073 = vshll.u32 %v3050, 16
      %v3075 = vrot.slane %v3073, 5
      %v3076 = vsel %vm567, %v3071, %v3075
      %3077 = vrot.lane.b32.xlu0 %v3066, 3
      %v3078 = vpop.permute.xlu0 %3077
      %3079 = vrot.lane.b32.xlu0 %v3076, 3
      %v3080 = vpop.permute.xlu0 %3079
      %3083 = vst.msk [vmem:[#allocation2 + $0x28] sm:$0xf] %vm598, %v3078
      %3084 = vst.msk [vmem:[#allocation2 + $0x2c] sm:$0xf] %vm598, %v3080
      %v3088 = vrot.slane %v3048, 5
      %v3089 = vrot.slane %v3088, 4
      %v3090 = vrot.slane %v3049, 5
      %v3091 = vsel %vm606, %v3089, %v3090
      %v3092 = vrot.slane %v3090, 4
      %v3093 = vrot.slane %v3050, 5
      %v3094 = vsel %vm606, %v3092, %v3093
      %3095 = vrot.lane.b32.xlu0 %v3091, 6
      %v3096 = vpop.permute.xlu0 %3095
      %3097 = vrot.lane.b32.xlu0 %v3094, 6
      %v3098 = vpop.permute.xlu0 %3097
      %3101 = vst.msk [vmem:[#allocation2 + $0x28] sm:$0xf] %vm620, %v3096
      %3102 = vst.msk [vmem:[#allocation2 + $0x2c] sm:$0xf] %vm620, %v3098
      %v3103 = vrot.slane %v3054, 5
      %v3104 = vrot.slane %v3057, 6
      %v3105 = vor.u32 %v3103, %v3104
      %v3106 = vrot.slane %v3105, 4
      %v3107 = vrot.slane %v3067, 5
      %v3108 = vrot.slane %v3063, 6
      %v3109 = vor.u32 %v3107, %v3108
      %v3110 = vsel %vm625, %v3106, %v3109
      %v3111 = vrot.slane %v3109, 4
      %v3112 = vshrl.u32 %v3050, 16
      %v3114 = vrot.slane %v3112, 5
      %v3115 = vrot.slane %v3073, 6
      %v3116 = vor.u32 %v3114, %v3115
      %v3117 = vsel %vm625, %v3111, %v3116
      %3118 = vrot.lane.b32.xlu0 %v3110, 9
      %v3119 = vpop.permute.xlu0 %3118
      %3120 = vrot.lane.b32.xlu0 %v3117, 9
      %v3121 = vpop.permute.xlu0 %3120
      %3124 = vst.msk [vmem:[#allocation2 + $0x28] sm:$0xf] %vm647, %v3119
      %3125 = vst.msk [vmem:[#allocation2 + $0x2c] sm:$0xf] %vm647, %v3121
      %v3126 = vrot.slane %v3048, 6
      %v3127 = vrot.slane %v3126, 4
      %v3128 = vrot.slane %v3049, 6
      %v3129 = vsel %vm652, %v3127, %v3128
      %v3130 = vrot.slane %v3128, 4
      %v3131 = vrot.slane %v3050, 6
      %v3132 = vsel %vm652, %v3130, %v3131
      %3133 = vrot.lane.b32.xlu0 %v3129, 12
      %v3134 = vpop.permute.xlu0 %3133
      %3135 = vrot.lane.b32.xlu0 %v3132, 12
      %v3136 = vpop.permute.xlu0 %3135
      %3139 = vst.msk [vmem:[#allocation2 + $0x28] sm:$0xf] %vm666, %v3134
      %3140 = vst.msk [vmem:[#allocation2 + $0x2c] sm:$0xf] %vm666, %v3136
      %v3141 = vld [vmem:[%s1969] sm:$0xf]
      %v3142 = vld [vmem:[%s1969 + $0x4] sm:$0xf]
      %v3143 = vld [vmem:[%s1969 + $0x8] sm:$0x3]
      %3146 = vrot.lane.b32.xlu0 %v3141, 15
      %v3147 = vpop.permute.xlu0 %3146
      %3148 = vrot.lane.b32.xlu0 %v3142, 15
      %v3149 = vpop.permute.xlu0 %3148
      %3152 = vst.msk [vmem:[#allocation2 + $0x28] sm:$0xf] %vm681, %v3147
      %3153 = vst.msk [vmem:[#allocation2 + $0x2c] sm:$0xf] %vm681, %v3149
      %v3155 = vshrl.u32 %v3141, 16
      %v3157 = vrot.slane %v3155, 4
      %v3158 = vshll.u32 %v3141, 16
      %v3160 = vrot.slane %v3158, 5
      %v3161 = vor.u32 %v3157, %v3160
      %v3162 = vrot.slane %v3161, 4
      %v3164 = vshll.u32 %v3142, 16
      %v3166 = vrot.slane %v3164, 5
      %v3167 = vsel %vm567, %v3162, %v3166
      %v3168 = vshrl.u32 %v3142, 16
      %v3170 = vrot.slane %v3168, 4
      %v3171 = vor.u32 %v3170, %v3166
      %v3172 = vrot.slane %v3171, 4
      %v3174 = vshll.u32 %v3143, 16
      %v3176 = vrot.slane %v3174, 5
      %v3177 = vsel %vm567, %v3172, %v3176
      %3178 = vrot.lane.b32.xlu0 %v3167, 18
      %v3179 = vpop.permute.xlu0 %3178
      %3180 = vrot.lane.b32.xlu0 %v3177, 18
      %v3181 = vpop.permute.xlu0 %3180
      %3184 = vst.msk [vmem:[#allocation2 + $0x28] sm:$0xf] %vm714, %v3179
      %3185 = vst.msk [vmem:[#allocation2 + $0x2c] sm:$0xf] %vm714, %v3181
      %v3187 = vrot.slane %v3141, 5
      %v3188 = vrot.slane %v3187, 4
      %v3189 = vrot.slane %v3142, 5
      %v3190 = vsel %vm606, %v3188, %v3189
      %v3191 = vrot.slane %v3189, 4
      %v3192 = vrot.slane %v3143, 5
      %v3193 = vsel %vm606, %v3191, %v3192
      %3194 = vrot.lane.b32.xlu0 %v3190, 21
      %v3195 = vpop.permute.xlu0 %3194
      %3196 = vrot.lane.b32.xlu0 %v3193, 21
      %v3197 = vpop.permute.xlu0 %3196
      %3200 = vst.msk [vmem:[#allocation2 + $0x28] sm:$0xf] %vm731, %v3195
      %3201 = vst.msk [vmem:[#allocation2 + $0x2c] sm:$0xf] %vm731, %v3197
      %v3202 = vrot.slane %v3155, 5
      %v3203 = vrot.slane %v3158, 6
      %v3204 = vor.u32 %v3202, %v3203
      %v3205 = vrot.slane %v3204, 4
      %v3206 = vrot.slane %v3168, 5
      %v3207 = vrot.slane %v3164, 6
      %v3208 = vor.u32 %v3206, %v3207
      %v3209 = vsel %vm625, %v3205, %v3208
      %v3210 = vrot.slane %v3208, 4
      %v3211 = vshrl.u32 %v3143, 16
      %v3213 = vrot.slane %v3211, 5
      %v3214 = vrot.slane %v3174, 6
      %v3215 = vor.u32 %v3213, %v3214
      %v3216 = vsel %vm625, %v3210, %v3215
      %3217 = vrot.lane.b32.xlu0 %v3209, 24
      %v3218 = vpop.permute.xlu0 %3217
      %3219 = vrot.lane.b32.xlu0 %v3216, 24
      %v3220 = vpop.permute.xlu0 %3219
      %3223 = vst.msk [vmem:[#allocation2 + $0x28] sm:$0xf] %vm755, %v3218
      %3224 = vst.msk [vmem:[#allocation2 + $0x2c] sm:$0xf] %vm755, %v3220
      %v3225 = vrot.slane %v3141, 6
      %v3226 = vrot.slane %v3225, 4
      %v3227 = vrot.slane %v3142, 6
      %v3228 = vsel %vm652, %v3226, %v3227
      %v3229 = vrot.slane %v3227, 4
      %v3230 = vrot.slane %v3143, 6
      %v3231 = vsel %vm652, %v3229, %v3230
      %3232 = vrot.lane.b32.xlu0 %v3228, 27
      %v3233 = vpop.permute.xlu0 %3232
      %3234 = vrot.lane.b32.xlu0 %v3231, 27
      %v3235 = vpop.permute.xlu0 %3234
      %3238 = vst.msk [vmem:[#allocation2 + $0x28] sm:$0xf] %vm771, %v3233
      %3239 = vst.msk [vmem:[#allocation2 + $0x2c] sm:$0xf] %vm771, %v3235
      %v3240 = vld [vmem:[%s2459] sm:$0xf]
      %v3241 = vld [vmem:[%s2459 + $0x4] sm:$0xf]
      %v3242 = vld [vmem:[%s2459 + $0x8] sm:$0x3]
      %3245 = vrot.lane.b32.xlu0 %v3240, 30
      %v3246 = vpop.permute.xlu0 %3245
      %3247 = vrot.lane.b32.xlu0 %v3241, 30
      %v3248 = vpop.permute.xlu0 %3247
      %3251 = vst.msk [vmem:[#allocation2 + $0x28] sm:$0xf] %vm786, %v3246
      %3252 = vst.msk [vmem:[#allocation2 + $0x2c] sm:$0xf] %vm786, %v3248
      %v3254 = vshrl.u32 %v3240, 16
      %v3256 = vrot.slane %v3254, 4
      %v3257 = vshll.u32 %v3240, 16
      %v3259 = vrot.slane %v3257, 5
      %v3260 = vor.u32 %v3256, %v3259
      %v3261 = vrot.slane %v3260, 4
      %v3263 = vshll.u32 %v3241, 16
      %v3265 = vrot.slane %v3263, 5
      %v3266 = vsel %vm567, %v3261, %v3265
      %v3267 = vshrl.u32 %v3241, 16
      %v3269 = vrot.slane %v3267, 4
      %v3270 = vor.u32 %v3269, %v3265
      %v3271 = vrot.slane %v3270, 4
      %v3273 = vshll.u32 %v3242, 16
      %v3275 = vrot.slane %v3273, 5
      %v3276 = vsel %vm567, %v3271, %v3275
      %3277 = vrot.lane.b32.xlu0 %v3266, 33
      %v3278 = vpop.permute.xlu0 %3277
      %3279 = vrot.lane.b32.xlu0 %v3276, 33
      %v3280 = vpop.permute.xlu0 %3279
      %3283 = vst.msk [vmem:[#allocation2 + $0x28] sm:$0xf] %vm819, %v3278
      %3284 = vst.msk [vmem:[#allocation2 + $0x2c] sm:$0xf] %vm819, %v3280
      %v3286 = vrot.slane %v3240, 5
      %v3287 = vrot.slane %v3286, 4
      %v3288 = vrot.slane %v3241, 5
      %v3289 = vsel %vm606, %v3287, %v3288
      %v3290 = vrot.slane %v3288, 4
      %v3291 = vrot.slane %v3242, 5
      %v3292 = vsel %vm606, %v3290, %v3291
      %3293 = vrot.lane.b32.xlu0 %v3289, 36
      %v3294 = vpop.permute.xlu0 %3293
      %3295 = vrot.lane.b32.xlu0 %v3292, 36
      %v3296 = vpop.permute.xlu0 %3295
      %3299 = vst.msk [vmem:[#allocation2 + $0x28] sm:$0xf] %vm836, %v3294
      %3300 = vst.msk [vmem:[#allocation2 + $0x2c] sm:$0xf] %vm836, %v3296
      %v3301 = vrot.slane %v3254, 5
      %v3302 = vrot.slane %v3257, 6
      %v3303 = vor.u32 %v3301, %v3302
      %v3304 = vrot.slane %v3303, 4
      %v3305 = vrot.slane %v3267, 5
      %v3306 = vrot.slane %v3263, 6
      %v3307 = vor.u32 %v3305, %v3306
      %v3308 = vsel %vm625, %v3304, %v3307
      %v3309 = vrot.slane %v3307, 4
      %v3310 = vshrl.u32 %v3242, 16
      %v3312 = vrot.slane %v3310, 5
      %v3313 = vrot.slane %v3273, 6
      %v3314 = vor.u32 %v3312, %v3313
      %v3315 = vsel %vm625, %v3309, %v3314
      %3316 = vrot.lane.b32.xlu0 %v3308, 39
      %v3317 = vpop.permute.xlu0 %3316
      %3318 = vrot.lane.b32.xlu0 %v3315, 39
      %v3319 = vpop.permute.xlu0 %3318
      %3322 = vst.msk [vmem:[#allocation2 + $0x28] sm:$0xf] %vm860, %v3317
      %3323 = vst.msk [vmem:[#allocation2 + $0x2c] sm:$0xf] %vm860, %v3319
      %v3324 = vrot.slane %v3240, 6
      %v3325 = vrot.slane %v3324, 4
      %v3326 = vrot.slane %v3241, 6
      %v3327 = vsel %vm652, %v3325, %v3326
      %v3328 = vrot.slane %v3326, 4
      %v3329 = vrot.slane %v3242, 6
      %v3330 = vsel %vm652, %v3328, %v3329
      %3331 = vrot.lane.b32.xlu0 %v3327, 42
      %v3332 = vpop.permute.xlu0 %3331
      %3333 = vrot.lane.b32.xlu0 %v3330, 42
      %v3334 = vpop.permute.xlu0 %3333
      %3337 = vst.msk [vmem:[#allocation2 + $0x28] sm:$0xf] %vm876, %v3332
      %3338 = vst.msk [vmem:[#allocation2 + $0x2c] sm:$0xf] %vm876, %v3334
      %v3339 = vld [vmem:[%s501] sm:$0xf]
      %v3340 = vld [vmem:[%s501 + $0x4] sm:$0xf]
      %v3341 = vld [vmem:[%s501 + $0x8] sm:$0x3]
      %3344 = vrot.lane.b32.xlu0 %v3339, 45
      %v3345 = vpop.permute.xlu0 %3344
      %3346 = vrot.lane.b32.xlu0 %v3340, 45
      %v3347 = vpop.permute.xlu0 %3346
      %3350 = vst.msk [vmem:[#allocation2 + $0x28] sm:$0xf] %vm891, %v3345
      %3351 = vst.msk [vmem:[#allocation2 + $0x2c] sm:$0xf] %vm891, %v3347
      %v3353 = vshrl.u32 %v3339, 16
      %v3355 = vrot.slane %v3353, 4
      %v3356 = vshll.u32 %v3339, 16
      %v3358 = vrot.slane %v3356, 5
      %v3359 = vor.u32 %v3355, %v3358
      %v3360 = vrot.slane %v3359, 4
      %v3362 = vshll.u32 %v3340, 16
      %v3364 = vrot.slane %v3362, 5
      %v3365 = vsel %vm567, %v3360, %v3364
      %v3366 = vshrl.u32 %v3340, 16
      %v3368 = vrot.slane %v3366, 4
      %v3369 = vor.u32 %v3368, %v3364
      %v3370 = vrot.slane %v3369, 4
      %v3372 = vshll.u32 %v3341, 16
      %v3374 = vrot.slane %v3372, 5
      %v3375 = vsel %vm567, %v3370, %v3374
      %3376 = vrot.lane.b32.xlu0 %v3365, 48
      %v3377 = vpop.permute.xlu0 %3376
      %3378 = vrot.lane.b32.xlu0 %v3375, 48
      %v3379 = vpop.permute.xlu0 %3378
      %3382 = vst.msk [vmem:[#allocation2 + $0x28] sm:$0xf] %vm924, %v3377
      %3383 = vst.msk [vmem:[#allocation2 + $0x2c] sm:$0xf] %vm924, %v3379
      %v3385 = vrot.slane %v3339, 5
      %v3386 = vrot.slane %v3385, 4
      %v3387 = vrot.slane %v3340, 5
      %v3388 = vsel %vm606, %v3386, %v3387
      %v3389 = vrot.slane %v3387, 4
      %v3390 = vrot.slane %v3341, 5
      %v3391 = vsel %vm606, %v3389, %v3390
      %3392 = vrot.lane.b32.xlu0 %v3388, 51
      %v3393 = vpop.permute.xlu0 %3392
      %3394 = vrot.lane.b32.xlu0 %v3391, 51
      %v3395 = vpop.permute.xlu0 %3394
      %3398 = vst.msk [vmem:[#allocation2 + $0x28] sm:$0xf] %vm941, %v3393
      %3399 = vst.msk [vmem:[#allocation2 + $0x2c] sm:$0xf] %vm941, %v3395
      %v3400 = vrot.slane %v3353, 5
      %v3401 = vrot.slane %v3356, 6
      %v3402 = vor.u32 %v3400, %v3401
      %v3403 = vrot.slane %v3402, 4
      %v3404 = vrot.slane %v3366, 5
      %v3405 = vrot.slane %v3362, 6
      %v3406 = vor.u32 %v3404, %v3405
      %v3407 = vsel %vm625, %v3403, %v3406
      %v3408 = vrot.slane %v3406, 4
      %v3409 = vshrl.u32 %v3341, 16
      %v3411 = vrot.slane %v3409, 5
      %v3412 = vrot.slane %v3372, 6
      %v3413 = vor.u32 %v3411, %v3412
      %v3414 = vsel %vm625, %v3408, %v3413
      %3415 = vrot.lane.b32.xlu0 %v3407, 54
      %v3416 = vpop.permute.xlu0 %3415
      %3417 = vrot.lane.b32.xlu0 %v3414, 54
      %v3418 = vpop.permute.xlu0 %3417
      %3421 = vst.msk [vmem:[#allocation2 + $0x28] sm:$0xf] %vm965, %v3416
      %3422 = vst.msk [vmem:[#allocation2 + $0x2c] sm:$0xf] %vm965, %v3418
      %v3423 = vrot.slane %v3339, 6
      %v3424 = vrot.slane %v3423, 4
      %v3425 = vrot.slane %v3340, 6
      %v3426 = vsel %vm652, %v3424, %v3425
      %v3427 = vrot.slane %v3425, 4
      %v3428 = vrot.slane %v3341, 6
      %v3429 = vsel %vm652, %v3427, %v3428
      %3430 = vrot.lane.b32.xlu0 %v3426, 57
      %v3431 = vpop.permute.xlu0 %3430
      %3432 = vrot.lane.b32.xlu0 %v3429, 57
      %v3433 = vpop.permute.xlu0 %3432
      %3436 = vst.msk [vmem:[#allocation2 + $0x28] sm:$0xf] %vm981, %v3431
      %3437 = vst.msk [vmem:[#allocation2 + $0x2c] sm:$0xf] %vm981, %v3433
      %v3438 = vld [vmem:[%s515] sm:$0xf]
      %v3439 = vld [vmem:[%s515 + $0x4] sm:$0xf]
      %v3440 = vld [vmem:[%s515 + $0x8] sm:$0x3]
      %3443 = vrot.lane.b32.xlu0 %v3438, 60
      %v3444 = vpop.permute.xlu0 %3443
      %3445 = vrot.lane.b32.xlu0 %v3439, 60
      %v3446 = vpop.permute.xlu0 %3445
      %3449 = vst.msk [vmem:[#allocation2 + $0x28] sm:$0xf] %vm996, %v3444
      %3450 = vst.msk [vmem:[#allocation2 + $0x2c] sm:$0xf] %vm996, %v3446
      %v3452 = vshrl.u32 %v3438, 16
      %v3454 = vrot.slane %v3452, 4
      %v3455 = vshll.u32 %v3438, 16
      %v3457 = vrot.slane %v3455, 5
      %v3458 = vor.u32 %v3454, %v3457
      %v3459 = vrot.slane %v3458, 4
      %v3461 = vshll.u32 %v3439, 16
      %v3463 = vrot.slane %v3461, 5
      %v3464 = vsel %vm567, %v3459, %v3463
      %v3465 = vshrl.u32 %v3439, 16
      %v3467 = vrot.slane %v3465, 4
      %v3468 = vor.u32 %v3467, %v3463
      %v3469 = vrot.slane %v3468, 4
      %v3471 = vshll.u32 %v3440, 16
      %v3473 = vrot.slane %v3471, 5
      %v3474 = vsel %vm567, %v3469, %v3473
      %3475 = vrot.lane.b32.xlu0 %v3464, 63
      %v3476 = vpop.permute.xlu0 %3475
      %3477 = vrot.lane.b32.xlu0 %v3474, 63
      %v3478 = vpop.permute.xlu0 %3477
      %3481 = vst.msk [vmem:[#allocation2 + $0x28] sm:$0xf] %vm1029, %v3476
      %3482 = vst.msk [vmem:[#allocation2 + $0x2c] sm:$0xf] %vm1029, %v3478
      %v3484 = vrot.slane %v3438, 5
      %v3485 = vrot.slane %v3484, 4
      %v3486 = vrot.slane %v3439, 5
      %v3487 = vsel %vm606, %v3485, %v3486
      %v3488 = vrot.slane %v3486, 4
      %v3489 = vrot.slane %v3440, 5
      %v3490 = vsel %vm606, %v3488, %v3489
      %3491 = vrot.lane.b32.xlu0 %v3487, 66
      %v3492 = vpop.permute.xlu0 %3491
      %3493 = vrot.lane.b32.xlu0 %v3490, 66
      %v3494 = vpop.permute.xlu0 %3493
      %3497 = vst.msk [vmem:[#allocation2 + $0x28] sm:$0xf] %vm1046, %v3492
      %3498 = vst.msk [vmem:[#allocation2 + $0x2c] sm:$0xf] %vm1046, %v3494
      %v3499 = vrot.slane %v3452, 5
      %v3500 = vrot.slane %v3455, 6
      %v3501 = vor.u32 %v3499, %v3500
      %v3502 = vrot.slane %v3501, 4
      %v3503 = vrot.slane %v3465, 5
      %v3504 = vrot.slane %v3461, 6
      %v3505 = vor.u32 %v3503, %v3504
      %v3506 = vsel %vm625, %v3502, %v3505
      %v3507 = vrot.slane %v3505, 4
      %v3508 = vshrl.u32 %v3440, 16
      %v3510 = vrot.slane %v3508, 5
      %v3511 = vrot.slane %v3471, 6
      %v3512 = vor.u32 %v3510, %v3511
      %v3513 = vsel %vm625, %v3507, %v3512
      %3514 = vrot.lane.b32.xlu0 %v3506, 69
      %v3515 = vpop.permute.xlu0 %3514
      %3516 = vrot.lane.b32.xlu0 %v3513, 69
      %v3517 = vpop.permute.xlu0 %3516
      %3520 = vst.msk [vmem:[#allocation2 + $0x28] sm:$0xf] %vm1070, %v3515
      %3521 = vst.msk [vmem:[#allocation2 + $0x2c] sm:$0xf] %vm1070, %v3517
      %v3522 = vrot.slane %v3438, 6
      %v3523 = vrot.slane %v3522, 4
      %v3524 = vrot.slane %v3439, 6
      %v3525 = vsel %vm652, %v3523, %v3524
      %v3526 = vrot.slane %v3524, 4
      %v3527 = vrot.slane %v3440, 6
      %v3528 = vsel %vm652, %v3526, %v3527
      %3529 = vrot.lane.b32.xlu0 %v3525, 72
      %v3530 = vpop.permute.xlu0 %3529
      %3531 = vrot.lane.b32.xlu0 %v3528, 72
      %v3532 = vpop.permute.xlu0 %3531
      %3535 = vst.msk [vmem:[#allocation2 + $0x28] sm:$0xf] %vm1086, %v3530
      %3536 = vst.msk [vmem:[#allocation2 + $0x2c] sm:$0xf] %vm1086, %v3532
      %v3537 = vld [vmem:[%s1969] sm:$0xf]
      %v3538 = vld [vmem:[%s1969 + $0x4] sm:$0xf]
      %v3539 = vld [vmem:[%s1969 + $0x8] sm:$0x3]
      %3540 = vst.msk [vmem:[#allocation2 + $0x30] sm:$0xf] %vm562, %v3537
      %3541 = vst.msk [vmem:[#allocation2 + $0x34] sm:$0xf] %vm562, %v3538
      %v3543 = vshrl.u32 %v3537, 16
      %v3545 = vrot.slane %v3543, 4
      %v3546 = vshll.u32 %v3537, 16
      %v3548 = vrot.slane %v3546, 5
      %v3549 = vor.u32 %v3545, %v3548
      %v3550 = vrot.slane %v3549, 4
      %v3552 = vshll.u32 %v3538, 16
      %v3554 = vrot.slane %v3552, 5
      %v3555 = vsel %vm567, %v3550, %v3554
      %v3556 = vshrl.u32 %v3538, 16
      %v3558 = vrot.slane %v3556, 4
      %v3559 = vor.u32 %v3558, %v3554
      %v3560 = vrot.slane %v3559, 4
      %v3562 = vshll.u32 %v3539, 16
      %v3564 = vrot.slane %v3562, 5
      %v3565 = vsel %vm567, %v3560, %v3564
      %3566 = vrot.lane.b32.xlu0 %v3555, 3
      %v3567 = vpop.permute.xlu0 %3566
      %3568 = vrot.lane.b32.xlu0 %v3565, 3
      %v3569 = vpop.permute.xlu0 %3568
      %3572 = vst.msk [vmem:[#allocation2 + $0x30] sm:$0xf] %vm598, %v3567
      %3573 = vst.msk [vmem:[#allocation2 + $0x34] sm:$0xf] %vm598, %v3569
      %v3577 = vrot.slane %v3537, 5
      %v3578 = vrot.slane %v3577, 4
      %v3579 = vrot.slane %v3538, 5
      %v3580 = vsel %vm606, %v3578, %v3579
      %v3581 = vrot.slane %v3579, 4
      %v3582 = vrot.slane %v3539, 5
      %v3583 = vsel %vm606, %v3581, %v3582
      %3584 = vrot.lane.b32.xlu0 %v3580, 6
      %v3585 = vpop.permute.xlu0 %3584
      %3586 = vrot.lane.b32.xlu0 %v3583, 6
      %v3587 = vpop.permute.xlu0 %3586
      %3590 = vst.msk [vmem:[#allocation2 + $0x30] sm:$0xf] %vm620, %v3585
      %3591 = vst.msk [vmem:[#allocation2 + $0x34] sm:$0xf] %vm620, %v3587
      %v3592 = vrot.slane %v3543, 5
      %v3593 = vrot.slane %v3546, 6
      %v3594 = vor.u32 %v3592, %v3593
      %v3595 = vrot.slane %v3594, 4
      %v3596 = vrot.slane %v3556, 5
      %v3597 = vrot.slane %v3552, 6
      %v3598 = vor.u32 %v3596, %v3597
      %v3599 = vsel %vm625, %v3595, %v3598
      %v3600 = vrot.slane %v3598, 4
      %v3601 = vshrl.u32 %v3539, 16
      %v3603 = vrot.slane %v3601, 5
      %v3604 = vrot.slane %v3562, 6
      %v3605 = vor.u32 %v3603, %v3604
      %v3606 = vsel %vm625, %v3600, %v3605
      %3607 = vrot.lane.b32.xlu0 %v3599, 9
      %v3608 = vpop.permute.xlu0 %3607
      %3609 = vrot.lane.b32.xlu0 %v3606, 9
      %v3610 = vpop.permute.xlu0 %3609
      %3613 = vst.msk [vmem:[#allocation2 + $0x30] sm:$0xf] %vm647, %v3608
      %3614 = vst.msk [vmem:[#allocation2 + $0x34] sm:$0xf] %vm647, %v3610
      %v3615 = vrot.slane %v3537, 6
      %v3616 = vrot.slane %v3615, 4
      %v3617 = vrot.slane %v3538, 6
      %v3618 = vsel %vm652, %v3616, %v3617
      %v3619 = vrot.slane %v3617, 4
      %v3620 = vrot.slane %v3539, 6
      %v3621 = vsel %vm652, %v3619, %v3620
      %3622 = vrot.lane.b32.xlu0 %v3618, 12
      %v3623 = vpop.permute.xlu0 %3622
      %3624 = vrot.lane.b32.xlu0 %v3621, 12
      %v3625 = vpop.permute.xlu0 %3624
      %3628 = vst.msk [vmem:[#allocation2 + $0x30] sm:$0xf] %vm666, %v3623
      %3629 = vst.msk [vmem:[#allocation2 + $0x34] sm:$0xf] %vm666, %v3625
      %v3630 = vld [vmem:[%s2459] sm:$0xf]
      %v3631 = vld [vmem:[%s2459 + $0x4] sm:$0xf]
      %v3632 = vld [vmem:[%s2459 + $0x8] sm:$0x3]
      %3635 = vrot.lane.b32.xlu0 %v3630, 15
      %v3636 = vpop.permute.xlu0 %3635
      %3637 = vrot.lane.b32.xlu0 %v3631, 15
      %v3638 = vpop.permute.xlu0 %3637
      %3641 = vst.msk [vmem:[#allocation2 + $0x30] sm:$0xf] %vm681, %v3636
      %3642 = vst.msk [vmem:[#allocation2 + $0x34] sm:$0xf] %vm681, %v3638
      %v3644 = vshrl.u32 %v3630, 16
      %v3646 = vrot.slane %v3644, 4
      %v3647 = vshll.u32 %v3630, 16
      %v3649 = vrot.slane %v3647, 5
      %v3650 = vor.u32 %v3646, %v3649
      %v3651 = vrot.slane %v3650, 4
      %v3653 = vshll.u32 %v3631, 16
      %v3655 = vrot.slane %v3653, 5
      %v3656 = vsel %vm567, %v3651, %v3655
      %v3657 = vshrl.u32 %v3631, 16
      %v3659 = vrot.slane %v3657, 4
      %v3660 = vor.u32 %v3659, %v3655
      %v3661 = vrot.slane %v3660, 4
      %v3663 = vshll.u32 %v3632, 16
      %v3665 = vrot.slane %v3663, 5
      %v3666 = vsel %vm567, %v3661, %v3665
      %3667 = vrot.lane.b32.xlu0 %v3656, 18
      %v3668 = vpop.permute.xlu0 %3667
      %3669 = vrot.lane.b32.xlu0 %v3666, 18
      %v3670 = vpop.permute.xlu0 %3669
      %3673 = vst.msk [vmem:[#allocation2 + $0x30] sm:$0xf] %vm714, %v3668
      %3674 = vst.msk [vmem:[#allocation2 + $0x34] sm:$0xf] %vm714, %v3670
      %v3676 = vrot.slane %v3630, 5
      %v3677 = vrot.slane %v3676, 4
      %v3678 = vrot.slane %v3631, 5
      %v3679 = vsel %vm606, %v3677, %v3678
      %v3680 = vrot.slane %v3678, 4
      %v3681 = vrot.slane %v3632, 5
      %v3682 = vsel %vm606, %v3680, %v3681
      %3683 = vrot.lane.b32.xlu0 %v3679, 21
      %v3684 = vpop.permute.xlu0 %3683
      %3685 = vrot.lane.b32.xlu0 %v3682, 21
      %v3686 = vpop.permute.xlu0 %3685
      %3689 = vst.msk [vmem:[#allocation2 + $0x30] sm:$0xf] %vm731, %v3684
      %3690 = vst.msk [vmem:[#allocation2 + $0x34] sm:$0xf] %vm731, %v3686
      %v3691 = vrot.slane %v3644, 5
      %v3692 = vrot.slane %v3647, 6
      %v3693 = vor.u32 %v3691, %v3692
      %v3694 = vrot.slane %v3693, 4
      %v3695 = vrot.slane %v3657, 5
      %v3696 = vrot.slane %v3653, 6
      %v3697 = vor.u32 %v3695, %v3696
      %v3698 = vsel %vm625, %v3694, %v3697
      %v3699 = vrot.slane %v3697, 4
      %v3700 = vshrl.u32 %v3632, 16
      %v3702 = vrot.slane %v3700, 5
      %v3703 = vrot.slane %v3663, 6
      %v3704 = vor.u32 %v3702, %v3703
      %v3705 = vsel %vm625, %v3699, %v3704
      %3706 = vrot.lane.b32.xlu0 %v3698, 24
      %v3707 = vpop.permute.xlu0 %3706
      %3708 = vrot.lane.b32.xlu0 %v3705, 24
      %v3709 = vpop.permute.xlu0 %3708
      %3712 = vst.msk [vmem:[#allocation2 + $0x30] sm:$0xf] %vm755, %v3707
      %3713 = vst.msk [vmem:[#allocation2 + $0x34] sm:$0xf] %vm755, %v3709
      %v3714 = vrot.slane %v3630, 6
      %v3715 = vrot.slane %v3714, 4
      %v3716 = vrot.slane %v3631, 6
      %v3717 = vsel %vm652, %v3715, %v3716
      %v3718 = vrot.slane %v3716, 4
      %v3719 = vrot.slane %v3632, 6
      %v3720 = vsel %vm652, %v3718, %v3719
      %3721 = vrot.lane.b32.xlu0 %v3717, 27
      %v3722 = vpop.permute.xlu0 %3721
      %3723 = vrot.lane.b32.xlu0 %v3720, 27
      %v3724 = vpop.permute.xlu0 %3723
      %3727 = vst.msk [vmem:[#allocation2 + $0x30] sm:$0xf] %vm771, %v3722
      %3728 = vst.msk [vmem:[#allocation2 + $0x34] sm:$0xf] %vm771, %v3724
      %v3729 = vld [vmem:[%s501] sm:$0xf]
      %v3730 = vld [vmem:[%s501 + $0x4] sm:$0xf]
      %v3731 = vld [vmem:[%s501 + $0x8] sm:$0x3]
      %3734 = vrot.lane.b32.xlu0 %v3729, 30
      %v3735 = vpop.permute.xlu0 %3734
      %3736 = vrot.lane.b32.xlu0 %v3730, 30
      %v3737 = vpop.permute.xlu0 %3736
      %3740 = vst.msk [vmem:[#allocation2 + $0x30] sm:$0xf] %vm786, %v3735
      %3741 = vst.msk [vmem:[#allocation2 + $0x34] sm:$0xf] %vm786, %v3737
      %v3743 = vshrl.u32 %v3729, 16
      %v3745 = vrot.slane %v3743, 4
      %v3746 = vshll.u32 %v3729, 16
      %v3748 = vrot.slane %v3746, 5
      %v3749 = vor.u32 %v3745, %v3748
      %v3750 = vrot.slane %v3749, 4
      %v3752 = vshll.u32 %v3730, 16
      %v3754 = vrot.slane %v3752, 5
      %v3755 = vsel %vm567, %v3750, %v3754
      %v3756 = vshrl.u32 %v3730, 16
      %v3758 = vrot.slane %v3756, 4
      %v3759 = vor.u32 %v3758, %v3754
      %v3760 = vrot.slane %v3759, 4
      %v3762 = vshll.u32 %v3731, 16
      %v3764 = vrot.slane %v3762, 5
      %v3765 = vsel %vm567, %v3760, %v3764
      %3766 = vrot.lane.b32.xlu0 %v3755, 33
      %v3767 = vpop.permute.xlu0 %3766
      %3768 = vrot.lane.b32.xlu0 %v3765, 33
      %v3769 = vpop.permute.xlu0 %3768
      %3772 = vst.msk [vmem:[#allocation2 + $0x30] sm:$0xf] %vm819, %v3767
      %3773 = vst.msk [vmem:[#allocation2 + $0x34] sm:$0xf] %vm819, %v3769
      %v3775 = vrot.slane %v3729, 5
      %v3776 = vrot.slane %v3775, 4
      %v3777 = vrot.slane %v3730, 5
      %v3778 = vsel %vm606, %v3776, %v3777
      %v3779 = vrot.slane %v3777, 4
      %v3780 = vrot.slane %v3731, 5
      %v3781 = vsel %vm606, %v3779, %v3780
      %3782 = vrot.lane.b32.xlu0 %v3778, 36
      %v3783 = vpop.permute.xlu0 %3782
      %3784 = vrot.lane.b32.xlu0 %v3781, 36
      %v3785 = vpop.permute.xlu0 %3784
      %3788 = vst.msk [vmem:[#allocation2 + $0x30] sm:$0xf] %vm836, %v3783
      %3789 = vst.msk [vmem:[#allocation2 + $0x34] sm:$0xf] %vm836, %v3785
      %v3790 = vrot.slane %v3743, 5
      %v3791 = vrot.slane %v3746, 6
      %v3792 = vor.u32 %v3790, %v3791
      %v3793 = vrot.slane %v3792, 4
      %v3794 = vrot.slane %v3756, 5
      %v3795 = vrot.slane %v3752, 6
      %v3796 = vor.u32 %v3794, %v3795
      %v3797 = vsel %vm625, %v3793, %v3796
      %v3798 = vrot.slane %v3796, 4
      %v3799 = vshrl.u32 %v3731, 16
      %v3801 = vrot.slane %v3799, 5
      %v3802 = vrot.slane %v3762, 6
      %v3803 = vor.u32 %v3801, %v3802
      %v3804 = vsel %vm625, %v3798, %v3803
      %3805 = vrot.lane.b32.xlu0 %v3797, 39
      %v3806 = vpop.permute.xlu0 %3805
      %3807 = vrot.lane.b32.xlu0 %v3804, 39
      %v3808 = vpop.permute.xlu0 %3807
      %3811 = vst.msk [vmem:[#allocation2 + $0x30] sm:$0xf] %vm860, %v3806
      %3812 = vst.msk [vmem:[#allocation2 + $0x34] sm:$0xf] %vm860, %v3808
      %v3813 = vrot.slane %v3729, 6
      %v3814 = vrot.slane %v3813, 4
      %v3815 = vrot.slane %v3730, 6
      %v3816 = vsel %vm652, %v3814, %v3815
      %v3817 = vrot.slane %v3815, 4
      %v3818 = vrot.slane %v3731, 6
      %v3819 = vsel %vm652, %v3817, %v3818
      %3820 = vrot.lane.b32.xlu0 %v3816, 42
      %v3821 = vpop.permute.xlu0 %3820
      %3822 = vrot.lane.b32.xlu0 %v3819, 42
      %v3823 = vpop.permute.xlu0 %3822
      %3826 = vst.msk [vmem:[#allocation2 + $0x30] sm:$0xf] %vm876, %v3821
      %3827 = vst.msk [vmem:[#allocation2 + $0x34] sm:$0xf] %vm876, %v3823
      %v3828 = vld [vmem:[%s515] sm:$0xf]
      %v3829 = vld [vmem:[%s515 + $0x4] sm:$0xf]
      %v3830 = vld [vmem:[%s515 + $0x8] sm:$0x3]
      %3833 = vrot.lane.b32.xlu0 %v3828, 45
      %v3834 = vpop.permute.xlu0 %3833
      %3835 = vrot.lane.b32.xlu0 %v3829, 45
      %v3836 = vpop.permute.xlu0 %3835
      %3839 = vst.msk [vmem:[#allocation2 + $0x30] sm:$0xf] %vm891, %v3834
      %3840 = vst.msk [vmem:[#allocation2 + $0x34] sm:$0xf] %vm891, %v3836
      %v3842 = vshrl.u32 %v3828, 16
      %v3844 = vrot.slane %v3842, 4
      %v3845 = vshll.u32 %v3828, 16
      %v3847 = vrot.slane %v3845, 5
      %v3848 = vor.u32 %v3844, %v3847
      %v3849 = vrot.slane %v3848, 4
      %v3851 = vshll.u32 %v3829, 16
      %v3853 = vrot.slane %v3851, 5
      %v3854 = vsel %vm567, %v3849, %v3853
      %v3855 = vshrl.u32 %v3829, 16
      %v3857 = vrot.slane %v3855, 4
      %v3858 = vor.u32 %v3857, %v3853
      %v3859 = vrot.slane %v3858, 4
      %v3861 = vshll.u32 %v3830, 16
      %v3863 = vrot.slane %v3861, 5
      %v3864 = vsel %vm567, %v3859, %v3863
      %3865 = vrot.lane.b32.xlu0 %v3854, 48
      %v3866 = vpop.permute.xlu0 %3865
      %3867 = vrot.lane.b32.xlu0 %v3864, 48
      %v3868 = vpop.permute.xlu0 %3867
      %3871 = vst.msk [vmem:[#allocation2 + $0x30] sm:$0xf] %vm924, %v3866
      %3872 = vst.msk [vmem:[#allocation2 + $0x34] sm:$0xf] %vm924, %v3868
      %v3874 = vrot.slane %v3828, 5
      %v3875 = vrot.slane %v3874, 4
      %v3876 = vrot.slane %v3829, 5
      %v3877 = vsel %vm606, %v3875, %v3876
      %v3878 = vrot.slane %v3876, 4
      %v3879 = vrot.slane %v3830, 5
      %v3880 = vsel %vm606, %v3878, %v3879
      %3881 = vrot.lane.b32.xlu0 %v3877, 51
      %v3882 = vpop.permute.xlu0 %3881
      %3883 = vrot.lane.b32.xlu0 %v3880, 51
      %v3884 = vpop.permute.xlu0 %3883
      %3887 = vst.msk [vmem:[#allocation2 + $0x30] sm:$0xf] %vm941, %v3882
      %3888 = vst.msk [vmem:[#allocation2 + $0x34] sm:$0xf] %vm941, %v3884
      %v3889 = vrot.slane %v3842, 5
      %v3890 = vrot.slane %v3845, 6
      %v3891 = vor.u32 %v3889, %v3890
      %v3892 = vrot.slane %v3891, 4
      %v3893 = vrot.slane %v3855, 5
      %v3894 = vrot.slane %v3851, 6
      %v3895 = vor.u32 %v3893, %v3894
      %v3896 = vsel %vm625, %v3892, %v3895
      %v3897 = vrot.slane %v3895, 4
      %v3898 = vshrl.u32 %v3830, 16
      %v3900 = vrot.slane %v3898, 5
      %v3901 = vrot.slane %v3861, 6
      %v3902 = vor.u32 %v3900, %v3901
      %v3903 = vsel %vm625, %v3897, %v3902
      %3904 = vrot.lane.b32.xlu0 %v3896, 54
      %v3905 = vpop.permute.xlu0 %3904
      %3906 = vrot.lane.b32.xlu0 %v3903, 54
      %v3907 = vpop.permute.xlu0 %3906
      %3910 = vst.msk [vmem:[#allocation2 + $0x30] sm:$0xf] %vm965, %v3905
      %3911 = vst.msk [vmem:[#allocation2 + $0x34] sm:$0xf] %vm965, %v3907
      %v3912 = vrot.slane %v3828, 6
      %v3913 = vrot.slane %v3912, 4
      %v3914 = vrot.slane %v3829, 6
      %v3915 = vsel %vm652, %v3913, %v3914
      %v3916 = vrot.slane %v3914, 4
      %v3917 = vrot.slane %v3830, 6
      %v3918 = vsel %vm652, %v3916, %v3917
      %3919 = vrot.lane.b32.xlu0 %v3915, 57
      %v3920 = vpop.permute.xlu0 %3919
      %3921 = vrot.lane.b32.xlu0 %v3918, 57
      %v3922 = vpop.permute.xlu0 %3921
      %3925 = vst.msk [vmem:[#allocation2 + $0x30] sm:$0xf] %vm981, %v3920
      %3926 = vst.msk [vmem:[#allocation2 + $0x34] sm:$0xf] %vm981, %v3922
      %v3927 = vld [vmem:[%s530] sm:$0xf]
      %v3928 = vld [vmem:[%s530 + $0x4] sm:$0xf]
      %v3929 = vld [vmem:[%s530 + $0x8] sm:$0x3]
      %3932 = vrot.lane.b32.xlu0 %v3927, 60
      %v3933 = vpop.permute.xlu0 %3932
      %3934 = vrot.lane.b32.xlu0 %v3928, 60
      %v3935 = vpop.permute.xlu0 %3934
      %3938 = vst.msk [vmem:[#allocation2 + $0x30] sm:$0xf] %vm996, %v3933
      %3939 = vst.msk [vmem:[#allocation2 + $0x34] sm:$0xf] %vm996, %v3935
      %v3941 = vshrl.u32 %v3927, 16
      %v3943 = vrot.slane %v3941, 4
      %v3944 = vshll.u32 %v3927, 16
      %v3946 = vrot.slane %v3944, 5
      %v3947 = vor.u32 %v3943, %v3946
      %v3948 = vrot.slane %v3947, 4
      %v3950 = vshll.u32 %v3928, 16
      %v3952 = vrot.slane %v3950, 5
      %v3953 = vsel %vm567, %v3948, %v3952
      %v3954 = vshrl.u32 %v3928, 16
      %v3956 = vrot.slane %v3954, 4
      %v3957 = vor.u32 %v3956, %v3952
      %v3958 = vrot.slane %v3957, 4
      %v3960 = vshll.u32 %v3929, 16
      %v3962 = vrot.slane %v3960, 5
      %v3963 = vsel %vm567, %v3958, %v3962
      %3964 = vrot.lane.b32.xlu0 %v3953, 63
      %v3965 = vpop.permute.xlu0 %3964
      %3966 = vrot.lane.b32.xlu0 %v3963, 63
      %v3967 = vpop.permute.xlu0 %3966
      %3970 = vst.msk [vmem:[#allocation2 + $0x30] sm:$0xf] %vm1029, %v3965
      %3971 = vst.msk [vmem:[#allocation2 + $0x34] sm:$0xf] %vm1029, %v3967
      %v3973 = vrot.slane %v3927, 5
      %v3974 = vrot.slane %v3973, 4
      %v3975 = vrot.slane %v3928, 5
      %v3976 = vsel %vm606, %v3974, %v3975
      %v3977 = vrot.slane %v3975, 4
      %v3978 = vrot.slane %v3929, 5
      %v3979 = vsel %vm606, %v3977, %v3978
      %3980 = vrot.lane.b32.xlu0 %v3976, 66
      %v3981 = vpop.permute.xlu0 %3980
      %3982 = vrot.lane.b32.xlu0 %v3979, 66
      %v3983 = vpop.permute.xlu0 %3982
      %3986 = vst.msk [vmem:[#allocation2 + $0x30] sm:$0xf] %vm1046, %v3981
      %3987 = vst.msk [vmem:[#allocation2 + $0x34] sm:$0xf] %vm1046, %v3983
      %v3988 = vrot.slane %v3941, 5
      %v3989 = vrot.slane %v3944, 6
      %v3990 = vor.u32 %v3988, %v3989
      %v3991 = vrot.slane %v3990, 4
      %v3992 = vrot.slane %v3954, 5
      %v3993 = vrot.slane %v3950, 6
      %v3994 = vor.u32 %v3992, %v3993
      %v3995 = vsel %vm625, %v3991, %v3994
      %v3996 = vrot.slane %v3994, 4
      %v3997 = vshrl.u32 %v3929, 16
      %v3999 = vrot.slane %v3997, 5
      %v4000 = vrot.slane %v3960, 6
      %v4001 = vor.u32 %v3999, %v4000
      %v4002 = vsel %vm625, %v3996, %v4001
      %4003 = vrot.lane.b32.xlu0 %v3995, 69
      %v4004 = vpop.permute.xlu0 %4003
      %4005 = vrot.lane.b32.xlu0 %v4002, 69
      %v4006 = vpop.permute.xlu0 %4005
      %4009 = vst.msk [vmem:[#allocation2 + $0x30] sm:$0xf] %vm1070, %v4004
      %4010 = vst.msk [vmem:[#allocation2 + $0x34] sm:$0xf] %vm1070, %v4006
      %v4011 = vrot.slane %v3927, 6
      %v4012 = vrot.slane %v4011, 4
      %v4013 = vrot.slane %v3928, 6
      %v4014 = vsel %vm652, %v4012, %v4013
      %v4015 = vrot.slane %v4013, 4
      %v4016 = vrot.slane %v3929, 6
      %v4017 = vsel %vm652, %v4015, %v4016
      %4018 = vrot.lane.b32.xlu0 %v4014, 72
      %v4019 = vpop.permute.xlu0 %4018
      %4020 = vrot.lane.b32.xlu0 %v4017, 72
      %v4021 = vpop.permute.xlu0 %4020
      %4024 = vst.msk [vmem:[#allocation2 + $0x30] sm:$0xf] %vm1086, %v4019
      %4025 = vst.msk [vmem:[#allocation2 + $0x34] sm:$0xf] %vm1086, %v4021
      %v4026 = vld [vmem:[%s2459] sm:$0xf]
      %v4027 = vld [vmem:[%s2459 + $0x4] sm:$0xf]
      %v4028 = vld [vmem:[%s2459 + $0x8] sm:$0x3]
      %4029 = vst.msk [vmem:[#allocation2 + $0x38] sm:$0xf] %vm562, %v4026
      %4030 = vst.msk [vmem:[#allocation2 + $0x3c] sm:$0xf] %vm562, %v4027
      %v4032 = vshrl.u32 %v4026, 16
      %v4034 = vrot.slane %v4032, 4
      %v4035 = vshll.u32 %v4026, 16
      %v4037 = vrot.slane %v4035, 5
      %v4038 = vor.u32 %v4034, %v4037
      %v4039 = vrot.slane %v4038, 4
      %v4041 = vshll.u32 %v4027, 16
      %v4043 = vrot.slane %v4041, 5
      %v4044 = vsel %vm567, %v4039, %v4043
      %v4045 = vshrl.u32 %v4027, 16
      %v4047 = vrot.slane %v4045, 4
      %v4048 = vor.u32 %v4047, %v4043
      %v4049 = vrot.slane %v4048, 4
      %v4051 = vshll.u32 %v4028, 16
      %v4053 = vrot.slane %v4051, 5
      %v4054 = vsel %vm567, %v4049, %v4053
      %4055 = vrot.lane.b32.xlu0 %v4044, 3
      %v4056 = vpop.permute.xlu0 %4055
      %4057 = vrot.lane.b32.xlu0 %v4054, 3
      %v4058 = vpop.permute.xlu0 %4057
      %4061 = vst.msk [vmem:[#allocation2 + $0x38] sm:$0xf] %vm598, %v4056
      %4062 = vst.msk [vmem:[#allocation2 + $0x3c] sm:$0xf] %vm598, %v4058
      %v4066 = vrot.slane %v4026, 5
      %v4067 = vrot.slane %v4066, 4
      %v4068 = vrot.slane %v4027, 5
      %v4069 = vsel %vm606, %v4067, %v4068
      %v4070 = vrot.slane %v4068, 4
      %v4071 = vrot.slane %v4028, 5
      %v4072 = vsel %vm606, %v4070, %v4071
      %4073 = vrot.lane.b32.xlu0 %v4069, 6
      %v4074 = vpop.permute.xlu0 %4073
      %4075 = vrot.lane.b32.xlu0 %v4072, 6
      %v4076 = vpop.permute.xlu0 %4075
      %4079 = vst.msk [vmem:[#allocation2 + $0x38] sm:$0xf] %vm620, %v4074
      %4080 = vst.msk [vmem:[#allocation2 + $0x3c] sm:$0xf] %vm620, %v4076
      %v4081 = vrot.slane %v4032, 5
      %v4082 = vrot.slane %v4035, 6
      %v4083 = vor.u32 %v4081, %v4082
      %v4084 = vrot.slane %v4083, 4
      %v4085 = vrot.slane %v4045, 5
      %v4086 = vrot.slane %v4041, 6
      %v4087 = vor.u32 %v4085, %v4086
      %v4088 = vsel %vm625, %v4084, %v4087
      %v4089 = vrot.slane %v4087, 4
      %v4090 = vshrl.u32 %v4028, 16
      %v4092 = vrot.slane %v4090, 5
      %v4093 = vrot.slane %v4051, 6
      %v4094 = vor.u32 %v4092, %v4093
      %v4095 = vsel %vm625, %v4089, %v4094
      %4096 = vrot.lane.b32.xlu0 %v4088, 9
      %v4097 = vpop.permute.xlu0 %4096
      %4098 = vrot.lane.b32.xlu0 %v4095, 9
      %v4099 = vpop.permute.xlu0 %4098
      %4102 = vst.msk [vmem:[#allocation2 + $0x38] sm:$0xf] %vm647, %v4097
      %4103 = vst.msk [vmem:[#allocation2 + $0x3c] sm:$0xf] %vm647, %v4099
      %v4104 = vrot.slane %v4026, 6
      %v4105 = vrot.slane %v4104, 4
      %v4106 = vrot.slane %v4027, 6
      %v4107 = vsel %vm652, %v4105, %v4106
      %v4108 = vrot.slane %v4106, 4
      %v4109 = vrot.slane %v4028, 6
      %v4110 = vsel %vm652, %v4108, %v4109
      %4111 = vrot.lane.b32.xlu0 %v4107, 12
      %v4112 = vpop.permute.xlu0 %4111
      %4113 = vrot.lane.b32.xlu0 %v4110, 12
      %v4114 = vpop.permute.xlu0 %4113
      %4117 = vst.msk [vmem:[#allocation2 + $0x38] sm:$0xf] %vm666, %v4112
      %4118 = vst.msk [vmem:[#allocation2 + $0x3c] sm:$0xf] %vm666, %v4114
      %v4119 = vld [vmem:[%s501] sm:$0xf]
      %v4120 = vld [vmem:[%s501 + $0x4] sm:$0xf]
      %v4121 = vld [vmem:[%s501 + $0x8] sm:$0x3]
      %4124 = vrot.lane.b32.xlu0 %v4119, 15
      %v4125 = vpop.permute.xlu0 %4124
      %4126 = vrot.lane.b32.xlu0 %v4120, 15
      %v4127 = vpop.permute.xlu0 %4126
      %4130 = vst.msk [vmem:[#allocation2 + $0x38] sm:$0xf] %vm681, %v4125
      %4131 = vst.msk [vmem:[#allocation2 + $0x3c] sm:$0xf] %vm681, %v4127
      %v4133 = vshrl.u32 %v4119, 16
      %v4135 = vrot.slane %v4133, 4
      %v4136 = vshll.u32 %v4119, 16
      %v4138 = vrot.slane %v4136, 5
      %v4139 = vor.u32 %v4135, %v4138
      %v4140 = vrot.slane %v4139, 4
      %v4142 = vshll.u32 %v4120, 16
      %v4144 = vrot.slane %v4142, 5
      %v4145 = vsel %vm567, %v4140, %v4144
      %v4146 = vshrl.u32 %v4120, 16
      %v4148 = vrot.slane %v4146, 4
      %v4149 = vor.u32 %v4148, %v4144
      %v4150 = vrot.slane %v4149, 4
      %v4152 = vshll.u32 %v4121, 16
      %v4154 = vrot.slane %v4152, 5
      %v4155 = vsel %vm567, %v4150, %v4154
      %4156 = vrot.lane.b32.xlu0 %v4145, 18
      %v4157 = vpop.permute.xlu0 %4156
      %4158 = vrot.lane.b32.xlu0 %v4155, 18
      %v4159 = vpop.permute.xlu0 %4158
      %4162 = vst.msk [vmem:[#allocation2 + $0x38] sm:$0xf] %vm714, %v4157
      %4163 = vst.msk [vmem:[#allocation2 + $0x3c] sm:$0xf] %vm714, %v4159
      %v4165 = vrot.slane %v4119, 5
      %v4166 = vrot.slane %v4165, 4
      %v4167 = vrot.slane %v4120, 5
      %v4168 = vsel %vm606, %v4166, %v4167
      %v4169 = vrot.slane %v4167, 4
      %v4170 = vrot.slane %v4121, 5
      %v4171 = vsel %vm606, %v4169, %v4170
      %4172 = vrot.lane.b32.xlu0 %v4168, 21
      %v4173 = vpop.permute.xlu0 %4172
      %4174 = vrot.lane.b32.xlu0 %v4171, 21
      %v4175 = vpop.permute.xlu0 %4174
      %4178 = vst.msk [vmem:[#allocation2 + $0x38] sm:$0xf] %vm731, %v4173
      %4179 = vst.msk [vmem:[#allocation2 + $0x3c] sm:$0xf] %vm731, %v4175
      %v4180 = vrot.slane %v4133, 5
      %v4181 = vrot.slane %v4136, 6
      %v4182 = vor.u32 %v4180, %v4181
      %v4183 = vrot.slane %v4182, 4
      %v4184 = vrot.slane %v4146, 5
      %v4185 = vrot.slane %v4142, 6
      %v4186 = vor.u32 %v4184, %v4185
      %v4187 = vsel %vm625, %v4183, %v4186
      %v4188 = vrot.slane %v4186, 4
      %v4189 = vshrl.u32 %v4121, 16
      %v4191 = vrot.slane %v4189, 5
      %v4192 = vrot.slane %v4152, 6
      %v4193 = vor.u32 %v4191, %v4192
      %v4194 = vsel %vm625, %v4188, %v4193
      %4195 = vrot.lane.b32.xlu0 %v4187, 24
      %v4196 = vpop.permute.xlu0 %4195
      %4197 = vrot.lane.b32.xlu0 %v4194, 24
      %v4198 = vpop.permute.xlu0 %4197
      %4201 = vst.msk [vmem:[#allocation2 + $0x38] sm:$0xf] %vm755, %v4196
      %4202 = vst.msk [vmem:[#allocation2 + $0x3c] sm:$0xf] %vm755, %v4198
      %v4203 = vrot.slane %v4119, 6
      %v4204 = vrot.slane %v4203, 4
      %v4205 = vrot.slane %v4120, 6
      %v4206 = vsel %vm652, %v4204, %v4205
      %v4207 = vrot.slane %v4205, 4
      %v4208 = vrot.slane %v4121, 6
      %v4209 = vsel %vm652, %v4207, %v4208
      %4210 = vrot.lane.b32.xlu0 %v4206, 27
      %v4211 = vpop.permute.xlu0 %4210
      %4212 = vrot.lane.b32.xlu0 %v4209, 27
      %v4213 = vpop.permute.xlu0 %4212
      %4216 = vst.msk [vmem:[#allocation2 + $0x38] sm:$0xf] %vm771, %v4211
      %4217 = vst.msk [vmem:[#allocation2 + $0x3c] sm:$0xf] %vm771, %v4213
      %v4218 = vld [vmem:[%s515] sm:$0xf]
      %v4219 = vld [vmem:[%s515 + $0x4] sm:$0xf]
      %v4220 = vld [vmem:[%s515 + $0x8] sm:$0x3]
      %4223 = vrot.lane.b32.xlu0 %v4218, 30
      %v4224 = vpop.permute.xlu0 %4223
      %4225 = vrot.lane.b32.xlu0 %v4219, 30
      %v4226 = vpop.permute.xlu0 %4225
      %4229 = vst.msk [vmem:[#allocation2 + $0x38] sm:$0xf] %vm786, %v4224
      %4230 = vst.msk [vmem:[#allocation2 + $0x3c] sm:$0xf] %vm786, %v4226
      %v4232 = vshrl.u32 %v4218, 16
      %v4234 = vrot.slane %v4232, 4
      %v4235 = vshll.u32 %v4218, 16
      %v4237 = vrot.slane %v4235, 5
      %v4238 = vor.u32 %v4234, %v4237
      %v4239 = vrot.slane %v4238, 4
      %v4241 = vshll.u32 %v4219, 16
      %v4243 = vrot.slane %v4241, 5
      %v4244 = vsel %vm567, %v4239, %v4243
      %v4245 = vshrl.u32 %v4219, 16
      %v4247 = vrot.slane %v4245, 4
      %v4248 = vor.u32 %v4247, %v4243
      %v4249 = vrot.slane %v4248, 4
      %v4251 = vshll.u32 %v4220, 16
      %v4253 = vrot.slane %v4251, 5
      %v4254 = vsel %vm567, %v4249, %v4253
      %4255 = vrot.lane.b32.xlu0 %v4244, 33
      %v4256 = vpop.permute.xlu0 %4255
      %4257 = vrot.lane.b32.xlu0 %v4254, 33
      %v4258 = vpop.permute.xlu0 %4257
      %4261 = vst.msk [vmem:[#allocation2 + $0x38] sm:$0xf] %vm819, %v4256
      %4262 = vst.msk [vmem:[#allocation2 + $0x3c] sm:$0xf] %vm819, %v4258
      %v4264 = vrot.slane %v4218, 5
      %v4265 = vrot.slane %v4264, 4
      %v4266 = vrot.slane %v4219, 5
      %v4267 = vsel %vm606, %v4265, %v4266
      %v4268 = vrot.slane %v4266, 4
      %v4269 = vrot.slane %v4220, 5
      %v4270 = vsel %vm606, %v4268, %v4269
      %4271 = vrot.lane.b32.xlu0 %v4267, 36
      %v4272 = vpop.permute.xlu0 %4271
      %4273 = vrot.lane.b32.xlu0 %v4270, 36
      %v4274 = vpop.permute.xlu0 %4273
      %4277 = vst.msk [vmem:[#allocation2 + $0x38] sm:$0xf] %vm836, %v4272
      %4278 = vst.msk [vmem:[#allocation2 + $0x3c] sm:$0xf] %vm836, %v4274
      %v4279 = vrot.slane %v4232, 5
      %v4280 = vrot.slane %v4235, 6
      %v4281 = vor.u32 %v4279, %v4280
      %v4282 = vrot.slane %v4281, 4
      %v4283 = vrot.slane %v4245, 5
      %v4284 = vrot.slane %v4241, 6
      %v4285 = vor.u32 %v4283, %v4284
      %v4286 = vsel %vm625, %v4282, %v4285
      %v4287 = vrot.slane %v4285, 4
      %v4288 = vshrl.u32 %v4220, 16
      %v4290 = vrot.slane %v4288, 5
      %v4291 = vrot.slane %v4251, 6
      %v4292 = vor.u32 %v4290, %v4291
      %v4293 = vsel %vm625, %v4287, %v4292
      %4294 = vrot.lane.b32.xlu0 %v4286, 39
      %v4295 = vpop.permute.xlu0 %4294
      %4296 = vrot.lane.b32.xlu0 %v4293, 39
      %v4297 = vpop.permute.xlu0 %4296
      %4300 = vst.msk [vmem:[#allocation2 + $0x38] sm:$0xf] %vm860, %v4295
      %4301 = vst.msk [vmem:[#allocation2 + $0x3c] sm:$0xf] %vm860, %v4297
      %v4302 = vrot.slane %v4218, 6
      %v4303 = vrot.slane %v4302, 4
      %v4304 = vrot.slane %v4219, 6
      %v4305 = vsel %vm652, %v4303, %v4304
      %v4306 = vrot.slane %v4304, 4
      %v4307 = vrot.slane %v4220, 6
      %v4308 = vsel %vm652, %v4306, %v4307
      %4309 = vrot.lane.b32.xlu0 %v4305, 42
      %v4310 = vpop.permute.xlu0 %4309
      %4311 = vrot.lane.b32.xlu0 %v4308, 42
      %v4312 = vpop.permute.xlu0 %4311
      %4315 = vst.msk [vmem:[#allocation2 + $0x38] sm:$0xf] %vm876, %v4310
      %4316 = vst.msk [vmem:[#allocation2 + $0x3c] sm:$0xf] %vm876, %v4312
      %v4317 = vld [vmem:[%s530] sm:$0xf]
      %v4318 = vld [vmem:[%s530 + $0x4] sm:$0xf]
      %v4319 = vld [vmem:[%s530 + $0x8] sm:$0x3]
      %4322 = vrot.lane.b32.xlu0 %v4317, 45
      %v4323 = vpop.permute.xlu0 %4322
      %4324 = vrot.lane.b32.xlu0 %v4318, 45
      %v4325 = vpop.permute.xlu0 %4324
      %4328 = vst.msk [vmem:[#allocation2 + $0x38] sm:$0xf] %vm891, %v4323
      %4329 = vst.msk [vmem:[#allocation2 + $0x3c] sm:$0xf] %vm891, %v4325
      %v4331 = vshrl.u32 %v4317, 16
      %v4333 = vrot.slane %v4331, 4
      %v4334 = vshll.u32 %v4317, 16
      %v4336 = vrot.slane %v4334, 5
      %v4337 = vor.u32 %v4333, %v4336
      %v4338 = vrot.slane %v4337, 4
      %v4340 = vshll.u32 %v4318, 16
      %v4342 = vrot.slane %v4340, 5
      %v4343 = vsel %vm567, %v4338, %v4342
      %v4344 = vshrl.u32 %v4318, 16
      %v4346 = vrot.slane %v4344, 4
      %v4347 = vor.u32 %v4346, %v4342
      %v4348 = vrot.slane %v4347, 4
      %v4350 = vshll.u32 %v4319, 16
      %v4352 = vrot.slane %v4350, 5
      %v4353 = vsel %vm567, %v4348, %v4352
      %4354 = vrot.lane.b32.xlu0 %v4343, 48
      %v4355 = vpop.permute.xlu0 %4354
      %4356 = vrot.lane.b32.xlu0 %v4353, 48
      %v4357 = vpop.permute.xlu0 %4356
      %4360 = vst.msk [vmem:[#allocation2 + $0x38] sm:$0xf] %vm924, %v4355
      %4361 = vst.msk [vmem:[#allocation2 + $0x3c] sm:$0xf] %vm924, %v4357
      %v4363 = vrot.slane %v4317, 5
      %v4364 = vrot.slane %v4363, 4
      %v4365 = vrot.slane %v4318, 5
      %v4366 = vsel %vm606, %v4364, %v4365
      %v4367 = vrot.slane %v4365, 4
      %v4368 = vrot.slane %v4319, 5
      %v4369 = vsel %vm606, %v4367, %v4368
      %4370 = vrot.lane.b32.xlu0 %v4366, 51
      %v4371 = vpop.permute.xlu0 %4370
      %4372 = vrot.lane.b32.xlu0 %v4369, 51
      %v4373 = vpop.permute.xlu0 %4372
      %4376 = vst.msk [vmem:[#allocation2 + $0x38] sm:$0xf] %vm941, %v4371
      %4377 = vst.msk [vmem:[#allocation2 + $0x3c] sm:$0xf] %vm941, %v4373
      %v4378 = vrot.slane %v4331, 5
      %v4379 = vrot.slane %v4334, 6
      %v4380 = vor.u32 %v4378, %v4379
      %v4381 = vrot.slane %v4380, 4
      %v4382 = vrot.slane %v4344, 5
      %v4383 = vrot.slane %v4340, 6
      %v4384 = vor.u32 %v4382, %v4383
      %v4385 = vsel %vm625, %v4381, %v4384
      %v4386 = vrot.slane %v4384, 4
      %v4387 = vshrl.u32 %v4319, 16
      %v4389 = vrot.slane %v4387, 5
      %v4390 = vrot.slane %v4350, 6
      %v4391 = vor.u32 %v4389, %v4390
      %v4392 = vsel %vm625, %v4386, %v4391
      %4393 = vrot.lane.b32.xlu0 %v4385, 54
      %v4394 = vpop.permute.xlu0 %4393
      %4395 = vrot.lane.b32.xlu0 %v4392, 54
      %v4396 = vpop.permute.xlu0 %4395
      %4399 = vst.msk [vmem:[#allocation2 + $0x38] sm:$0xf] %vm965, %v4394
      %4400 = vst.msk [vmem:[#allocation2 + $0x3c] sm:$0xf] %vm965, %v4396
      %v4401 = vrot.slane %v4317, 6
      %v4402 = vrot.slane %v4401, 4
      %v4403 = vrot.slane %v4318, 6
      %v4404 = vsel %vm652, %v4402, %v4403
      %v4405 = vrot.slane %v4403, 4
      %v4406 = vrot.slane %v4319, 6
      %v4407 = vsel %vm652, %v4405, %v4406
      %4408 = vrot.lane.b32.xlu0 %v4404, 57
      %v4409 = vpop.permute.xlu0 %4408
      %4410 = vrot.lane.b32.xlu0 %v4407, 57
      %v4411 = vpop.permute.xlu0 %4410
      %4414 = vst.msk [vmem:[#allocation2 + $0x38] sm:$0xf] %vm981, %v4409
      %4415 = vst.msk [vmem:[#allocation2 + $0x3c] sm:$0xf] %vm981, %v4411
      %v4416 = vld [vmem:[%s545] sm:$0xf]
      %v4417 = vld [vmem:[%s545 + $0x4] sm:$0xf]
      %v4418 = vld [vmem:[%s545 + $0x8] sm:$0x3]
      %4421 = vrot.lane.b32.xlu0 %v4416, 60
      %v4422 = vpop.permute.xlu0 %4421
      %4423 = vrot.lane.b32.xlu0 %v4417, 60
      %v4424 = vpop.permute.xlu0 %4423
      %4427 = vst.msk [vmem:[#allocation2 + $0x38] sm:$0xf] %vm996, %v4422
      %4428 = vst.msk [vmem:[#allocation2 + $0x3c] sm:$0xf] %vm996, %v4424
      %v4430 = vshrl.u32 %v4416, 16
      %v4432 = vrot.slane %v4430, 4
      %v4433 = vshll.u32 %v4416, 16
      %v4435 = vrot.slane %v4433, 5
      %v4436 = vor.u32 %v4432, %v4435
      %v4437 = vrot.slane %v4436, 4
      %v4439 = vshll.u32 %v4417, 16
      %v4441 = vrot.slane %v4439, 5
      %v4442 = vsel %vm567, %v4437, %v4441
      %v4443 = vshrl.u32 %v4417, 16
      %v4445 = vrot.slane %v4443, 4
      %v4446 = vor.u32 %v4445, %v4441
      %v4447 = vrot.slane %v4446, 4
      %v4449 = vshll.u32 %v4418, 16
      %v4451 = vrot.slane %v4449, 5
      %v4452 = vsel %vm567, %v4447, %v4451
      %4453 = vrot.lane.b32.xlu0 %v4442, 63
      %v4454 = vpop.permute.xlu0 %4453
      %4455 = vrot.lane.b32.xlu0 %v4452, 63
      %v4456 = vpop.permute.xlu0 %4455
      %4459 = vst.msk [vmem:[#allocation2 + $0x38] sm:$0xf] %vm1029, %v4454
      %4460 = vst.msk [vmem:[#allocation2 + $0x3c] sm:$0xf] %vm1029, %v4456
      %v4462 = vrot.slane %v4416, 5
      %v4463 = vrot.slane %v4462, 4
      %v4464 = vrot.slane %v4417, 5
      %v4465 = vsel %vm606, %v4463, %v4464
      %v4466 = vrot.slane %v4464, 4
      %v4467 = vrot.slane %v4418, 5
      %v4468 = vsel %vm606, %v4466, %v4467
      %4469 = vrot.lane.b32.xlu0 %v4465, 66
      %v4470 = vpop.permute.xlu0 %4469
      %4471 = vrot.lane.b32.xlu0 %v4468, 66
      %v4472 = vpop.permute.xlu0 %4471
      %4475 = vst.msk [vmem:[#allocation2 + $0x38] sm:$0xf] %vm1046, %v4470
      %4476 = vst.msk [vmem:[#allocation2 + $0x3c] sm:$0xf] %vm1046, %v4472
      %v4477 = vrot.slane %v4430, 5
      %v4478 = vrot.slane %v4433, 6
      %v4479 = vor.u32 %v4477, %v4478
      %v4480 = vrot.slane %v4479, 4
      %v4481 = vrot.slane %v4443, 5
      %v4482 = vrot.slane %v4439, 6
      %v4483 = vor.u32 %v4481, %v4482
      %v4484 = vsel %vm625, %v4480, %v4483
      %v4485 = vrot.slane %v4483, 4
      %v4486 = vshrl.u32 %v4418, 16
      %v4488 = vrot.slane %v4486, 5
      %v4489 = vrot.slane %v4449, 6
      %v4490 = vor.u32 %v4488, %v4489
      %v4491 = vsel %vm625, %v4485, %v4490
      %4492 = vrot.lane.b32.xlu0 %v4484, 69
      %v4493 = vpop.permute.xlu0 %4492
      %4494 = vrot.lane.b32.xlu0 %v4491, 69
      %v4495 = vpop.permute.xlu0 %4494
      %4498 = vst.msk [vmem:[#allocation2 + $0x38] sm:$0xf] %vm1070, %v4493
      %4499 = vst.msk [vmem:[#allocation2 + $0x3c] sm:$0xf] %vm1070, %v4495
      %v4500 = vrot.slane %v4416, 6
      %v4501 = vrot.slane %v4500, 4
      %v4502 = vrot.slane %v4417, 6
      %v4503 = vsel %vm652, %v4501, %v4502
      %v4504 = vrot.slane %v4502, 4
      %v4505 = vrot.slane %v4418, 6
      %v4506 = vsel %vm652, %v4504, %v4505
      %4507 = vrot.lane.b32.xlu0 %v4503, 72
      %v4508 = vpop.permute.xlu0 %4507
      %4509 = vrot.lane.b32.xlu0 %v4506, 72
      %v4510 = vpop.permute.xlu0 %4509
      %4513 = vst.msk [vmem:[#allocation2 + $0x38] sm:$0xf] %vm1086, %v4508
      %4514 = vst.msk [vmem:[#allocation2 + $0x3c] sm:$0xf] %vm1086, %v4510
      %v4515 = vld [vmem:[#allocation2] sm:$0xf]
      %v4516 = vld [vmem:[#allocation2 + $0x4] sm:$0xf]
      %v4517 = vld [vmem:[#allocation2 + $0x8] sm:$0xf]
      %v4518 = vld [vmem:[#allocation2 + $0xc] sm:$0xf]
      %v4519 = vld [vmem:[#allocation2 + $0x10] sm:$0xf]
      %v4520 = vld [vmem:[#allocation2 + $0x14] sm:$0xf]
      %v4521 = vld [vmem:[#allocation2 + $0x18] sm:$0xf]
      %v4522 = vld [vmem:[#allocation2 + $0x1c] sm:$0xf]
      %v4523 = vld [vmem:[#allocation2 + $0x20] sm:$0xf]
      %v4524 = vld [vmem:[#allocation2 + $0x24] sm:$0xf]
      %v4525 = vld [vmem:[#allocation2 + $0x28] sm:$0xf]
      %v4526 = vld [vmem:[#allocation2 + $0x2c] sm:$0xf]
      %v4527 = vld [vmem:[#allocation2 + $0x30] sm:$0xf]
      %v4528 = vld [vmem:[#allocation2 + $0x34] sm:$0xf]
      %v4529 = vld [vmem:[#allocation2 + $0x38] sm:$0xf]
      %v4530 = vld [vmem:[#allocation2 + $0x3c] sm:$0xf]
      %v4531 = vld [vmem:[%s5] sm:$0xf]
      %v4532 = vld [vmem:[%s5 + $0x4] sm:$0xf]
      %v4533 = vld [vmem:[%s5 + $0x8] sm:$0xf]
      %v4534 = vld [vmem:[%s5 + $0xc] sm:$0xf]
      %v4535 = vld [vmem:[%s5 + $0x10] sm:$0xf]
      %v4536 = vld [vmem:[%s5 + $0x14] sm:$0xf]
      %v4537 = vld [vmem:[%s5 + $0x18] sm:$0xf]
      %v4538 = vld [vmem:[%s5 + $0x1c] sm:$0xf]
      %v4539 = vld [vmem:[%s5 + $0x20] sm:$0xf]
      %v4540 = vld [vmem:[%s5 + $0x24] sm:$0x3]
      %v4541 = vld [vmem:[%s6] sm:$0x1]
      %v4543 = vlaneseq
      %v4544 = vshrl.u32 %v4543, 7
      %v4545 = vsub.s32 0, %v4544
      %v4546 = vrot.slane %v4541, %v4545
      %v4564 = vunpack.c.l.b16 %v4515
      %v4565 = vunpack.c.l.b16 %v4516
      %v4566 = vunpack.c.l.b16 %v4517
      %v4567 = vunpack.c.l.b16 %v4518
      %v4568 = vunpack.c.l.b16 %v4519
      %v4569 = vunpack.c.l.b16 %v4520
      %v4570 = vunpack.c.l.b16 %v4521
      %v4571 = vunpack.c.l.b16 %v4522
      %v4572 = vunpack.c.l.b16 %v4523
      %v4573 = vunpack.c.l.b16 %v4524
      %v4574 = vunpack.c.l.b16 %v4525
      %v4575 = vunpack.c.l.b16 %v4526
      %v4576 = vunpack.c.l.b16 %v4527
      %v4577 = vunpack.c.l.b16 %v4528
      %v4578 = vunpack.c.l.b16 %v4529
      %v4579 = vunpack.c.l.b16 %v4530
      %v4580 = vpack.c.b16 %v4565, %v4564
      %v4581 = vpack.c.b16 %v4567, %v4566
      %v4582 = vpack.c.b16 %v4569, %v4568
      %v4583 = vpack.c.b16 %v4571, %v4570
      %v4584 = vpack.c.b16 %v4573, %v4572
      %v4585 = vpack.c.b16 %v4575, %v4574
      %v4586 = vpack.c.b16 %v4577, %v4576
      %v4587 = vpack.c.b16 %v4579, %v4578
      %v4598 = vunpack.c.l.b16 %v4531
      %v4599 = vunpack.c.l.b16 %v4532
      %v4600 = vunpack.c.l.b16 %v4533
      %v4601 = vunpack.c.l.b16 %v4534
      %v4602 = vunpack.c.l.b16 %v4535
      %v4603 = vunpack.c.l.b16 %v4536
      %v4604 = vunpack.c.l.b16 %v4537
      %v4605 = vunpack.c.l.b16 %v4538
      %v4606 = vunpack.c.l.b16 %v4539
      %v4607 = vunpack.c.l.b16 %v4540
      %v4608 = vpack.c.b16 %v4599, %v4598
      %v4609 = vpack.c.b16 %v4601, %v4600
      %v4610 = vpack.c.b16 %v4603, %v4602
      %v4611 = vpack.c.b16 %v4605, %v4604
      %v4612 = vpack.c.b16 %v4607, %v4606
      %vm4617 = vcmask 613376
      %v4619 = vsel %vm4617, %v4580, 0
      %v4622 = vsel %vm4617, %v4581, 0
      %v4625 = vsel %vm4617, %v4582, 0
      %v4628 = vsel %vm4617, %v4583, 0
      %v4631 = vsel %vm4617, %v4584, 0
      %v4634 = vsel %vm4617, %v4585, 0
      %v4637 = vsel %vm4617, %v4586, 0
      %v4640 = vsel %vm4617, %v4587, 0
      %vm4642 = vcmask 1044480
      %vm4643 = vcmask 1045504
      %v4644 = vsel %vm4642, 4294967295, 65535
      %v4645 = vsel %vm4643, %v4644, 0
      %v4647 = vand.u32 %v4612, %v4645
      %4649 = vmatprep.subr.bf16.mxu0 0
      %4650 = vmatpush1.bf16.msra.mxu0 0
      %4651 = vmatprep.subr.bf16.mxu0 0
      %4652 = vmatpush1.bf16.msra.mxu0 0
      %4653 = vmatprep.subr.bf16.mxu0 0
      %4654 = vmatpush1.bf16.msra.mxu0 0
      %4655 = vmatprep.subr.bf16.mxu0 0
      %4656 = vmatpush1.bf16.msra.mxu0 %v4647
      %4657 = vmatprep.subr.bf16.mxu0 0
      %4658 = vmatpush1.bf16.msra.mxu0 %v4611
      %4659 = vmatprep.subr.bf16.mxu0 0
      %4660 = vmatpush1.bf16.msra.mxu0 %v4610
      %4661 = vmatprep.subr.bf16.mxu0 0
      %4662 = vmatpush1.bf16.msra.mxu0 %v4609
      %4663 = vmatprep.subr.bf16.mxu0 0
      %4664 = vmatpush1.bf16.msra.mxu0 %v4608
      %4665 = vmatprep.subr.bf16.mxu0 0
      %4666 = vmatpush2.bf16.msra.mxu0 0
      %4667 = vmatprep.subr.bf16.mxu0 0
      %4668 = vmatpush2.bf16.msra.mxu0 0
      %4669 = vmatprep.subr.bf16.mxu0 0
      %4670 = vmatpush2.bf16.msra.mxu0 0
      %4671 = vmatprep.subr.bf16.mxu0 0
      %4672 = vmatpush2.bf16.msra.mxu0 0
      %4673 = vmatprep.subr.bf16.mxu0 0
      %4674 = vmatpush2.bf16.msra.mxu0 0
      %4675 = vmatprep.subr.bf16.mxu0 0
      %4676 = vmatpush2.bf16.msra.mxu0 0
      %4677 = vmatprep.subr.bf16.mxu0 0
      %4678 = vmatpush2.bf16.msra.mxu0 0
      %4679 = vmatprep.subr.bf16.mxu0 0
      %4680 = vmatpush2.bf16.msra.mxu0 0
      %4681 = vmatprep.mubr.bf16.mxu0 0
      %4682 = vmatmul.mubr.bf16.gmra.mxu0 %v4619
      %v4683 = vpop.f32.mrf.mxu0
      %v4684 = vadd.f32 %v4546, %v4683
      %v4685 = vpop.f32.mrf.mxu0
      %v4686 = vpop.f32.mrf.mxu0
      %v4687 = vadd.f32 %v4546, %v4686
      %v4688 = vpop.f32.mrf.mxu0
      %4689 = vmatprep.mubr.bf16.mxu0 0
      %4690 = vmatmul.mubr.bf16.gmra.mxu0 %v4622
      %v4691 = vpop.f32.mrf.mxu0
      %v4692 = vadd.f32 %v4546, %v4691
      %v4693 = vpop.f32.mrf.mxu0
      %v4694 = vpop.f32.mrf.mxu0
      %v4695 = vadd.f32 %v4546, %v4694
      %v4696 = vpop.f32.mrf.mxu0
      %4697 = vmatprep.mubr.bf16.mxu0 0
      %4698 = vmatmul.mubr.bf16.gmra.mxu0 %v4625
      %v4699 = vpop.f32.mrf.mxu0
      %v4700 = vadd.f32 %v4546, %v4699
      %v4701 = vpop.f32.mrf.mxu0
      %v4702 = vpop.f32.mrf.mxu0
      %v4703 = vadd.f32 %v4546, %v4702
      %v4704 = vpop.f32.mrf.mxu0
      %4705 = vmatprep.mubr.bf16.mxu0 0
      %4706 = vmatmul.mubr.bf16.gmra.mxu0 %v4628
      %v4707 = vpop.f32.mrf.mxu0
      %v4708 = vadd.f32 %v4546, %v4707
      %v4709 = vpop.f32.mrf.mxu0
      %v4710 = vpop.f32.mrf.mxu0
      %v4711 = vadd.f32 %v4546, %v4710
      %v4712 = vpop.f32.mrf.mxu0
      %4713 = vmatprep.mubr.bf16.mxu0 0
      %4714 = vmatmul.mubr.bf16.gmra.mxu0 %v4631
      %v4715 = vpop.f32.mrf.mxu0
      %v4716 = vadd.f32 %v4546, %v4715
      %v4717 = vpop.f32.mrf.mxu0
      %v4718 = vpop.f32.mrf.mxu0
      %v4719 = vadd.f32 %v4546, %v4718
      %v4720 = vpop.f32.mrf.mxu0
      %4721 = vmatprep.mubr.bf16.mxu0 0
      %4722 = vmatmul.mubr.bf16.gmra.mxu0 %v4634
      %v4723 = vpop.f32.mrf.mxu0
      %v4724 = vadd.f32 %v4546, %v4723
      %v4725 = vpop.f32.mrf.mxu0
      %v4726 = vpop.f32.mrf.mxu0
      %v4727 = vadd.f32 %v4546, %v4726
      %v4728 = vpop.f32.mrf.mxu0
      %4729 = vmatprep.mubr.bf16.mxu0 0
      %4730 = vmatmul.mubr.bf16.gmra.mxu0 %v4637
      %v4731 = vpop.f32.mrf.mxu0
      %v4732 = vadd.f32 %v4546, %v4731
      %v4733 = vpop.f32.mrf.mxu0
      %v4734 = vpop.f32.mrf.mxu0
      %v4735 = vadd.f32 %v4546, %v4734
      %v4736 = vpop.f32.mrf.mxu0
      %4737 = vmatprep.mubr.bf16.mxu0 0
      %4738 = vmatmul.mubr.bf16.gmra.mxu0 %v4640
      %v4739 = vpop.f32.mrf.mxu0
      %v4740 = vadd.f32 %v4546, %v4739
      %v4741 = vpop.f32.mrf.mxu0
      %v4742 = vpop.f32.mrf.mxu0
      %v4743 = vadd.f32 %v4546, %v4742
      %v4744 = vpop.f32.mrf.mxu0
      %4745 = vdwg.mxu0
      %v4746 = vmax.f32 %v4684, 0.0
      %v4747 = vmax.f32 %v4687, 0.0
      %v4748 = vmax.f32 %v4692, 0.0
      %v4749 = vmax.f32 %v4695, 0.0
      %v4750 = vmax.f32 %v4700, 0.0
      %v4751 = vmax.f32 %v4703, 0.0
      %v4752 = vmax.f32 %v4708, 0.0
      %v4753 = vmax.f32 %v4711, 0.0
      %v4754 = vmax.f32 %v4716, 0.0
      %v4755 = vmax.f32 %v4719, 0.0
      %v4756 = vmax.f32 %v4724, 0.0
      %v4757 = vmax.f32 %v4727, 0.0
      %v4758 = vmax.f32 %v4732, 0.0
      %v4759 = vmax.f32 %v4735, 0.0
      %v4760 = vmax.f32 %v4740, 0.0
      %v4761 = vmax.f32 %v4743, 0.0
      %v4762 = vpack.c.bf16 %v4747, %v4746
      %v4763 = vpack.c.bf16 %v4749, %v4748
      %v4764 = vpack.c.bf16 %v4751, %v4750
      %v4765 = vpack.c.bf16 %v4753, %v4752
      %v4766 = vpack.c.bf16 %v4755, %v4754
      %v4767 = vpack.c.bf16 %v4757, %v4756
      %v4768 = vpack.c.bf16 %v4759, %v4758
      %v4769 = vpack.c.bf16 %v4761, %v4760
      %v4778 = vunpack.c.l.b16 %v4762
      %v4779 = vunpack.c.h.b16 %v4762
      %v4780 = vunpack.c.l.b16 %v4763
      %v4781 = vunpack.c.h.b16 %v4763
      %v4782 = vunpack.c.l.b16 %v4764
      %v4783 = vunpack.c.h.b16 %v4764
      %v4784 = vunpack.c.l.b16 %v4765
      %v4785 = vunpack.c.h.b16 %v4765
      %v4786 = vunpack.c.l.b16 %v4766
      %v4787 = vunpack.c.h.b16 %v4766
      %v4788 = vunpack.c.l.b16 %v4767
      %v4789 = vunpack.c.h.b16 %v4767
      %v4790 = vunpack.c.l.b16 %v4768
      %v4791 = vunpack.c.h.b16 %v4768
      %v4792 = vunpack.c.l.b16 %v4769
      %v4793 = vunpack.c.h.b16 %v4769
      %v4794 = vpack.c.b16 %v4778, %v4778
      %v4795 = vpack.c.b16 %v4779, %v4779
      %v4796 = vpack.c.b16 %v4780, %v4780
      %v4797 = vpack.c.b16 %v4781, %v4781
      %v4798 = vpack.c.b16 %v4782, %v4782
      %v4799 = vpack.c.b16 %v4783, %v4783
      %v4800 = vpack.c.b16 %v4784, %v4784
      %v4801 = vpack.c.b16 %v4785, %v4785
      %v4802 = vpack.c.b16 %v4786, %v4786
      %v4803 = vpack.c.b16 %v4787, %v4787
      %v4804 = vpack.c.b16 %v4788, %v4788
      %v4805 = vpack.c.b16 %v4789, %v4789
      %v4806 = vpack.c.b16 %v4790, %v4790
      %v4807 = vpack.c.b16 %v4791, %v4791
      %v4808 = vpack.c.b16 %v4792, %v4792
      %v4809 = vpack.c.b16 %v4793, %v4793
      %vm4826 = vcmask 257024
      %4827 = vst.msk [vmem:[%s557] sm:$0xf] %vm4826, %v4794
      %4828 = vst.msk [vmem:[%s557 + $0x4] sm:$0xf] %vm4826, %v4795
      %4829 = vst.msk [vmem:[%s557 + $0x8] sm:$0xf] %vm4826, %v4796
      %4830 = vst.msk [vmem:[%s557 + $0xc] sm:$0xf] %vm4826, %v4797
      %4831 = vst.msk [vmem:[%s557 + $0x10] sm:$0xf] %vm4826, %v4798
      %4832 = vst.msk [vmem:[%s557 + $0x14] sm:$0xf] %vm4826, %v4799
      %4833 = vst.msk [vmem:[%s557 + $0x18] sm:$0xf] %vm4826, %v4800
      %4834 = vst.msk [vmem:[%s557 + $0x1c] sm:$0xf] %vm4826, %v4801
      %4835 = vst.msk [vmem:[%s557 + $0x20] sm:$0xf] %vm4826, %v4802
      %4836 = vst.msk [vmem:[%s557 + $0x24] sm:$0xf] %vm4826, %v4803
      %4837 = vst.msk [vmem:[%s557 + $0x28] sm:$0xf] %vm4826, %v4804
      %4838 = vst.msk [vmem:[%s557 + $0x2c] sm:$0xf] %vm4826, %v4805
      %4839 = vst.msk [vmem:[%s557 + $0x30] sm:$0xf] %vm4826, %v4806
      %4840 = vst.msk [vmem:[%s557 + $0x34] sm:$0xf] %vm4826, %v4807
      %4841 = vst.msk [vmem:[%s557 + $0x38] sm:$0xf] %vm4826, %v4808
      %4842 = vst.msk [vmem:[%s557 + $0x3c] sm:$0xf] %vm4826, %v4809
      %p4843 = scmp.lt.s32.totalorder %s22, 1
      %s4844 = scalar_select %p4843, %s22, 1
      %p4845 = scmp.lt.s32.totalorder %s23, 1
      %s4846 = scalar_select %p4845, %s23, 1
      %s4847 = smul.addr %s4846, 16
      %s4848 = smul.addr %s4844, 32
      %s4849 = sadd.s32 %s4847, %s4848
      %s4850 = smul.addr %s4849, 4
      %s4851 = scalar_lea.vmem %s7, %s4850
      // Predicated region
      $region49: #{tpu_custom_call.1} parent=47 // pred_check
        %p4852 = pneg %p254
      $region50: #{tpu_custom_call.1} parent=47 // pred_check_branch
        %4854 = sbr.rel (%p4852) target = $region52
      $region51: #{tpu_custom_call.1} parent=47 // pred_region
        _
      $region52: #{tpu_custom_call.1} parent=47 // pred_fallthru
        _
    $region48: #{tpu_custom_call.1} parent=5 // pred_fallthru
      _
    %p4855 = scmp.le.s32.totalorder 2, %s13
    // Predicated region
    $region53: #{tpu_custom_call.1} parent=5 // pred_check
      %p4856 = pneg %p4855
    $region54: #{tpu_custom_call.1} parent=5 // pred_check_branch
      %4858 = sbr.rel (%p4856) target = $region56
    $region55: #{tpu_custom_call.1} parent=5 // pred_region
      %s4859 = ssub.s32 %s13, 2
      // Predicated region
      $region57: #{tpu_custom_call.1} parent=55 // pred_check
        %p4860 = pneg %p260
      $region58: #{tpu_custom_call.1} parent=55 // pred_check_branch
        %4862 = sbr.rel (%p4860) target = $region60
      $region59: #{tpu_custom_call.1} parent=55 // pred_region
        %p4863 = scmp.lt.s32.totalorder %s24, 1
        %s4864 = scalar_select %p4863, %s24, 1
        %p4865 = scmp.lt.s32.totalorder %s25, 1
        %s4866 = scalar_select %p4865, %s25, 1
        %s4867 = smul.addr %s4866, 16
        %s4868 = smul.addr %s4864, 32
        %s4869 = sadd.s32 %s4867, %s4868
        %s4870 = smul.addr %s4869, 4
        %s4871 = scalar_lea.vmem %s7, %s4870
      $region60: #{tpu_custom_call.1} parent=55 // pred_fallthru
        _
    $region56: #{tpu_custom_call.1} parent=5 // pred_fallthru
      _
  $region6: #{tpu_custom_call.1} parent=0 // loop_footer
    %s17 = sadd.s32 1, %s13
  $region7: #{tpu_custom_call.1} parent=0 // loop_footer_branch
    %12 = sbr.rel target = $region3
  $region8: #{tpu_custom_call.1} parent=0 // loop_exit
    _

</llo_original>
